<compile_context>
chip_gen: v7x
topology: tpu7x:2x2x1
jax: 0.10.0
libtpu: 0.0.40
codegen_flags: <defaults>
</compile_context>

<pallas_src>
import functools

import jax
import jax.numpy as jnp
import numpy as np
from jax.experimental import pallas as pl
from jax.experimental.pallas import tpu as pltpu

_VMEM_LIMIT = 32 * 1024 * 1024


def _round_up(x, m):
    return (x + m - 1) // m * m


# ----------------------------------------------------------------------------
# Generic row/col/K-tiled matmul (+bias +optional ReLU), bf16 MXU, f32 accum
# ----------------------------------------------------------------------------
def _mm_bias_kernel(x_ref, w_ref, b_ref, o_ref, acc_ref, *, relu, nk):
    if nk == 1:
        y = jnp.dot(x_ref[...], w_ref[...], preferred_element_type=jnp.float32)
        y = y + b_ref[...]
        if relu:
            y = jnp.maximum(y, 0.0)
        o_ref[...] = y
    else:
        @pl.when(pl.program_id(2) == 0)
        def _():
            acc_ref[...] = jnp.zeros_like(acc_ref)

        acc_ref[...] += jnp.dot(x_ref[...], w_ref[...],
                                preferred_element_type=jnp.float32)

        @pl.when(pl.program_id(2) == nk - 1)
        def _():
            y = acc_ref[...] + b_ref[...]
            if relu:
                y = jnp.maximum(y, 0.0)
            o_ref[...] = y


def matmul_bias(x, w, b, relu=False, *, tm=256, tk=512):
    """y = act(x @ w + b); x:(M,K), w:(K,N), b:(N,).  bf16 operands, f32 accum.

    The kernel always writes a lane-dense (N padded to 128) output; padding is
    sliced off here, outside the kernel.
    """
    M, K = x.shape
    N = w.shape[1]

    Np = _round_up(N, 128)
    tn = 256 if Np % 256 == 0 else 128

    if M <= tm:
        tm_eff, Mp = M, M
    else:
        tm_eff, Mp = tm, _round_up(M, tm)

    if K <= tk:
        tk_eff, Kp = K, K
    else:
        tk_eff, Kp = tk, _round_up(K, tk)
    nk = Kp // tk_eff

    xb = x.astype(jnp.bfloat16)
    wb = w.astype(jnp.bfloat16)
    if (Mp - M) or (Kp - K):
        xb = jnp.pad(xb, ((0, Mp - M), (0, Kp - K)))
    if (Kp - K) or (Np - N):
        wb = jnp.pad(wb, ((0, Kp - K), (0, Np - N)))
    bp = b.astype(jnp.float32)
    if Np - N:
        bp = jnp.pad(bp, (0, Np - N))
    bp = bp.reshape(1, Np)

    out = pl.pallas_call(
        functools.partial(_mm_bias_kernel, relu=relu, nk=nk),
        out_shape=jax.ShapeDtypeStruct((Mp, Np), jnp.float32),
        grid_spec=pltpu.PrefetchScalarGridSpec(
            num_scalar_prefetch=0,
            grid=(Mp // tm_eff, Np // tn, nk),
            in_specs=[
                pl.BlockSpec((tm_eff, tk_eff), lambda i, j, k: (i, k)),
                pl.BlockSpec((tk_eff, tn), lambda i, j, k: (k, j)),
                pl.BlockSpec((1, tn), lambda i, j, k: (0, j)),
            ],
            out_specs=pl.BlockSpec((tm_eff, tn), lambda i, j, k: (i, j)),
            scratch_shapes=[pltpu.VMEM((tm_eff, tn), jnp.float32)],
        ),
        compiler_params=pltpu.CompilerParams(
            dimension_semantics=("parallel", "parallel", "arbitrary"),
            vmem_limit_bytes=_VMEM_LIMIT,
        ),
    )(xb, wb, bp)

    if (Mp - M) or (Np - N):
        out = out[:M, :N]
    return out


# ----------------------------------------------------------------------------
# Two-input matmul: y = act(x1 @ w1 + x2 @ w2 + b)   (avoids HBM concat)
# ----------------------------------------------------------------------------
def _mm2_bias_kernel(x1_ref, w1_ref, x2_ref, w2_ref, b_ref, o_ref, *, relu):
    y = jnp.dot(x1_ref[...], w1_ref[...], preferred_element_type=jnp.float32)
    y = y + jnp.dot(x2_ref[...], w2_ref[...], preferred_element_type=jnp.float32)
    y = y + b_ref[...]
    if relu:
        y = jnp.maximum(y, 0.0)
    o_ref[...] = y


def matmul2_bias(x1, w1, x2, w2, b, relu=False, *, tm=256):
    M, K1 = x1.shape
    K2 = x2.shape[1]
    N = w1.shape[1]
    Np = _round_up(N, 128)
    tn = 256 if Np % 256 == 0 else 128
    if M <= tm:
        tm_eff, Mp = M, M
    else:
        tm_eff, Mp = tm, _round_up(M, tm)

    def prep_x(x):
        xb = x.astype(jnp.bfloat16)
        if Mp - M:
            xb = jnp.pad(xb, ((0, Mp - M), (0, 0)))
        return xb

    def prep_w(w):
        wb = w.astype(jnp.bfloat16)
        if Np - N:
            wb = jnp.pad(wb, ((0, 0), (0, Np - N)))
        return wb

    bp = b.astype(jnp.float32)
    if Np - N:
        bp = jnp.pad(bp, (0, Np - N))
    bp = bp.reshape(1, Np)

    out = pl.pallas_call(
        functools.partial(_mm2_bias_kernel, relu=relu),
        out_shape=jax.ShapeDtypeStruct((Mp, Np), jnp.float32),
        grid_spec=pltpu.PrefetchScalarGridSpec(
            num_scalar_prefetch=0,
            grid=(Mp // tm_eff, Np // tn),
            in_specs=[
                pl.BlockSpec((tm_eff, K1), lambda i, j: (i, 0)),
                pl.BlockSpec((K1, tn), lambda i, j: (0, j)),
                pl.BlockSpec((tm_eff, K2), lambda i, j: (i, 0)),
                pl.BlockSpec((K2, tn), lambda i, j: (0, j)),
                pl.BlockSpec((1, tn), lambda i, j: (0, j)),
            ],
            out_specs=pl.BlockSpec((tm_eff, tn), lambda i, j: (i, j)),
        ),
        compiler_params=pltpu.CompilerParams(
            dimension_semantics=("parallel", "parallel"),
            vmem_limit_bytes=_VMEM_LIMIT,
        ),
    )(prep_x(x1), prep_w(w1), prep_x(x2), prep_w(w2), bp)

    if (Mp - M) or (Np - N):
        out = out[:M, :N]
    return out


# ----------------------------------------------------------------------------
# 3x3 conv (+folded BN +ReLU): 9 shifted bf16 matmuls accumulated in-kernel
# ----------------------------------------------------------------------------
def _conv3x3_kernel(xp_ref, w_ref, b_ref, o_ref, *, relu):
    hh = xp_ref.shape[1] - 2
    ww = xp_ref.shape[2] - 2
    cin = xp_ref.shape[3]
    xblk = xp_ref[0]                                   # (hh+2, ww+2, cin) bf16
    acc = jnp.zeros(o_ref.shape[1:], jnp.float32)      # (hh*ww, cmid)
    for dy in range(3):
        for dx in range(3):
            tap = xblk[dy:dy + hh, dx:dx + ww, :].reshape(hh * ww, cin)
            acc = acc + jnp.dot(tap, w_ref[3 * dy + dx],
                                preferred_element_type=jnp.float32)
    y = acc + b_ref[...]
    if relu:
        y = jnp.maximum(y, 0.0)
    o_ref[0] = y


def conv3x3_bn_relu(x_nhwc, w9, b, relu=True):
    """x_nhwc:(N,H,W,Cin), w9:(9,Cin,Cmid), b:(Cmid,) -> (N, H*W, Cmid)."""
    N, H, W, C = x_nhwc.shape
    Cmid = w9.shape[-1]
    xp = jnp.pad(x_nhwc, ((0, 0), (1, 1), (1, 1), (0, 0))).astype(jnp.bfloat16)
    # TODO(synk): for production spatial sizes, tile H with a halo (Element-indexed
    # BlockSpec or manual DMA) instead of one full image per grid step.
    return pl.pallas_call(
        functools.partial(_conv3x3_kernel, relu=relu),
        out_shape=jax.ShapeDtypeStruct((N, H * W, Cmid), jnp.float32),
        grid_spec=pltpu.PrefetchScalarGridSpec(
            num_scalar_prefetch=0,
            grid=(N,),
            in_specs=[
                pl.BlockSpec((1, H + 2, W + 2, C), lambda n: (n, 0, 0, 0)),
                pl.BlockSpec((9, C, Cmid), lambda n: (0, 0, 0)),
                pl.BlockSpec((1, Cmid), lambda n: (0, 0)),
            ],
            out_specs=pl.BlockSpec((1, H * W, Cmid), lambda n: (n, 0, 0)),
        ),
        compiler_params=pltpu.CompilerParams(
            dimension_semantics=("parallel",),
            vmem_limit_bytes=_VMEM_LIMIT,
        ),
    )(xp, w9.astype(jnp.bfloat16), b.reshape(1, Cmid).astype(jnp.float32))


# ----------------------------------------------------------------------------
# SpatialGather: softmax(probs over HW) @ feats, HW-tiled online softmax
# ----------------------------------------------------------------------------
def _spatial_gather_kernel(p_ref, f_ref, o_ref, m_ref, l_ref, acc_ref):
    j = pl.program_id(1)

    @pl.when(j == 0)
    def _():
        m_ref[...] = jnp.full_like(m_ref, -1e30)
        l_ref[...] = jnp.zeros_like(l_ref)
        acc_ref[...] = jnp.zeros_like(acc_ref)

    p = p_ref[0]                                           # (Kc, thw) f32
    m_prev = m_ref[...]
    m_new = jnp.maximum(m_prev, jnp.max(p, axis=-1, keepdims=True))
    alpha = jnp.exp(m_prev - m_new)
    e = jnp.exp(p - m_new)                                 # f32 softmax math
    l_ref[...] = alpha * l_ref[...] + jnp.sum(e, axis=-1, keepdims=True)
    acc_ref[...] = alpha * acc_ref[...] + jnp.dot(
        e.astype(jnp.bfloat16), f_ref[0], preferred_element_type=jnp.float32)
    m_ref[...] = m_new

    @pl.when(j == pl.num_programs(1) - 1)
    def _():
        o_ref[0] = acc_ref[...] * pl.reciprocal(l_ref[...], approx=True)


def spatial_gather(probs, feats, *, thw=512):
    """probs:(N,Kc,HW) f32, feats:(N,HW,C) -> (N,Kc,C)."""
    N, Kc, HW = probs.shape
    C = feats.shape[-1]
    thw_eff = min(thw, _round_up(HW, 128))
    HWp = _round_up(HW, thw_eff)
    if HWp != HW:
        probs = jnp.pad(probs, ((0, 0), (0, 0), (0, HWp - HW)),
                        constant_values=-1e30)
        feats = jnp.pad(feats, ((0, 0), (0, HWp - HW), (0, 0)))
    return pl.pallas_call(
        _spatial_gather_kernel,
        out_shape=jax.ShapeDtypeStruct((N, Kc, C), jnp.float32),
        grid_spec=pltpu.PrefetchScalarGridSpec(
            num_scalar_prefetch=0,
            grid=(N, HWp // thw_eff),
            in_specs=[
                pl.BlockSpec((1, Kc, thw_eff), lambda b, j: (b, 0, j)),
                pl.BlockSpec((1, thw_eff, C), lambda b, j: (b, j, 0)),
            ],
            out_specs=pl.BlockSpec((1, Kc, C), lambda b, j: (b, 0, 0)),
            scratch_shapes=[
                pltpu.VMEM((Kc, 1), jnp.float32),
                pltpu.VMEM((Kc, 1), jnp.float32),
                pltpu.VMEM((Kc, C), jnp.float32),
            ],
        ),
        compiler_params=pltpu.CompilerParams(
            dimension_semantics=("parallel", "arbitrary"),
            vmem_limit_bytes=_VMEM_LIMIT,
        ),
    )(probs.astype(jnp.float32), feats.astype(jnp.bfloat16))


# ----------------------------------------------------------------------------
# Object attention: softmax over classes (HW tiles are independent -> parallel)
# Attention scale is folded into the f_pixel weights at init.
# ----------------------------------------------------------------------------
def _obj_attn_kernel(q_ref, k_ref, v_ref, o_ref):
    sim = jnp.dot(q_ref[0], k_ref[0], preferred_element_type=jnp.float32)
    sim = sim - jnp.max(sim, axis=-1, keepdims=True)
    e = jnp.exp(sim)
    sm = e * pl.reciprocal(jnp.sum(e, axis=-1, keepdims=True), approx=True)
    o_ref[0] = jnp.dot(sm.astype(jnp.bfloat16), v_ref[0],
                       preferred_element_type=jnp.float32)


def object_attention(query, key, value, *, thw=512):
    """query:(N,HW,Ck), key:(N,Ck,Kc), value:(N,Kc,Ck) -> (N,HW,Ck)."""
    N, HW, Ck = query.shape
    Kc = key.shape[-1]
    thw_eff = min(thw, _round_up(HW, 128))
    HWp = _round_up(HW, thw_eff)
    if HWp != HW:
        query = jnp.pad(query, ((0, 0), (0, HWp - HW), (0, 0)))
    out = pl.pallas_call(
        _obj_attn_kernel,
        out_shape=jax.ShapeDtypeStruct((N, HWp, Ck), jnp.float32),
        grid_spec=pltpu.PrefetchScalarGridSpec(
            num_scalar_prefetch=0,
            grid=(N, HWp // thw_eff),
            in_specs=[
                pl.BlockSpec((1, thw_eff, Ck), lambda b, i: (b, i, 0)),
                pl.BlockSpec((1, Ck, Kc), lambda b, i: (b, 0, 0)),
                pl.BlockSpec((1, Kc, Ck), lambda b, i: (b, 0, 0)),
            ],
            out_specs=pl.BlockSpec((1, thw_eff, Ck), lambda b, i: (b, i, 0)),
        ),
        compiler_params=pltpu.CompilerParams(
            dimension_semantics=("parallel", "parallel"),
            vmem_limit_bytes=_VMEM_LIMIT,
        ),
    )(query.astype(jnp.bfloat16), key.astype(jnp.bfloat16),
      value.astype(jnp.bfloat16))
    return out[:, :HW] if HWp != HW else out


# ----------------------------------------------------------------------------
# Fused proxy -> (key, value) transforms (tiny M = N * num_classes)
# ----------------------------------------------------------------------------
def _proxy_kv_kernel(x_ref, w1_ref, b1_ref, w2_ref, b2_ref, w3_ref, b3_ref,
                     k_ref, v_ref):
    x = x_ref[...]
    h = jnp.dot(x, w1_ref[...], preferred_element_type=jnp.float32) + b1_ref[...]
    h = jnp.maximum(h, 0.0)
    k = jnp.dot(h.astype(jnp.bfloat16), w2_ref[...],
                preferred_element_type=jnp.float32) + b2_ref[...]
    k_ref[...] = jnp.maximum(k, 0.0)
    v = jnp.dot(x, w3_ref[...], preferred_element_type=jnp.float32) + b3_ref[...]
    v_ref[...] = jnp.maximum(v, 0.0)


def proxy_key_value(proxy_flat, p):
    M, _ = proxy_flat.shape
    c_key = p["fobj1_w"].shape[1]
    return pl.pallas_call(
        _proxy_kv_kernel,
        out_shape=(jax.ShapeDtypeStruct((M, c_key), jnp.float32),
                   jax.ShapeDtypeStruct((M, c_key), jnp.float32)),
    )(proxy_flat.astype(jnp.bfloat16),
      p["fobj1_w"].astype(jnp.bfloat16), p["fobj1_b"].reshape(1, -1),
      p["fobj2_w"].astype(jnp.bfloat16), p["fobj2_b"].reshape(1, -1),
      p["fdown_w"].astype(jnp.bfloat16), p["fdown_b"].reshape(1, -1))


# ----------------------------------------------------------------------------
# Bilinear upsample (align_corners=True), NCHW in / NCHW out, per-(n,c) 2D matmuls
# ----------------------------------------------------------------------------
def _upsample_kernel(x_ref, ah_ref, awt_ref, o_ref):
    t = jnp.dot(ah_ref[...], x_ref[0, 0], preferred_element_type=jnp.float32)
    o_ref[0, 0] = jnp.dot(t, awt_ref[...], preferred_element_type=jnp.float32)


def bilinear_matrix(in_size, out_size):
    # align_corners=True (nn.UpsamplingBilinear2d)
    idx = np.arange(out_size, dtype=np.float64)
    src = idx * (in_size - 1) / max(out_size - 1, 1)
    i0 = np.clip(np.floor(src).astype(np.int64), 0, in_size - 1)
    i1 = np.clip(i0 + 1, 0, in_size - 1)
    frac = src - i0
    m = np.zeros((out_size, in_size), dtype=np.float32)
    m[np.arange(out_size), i0] += (1.0 - frac).astype(np.float32)
    m[np.arange(out_size), i1] += frac.astype(np.float32)
    return jnp.asarray(m)


def upsample_bilinear_nchw(x_nchw, out_h, out_w):
    N, C, H, W = x_nchw.shape
    ah = bilinear_matrix(H, out_h)            # (out_h, H)
    awt = bilinear_matrix(W, out_w).T         # (W, out_w)
    # TODO(synk): tile out_h/out_w for very large production output resolutions.
    return pl.pallas_call(
        _upsample_kernel,
        out_shape=jax.ShapeDtypeStruct((N, C, out_h, out_w), jnp.float32),
        grid_spec=pltpu.PrefetchScalarGridSpec(
            num_scalar_prefetch=0,
            grid=(N, C),
            in_specs=[
                pl.BlockSpec((1, 1, H, W), lambda n, c: (n, c, 0, 0)),
                pl.BlockSpec((out_h, H), lambda n, c: (0, 0)),
                pl.BlockSpec((W, out_w), lambda n, c: (0, 0)),
            ],
            out_specs=pl.BlockSpec((1, 1, out_h, out_w), lambda n, c: (n, c, 0, 0)),
        ),
        compiler_params=pltpu.CompilerParams(
            dimension_semantics=("parallel", "parallel"),
            vmem_limit_bytes=_VMEM_LIMIT,
        ),
    )(x_nchw.astype(jnp.float32), ah, awt)


# ----------------------------------------------------------------------------
# BN folding and parameter init
# ----------------------------------------------------------------------------
def fold_bn(w, b, bn, eps=1e-5):
    gamma, beta, mean, var = bn
    scale = gamma / jnp.sqrt(var + eps)
    return w * scale, (b - mean) * scale + beta


def init_conv1(key, cin, cout, bias=True):
    k1, k2 = jax.random.split(key)
    w = jax.random.normal(k1, (cin, cout), jnp.float32) / np.sqrt(cin)
    b = (0.01 * jax.random.normal(k2, (cout,), jnp.float32)
         if bias else jnp.zeros((cout,), jnp.float32))
    return w, b


def init_conv3(key, cin, cout):
    k1, k2 = jax.random.split(key)
    w = jax.random.normal(k1, (3, 3, cin, cout), jnp.float32) / np.sqrt(9 * cin)
    b = 0.01 * jax.random.normal(k2, (cout,), jnp.float32)
    return w, b


def init_bn(key, c):
    k1, k2, k3, k4 = jax.random.split(key, 4)
    gamma = 1.0 + 0.1 * jax.random.normal(k1, (c,), jnp.float32)
    beta = 0.1 * jax.random.normal(k2, (c,), jnp.float32)
    mean = 0.1 * jax.random.normal(k3, (c,), jnp.float32)
    var = 1.0 + 0.1 * jax.random.uniform(k4, (c,), jnp.float32)
    return gamma, beta, mean, var


def init_params(key, c_in, c_mid, c_key, n_cls):
    keys = iter(jax.random.split(key, 48))
    p = {}

    # conv3x3_ocr: conv3x3(bias) + BN + ReLU  (BN folded) -> (9, Cin, Cmid)
    w, b = init_conv3(next(keys), c_in, c_mid)
    wf, bf = fold_bn(w, b, init_bn(next(keys), c_mid))
    p["ocr3_w"] = wf.reshape(9, c_in, c_mid)
    p["ocr3_b"] = bf

    # aux_head: conv1x1(bias)+BN+ReLU, conv1x1(bias)
    w, b = init_conv1(next(keys), c_in, c_in)
    p["aux1_w"], p["aux1_b"] = fold_bn(w, b, init_bn(next(keys), c_in))
    p["aux2_w"], p["aux2_b"] = init_conv1(next(keys), c_in, n_cls)

    def conv_bn(cin, cout):
        w_, b_ = init_conv1(next(keys), cin, cout, bias=False)
        return fold_bn(w_, b_, init_bn(next(keys), cout))

    # _ObjectAttentionBlock transforms (all conv1x1 no bias + BN + ReLU)
    p["fpix1_w"], p["fpix1_b"] = conv_bn(c_mid, c_key)
    w2, b2 = conv_bn(c_key, c_key)
    scale = float(c_key) ** (-0.5)           # attention scale folded (ReLU pos-homog.)
    p["fpix2_w"], p["fpix2_b"] = w2 * scale, b2 * scale
    p["fobj1_w"], p["fobj1_b"] = conv_bn(c_mid, c_key)
    p["fobj2_w"], p["fobj2_b"] = conv_bn(c_key, c_key)
    p["fdown_w"], p["fdown_b"] = conv_bn(c_mid, c_key)
    p["fup_w"], p["fup_b"] = conv_bn(c_key, c_mid)

    # SpatialOCR conv_bn_dropout: conv1x1(2*mid -> mid, no bias)+BN+ReLU
    p["fuse_w"], p["fuse_b"] = conv_bn(2 * c_mid, c_mid)

    # cls_head: conv1x1(bias)
    p["cls_w"], p["cls_b"] = init_conv1(next(keys), c_mid, n_cls)
    return p


# ----------------------------------------------------------------------------
# OCR forward (eval mode)
# ----------------------------------------------------------------------------
@functools.partial(jax.jit, static_argnames=("out_size",))
def ocr_forward(p, feats_nchw, *, out_size):
    N, c_in, H, W = feats_nchw.shape
    HW = H * W
    n_cls = p["cls_b"].shape[0]
    c_mid = p["fuse_b"].shape[0]
    c_key = p["fpix1_b"].shape[0]

    x_nhwc = jnp.transpose(feats_nchw, (0, 2, 3, 1))               # (N,H,W,Cin)
    x_flat = x_nhwc.reshape(N * HW, c_in)

    # --- aux_head ---
    a = matmul_bias(x_flat, p["aux1_w"], p["aux1_b"], relu=True)
    out_aux = matmul_bias(a, p["aux2_w"], p["aux2_b"], relu=False)  # (N*HW, n_cls)

    # --- conv3x3_ocr (no im2col: 9 shifted accumulating matmuls in-kernel) ---
    feats_mid = conv3x3_bn_relu(x_nhwc, p["ocr3_w"], p["ocr3_b"])   # (N, HW, Cmid)
    feats_mid_flat = feats_mid.reshape(N * HW, c_mid)

    # --- ocr_gather_head (SpatialGather_Module, scale=1) ---
    probs = jnp.transpose(out_aux.reshape(N, HW, n_cls), (0, 2, 1))  # (N,Kcls,HW)
    proxy = spatial_gather(probs, feats_mid)                         # (N,Kcls,Cmid)

    # --- ocr_distri_head: ObjectAttentionBlock2D (scale folded into fpix2) ---
    q = matmul_bias(feats_mid_flat, p["fpix1_w"], p["fpix1_b"], relu=True)
    q = matmul_bias(q, p["fpix2_w"], p["fpix2_b"], relu=True)        # (N*HW, Ck)
    query = q.reshape(N, HW, c_key)

    key_flat, val_flat = proxy_key_value(proxy.reshape(N * n_cls, c_mid), p)
    key = jnp.transpose(key_flat.reshape(N, n_cls, c_key), (0, 2, 1))  # (N,Ck,Kcls)
    value = val_flat.reshape(N, n_cls, c_key)                          # (N,Kcls,Ck)

    ctx = object_attention(query, key, value)                          # (N,HW,Ck)
    ctx = matmul_bias(ctx.reshape(N * HW, c_key), p["fup_w"], p["fup_b"], relu=True)

    # cat([context, feats]) -> conv1x1+BN+ReLU (concat-free; Dropout2d identity in eval)
    feats_out = matmul2_bias(ctx, p["fuse_w"][:c_mid],
                             feats_mid_flat, p["fuse_w"][c_mid:],
                             p["fuse_b"], relu=True)

    # --- cls_head (kernel writes 128-lane-dense logits; slice happens inside wrapper) ---
    out = matmul_bias(feats_out, p["cls_w"], p["cls_b"], relu=False)   # (N*HW, n_cls)

    # --- upsample bilinear (align_corners=True) directly to NCHW ---
    logits_nchw = jnp.transpose(out.reshape(N, H, W, n_cls), (0, 3, 1, 2))
    blob_pred = upsample_bilinear_nchw(logits_nchw, out_size[0], out_size[1])
    return blob_pred                                                    # (N,Kcls,outH,outW)

    # TODO(synk): training branch (loss + aux upsample) not implemented; eval forward only.


# ----------------------------------------------------------------------------
if __name__ == "__main__":
    # Small shapes consistent with the module (scaled-down channel widths).
    N, C_IN, H, W = 2, 32, 16, 16            # last_inp_channels = sum(inplanes)
    C_MID, C_KEY, N_CLS = 128, 128, 19       # (512 / 256 / 19 in the real model)
    OUT_H, OUT_W = 32, 32                    # input['size']

    root = jax.random.PRNGKey(0)
    k_in, k_par = jax.random.split(root)
    feats = jax.random.normal(k_in, (N, C_IN, H, W), jnp.float32)
    params = init_params(k_par, C_IN, C_MID, C_KEY, N_CLS)

    out = ocr_forward(params, feats, out_size=(OUT_H, OUT_W))
    out = jax.block_until_ready(out)

    assert out.shape == (N, N_CLS, OUT_H, OUT_W), out.shape
    assert bool(jnp.all(jnp.isfinite(out)))
    print("KERNEL_OK")
</pallas_src>

<mosaic_0001>
module attributes {stable_mosaic.version = 11 : i64} {
  func.func @_conv3x3_kernel(%arg0: i32, %arg1: memref<1x18x18x32xbf16, #tpu.memory_space<vmem>>, %arg2: memref<9x32x128xbf16, #tpu.memory_space<vmem>>, %arg3: memref<1x128xf32, #tpu.memory_space<vmem>>, %arg4: memref<1x256x128xf32, #tpu.memory_space<vmem>>) attributes {dimension_semantics = [#tpu.dimension_semantics<parallel>], iteration_bounds = array<i64: 2>, scalar_prefetch = 0 : i64, scratch_operands = 0 : i64, tpu.core_type = #tpu.core_type<tc>, window_params = [{transform_indices = @transform_0, window_bounds = array<i64: 1, 18, 18, 32>}, {pipeline_mode = #tpu.pipeline_mode<synchronous>, transform_indices = @transform_1, window_bounds = array<i64: 9, 32, 128>}, {pipeline_mode = #tpu.pipeline_mode<synchronous>, transform_indices = @transform_2, window_bounds = array<i64: 1, 128>}, {transform_indices = @transform_3, window_bounds = array<i64: 1, 256, 128>}]} {
    %c0 = arith.constant 0 : index
    %c0_0 = arith.constant 0 : index
    %c0_1 = arith.constant 0 : index
    %c0_2 = arith.constant 0 : index
    %0 = vector.load %arg1[%c0, %c0_0, %c0_1, %c0_2] : memref<1x18x18x32xbf16, #tpu.memory_space<vmem>>, vector<1x18x18x32xbf16>
    %1 = vector.shape_cast %0 : vector<1x18x18x32xbf16> to vector<18x18x32xbf16>
    %cst = arith.constant 0.000000e+00 : f32
    %2 = vector.broadcast %cst : f32 to vector<256x128xf32>
    %3 = vector.extract_strided_slice %1 {offsets = [0, 0, 0], sizes = [16, 16, 32], strides = [1, 1, 1]} : vector<18x18x32xbf16> to vector<16x16x32xbf16>
    %4 = vector.shape_cast %3 : vector<16x16x32xbf16> to vector<256x32xbf16>
    %c0_3 = arith.constant 0 : index
    %c0_4 = arith.constant 0 : index
    %c0_5 = arith.constant 0 : index
    %5 = vector.load %arg2[%c0_3, %c0_4, %c0_5] : memref<9x32x128xbf16, #tpu.memory_space<vmem>>, vector<1x32x128xbf16>
    %6 = vector.shape_cast %5 : vector<1x32x128xbf16> to vector<32x128xbf16>
    %cst_6 = arith.constant dense<0.000000e+00> : vector<256x128xf32>
    %7 = tpu.matmul %4, %6, %cst_6 {dimension_numbers = #tpu.dot_dimension_numbers<[1], [0], [0], [1], [0, 0, 1, 1], [], []>} : vector<256x32xbf16>, vector<32x128xbf16>, vector<256x128xf32> -> vector<256x128xf32>
    %8 = arith.addf %2, %7 : vector<256x128xf32>
    %9 = vector.extract_strided_slice %1 {offsets = [0, 1, 0], sizes = [16, 16, 32], strides = [1, 1, 1]} : vector<18x18x32xbf16> to vector<16x16x32xbf16>
    %10 = vector.shape_cast %9 : vector<16x16x32xbf16> to vector<256x32xbf16>
    %c1 = arith.constant 1 : index
    %c0_7 = arith.constant 0 : index
    %c0_8 = arith.constant 0 : index
    %11 = vector.load %arg2[%c1, %c0_7, %c0_8] : memref<9x32x128xbf16, #tpu.memory_space<vmem>>, vector<1x32x128xbf16>
    %12 = vector.shape_cast %11 : vector<1x32x128xbf16> to vector<32x128xbf16>
    %cst_9 = arith.constant dense<0.000000e+00> : vector<256x128xf32>
    %13 = tpu.matmul %10, %12, %cst_9 {dimension_numbers = #tpu.dot_dimension_numbers<[1], [0], [0], [1], [0, 0, 1, 1], [], []>} : vector<256x32xbf16>, vector<32x128xbf16>, vector<256x128xf32> -> vector<256x128xf32>
    %14 = arith.addf %8, %13 : vector<256x128xf32>
    %15 = vector.extract_strided_slice %1 {offsets = [0, 2, 0], sizes = [16, 16, 32], strides = [1, 1, 1]} : vector<18x18x32xbf16> to vector<16x16x32xbf16>
    %16 = vector.shape_cast %15 : vector<16x16x32xbf16> to vector<256x32xbf16>
    %c2 = arith.constant 2 : index
    %c0_10 = arith.constant 0 : index
    %c0_11 = arith.constant 0 : index
    %17 = vector.load %arg2[%c2, %c0_10, %c0_11] : memref<9x32x128xbf16, #tpu.memory_space<vmem>>, vector<1x32x128xbf16>
    %18 = vector.shape_cast %17 : vector<1x32x128xbf16> to vector<32x128xbf16>
    %cst_12 = arith.constant dense<0.000000e+00> : vector<256x128xf32>
    %19 = tpu.matmul %16, %18, %cst_12 {dimension_numbers = #tpu.dot_dimension_numbers<[1], [0], [0], [1], [0, 0, 1, 1], [], []>} : vector<256x32xbf16>, vector<32x128xbf16>, vector<256x128xf32> -> vector<256x128xf32>
    %20 = arith.addf %14, %19 : vector<256x128xf32>
    %21 = vector.extract_strided_slice %1 {offsets = [1, 0, 0], sizes = [16, 16, 32], strides = [1, 1, 1]} : vector<18x18x32xbf16> to vector<16x16x32xbf16>
    %22 = vector.shape_cast %21 : vector<16x16x32xbf16> to vector<256x32xbf16>
    %c3 = arith.constant 3 : index
    %c0_13 = arith.constant 0 : index
    %c0_14 = arith.constant 0 : index
    %23 = vector.load %arg2[%c3, %c0_13, %c0_14] : memref<9x32x128xbf16, #tpu.memory_space<vmem>>, vector<1x32x128xbf16>
    %24 = vector.shape_cast %23 : vector<1x32x128xbf16> to vector<32x128xbf16>
    %cst_15 = arith.constant dense<0.000000e+00> : vector<256x128xf32>
    %25 = tpu.matmul %22, %24, %cst_15 {dimension_numbers = #tpu.dot_dimension_numbers<[1], [0], [0], [1], [0, 0, 1, 1], [], []>} : vector<256x32xbf16>, vector<32x128xbf16>, vector<256x128xf32> -> vector<256x128xf32>
    %26 = arith.addf %20, %25 : vector<256x128xf32>
    %27 = vector.extract_strided_slice %1 {offsets = [1, 1, 0], sizes = [16, 16, 32], strides = [1, 1, 1]} : vector<18x18x32xbf16> to vector<16x16x32xbf16>
    %28 = vector.shape_cast %27 : vector<16x16x32xbf16> to vector<256x32xbf16>
    %c4 = arith.constant 4 : index
    %c0_16 = arith.constant 0 : index
    %c0_17 = arith.constant 0 : index
    %29 = vector.load %arg2[%c4, %c0_16, %c0_17] : memref<9x32x128xbf16, #tpu.memory_space<vmem>>, vector<1x32x128xbf16>
    %30 = vector.shape_cast %29 : vector<1x32x128xbf16> to vector<32x128xbf16>
    %cst_18 = arith.constant dense<0.000000e+00> : vector<256x128xf32>
    %31 = tpu.matmul %28, %30, %cst_18 {dimension_numbers = #tpu.dot_dimension_numbers<[1], [0], [0], [1], [0, 0, 1, 1], [], []>} : vector<256x32xbf16>, vector<32x128xbf16>, vector<256x128xf32> -> vector<256x128xf32>
    %32 = arith.addf %26, %31 : vector<256x128xf32>
    %33 = vector.extract_strided_slice %1 {offsets = [1, 2, 0], sizes = [16, 16, 32], strides = [1, 1, 1]} : vector<18x18x32xbf16> to vector<16x16x32xbf16>
    %34 = vector.shape_cast %33 : vector<16x16x32xbf16> to vector<256x32xbf16>
    %c5 = arith.constant 5 : index
    %c0_19 = arith.constant 0 : index
    %c0_20 = arith.constant 0 : index
    %35 = vector.load %arg2[%c5, %c0_19, %c0_20] : memref<9x32x128xbf16, #tpu.memory_space<vmem>>, vector<1x32x128xbf16>
    %36 = vector.shape_cast %35 : vector<1x32x128xbf16> to vector<32x128xbf16>
    %cst_21 = arith.constant dense<0.000000e+00> : vector<256x128xf32>
    %37 = tpu.matmul %34, %36, %cst_21 {dimension_numbers = #tpu.dot_dimension_numbers<[1], [0], [0], [1], [0, 0, 1, 1], [], []>} : vector<256x32xbf16>, vector<32x128xbf16>, vector<256x128xf32> -> vector<256x128xf32>
    %38 = arith.addf %32, %37 : vector<256x128xf32>
    %39 = vector.extract_strided_slice %1 {offsets = [2, 0, 0], sizes = [16, 16, 32], strides = [1, 1, 1]} : vector<18x18x32xbf16> to vector<16x16x32xbf16>
    %40 = vector.shape_cast %39 : vector<16x16x32xbf16> to vector<256x32xbf16>
    %c6 = arith.constant 6 : index
    %c0_22 = arith.constant 0 : index
    %c0_23 = arith.constant 0 : index
    %41 = vector.load %arg2[%c6, %c0_22, %c0_23] : memref<9x32x128xbf16, #tpu.memory_space<vmem>>, vector<1x32x128xbf16>
    %42 = vector.shape_cast %41 : vector<1x32x128xbf16> to vector<32x128xbf16>
    %cst_24 = arith.constant dense<0.000000e+00> : vector<256x128xf32>
    %43 = tpu.matmul %40, %42, %cst_24 {dimension_numbers = #tpu.dot_dimension_numbers<[1], [0], [0], [1], [0, 0, 1, 1], [], []>} : vector<256x32xbf16>, vector<32x128xbf16>, vector<256x128xf32> -> vector<256x128xf32>
    %44 = arith.addf %38, %43 : vector<256x128xf32>
    %45 = vector.extract_strided_slice %1 {offsets = [2, 1, 0], sizes = [16, 16, 32], strides = [1, 1, 1]} : vector<18x18x32xbf16> to vector<16x16x32xbf16>
    %46 = vector.shape_cast %45 : vector<16x16x32xbf16> to vector<256x32xbf16>
    %c7 = arith.constant 7 : index
    %c0_25 = arith.constant 0 : index
    %c0_26 = arith.constant 0 : index
    %47 = vector.load %arg2[%c7, %c0_25, %c0_26] : memref<9x32x128xbf16, #tpu.memory_space<vmem>>, vector<1x32x128xbf16>
    %48 = vector.shape_cast %47 : vector<1x32x128xbf16> to vector<32x128xbf16>
    %cst_27 = arith.constant dense<0.000000e+00> : vector<256x128xf32>
    %49 = tpu.matmul %46, %48, %cst_27 {dimension_numbers = #tpu.dot_dimension_numbers<[1], [0], [0], [1], [0, 0, 1, 1], [], []>} : vector<256x32xbf16>, vector<32x128xbf16>, vector<256x128xf32> -> vector<256x128xf32>
    %50 = arith.addf %44, %49 : vector<256x128xf32>
    %51 = vector.extract_strided_slice %1 {offsets = [2, 2, 0], sizes = [16, 16, 32], strides = [1, 1, 1]} : vector<18x18x32xbf16> to vector<16x16x32xbf16>
    %52 = vector.shape_cast %51 : vector<16x16x32xbf16> to vector<256x32xbf16>
    %c8 = arith.constant 8 : index
    %c0_28 = arith.constant 0 : index
    %c0_29 = arith.constant 0 : index
    %53 = vector.load %arg2[%c8, %c0_28, %c0_29] : memref<9x32x128xbf16, #tpu.memory_space<vmem>>, vector<1x32x128xbf16>
    %54 = vector.shape_cast %53 : vector<1x32x128xbf16> to vector<32x128xbf16>
    %cst_30 = arith.constant dense<0.000000e+00> : vector<256x128xf32>
    %55 = tpu.matmul %52, %54, %cst_30 {dimension_numbers = #tpu.dot_dimension_numbers<[1], [0], [0], [1], [0, 0, 1, 1], [], []>} : vector<256x32xbf16>, vector<32x128xbf16>, vector<256x128xf32> -> vector<256x128xf32>
    %56 = arith.addf %50, %55 : vector<256x128xf32>
    %c0_31 = arith.constant 0 : index
    %c0_32 = arith.constant 0 : index
    %57 = vector.load %arg3[%c0_31, %c0_32] : memref<1x128xf32, #tpu.memory_space<vmem>>, vector<1x128xf32>
    %58 = vector.broadcast %57 : vector<1x128xf32> to vector<256x128xf32>
    %59 = arith.addf %56, %58 : vector<256x128xf32>
    %cst_33 = arith.constant 0.000000e+00 : f32
    %60 = vector.broadcast %cst_33 : f32 to vector<256x128xf32>
    %61 = arith.maximumf %59, %60 : vector<256x128xf32>
    %c0_34 = arith.constant 0 : index
    %c0_35 = arith.constant 0 : index
    %c0_36 = arith.constant 0 : index
    %62 = vector.load %arg4[%c0_34, %c0_35, %c0_36] : memref<1x256x128xf32, #tpu.memory_space<vmem>>, vector<1x256x128xf32>
    %63 = vector.shape_cast %62 : vector<1x256x128xf32> to vector<256x128xf32>
    %64 = vector.shape_cast %61 : vector<256x128xf32> to vector<1x256x128xf32>
    tpu.vector_store %arg4[%c0_34, %c0_35, %c0_36], %64 {strides = array<i32>} : memref<1x256x128xf32, #tpu.memory_space<vmem>>, vector<1x256x128xf32>,
    return
  }
  func.func @transform_0(%arg0: i32) -> (i32, i32, i32, i32) {
    %c0_i32 = arith.constant 0 : i32
    %c0_i32_0 = arith.constant 0 : i32
    %c0_i32_1 = arith.constant 0 : i32
    %c0_i32_2 = arith.constant 0 : i32
    return %arg0, %c0_i32, %c0_i32_0, %c0_i32_1 : i32, i32, i32, i32
  }
  func.func @transform_1(%arg0: i32) -> (i32, i32, i32) {
    %c0_i32 = arith.constant 0 : i32
    %c0_i32_0 = arith.constant 0 : i32
    %c0_i32_1 = arith.constant 0 : i32
    %c0_i32_2 = arith.constant 0 : i32
    return %c0_i32, %c0_i32_0, %c0_i32_1 : i32, i32, i32
  }
  func.func @transform_2(%arg0: i32) -> (i32, i32) {
    %c0_i32 = arith.constant 0 : i32
    %c0_i32_0 = arith.constant 0 : i32
    %c0_i32_1 = arith.constant 0 : i32
    return %c0_i32, %c0_i32_0 : i32, i32
  }
  func.func @transform_3(%arg0: i32) -> (i32, i32, i32) {
    %c0_i32 = arith.constant 0 : i32
    %c0_i32_0 = arith.constant 0 : i32
    %c0_i32_1 = arith.constant 0 : i32
    return %arg0, %c0_i32, %c0_i32_0 : i32, i32, i32
  }
}

module attributes {stable_mosaic.version = 11 : i64} {
  func.func @_mm_bias_kernel(%arg0: i32, %arg1: i32, %arg2: i32, %arg3: memref<256x32xbf16, #tpu.memory_space<vmem>>, %arg4: memref<32x128xbf16, #tpu.memory_space<vmem>>, %arg5: memref<1x128xf32, #tpu.memory_space<vmem>>, %arg6: memref<256x128xf32, #tpu.memory_space<vmem>>, %arg7: memref<256x128xf32, #tpu.memory_space<vmem>>) attributes {dimension_semantics = [#tpu.dimension_semantics<parallel>, #tpu.dimension_semantics<parallel>, #tpu.dimension_semantics<arbitrary>], iteration_bounds = array<i64: 2, 1, 1>, scalar_prefetch = 0 : i64, scratch_operands = 1 : i64, tpu.core_type = #tpu.core_type<tc>, window_params = [{transform_indices = @transform_0, window_bounds = array<i64: 256, 32>}, {transform_indices = @transform_1, window_bounds = array<i64: 32, 128>}, {transform_indices = @transform_2, window_bounds = array<i64: 1, 128>}, {transform_indices = @transform_3, window_bounds = array<i64: 256, 128>}]} {
    %c0 = arith.constant 0 : index
    %c0_0 = arith.constant 0 : index
    %0 = vector.load %arg3[%c0, %c0_0] : memref<256x32xbf16, #tpu.memory_space<vmem>>, vector<256x32xbf16>
    %c0_1 = arith.constant 0 : index
    %c0_2 = arith.constant 0 : index
    %1 = vector.load %arg4[%c0_1, %c0_2] : memref<32x128xbf16, #tpu.memory_space<vmem>>, vector<32x128xbf16>
    %cst = arith.constant dense<0.000000e+00> : vector<256x128xf32>
    %2 = tpu.matmul %0, %1, %cst {dimension_numbers = #tpu.dot_dimension_numbers<[1], [0], [0], [1], [0, 0, 1, 1], [], []>} : vector<256x32xbf16>, vector<32x128xbf16>, vector<256x128xf32> -> vector<256x128xf32>
    %c0_3 = arith.constant 0 : index
    %c0_4 = arith.constant 0 : index
    %3 = vector.load %arg5[%c0_3, %c0_4] : memref<1x128xf32, #tpu.memory_space<vmem>>, vector<1x128xf32>
    %4 = vector.broadcast %3 : vector<1x128xf32> to vector<256x128xf32>
    %5 = arith.addf %2, %4 : vector<256x128xf32>
    %cst_5 = arith.constant 0.000000e+00 : f32
    %6 = vector.broadcast %cst_5 : f32 to vector<256x128xf32>
    %7 = arith.maximumf %5, %6 : vector<256x128xf32>
    %c0_6 = arith.constant 0 : index
    %c0_7 = arith.constant 0 : index
    %8 = vector.load %arg6[%c0_6, %c0_7] : memref<256x128xf32, #tpu.memory_space<vmem>>, vector<256x128xf32>
    tpu.vector_store %arg6[%c0_6, %c0_7], %7 {strides = array<i32>} : memref<256x128xf32, #tpu.memory_space<vmem>>, vector<256x128xf32>,
    return
  }
  func.func @transform_0(%arg0: i32, %arg1: i32, %arg2: i32) -> (i32, i32) {
    %c0_i32 = arith.constant 0 : i32
    return %arg0, %arg2 : i32, i32
  }
  func.func @transform_1(%arg0: i32, %arg1: i32, %arg2: i32) -> (i32, i32) {
    %c0_i32 = arith.constant 0 : i32
    return %arg2, %arg1 : i32, i32
  }
  func.func @transform_2(%arg0: i32, %arg1: i32, %arg2: i32) -> (i32, i32) {
    %c0_i32 = arith.constant 0 : i32
    %c0_i32_0 = arith.constant 0 : i32
    return %c0_i32, %arg1 : i32, i32
  }
  func.func @transform_3(%arg0: i32, %arg1: i32, %arg2: i32) -> (i32, i32) {
    %c0_i32 = arith.constant 0 : i32
    return %arg0, %arg1 : i32, i32
  }
}

module attributes {stable_mosaic.version = 11 : i64} {
  func.func @_mm_bias_kernel(%arg0: i32, %arg1: i32, %arg2: i32, %arg3: memref<256x32xbf16, #tpu.memory_space<vmem>>, %arg4: memref<32x128xbf16, #tpu.memory_space<vmem>>, %arg5: memref<1x128xf32, #tpu.memory_space<vmem>>, %arg6: memref<256x128xf32, #tpu.memory_space<vmem>>, %arg7: memref<256x128xf32, #tpu.memory_space<vmem>>) attributes {dimension_semantics = [#tpu.dimension_semantics<parallel>, #tpu.dimension_semantics<parallel>, #tpu.dimension_semantics<arbitrary>], iteration_bounds = array<i64: 2, 1, 1>, scalar_prefetch = 0 : i64, scratch_operands = 1 : i64, tpu.core_type = #tpu.core_type<tc>, window_params = [{transform_indices = @transform_0, window_bounds = array<i64: 256, 32>}, {transform_indices = @transform_1, window_bounds = array<i64: 32, 128>}, {transform_indices = @transform_2, window_bounds = array<i64: 1, 128>}, {transform_indices = @transform_3, window_bounds = array<i64: 256, 128>}]} {
    %c0 = arith.constant 0 : index
    %c0_0 = arith.constant 0 : index
    %0 = vector.load %arg3[%c0, %c0_0] : memref<256x32xbf16, #tpu.memory_space<vmem>>, vector<256x32xbf16>
    %c0_1 = arith.constant 0 : index
    %c0_2 = arith.constant 0 : index
    %1 = vector.load %arg4[%c0_1, %c0_2] : memref<32x128xbf16, #tpu.memory_space<vmem>>, vector<32x128xbf16>
    %cst = arith.constant dense<0.000000e+00> : vector<256x128xf32>
    %2 = tpu.matmul %0, %1, %cst {dimension_numbers = #tpu.dot_dimension_numbers<[1], [0], [0], [1], [0, 0, 1, 1], [], []>} : vector<256x32xbf16>, vector<32x128xbf16>, vector<256x128xf32> -> vector<256x128xf32>
    %c0_3 = arith.constant 0 : index
    %c0_4 = arith.constant 0 : index
    %3 = vector.load %arg5[%c0_3, %c0_4] : memref<1x128xf32, #tpu.memory_space<vmem>>, vector<1x128xf32>
    %4 = vector.broadcast %3 : vector<1x128xf32> to vector<256x128xf32>
    %5 = arith.addf %2, %4 : vector<256x128xf32>
    %c0_5 = arith.constant 0 : index
    %c0_6 = arith.constant 0 : index
    %6 = vector.load %arg6[%c0_5, %c0_6] : memref<256x128xf32, #tpu.memory_space<vmem>>, vector<256x128xf32>
    tpu.vector_store %arg6[%c0_5, %c0_6], %5 {strides = array<i32>} : memref<256x128xf32, #tpu.memory_space<vmem>>, vector<256x128xf32>,
    return
  }
  func.func @transform_0(%arg0: i32, %arg1: i32, %arg2: i32) -> (i32, i32) {
    %c0_i32 = arith.constant 0 : i32
    return %arg0, %arg2 : i32, i32
  }
  func.func @transform_1(%arg0: i32, %arg1: i32, %arg2: i32) -> (i32, i32) {
    %c0_i32 = arith.constant 0 : i32
    return %arg2, %arg1 : i32, i32
  }
  func.func @transform_2(%arg0: i32, %arg1: i32, %arg2: i32) -> (i32, i32) {
    %c0_i32 = arith.constant 0 : i32
    %c0_i32_0 = arith.constant 0 : i32
    return %c0_i32, %arg1 : i32, i32
  }
  func.func @transform_3(%arg0: i32, %arg1: i32, %arg2: i32) -> (i32, i32) {
    %c0_i32 = arith.constant 0 : i32
    return %arg0, %arg1 : i32, i32
  }
}

module attributes {stable_mosaic.version = 11 : i64} {
  func.func @_spatial_gather_kernel(%arg0: i32, %arg1: i32, %arg2: memref<1x19x256xf32, #tpu.memory_space<vmem>>, %arg3: memref<1x256x128xbf16, #tpu.memory_space<vmem>>, %arg4: memref<1x19x128xf32, #tpu.memory_space<vmem>>, %arg5: memref<19x1xf32, #tpu.memory_space<vmem>>, %arg6: memref<19x1xf32, #tpu.memory_space<vmem>>, %arg7: memref<19x128xf32, #tpu.memory_space<vmem>>) attributes {dimension_semantics = [#tpu.dimension_semantics<parallel>, #tpu.dimension_semantics<arbitrary>], iteration_bounds = array<i64: 2, 1>, scalar_prefetch = 0 : i64, scratch_operands = 3 : i64, tpu.core_type = #tpu.core_type<tc>, window_params = [{transform_indices = @transform_0, window_bounds = array<i64: 1, 19, 256>}, {transform_indices = @transform_1, window_bounds = array<i64: 1, 256, 128>}, {transform_indices = @transform_2, window_bounds = array<i64: 1, 19, 128>}]} {
    %c0_i32 = arith.constant 0 : i32
    %0 = arith.cmpi eq, %arg1, %c0_i32 : i32
    %1 = arith.extui %0 : i1 to i32
    %c0_i32_0 = arith.constant 0 : i32
    %2 = arith.cmpi ne, %1, %c0_i32_0 : i32
    scf.if %2 {
      %cst_22 = arith.constant -1.000000e+30 : f32
      %33 = vector.broadcast %cst_22 : f32 to vector<19x1xf32>
      %c0_23 = arith.constant 0 : index
      %c0_24 = arith.constant 0 : index
      %34 = vector.load %arg5[%c0_23, %c0_24] : memref<19x1xf32, #tpu.memory_space<vmem>>, vector<19x1xf32>
      tpu.vector_store %arg5[%c0_23, %c0_24], %33 {strides = array<i32>} : memref<19x1xf32, #tpu.memory_space<vmem>>, vector<19x1xf32>,
      %cst_25 = arith.constant 0.000000e+00 : f32
      %35 = vector.broadcast %cst_25 : f32 to vector<19x1xf32>
      %c0_26 = arith.constant 0 : index
      %c0_27 = arith.constant 0 : index
      %36 = vector.load %arg6[%c0_26, %c0_27] : memref<19x1xf32, #tpu.memory_space<vmem>>, vector<19x1xf32>
      tpu.vector_store %arg6[%c0_26, %c0_27], %35 {strides = array<i32>} : memref<19x1xf32, #tpu.memory_space<vmem>>, vector<19x1xf32>,
      %cst_28 = arith.constant 0.000000e+00 : f32
      %37 = vector.broadcast %cst_28 : f32 to vector<19x128xf32>
      %c0_29 = arith.constant 0 : index
      %c0_30 = arith.constant 0 : index
      %38 = vector.load %arg7[%c0_29, %c0_30] : memref<19x128xf32, #tpu.memory_space<vmem>>, vector<19x128xf32>
      tpu.vector_store %arg7[%c0_29, %c0_30], %37 {strides = array<i32>} : memref<19x128xf32, #tpu.memory_space<vmem>>, vector<19x128xf32>,
    } else {
    }
    %c0 = arith.constant 0 : index
    %c0_1 = arith.constant 0 : index
    %c0_2 = arith.constant 0 : index
    %3 = vector.load %arg2[%c0, %c0_1, %c0_2] : memref<1x19x256xf32, #tpu.memory_space<vmem>>, vector<1x19x256xf32>
    %4 = vector.shape_cast %3 : vector<1x19x256xf32> to vector<19x256xf32>
    %c0_3 = arith.constant 0 : index
    %c0_4 = arith.constant 0 : index
    %5 = vector.load %arg5[%c0_3, %c0_4] : memref<19x1xf32, #tpu.memory_space<vmem>>, vector<19x1xf32>
    %cst = arith.constant dense<0xFF800000> : vector<19xf32>
    %6 = vector.multi_reduction <maximumf>, %4, %cst [1] : vector<19x256xf32> to vector<19xf32>
    %7 = vector.shape_cast %6 : vector<19xf32> to vector<19x1xf32>
    %8 = arith.maximumf %5, %7 : vector<19x1xf32>
    %9 = arith.subf %5, %8 : vector<19x1xf32>
    %10 = math.exp %9 : vector<19x1xf32>
    %11 = vector.broadcast %8 : vector<19x1xf32> to vector<19x256xf32>
    %12 = arith.subf %4, %11 : vector<19x256xf32>
    %13 = math.exp %12 : vector<19x256xf32>
    %c0_5 = arith.constant 0 : index
    %c0_6 = arith.constant 0 : index
    %14 = vector.load %arg6[%c0_5, %c0_6] : memref<19x1xf32, #tpu.memory_space<vmem>>, vector<19x1xf32>
    %15 = arith.mulf %10, %14 : vector<19x1xf32>
    %cst_7 = arith.constant dense<0.000000e+00> : vector<19xf32>
    %16 = vector.multi_reduction <add>, %13, %cst_7 [1] : vector<19x256xf32> to vector<19xf32>
    %17 = vector.shape_cast %16 : vector<19xf32> to vector<19x1xf32>
    %18 = arith.addf %15, %17 : vector<19x1xf32>
    %c0_8 = arith.constant 0 : index
    %c0_9 = arith.constant 0 : index
    %19 = vector.load %arg6[%c0_8, %c0_9] : memref<19x1xf32, #tpu.memory_space<vmem>>, vector<19x1xf32>
    tpu.vector_store %arg6[%c0_8, %c0_9], %18 {strides = array<i32>} : memref<19x1xf32, #tpu.memory_space<vmem>>, vector<19x1xf32>,
    %c0_10 = arith.constant 0 : index
    %c0_11 = arith.constant 0 : index
    %20 = vector.load %arg7[%c0_10, %c0_11] : memref<19x128xf32, #tpu.memory_space<vmem>>, vector<19x128xf32>
    %21 = vector.broadcast %10 : vector<19x1xf32> to vector<19x128xf32>
    %22 = arith.mulf %21, %20 : vector<19x128xf32>
    %23 = arith.truncf %13 : vector<19x256xf32> to vector<19x256xbf16>
    %c0_12 = arith.constant 0 : index
    %c0_13 = arith.constant 0 : index
    %c0_14 = arith.constant 0 : index
    %24 = vector.load %arg3[%c0_12, %c0_13, %c0_14] : memref<1x256x128xbf16, #tpu.memory_space<vmem>>, vector<1x256x128xbf16>
    %25 = vector.shape_cast %24 : vector<1x256x128xbf16> to vector<256x128xbf16>
    %cst_15 = arith.constant dense<0.000000e+00> : vector<19x128xf32>
    %26 = tpu.matmul %23, %25, %cst_15 {dimension_numbers = #tpu.dot_dimension_numbers<[1], [0], [0], [1], [0, 0, 1, 1], [], []>} : vector<19x256xbf16>, vector<256x128xbf16>, vector<19x128xf32> -> vector<19x128xf32>
    %27 = arith.addf %22, %26 : vector<19x128xf32>
    %c0_16 = arith.constant 0 : index
    %c0_17 = arith.constant 0 : index
    %28 = vector.load %arg7[%c0_16, %c0_17] : memref<19x128xf32, #tpu.memory_space<vmem>>, vector<19x128xf32>
    tpu.vector_store %arg7[%c0_16, %c0_17], %27 {strides = array<i32>} : memref<19x128xf32, #tpu.memory_space<vmem>>, vector<19x128xf32>,
    %c0_18 = arith.constant 0 : index
    %c0_19 = arith.constant 0 : index
    %29 = vector.load %arg5[%c0_18, %c0_19] : memref<19x1xf32, #tpu.memory_space<vmem>>, vector<19x1xf32>
    tpu.vector_store %arg5[%c0_18, %c0_19], %8 {strides = array<i32>} : memref<19x1xf32, #tpu.memory_space<vmem>>, vector<19x1xf32>,
    %c0_i32_20 = arith.constant 0 : i32
    %30 = arith.cmpi eq, %arg1, %c0_i32_20 : i32
    %31 = arith.extui %30 : i1 to i32
    %c0_i32_21 = arith.constant 0 : i32
    %32 = arith.cmpi ne, %31, %c0_i32_21 : i32
    scf.if %32 {
      %c0_22 = arith.constant 0 : index
      %c0_23 = arith.constant 0 : index
      %33 = vector.load %arg7[%c0_22, %c0_23] : memref<19x128xf32, #tpu.memory_space<vmem>>, vector<19x128xf32>
      %c0_24 = arith.constant 0 : index
      %c0_25 = arith.constant 0 : index
      %34 = vector.load %arg6[%c0_24, %c0_25] : memref<19x1xf32, #tpu.memory_space<vmem>>, vector<19x1xf32>
      %35 = tpu.reciprocal %34 {approx = true} : vector<19x1xf32> -> vector<19x1xf32>
      %36 = vector.broadcast %35 : vector<19x1xf32> to vector<19x128xf32>
      %37 = arith.mulf %33, %36 : vector<19x128xf32>
      %c0_26 = arith.constant 0 : index
      %c0_27 = arith.constant 0 : index
      %c0_28 = arith.constant 0 : index
      %38 = vector.load %arg4[%c0_26, %c0_27, %c0_28] : memref<1x19x128xf32, #tpu.memory_space<vmem>>, vector<1x19x128xf32>
      %39 = vector.shape_cast %38 : vector<1x19x128xf32> to vector<19x128xf32>
      %40 = vector.shape_cast %37 : vector<19x128xf32> to vector<1x19x128xf32>
      tpu.vector_store %arg4[%c0_26, %c0_27, %c0_28], %40 {strides = array<i32>} : memref<1x19x128xf32, #tpu.memory_space<vmem>>, vector<1x19x128xf32>,
    } else {
    }
    return
  }
  func.func @transform_0(%arg0: i32, %arg1: i32) -> (i32, i32, i32) {
    %c0_i32 = arith.constant 0 : i32
    %c0_i32_0 = arith.constant 0 : i32
    return %arg0, %c0_i32, %arg1 : i32, i32, i32
  }
  func.func @transform_1(%arg0: i32, %arg1: i32) -> (i32, i32, i32) {
    %c0_i32 = arith.constant 0 : i32
    %c0_i32_0 = arith.constant 0 : i32
    return %arg0, %arg1, %c0_i32 : i32, i32, i32
  }
  func.func @transform_2(%arg0: i32, %arg1: i32) -> (i32, i32, i32) {
    %c0_i32 = arith.constant 0 : i32
    %c0_i32_0 = arith.constant 0 : i32
    %c0_i32_1 = arith.constant 0 : i32
    return %arg0, %c0_i32, %c0_i32_0 : i32, i32, i32
  }
}

module attributes {stable_mosaic.version = 11 : i64} {
  func.func @_proxy_kv_kernel(%arg0: memref<38x128xbf16, #tpu.memory_space<vmem>>, %arg1: memref<128x128xbf16, #tpu.memory_space<vmem>>, %arg2: memref<1x128xf32, #tpu.memory_space<vmem>>, %arg3: memref<128x128xbf16, #tpu.memory_space<vmem>>, %arg4: memref<1x128xf32, #tpu.memory_space<vmem>>, %arg5: memref<128x128xbf16, #tpu.memory_space<vmem>>, %arg6: memref<1x128xf32, #tpu.memory_space<vmem>>, %arg7: memref<38x128xf32, #tpu.memory_space<vmem>>, %arg8: memref<38x128xf32, #tpu.memory_space<vmem>>) attributes {dimension_semantics = [], scalar_prefetch = 0 : i64, scratch_operands = 0 : i64, tpu.core_type = #tpu.core_type<tc>} {
    %c0 = arith.constant 0 : index
    %c0_0 = arith.constant 0 : index
    %0 = vector.load %arg0[%c0, %c0_0] : memref<38x128xbf16, #tpu.memory_space<vmem>>, vector<38x128xbf16>
    %c0_1 = arith.constant 0 : index
    %c0_2 = arith.constant 0 : index
    %1 = vector.load %arg1[%c0_1, %c0_2] : memref<128x128xbf16, #tpu.memory_space<vmem>>, vector<128x128xbf16>
    %cst = arith.constant dense<0.000000e+00> : vector<38x128xf32>
    %2 = tpu.matmul %0, %1, %cst {dimension_numbers = #tpu.dot_dimension_numbers<[1], [0], [0], [1], [0, 0, 1, 1], [], []>} : vector<38x128xbf16>, vector<128x128xbf16>, vector<38x128xf32> -> vector<38x128xf32>
    %c0_3 = arith.constant 0 : index
    %c0_4 = arith.constant 0 : index
    %3 = vector.load %arg2[%c0_3, %c0_4] : memref<1x128xf32, #tpu.memory_space<vmem>>, vector<1x128xf32>
    %4 = vector.broadcast %3 : vector<1x128xf32> to vector<38x128xf32>
    %5 = arith.addf %2, %4 : vector<38x128xf32>
    %cst_5 = arith.constant 0.000000e+00 : f32
    %6 = vector.broadcast %cst_5 : f32 to vector<38x128xf32>
    %7 = arith.maximumf %5, %6 : vector<38x128xf32>
    %8 = arith.truncf %7 : vector<38x128xf32> to vector<38x128xbf16>
    %c0_6 = arith.constant 0 : index
    %c0_7 = arith.constant 0 : index
    %9 = vector.load %arg3[%c0_6, %c0_7] : memref<128x128xbf16, #tpu.memory_space<vmem>>, vector<128x128xbf16>
    %cst_8 = arith.constant dense<0.000000e+00> : vector<38x128xf32>
    %10 = tpu.matmul %8, %9, %cst_8 {dimension_numbers = #tpu.dot_dimension_numbers<[1], [0], [0], [1], [0, 0, 1, 1], [], []>} : vector<38x128xbf16>, vector<128x128xbf16>, vector<38x128xf32> -> vector<38x128xf32>
    %c0_9 = arith.constant 0 : index
    %c0_10 = arith.constant 0 : index
    %11 = vector.load %arg4[%c0_9, %c0_10] : memref<1x128xf32, #tpu.memory_space<vmem>>, vector<1x128xf32>
    %12 = vector.broadcast %11 : vector<1x128xf32> to vector<38x128xf32>
    %13 = arith.addf %10, %12 : vector<38x128xf32>
    %cst_11 = arith.constant 0.000000e+00 : f32
    %14 = vector.broadcast %cst_11 : f32 to vector<38x128xf32>
    %15 = arith.maximumf %13, %14 : vector<38x128xf32>
    %c0_12 = arith.constant 0 : index
    %c0_13 = arith.constant 0 : index
    %16 = vector.load %arg7[%c0_12, %c0_13] : memref<38x128xf32, #tpu.memory_space<vmem>>, vector<38x128xf32>
    tpu.vector_store %arg7[%c0_12, %c0_13], %15 {strides = array<i32>} : memref<38x128xf32, #tpu.memory_space<vmem>>, vector<38x128xf32>,
    %c0_14 = arith.constant 0 : index
    %c0_15 = arith.constant 0 : index
    %17 = vector.load %arg5[%c0_14, %c0_15] : memref<128x128xbf16, #tpu.memory_space<vmem>>, vector<128x128xbf16>
    %cst_16 = arith.constant dense<0.000000e+00> : vector<38x128xf32>
    %18 = tpu.matmul %0, %17, %cst_16 {dimension_numbers = #tpu.dot_dimension_numbers<[1], [0], [0], [1], [0, 0, 1, 1], [], []>} : vector<38x128xbf16>, vector<128x128xbf16>, vector<38x128xf32> -> vector<38x128xf32>
    %c0_17 = arith.constant 0 : index
    %c0_18 = arith.constant 0 : index
    %19 = vector.load %arg6[%c0_17, %c0_18] : memref<1x128xf32, #tpu.memory_space<vmem>>, vector<1x128xf32>
    %20 = vector.broadcast %19 : vector<1x128xf32> to vector<38x128xf32>
    %21 = arith.addf %18, %20 : vector<38x128xf32>
    %cst_19 = arith.constant 0.000000e+00 : f32
    %22 = vector.broadcast %cst_19 : f32 to vector<38x128xf32>
    %23 = arith.maximumf %21, %22 : vector<38x128xf32>
    %c0_20 = arith.constant 0 : index
    %c0_21 = arith.constant 0 : index
    %24 = vector.load %arg8[%c0_20, %c0_21] : memref<38x128xf32, #tpu.memory_space<vmem>>, vector<38x128xf32>
    tpu.vector_store %arg8[%c0_20, %c0_21], %23 {strides = array<i32>} : memref<38x128xf32, #tpu.memory_space<vmem>>, vector<38x128xf32>,
    return
  }
}

module attributes {stable_mosaic.version = 11 : i64} {
  func.func @_mm_bias_kernel(%arg0: i32, %arg1: i32, %arg2: i32, %arg3: memref<256x128xbf16, #tpu.memory_space<vmem>>, %arg4: memref<128x128xbf16, #tpu.memory_space<vmem>>, %arg5: memref<1x128xf32, #tpu.memory_space<vmem>>, %arg6: memref<256x128xf32, #tpu.memory_space<vmem>>, %arg7: memref<256x128xf32, #tpu.memory_space<vmem>>) attributes {dimension_semantics = [#tpu.dimension_semantics<parallel>, #tpu.dimension_semantics<parallel>, #tpu.dimension_semantics<arbitrary>], iteration_bounds = array<i64: 2, 1, 1>, scalar_prefetch = 0 : i64, scratch_operands = 1 : i64, tpu.core_type = #tpu.core_type<tc>, window_params = [{transform_indices = @transform_0, window_bounds = array<i64: 256, 128>}, {transform_indices = @transform_1, window_bounds = array<i64: 128, 128>}, {transform_indices = @transform_2, window_bounds = array<i64: 1, 128>}, {transform_indices = @transform_3, window_bounds = array<i64: 256, 128>}]} {
    %c0 = arith.constant 0 : index
    %c0_0 = arith.constant 0 : index
    %0 = vector.load %arg3[%c0, %c0_0] : memref<256x128xbf16, #tpu.memory_space<vmem>>, vector<256x128xbf16>
    %c0_1 = arith.constant 0 : index
    %c0_2 = arith.constant 0 : index
    %1 = vector.load %arg4[%c0_1, %c0_2] : memref<128x128xbf16, #tpu.memory_space<vmem>>, vector<128x128xbf16>
    %cst = arith.constant dense<0.000000e+00> : vector<256x128xf32>
    %2 = tpu.matmul %0, %1, %cst {dimension_numbers = #tpu.dot_dimension_numbers<[1], [0], [0], [1], [0, 0, 1, 1], [], []>} : vector<256x128xbf16>, vector<128x128xbf16>, vector<256x128xf32> -> vector<256x128xf32>
    %c0_3 = arith.constant 0 : index
    %c0_4 = arith.constant 0 : index
    %3 = vector.load %arg5[%c0_3, %c0_4] : memref<1x128xf32, #tpu.memory_space<vmem>>, vector<1x128xf32>
    %4 = vector.broadcast %3 : vector<1x128xf32> to vector<256x128xf32>
    %5 = arith.addf %2, %4 : vector<256x128xf32>
    %cst_5 = arith.constant 0.000000e+00 : f32
    %6 = vector.broadcast %cst_5 : f32 to vector<256x128xf32>
    %7 = arith.maximumf %5, %6 : vector<256x128xf32>
    %c0_6 = arith.constant 0 : index
    %c0_7 = arith.constant 0 : index
    %8 = vector.load %arg6[%c0_6, %c0_7] : memref<256x128xf32, #tpu.memory_space<vmem>>, vector<256x128xf32>
    tpu.vector_store %arg6[%c0_6, %c0_7], %7 {strides = array<i32>} : memref<256x128xf32, #tpu.memory_space<vmem>>, vector<256x128xf32>,
    return
  }
  func.func @transform_0(%arg0: i32, %arg1: i32, %arg2: i32) -> (i32, i32) {
    %c0_i32 = arith.constant 0 : i32
    return %arg0, %arg2 : i32, i32
  }
  func.func @transform_1(%arg0: i32, %arg1: i32, %arg2: i32) -> (i32, i32) {
    %c0_i32 = arith.constant 0 : i32
    return %arg2, %arg1 : i32, i32
  }
  func.func @transform_2(%arg0: i32, %arg1: i32, %arg2: i32) -> (i32, i32) {
    %c0_i32 = arith.constant 0 : i32
    %c0_i32_0 = arith.constant 0 : i32
    return %c0_i32, %arg1 : i32, i32
  }
  func.func @transform_3(%arg0: i32, %arg1: i32, %arg2: i32) -> (i32, i32) {
    %c0_i32 = arith.constant 0 : i32
    return %arg0, %arg1 : i32, i32
  }
}

module attributes {stable_mosaic.version = 11 : i64} {
  func.func @_obj_attn_kernel(%arg0: i32, %arg1: i32, %arg2: memref<1x256x128xbf16, #tpu.memory_space<vmem>>, %arg3: memref<1x128x19xbf16, #tpu.memory_space<vmem>>, %arg4: memref<1x19x128xbf16, #tpu.memory_space<vmem>>, %arg5: memref<1x256x128xf32, #tpu.memory_space<vmem>>) attributes {dimension_semantics = [#tpu.dimension_semantics<parallel>, #tpu.dimension_semantics<parallel>], iteration_bounds = array<i64: 2, 1>, scalar_prefetch = 0 : i64, scratch_operands = 0 : i64, tpu.core_type = #tpu.core_type<tc>, window_params = [{transform_indices = @transform_0, window_bounds = array<i64: 1, 256, 128>}, {transform_indices = @transform_1, window_bounds = array<i64: 1, 128, 19>}, {transform_indices = @transform_2, window_bounds = array<i64: 1, 19, 128>}, {transform_indices = @transform_3, window_bounds = array<i64: 1, 256, 128>}]} {
    %c0 = arith.constant 0 : index
    %c0_0 = arith.constant 0 : index
    %c0_1 = arith.constant 0 : index
    %0 = vector.load %arg2[%c0, %c0_0, %c0_1] : memref<1x256x128xbf16, #tpu.memory_space<vmem>>, vector<1x256x128xbf16>
    %1 = vector.shape_cast %0 : vector<1x256x128xbf16> to vector<256x128xbf16>
    %c0_2 = arith.constant 0 : index
    %c0_3 = arith.constant 0 : index
    %c0_4 = arith.constant 0 : index
    %2 = vector.load %arg3[%c0_2, %c0_3, %c0_4] : memref<1x128x19xbf16, #tpu.memory_space<vmem>>, vector<1x128x19xbf16>
    %3 = vector.shape_cast %2 : vector<1x128x19xbf16> to vector<128x19xbf16>
    %cst = arith.constant dense<0.000000e+00> : vector<256x19xf32>
    %4 = tpu.matmul %1, %3, %cst {dimension_numbers = #tpu.dot_dimension_numbers<[1], [0], [0], [1], [0, 0, 1, 1], [], []>} : vector<256x128xbf16>, vector<128x19xbf16>, vector<256x19xf32> -> vector<256x19xf32>
    %cst_5 = arith.constant dense<0xFF800000> : vector<256xf32>
    %5 = vector.multi_reduction <maximumf>, %4, %cst_5 [1] : vector<256x19xf32> to vector<256xf32>
    %6 = vector.shape_cast %5 : vector<256xf32> to vector<256x1xf32>
    %7 = vector.broadcast %6 : vector<256x1xf32> to vector<256x19xf32>
    %8 = arith.subf %4, %7 : vector<256x19xf32>
    %9 = math.exp %8 : vector<256x19xf32>
    %cst_6 = arith.constant dense<0.000000e+00> : vector<256xf32>
    %10 = vector.multi_reduction <add>, %9, %cst_6 [1] : vector<256x19xf32> to vector<256xf32>
    %11 = vector.shape_cast %10 : vector<256xf32> to vector<256x1xf32>
    %12 = tpu.reciprocal %11 {approx = true} : vector<256x1xf32> -> vector<256x1xf32>
    %13 = vector.broadcast %12 : vector<256x1xf32> to vector<256x19xf32>
    %14 = arith.mulf %9, %13 : vector<256x19xf32>
    %15 = arith.truncf %14 : vector<256x19xf32> to vector<256x19xbf16>
    %c0_7 = arith.constant 0 : index
    %c0_8 = arith.constant 0 : index
    %c0_9 = arith.constant 0 : index
    %16 = vector.load %arg4[%c0_7, %c0_8, %c0_9] : memref<1x19x128xbf16, #tpu.memory_space<vmem>>, vector<1x19x128xbf16>
    %17 = vector.shape_cast %16 : vector<1x19x128xbf16> to vector<19x128xbf16>
    %cst_10 = arith.constant dense<0.000000e+00> : vector<256x128xf32>
    %18 = tpu.matmul %15, %17, %cst_10 {dimension_numbers = #tpu.dot_dimension_numbers<[1], [0], [0], [1], [0, 0, 1, 1], [], []>} : vector<256x19xbf16>, vector<19x128xbf16>, vector<256x128xf32> -> vector<256x128xf32>
    %c0_11 = arith.constant 0 : index
    %c0_12 = arith.constant 0 : index
    %c0_13 = arith.constant 0 : index
    %19 = vector.load %arg5[%c0_11, %c0_12, %c0_13] : memref<1x256x128xf32, #tpu.memory_space<vmem>>, vector<1x256x128xf32>
    %20 = vector.shape_cast %19 : vector<1x256x128xf32> to vector<256x128xf32>
    %21 = vector.shape_cast %18 : vector<256x128xf32> to vector<1x256x128xf32>
    tpu.vector_store %arg5[%c0_11, %c0_12, %c0_13], %21 {strides = array<i32>} : memref<1x256x128xf32, #tpu.memory_space<vmem>>, vector<1x256x128xf32>,
    return
  }
  func.func @transform_0(%arg0: i32, %arg1: i32) -> (i32, i32, i32) {
    %c0_i32 = arith.constant 0 : i32
    %c0_i32_0 = arith.constant 0 : i32
    return %arg0, %arg1, %c0_i32 : i32, i32, i32
  }
  func.func @transform_1(%arg0: i32, %arg1: i32) -> (i32, i32, i32) {
    %c0_i32 = arith.constant 0 : i32
    %c0_i32_0 = arith.constant 0 : i32
    %c0_i32_1 = arith.constant 0 : i32
    return %arg0, %c0_i32, %c0_i32_0 : i32, i32, i32
  }
  func.func @transform_2(%arg0: i32, %arg1: i32) -> (i32, i32, i32) {
    %c0_i32 = arith.constant 0 : i32
    %c0_i32_0 = arith.constant 0 : i32
    %c0_i32_1 = arith.constant 0 : i32
    return %arg0, %c0_i32, %c0_i32_0 : i32, i32, i32
  }
  func.func @transform_3(%arg0: i32, %arg1: i32) -> (i32, i32, i32) {
    %c0_i32 = arith.constant 0 : i32
    %c0_i32_0 = arith.constant 0 : i32
    return %arg0, %arg1, %c0_i32 : i32, i32, i32
  }
}

module attributes {stable_mosaic.version = 11 : i64} {
  func.func @_mm2_bias_kernel(%arg0: i32, %arg1: i32, %arg2: memref<256x128xbf16, #tpu.memory_space<vmem>>, %arg3: memref<128x128xbf16, #tpu.memory_space<vmem>>, %arg4: memref<256x128xbf16, #tpu.memory_space<vmem>>, %arg5: memref<128x128xbf16, #tpu.memory_space<vmem>>, %arg6: memref<1x128xf32, #tpu.memory_space<vmem>>, %arg7: memref<256x128xf32, #tpu.memory_space<vmem>>) attributes {dimension_semantics = [#tpu.dimension_semantics<parallel>, #tpu.dimension_semantics<parallel>], iteration_bounds = array<i64: 2, 1>, scalar_prefetch = 0 : i64, scratch_operands = 0 : i64, tpu.core_type = #tpu.core_type<tc>, window_params = [{transform_indices = @transform_0, window_bounds = array<i64: 256, 128>}, {transform_indices = @transform_1, window_bounds = array<i64: 128, 128>}, {transform_indices = @transform_2, window_bounds = array<i64: 256, 128>}, {transform_indices = @transform_3, window_bounds = array<i64: 128, 128>}, {transform_indices = @transform_4, window_bounds = array<i64: 1, 128>}, {transform_indices = @transform_5, window_bounds = array<i64: 256, 128>}]} {
    %c0 = arith.constant 0 : index
    %c0_0 = arith.constant 0 : index
    %0 = vector.load %arg2[%c0, %c0_0] : memref<256x128xbf16, #tpu.memory_space<vmem>>, vector<256x128xbf16>
    %c0_1 = arith.constant 0 : index
    %c0_2 = arith.constant 0 : index
    %1 = vector.load %arg3[%c0_1, %c0_2] : memref<128x128xbf16, #tpu.memory_space<vmem>>, vector<128x128xbf16>
    %cst = arith.constant dense<0.000000e+00> : vector<256x128xf32>
    %2 = tpu.matmul %0, %1, %cst {dimension_numbers = #tpu.dot_dimension_numbers<[1], [0], [0], [1], [0, 0, 1, 1], [], []>} : vector<256x128xbf16>, vector<128x128xbf16>, vector<256x128xf32> -> vector<256x128xf32>
    %c0_3 = arith.constant 0 : index
    %c0_4 = arith.constant 0 : index
    %3 = vector.load %arg4[%c0_3, %c0_4] : memref<256x128xbf16, #tpu.memory_space<vmem>>, vector<256x128xbf16>
    %c0_5 = arith.constant 0 : index
    %c0_6 = arith.constant 0 : index
    %4 = vector.load %arg5[%c0_5, %c0_6] : memref<128x128xbf16, #tpu.memory_space<vmem>>, vector<128x128xbf16>
    %cst_7 = arith.constant dense<0.000000e+00> : vector<256x128xf32>
    %5 = tpu.matmul %3, %4, %cst_7 {dimension_numbers = #tpu.dot_dimension_numbers<[1], [0], [0], [1], [0, 0, 1, 1], [], []>} : vector<256x128xbf16>, vector<128x128xbf16>, vector<256x128xf32> -> vector<256x128xf32>
    %6 = arith.addf %2, %5 : vector<256x128xf32>
    %c0_8 = arith.constant 0 : index
    %c0_9 = arith.constant 0 : index
    %7 = vector.load %arg6[%c0_8, %c0_9] : memref<1x128xf32, #tpu.memory_space<vmem>>, vector<1x128xf32>
    %8 = vector.broadcast %7 : vector<1x128xf32> to vector<256x128xf32>
    %9 = arith.addf %6, %8 : vector<256x128xf32>
    %cst_10 = arith.constant 0.000000e+00 : f32
    %10 = vector.broadcast %cst_10 : f32 to vector<256x128xf32>
    %11 = arith.maximumf %9, %10 : vector<256x128xf32>
    %c0_11 = arith.constant 0 : index
    %c0_12 = arith.constant 0 : index
    %12 = vector.load %arg7[%c0_11, %c0_12] : memref<256x128xf32, #tpu.memory_space<vmem>>, vector<256x128xf32>
    tpu.vector_store %arg7[%c0_11, %c0_12], %11 {strides = array<i32>} : memref<256x128xf32, #tpu.memory_space<vmem>>, vector<256x128xf32>,
    return
  }
  func.func @transform_0(%arg0: i32, %arg1: i32) -> (i32, i32) {
    %c0_i32 = arith.constant 0 : i32
    %c0_i32_0 = arith.constant 0 : i32
    return %arg0, %c0_i32 : i32, i32
  }
  func.func @transform_1(%arg0: i32, %arg1: i32) -> (i32, i32) {
    %c0_i32 = arith.constant 0 : i32
    %c0_i32_0 = arith.constant 0 : i32
    return %c0_i32, %arg1 : i32, i32
  }
  func.func @transform_2(%arg0: i32, %arg1: i32) -> (i32, i32) {
    %c0_i32 = arith.constant 0 : i32
    %c0_i32_0 = arith.constant 0 : i32
    return %arg0, %c0_i32 : i32, i32
  }
  func.func @transform_3(%arg0: i32, %arg1: i32) -> (i32, i32) {
    %c0_i32 = arith.constant 0 : i32
    %c0_i32_0 = arith.constant 0 : i32
    return %c0_i32, %arg1 : i32, i32
  }
  func.func @transform_4(%arg0: i32, %arg1: i32) -> (i32, i32) {
    %c0_i32 = arith.constant 0 : i32
    %c0_i32_0 = arith.constant 0 : i32
    return %c0_i32, %arg1 : i32, i32
  }
  func.func @transform_5(%arg0: i32, %arg1: i32) -> (i32, i32) {
    %c0_i32 = arith.constant 0 : i32
    return %arg0, %arg1 : i32, i32
  }
}

module attributes {stable_mosaic.version = 11 : i64} {
  func.func @_mm_bias_kernel(%arg0: i32, %arg1: i32, %arg2: i32, %arg3: memref<256x128xbf16, #tpu.memory_space<vmem>>, %arg4: memref<128x128xbf16, #tpu.memory_space<vmem>>, %arg5: memref<1x128xf32, #tpu.memory_space<vmem>>, %arg6: memref<256x128xf32, #tpu.memory_space<vmem>>, %arg7: memref<256x128xf32, #tpu.memory_space<vmem>>) attributes {dimension_semantics = [#tpu.dimension_semantics<parallel>, #tpu.dimension_semantics<parallel>, #tpu.dimension_semantics<arbitrary>], iteration_bounds = array<i64: 2, 1, 1>, scalar_prefetch = 0 : i64, scratch_operands = 1 : i64, tpu.core_type = #tpu.core_type<tc>, window_params = [{transform_indices = @transform_0, window_bounds = array<i64: 256, 128>}, {transform_indices = @transform_1, window_bounds = array<i64: 128, 128>}, {transform_indices = @transform_2, window_bounds = array<i64: 1, 128>}, {transform_indices = @transform_3, window_bounds = array<i64: 256, 128>}]} {
    %c0 = arith.constant 0 : index
    %c0_0 = arith.constant 0 : index
    %0 = vector.load %arg3[%c0, %c0_0] : memref<256x128xbf16, #tpu.memory_space<vmem>>, vector<256x128xbf16>
    %c0_1 = arith.constant 0 : index
    %c0_2 = arith.constant 0 : index
    %1 = vector.load %arg4[%c0_1, %c0_2] : memref<128x128xbf16, #tpu.memory_space<vmem>>, vector<128x128xbf16>
    %cst = arith.constant dense<0.000000e+00> : vector<256x128xf32>
    %2 = tpu.matmul %0, %1, %cst {dimension_numbers = #tpu.dot_dimension_numbers<[1], [0], [0], [1], [0, 0, 1, 1], [], []>} : vector<256x128xbf16>, vector<128x128xbf16>, vector<256x128xf32> -> vector<256x128xf32>
    %c0_3 = arith.constant 0 : index
    %c0_4 = arith.constant 0 : index
    %3 = vector.load %arg5[%c0_3, %c0_4] : memref<1x128xf32, #tpu.memory_space<vmem>>, vector<1x128xf32>
    %4 = vector.broadcast %3 : vector<1x128xf32> to vector<256x128xf32>
    %5 = arith.addf %2, %4 : vector<256x128xf32>
    %c0_5 = arith.constant 0 : index
    %c0_6 = arith.constant 0 : index
    %6 = vector.load %arg6[%c0_5, %c0_6] : memref<256x128xf32, #tpu.memory_space<vmem>>, vector<256x128xf32>
    tpu.vector_store %arg6[%c0_5, %c0_6], %5 {strides = array<i32>} : memref<256x128xf32, #tpu.memory_space<vmem>>, vector<256x128xf32>,
    return
  }
  func.func @transform_0(%arg0: i32, %arg1: i32, %arg2: i32) -> (i32, i32) {
    %c0_i32 = arith.constant 0 : i32
    return %arg0, %arg2 : i32, i32
  }
  func.func @transform_1(%arg0: i32, %arg1: i32, %arg2: i32) -> (i32, i32) {
    %c0_i32 = arith.constant 0 : i32
    return %arg2, %arg1 : i32, i32
  }
  func.func @transform_2(%arg0: i32, %arg1: i32, %arg2: i32) -> (i32, i32) {
    %c0_i32 = arith.constant 0 : i32
    %c0_i32_0 = arith.constant 0 : i32
    return %c0_i32, %arg1 : i32, i32
  }
  func.func @transform_3(%arg0: i32, %arg1: i32, %arg2: i32) -> (i32, i32) {
    %c0_i32 = arith.constant 0 : i32
    return %arg0, %arg1 : i32, i32
  }
}

module attributes {stable_mosaic.version = 11 : i64} {
  func.func @_upsample_kernel(%arg0: i32, %arg1: i32, %arg2: memref<1x1x16x16xf32, #tpu.memory_space<vmem>>, %arg3: memref<32x16xf32, #tpu.memory_space<vmem>>, %arg4: memref<16x32xf32, #tpu.memory_space<vmem>>, %arg5: memref<1x1x32x32xf32, #tpu.memory_space<vmem>>) attributes {dimension_semantics = [#tpu.dimension_semantics<parallel>, #tpu.dimension_semantics<parallel>], iteration_bounds = array<i64: 2, 19>, scalar_prefetch = 0 : i64, scratch_operands = 0 : i64, tpu.core_type = #tpu.core_type<tc>, window_params = [{transform_indices = @transform_0, window_bounds = array<i64: 1, 1, 16, 16>}, {pipeline_mode = #tpu.pipeline_mode<synchronous>, transform_indices = @transform_1, window_bounds = array<i64: 32, 16>}, {pipeline_mode = #tpu.pipeline_mode<synchronous>, transform_indices = @transform_2, window_bounds = array<i64: 16, 32>}, {transform_indices = @transform_3, window_bounds = array<i64: 1, 1, 32, 32>}]} {
    %c0 = arith.constant 0 : index
    %c0_0 = arith.constant 0 : index
    %0 = vector.load %arg3[%c0, %c0_0] : memref<32x16xf32, #tpu.memory_space<vmem>>, vector<32x16xf32>
    %c0_1 = arith.constant 0 : index
    %c0_2 = arith.constant 0 : index
    %c0_3 = arith.constant 0 : index
    %c0_4 = arith.constant 0 : index
    %1 = vector.load %arg2[%c0_1, %c0_2, %c0_3, %c0_4] : memref<1x1x16x16xf32, #tpu.memory_space<vmem>>, vector<1x1x16x16xf32>
    %2 = vector.shape_cast %1 : vector<1x1x16x16xf32> to vector<16x16xf32>
    %cst = arith.constant dense<0.000000e+00> : vector<32x16xf32>
    %3 = tpu.matmul %0, %2, %cst {dimension_numbers = #tpu.dot_dimension_numbers<[1], [0], [0], [1], [0, 0, 1, 1], [], []>} : vector<32x16xf32>, vector<16x16xf32>, vector<32x16xf32> -> vector<32x16xf32>
    %c0_5 = arith.constant 0 : index
    %c0_6 = arith.constant 0 : index
    %4 = vector.load %arg4[%c0_5, %c0_6] : memref<16x32xf32, #tpu.memory_space<vmem>>, vector<16x32xf32>
    %cst_7 = arith.constant dense<0.000000e+00> : vector<32x32xf32>
    %5 = tpu.matmul %3, %4, %cst_7 {dimension_numbers = #tpu.dot_dimension_numbers<[1], [0], [0], [1], [0, 0, 1, 1], [], []>} : vector<32x16xf32>, vector<16x32xf32>, vector<32x32xf32> -> vector<32x32xf32>
    %c0_8 = arith.constant 0 : index
    %c0_9 = arith.constant 0 : index
    %c0_10 = arith.constant 0 : index
    %c0_11 = arith.constant 0 : index
    %6 = vector.load %arg5[%c0_8, %c0_9, %c0_10, %c0_11] : memref<1x1x32x32xf32, #tpu.memory_space<vmem>>, vector<1x1x32x32xf32>
    %7 = vector.shape_cast %6 : vector<1x1x32x32xf32> to vector<32x32xf32>
    %8 = vector.shape_cast %5 : vector<32x32xf32> to vector<1x1x32x32xf32>
    tpu.vector_store %arg5[%c0_8, %c0_9, %c0_10, %c0_11], %8 {strides = array<i32>} : memref<1x1x32x32xf32, #tpu.memory_space<vmem>>, vector<1x1x32x32xf32>,
    return
  }
  func.func @transform_0(%arg0: i32, %arg1: i32) -> (i32, i32, i32, i32) {
    %c0_i32 = arith.constant 0 : i32
    %c0_i32_0 = arith.constant 0 : i32
    %c0_i32_1 = arith.constant 0 : i32
    return %arg0, %arg1, %c0_i32, %c0_i32_0 : i32, i32, i32, i32
  }
  func.func @transform_1(%arg0: i32, %arg1: i32) -> (i32, i32) {
    %c0_i32 = arith.constant 0 : i32
    %c0_i32_0 = arith.constant 0 : i32
    %c0_i32_1 = arith.constant 0 : i32
    return %c0_i32, %c0_i32_0 : i32, i32
  }
  func.func @transform_2(%arg0: i32, %arg1: i32) -> (i32, i32) {
    %c0_i32 = arith.constant 0 : i32
    %c0_i32_0 = arith.constant 0 : i32
    %c0_i32_1 = arith.constant 0 : i32
    return %c0_i32, %c0_i32_0 : i32, i32
  }
  func.func @transform_3(%arg0: i32, %arg1: i32) -> (i32, i32, i32, i32) {
    %c0_i32 = arith.constant 0 : i32
    %c0_i32_0 = arith.constant 0 : i32
    %c0_i32_1 = arith.constant 0 : i32
    return %arg0, %arg1, %c0_i32, %c0_i32_0 : i32, i32, i32, i32
  }
}

</mosaic_0001>

<llo_original>
// kernel: ocr_forward.13
$region0: #{ocr_forward.13}
  #allocation0 [shape = 'u32[]', space=smem, size = 0x4, offset = 0x4, fixed_abs, tag = 'smem constant byte address 0x4 - core index']
  #allocation1 [shape = 'u32[144,128]{1,0:T(1,128)}', space=vmem, size = 0x12000, scoped, tag = 'internal scratch']
  #allocation2 [shape = 'f32[256,128]{1,0:T(8,128)}', space=vmem, size = 0x20000, scoped, tag = 'scratch operand']
  %s0 = inlined_call_operand.vmem [shape: bf16[512,32], index: 0, kind: input, shape index: {}]
  %s1 = inlined_call_operand.vmem [shape: bf16[32,128], index: 1, kind: input, shape index: {}]
  %s2 = inlined_call_operand.vmem [shape: f32[1,128], index: 2, kind: input, shape index: {}]
  %s3 = inlined_call_operand.vmem [shape: f32[512,128], index: 3, kind: output, shape index: {}]
  %s4 = sld [smem:[#allocation0]]
  $region45: #{ocr_forward.13} parent=0
    _
  %s6 = ssub.s32 1, %s4
  %s7 = scalar_select 0, %s6, %s4
  loop: start=0, step=1, limit=4
  $region2: #{ocr_forward.13} parent=0 // loop_pre_header
    _
  $region3: #{ocr_forward.13} parent=0 // loop_header
    %s9 = sphi 0, %s13
    %p10 = scmp.ge.s32.totalorder %s9, 4
    %s16 = sphi 0, %s35
    %s17 = sphi 0, %s31
    %s18 = sphi 0, %s27
    %s19 = sphi 0, %s16
    %s20 = sphi 0, %s17
    %s21 = sphi 0, %s18
    %s22 = sphi 0, %s19
    %s23 = sphi 0, %s20
    %s24 = sphi 0, %s21
    %s40 = sphi 0, %s42
    %s43 = sphi 0, %s40
    %s44 = sphi 0, %s43
    %s60 = sphi 0, %s44
    %s68 = sphi 0, %s70
    %s71 = sphi 0, %s68
    %s72 = sphi 0, %s71
    %s88 = sphi 0, %s72
    %s94 = sphi 0, %s96
    %s97 = sphi 0, %s94
    %s98 = sphi 0, %s97
    %s114 = sphi 0, %s98
    %s122 = sphi 0, %s124
    %s125 = sphi 0, %s122
    %s126 = sphi 0, %s125
    %s142 = sphi 0, %s126
  $region4: #{ocr_forward.13} parent=0 // loop_header_branch
    %12 = sbr.rel (%p10) target = $region8
  $region5: #{ocr_forward.13} parent=0 // loop_body
    %s14 = ssub.s32 %s9, 1
    %s15 = ssub.s32 %s9, 2
    %s25 = sadd.s32 1, %s18
    %p26 = scmp.ge.s32.totalorder %s25, 1
    %s27 = scalar_select %p26, 0, %s25
    %s28 = sadd.s32 1, %s17
    %s29 = scalar_select %p26, %s28, %s17
    %p30 = scmp.ge.s32.totalorder %s29, 1
    %s31 = scalar_select %p30, 0, %s29
    %s32 = sadd.s32 1, %s16
    %s33 = scalar_select %p30, %s32, %s16
    %p34 = scmp.ge.s32.totalorder %s33, 2
    %s35 = scalar_select %p34, 0, %s33
    %s36 = ssub.s32 %s16, %s35
    %s37 = ssub.s32 %s18, %s27
    %s38 = sor.u32 %s36, %s37
    %p39 = scmp.eq.s32.totalorder %s38, 0
    %s41 = sadd.s32 %s40, 1
    %s42 = scalar_select %p39, %s40, %s41
    %p45 = pneg %p39
    %p46 = scmp.eq.s32.totalorder %s9, 1
    %p47 = por %p45, %p46
    %p48 = scmp.ne.s32.totalorder %s40, %s43
    %p49 = scmp.eq.s32.totalorder %s9, 0
    %p50 = por %p48, %p49
    %p51 = scmp.ne.s32.totalorder %s40, %s43
    %p52 = scmp.eq.s32.totalorder %s14, 1
    %p53 = por %p51, %p52
    %p54 = scmp.ne.s32.totalorder %s43, %s44
    %p55 = scmp.eq.s32.totalorder %s14, 0
    %p56 = por %p54, %p55
    %p57 = scmp.ne.s32.totalorder %s43, %s44
    %p58 = scmp.eq.s32.totalorder %s15, 1
    %p59 = por %p57, %p58
    %p61 = scmp.ne.s32.totalorder %s44, %s60
    %p62 = scmp.eq.s32.totalorder %s15, 0
    %p63 = por %p61, %p62
    %s64 = ssub.s32 %s18, %s27
    %s65 = ssub.s32 %s17, %s31
    %s66 = sor.u32 %s64, %s65
    %p67 = scmp.eq.s32.totalorder %s66, 0
    %s69 = sadd.s32 %s68, 1
    %s70 = scalar_select %p67, %s68, %s69
    %p73 = pneg %p67
    %p74 = scmp.eq.s32.totalorder %s9, 1
    %p75 = por %p73, %p74
    %p76 = scmp.ne.s32.totalorder %s68, %s71
    %p77 = scmp.eq.s32.totalorder %s9, 0
    %p78 = por %p76, %p77
    %p79 = scmp.ne.s32.totalorder %s68, %s71
    %p80 = scmp.eq.s32.totalorder %s14, 1
    %p81 = por %p79, %p80
    %p82 = scmp.ne.s32.totalorder %s71, %s72
    %p83 = scmp.eq.s32.totalorder %s14, 0
    %p84 = por %p82, %p83
    %p85 = scmp.ne.s32.totalorder %s71, %s72
    %p86 = scmp.eq.s32.totalorder %s15, 1
    %p87 = por %p85, %p86
    %p89 = scmp.ne.s32.totalorder %s72, %s88
    %p90 = scmp.eq.s32.totalorder %s15, 0
    %p91 = por %p89, %p90
    %s92 = ssub.s32 %s17, %s31
    %p93 = scmp.eq.s32.totalorder %s92, 0
    %s95 = sadd.s32 %s94, 1
    %s96 = scalar_select %p93, %s94, %s95
    %p99 = pneg %p93
    %p100 = scmp.eq.s32.totalorder %s9, 1
    %p101 = por %p99, %p100
    %p102 = scmp.ne.s32.totalorder %s94, %s97
    %p103 = scmp.eq.s32.totalorder %s9, 0
    %p104 = por %p102, %p103
    %p105 = scmp.ne.s32.totalorder %s94, %s97
    %p106 = scmp.eq.s32.totalorder %s14, 1
    %p107 = por %p105, %p106
    %p108 = scmp.ne.s32.totalorder %s97, %s98
    %p109 = scmp.eq.s32.totalorder %s14, 0
    %p110 = por %p108, %p109
    %p111 = scmp.ne.s32.totalorder %s97, %s98
    %p112 = scmp.eq.s32.totalorder %s15, 1
    %p113 = por %p111, %p112
    %p115 = scmp.ne.s32.totalorder %s98, %s114
    %p116 = scmp.eq.s32.totalorder %s15, 0
    %p117 = por %p115, %p116
    %s118 = ssub.s32 %s16, %s35
    %s119 = ssub.s32 %s17, %s31
    %s120 = sor.u32 %s118, %s119
    %p121 = scmp.eq.s32.totalorder %s120, 0
    %s123 = sadd.s32 %s122, 1
    %s124 = scalar_select %p121, %s122, %s123
    %p127 = pneg %p121
    %p128 = scmp.eq.s32.totalorder %s9, 1
    %p129 = por %p127, %p128
    %p130 = scmp.ne.s32.totalorder %s122, %s125
    %p131 = scmp.eq.s32.totalorder %s9, 0
    %p132 = por %p130, %p131
    %p133 = scmp.ne.s32.totalorder %s122, %s125
    %p134 = scmp.eq.s32.totalorder %s14, 1
    %p135 = por %p133, %p134
    %p136 = scmp.ne.s32.totalorder %s125, %s126
    %p137 = scmp.eq.s32.totalorder %s14, 0
    %p138 = por %p136, %p137
    %p139 = scmp.ne.s32.totalorder %s125, %s126
    %p140 = scmp.eq.s32.totalorder %s15, 1
    %p141 = por %p139, %p140
    %p143 = scmp.ne.s32.totalorder %s126, %s142
    %p144 = scmp.eq.s32.totalorder %s15, 0
    %p145 = por %p143, %p144
    %p146 = scmp.le.s32.totalorder 1, %s9
    %p147 = scmp.lt.s32.totalorder %s9, 3
    %p148 = pnand %p146, %p147
    %p149 = pneg %p148
    // Predicated region
    $region9: #{ocr_forward.13} parent=5 // pred_check
      _
    $region10: #{ocr_forward.13} parent=5 // pred_check_branch
      %151 = sbr.rel (%p148) target = $region12
    $region11: #{ocr_forward.13} parent=5 // pred_region
      %s152 = ssub.s32 %s9, 1
      // Predicated region
      $region13: #{ocr_forward.13} parent=11 // pred_check
        %p153 = pneg %p84
      $region14: #{ocr_forward.13} parent=11 // pred_check_branch
        %155 = sbr.rel (%p153) target = $region16
      $region15: #{ocr_forward.13} parent=11 // pred_region
        %s156 = smul.u32 4, %s21
        %p157 = scmp.lt.s32.totalorder %s156, 3
        %s158 = scalar_select %p157, %s156, 3
        %p159 = scmp.lt.s32.totalorder %s20, 0
        %s160 = scalar_select %p159, %s20, 0
        %s161 = sadd.s32 %s160, %s158
        %s162 = smul.addr %s161, 4
        %s163 = scalar_lea.vmem %s1, %s162
        %s164 = smul.u32 4, %s21
      $region16: #{ocr_forward.13} parent=11 // pred_fallthru
        _
      // Predicated region
      $region17: #{ocr_forward.13} parent=11 // pred_check
        %p165 = pneg %p110
      $region18: #{ocr_forward.13} parent=11 // pred_check_branch
        %167 = sbr.rel (%p165) target = $region20
      $region19: #{ocr_forward.13} parent=11 // pred_region
        %p168 = scmp.lt.s32.totalorder %s20, 0
        %s169 = scalar_select %p168, %s20, 0
        %s170 = scalar_lea.vmem %s2, %s169
      $region20: #{ocr_forward.13} parent=11 // pred_fallthru
        _
    $region12: #{ocr_forward.13} parent=5 // pred_fallthru
      _
    %p171 = scmp.lt.s32.totalorder %s9, 2
    // Predicated region
    $region21: #{ocr_forward.13} parent=5 // pred_check
      %p172 = pneg %p171
    $region22: #{ocr_forward.13} parent=5 // pred_check_branch
      %174 = sbr.rel (%p172) target = $region24
    $region23: #{ocr_forward.13} parent=5 // pred_region
      // Predicated region
      $region25: #{ocr_forward.13} parent=23 // pred_check
        %p175 = pneg %p50
      $region26: #{ocr_forward.13} parent=23 // pred_check_branch
        %177 = sbr.rel (%p175) target = $region28
      $region27: #{ocr_forward.13} parent=23 // pred_region
        %s178 = smul.u32 32, %s16
        %p179 = scmp.lt.s32.totalorder %s178, 63
        %s180 = scalar_select %p179, %s178, 63
        %p181 = scmp.lt.s32.totalorder %s18, 0
        %s182 = scalar_select %p181, %s18, 0
        %s183 = sadd.s32 %s182, %s180
        %s184 = smul.addr %s183, 4
        %s185 = scalar_lea.vmem %s0, %s184
        %s186 = smul.u32 32, %s16
      $region28: #{ocr_forward.13} parent=23 // pred_fallthru
        _
    $region24: #{ocr_forward.13} parent=5 // pred_fallthru
      _
    %p187 = scmp.le.s32.totalorder 1, %s9
    %p188 = scmp.lt.s32.totalorder %s9, 3
    %p189 = pnand %p187, %p188
    %p190 = pneg %p189
    // Predicated region
    $region29: #{ocr_forward.13} parent=5 // pred_check
      _
    $region30: #{ocr_forward.13} parent=5 // pred_check_branch
      %192 = sbr.rel (%p189) target = $region32
    $region31: #{ocr_forward.13} parent=5 // pred_region
      %s193 = ssub.s32 %s9, 1
      %s194 = smul.u32 32, %s19
      %p195 = scmp.lt.s32.totalorder %s194, 63
      %s196 = scalar_select %p195, %s194, 63
      %p197 = scmp.lt.s32.totalorder %s21, 0
      %s198 = scalar_select %p197, %s21, 0
      %s199 = sadd.s32 %s198, %s196
      %s200 = smul.addr %s199, 4
      %s201 = scalar_lea.vmem %s0, %s200
      %p202 = pneg %p56
      %p203 = pneg %p53
      %s204 = smul.u32 4, %s21
      %p205 = scmp.lt.s32.totalorder %s204, 3
      %s206 = scalar_select %p205, %s204, 3
      %p207 = scmp.lt.s32.totalorder %s20, 0
      %s208 = scalar_select %p207, %s20, 0
      %s209 = sadd.s32 %s208, %s206
      %s210 = smul.addr %s209, 4
      %s211 = scalar_lea.vmem %s1, %s210
      %p212 = pneg %p84
      %p213 = pneg %p81
      %p214 = scmp.lt.s32.totalorder %s20, 0
      %s215 = scalar_select %p214, %s20, 0
      %s216 = scalar_lea.vmem %s2, %s215
      %p217 = pneg %p110
      %p218 = pneg %p107
      %p219 = pneg %p138
      %p220 = pneg %p135
      %s221 = smul.u32 32, %s19
      %p222 = scmp.lt.s32.totalorder %s221, 63
      %s223 = scalar_select %p222, %s221, 63
      %p224 = scmp.lt.s32.totalorder %s20, 0
      %s225 = scalar_select %p224, %s20, 0
      %s226 = sadd.s32 %s225, %s223
      %s227 = smul.addr %s226, 8
      %s228 = scalar_lea.vmem %s3, %s227
      %s229 = smul.u32 32, %s19
      %p230 = scmp.lt.s32.totalorder %s229, 63
      %s231 = scalar_select %p230, %s229, 63
      %p232 = scmp.lt.s32.totalorder %s21, 0
      %s233 = scalar_select %p232, %s21, 0
      %s234 = sadd.s32 %s233, %s231
      %s235 = smul.addr %s234, 4
      %s236 = scalar_lea.vmem %s0, %s235
      %s237 = smul.u32 32, %s19
      %s238 = smul.u32 4, %s21
      %p239 = scmp.lt.s32.totalorder %s238, 3
      %s240 = scalar_select %p239, %s238, 3
      %p241 = scmp.lt.s32.totalorder %s20, 0
      %s242 = scalar_select %p241, %s20, 0
      %s243 = sadd.s32 %s242, %s240
      %s244 = smul.addr %s243, 4
      %s245 = scalar_lea.vmem %s1, %s244
      %s246 = smul.u32 4, %s21
      %p247 = scmp.lt.s32.totalorder %s20, 0
      %s248 = scalar_select %p247, %s20, 0
      %s249 = scalar_lea.vmem %s2, %s248
      %s250 = smul.u32 32, %s19
      %p251 = scmp.lt.s32.totalorder %s250, 63
      %s252 = scalar_select %p251, %s250, 63
      %p253 = scmp.lt.s32.totalorder %s20, 0
      %s254 = scalar_select %p253, %s20, 0
      %s255 = sadd.s32 %s254, %s252
      %s256 = smul.addr %s255, 8
      %s257 = scalar_lea.vmem %s3, %s256
      %s258 = smul.u32 32, %s19
      %v260 = vld [vmem:[%s236] sm:$0xf]
      %v261 = vld [vmem:[%s236 + $0x4] sm:$0xf]
      %v262 = vld [vmem:[%s236 + $0x8] sm:$0xf]
      %v263 = vld [vmem:[%s236 + $0xc] sm:$0xf]
      %v264 = vld [vmem:[%s236 + $0x10] sm:$0xf]
      %v265 = vld [vmem:[%s236 + $0x14] sm:$0xf]
      %v266 = vld [vmem:[%s236 + $0x18] sm:$0xf]
      %v267 = vld [vmem:[%s236 + $0x1c] sm:$0xf]
      %v268 = vld [vmem:[%s236 + $0x20] sm:$0xf]
      %v269 = vld [vmem:[%s236 + $0x24] sm:$0xf]
      %v270 = vld [vmem:[%s236 + $0x28] sm:$0xf]
      %v271 = vld [vmem:[%s236 + $0x2c] sm:$0xf]
      %v272 = vld [vmem:[%s236 + $0x30] sm:$0xf]
      %v273 = vld [vmem:[%s236 + $0x34] sm:$0xf]
      %v274 = vld [vmem:[%s236 + $0x38] sm:$0xf]
      %v275 = vld [vmem:[%s236 + $0x3c] sm:$0xf]
      %v276 = vld [vmem:[%s236 + $0x40] sm:$0xf]
      %v277 = vld [vmem:[%s236 + $0x44] sm:$0xf]
      %v278 = vld [vmem:[%s236 + $0x48] sm:$0xf]
      %v279 = vld [vmem:[%s236 + $0x4c] sm:$0xf]
      %v280 = vld [vmem:[%s236 + $0x50] sm:$0xf]
      %v281 = vld [vmem:[%s236 + $0x54] sm:$0xf]
      %v282 = vld [vmem:[%s236 + $0x58] sm:$0xf]
      %v283 = vld [vmem:[%s236 + $0x5c] sm:$0xf]
      %v284 = vld [vmem:[%s236 + $0x60] sm:$0xf]
      %v285 = vld [vmem:[%s236 + $0x64] sm:$0xf]
      %v286 = vld [vmem:[%s236 + $0x68] sm:$0xf]
      %v287 = vld [vmem:[%s236 + $0x6c] sm:$0xf]
      %v288 = vld [vmem:[%s236 + $0x70] sm:$0xf]
      %v289 = vld [vmem:[%s236 + $0x74] sm:$0xf]
      %v290 = vld [vmem:[%s236 + $0x78] sm:$0xf]
      %v291 = vld [vmem:[%s236 + $0x7c] sm:$0xf]
      %v292 = vld [vmem:[%s245] sm:$0xf]
      %v293 = vld [vmem:[%s245 + $0x4] sm:$0xf]
      %v294 = vld [vmem:[%s245 + $0x8] sm:$0xf]
      %v295 = vld [vmem:[%s245 + $0xc] sm:$0xf]
      %v296 = vld [vmem:[%s249] sm:$0x1]
      %v298 = vlaneseq
      %v299 = vshrl.u32 %v298, 7
      %v300 = vsub.s32 0, %v299
      %v301 = vrot.slane %v296, %v300
      %v335 = vunpack.c.l.b16 %v260
      %v336 = vunpack.c.l.b16 %v261
      %v337 = vunpack.c.l.b16 %v262
      %v338 = vunpack.c.l.b16 %v263
      %v339 = vunpack.c.l.b16 %v264
      %v340 = vunpack.c.l.b16 %v265
      %v341 = vunpack.c.l.b16 %v266
      %v342 = vunpack.c.l.b16 %v267
      %v343 = vunpack.c.l.b16 %v268
      %v344 = vunpack.c.l.b16 %v269
      %v345 = vunpack.c.l.b16 %v270
      %v346 = vunpack.c.l.b16 %v271
      %v347 = vunpack.c.l.b16 %v272
      %v348 = vunpack.c.l.b16 %v273
      %v349 = vunpack.c.l.b16 %v274
      %v350 = vunpack.c.l.b16 %v275
      %v351 = vunpack.c.l.b16 %v276
      %v352 = vunpack.c.l.b16 %v277
      %v353 = vunpack.c.l.b16 %v278
      %v354 = vunpack.c.l.b16 %v279
      %v355 = vunpack.c.l.b16 %v280
      %v356 = vunpack.c.l.b16 %v281
      %v357 = vunpack.c.l.b16 %v282
      %v358 = vunpack.c.l.b16 %v283
      %v359 = vunpack.c.l.b16 %v284
      %v360 = vunpack.c.l.b16 %v285
      %v361 = vunpack.c.l.b16 %v286
      %v362 = vunpack.c.l.b16 %v287
      %v363 = vunpack.c.l.b16 %v288
      %v364 = vunpack.c.l.b16 %v289
      %v365 = vunpack.c.l.b16 %v290
      %v366 = vunpack.c.l.b16 %v291
      %v367 = vpack.c.b16 %v336, %v335
      %v368 = vpack.c.b16 %v338, %v337
      %v369 = vpack.c.b16 %v340, %v339
      %v370 = vpack.c.b16 %v342, %v341
      %v371 = vpack.c.b16 %v344, %v343
      %v372 = vpack.c.b16 %v346, %v345
      %v373 = vpack.c.b16 %v348, %v347
      %v374 = vpack.c.b16 %v350, %v349
      %v375 = vpack.c.b16 %v352, %v351
      %v376 = vpack.c.b16 %v354, %v353
      %v377 = vpack.c.b16 %v356, %v355
      %v378 = vpack.c.b16 %v358, %v357
      %v379 = vpack.c.b16 %v360, %v359
      %v380 = vpack.c.b16 %v362, %v361
      %v381 = vpack.c.b16 %v364, %v363
      %v382 = vpack.c.b16 %v366, %v365
      %v387 = vunpack.c.l.b16 %v292
      %v388 = vunpack.c.l.b16 %v293
      %v389 = vunpack.c.l.b16 %v294
      %v390 = vunpack.c.l.b16 %v295
      %v391 = vpack.c.b16 %v388, %v387
      %v392 = vpack.c.b16 %v390, %v389
      %vm395 = vcmask 261120
      %v397 = vsel %vm395, %v367, 0
      %v400 = vsel %vm395, %v368, 0
      %v403 = vsel %vm395, %v369, 0
      %v406 = vsel %vm395, %v370, 0
      %v409 = vsel %vm395, %v371, 0
      %v412 = vsel %vm395, %v372, 0
      %v415 = vsel %vm395, %v373, 0
      %v418 = vsel %vm395, %v374, 0
      %v421 = vsel %vm395, %v375, 0
      %v424 = vsel %vm395, %v376, 0
      %v427 = vsel %vm395, %v377, 0
      %v430 = vsel %vm395, %v378, 0
      %v433 = vsel %vm395, %v379, 0
      %v436 = vsel %vm395, %v380, 0
      %v439 = vsel %vm395, %v381, 0
      %v442 = vsel %vm395, %v382, 0
      %444 = vmatprep.subr.bf16.mxu0 0
      %445 = vmatpush1.bf16.msra.mxu0 %v391
      %446 = vmatprep.subr.bf16.mxu0 0
      %447 = vmatpush1.bf16.msra.mxu0 %v392
      %448 = vmatprep.subr.bf16.mxu0 0
      %449 = vmatpush1.bf16.msra.mxu0 0
      %450 = vmatprep.subr.bf16.mxu0 0
      %451 = vmatpush1.bf16.msra.mxu0 0
      %452 = vmatprep.subr.bf16.mxu0 0
      %453 = vmatpush1.bf16.msra.mxu0 0
      %454 = vmatprep.subr.bf16.mxu0 0
      %455 = vmatpush1.bf16.msra.mxu0 0
      %456 = vmatprep.subr.bf16.mxu0 0
      %457 = vmatpush1.bf16.msra.mxu0 0
      %458 = vmatprep.subr.bf16.mxu0 0
      %459 = vmatpush1.bf16.msra.mxu0 0
      %460 = vmatprep.subr.bf16.mxu0 0
      %461 = vmatpush1.bf16.msra.mxu0 0
      %462 = vmatprep.subr.bf16.mxu0 0
      %463 = vmatpush1.bf16.msra.mxu0 0
      %464 = vmatprep.subr.bf16.mxu0 0
      %465 = vmatpush1.bf16.msra.mxu0 0
      %466 = vmatprep.subr.bf16.mxu0 0
      %467 = vmatpush1.bf16.msra.mxu0 0
      %468 = vmatprep.subr.bf16.mxu0 0
      %469 = vmatpush1.bf16.msra.mxu0 0
      %470 = vmatprep.subr.bf16.mxu0 0
      %471 = vmatpush1.bf16.msra.mxu0 0
      %472 = vmatprep.subr.bf16.mxu0 0
      %473 = vmatpush1.bf16.msra.mxu0 0
      %474 = vmatprep.subr.bf16.mxu0 0
      %475 = vmatpush1.bf16.msra.mxu0 0
      %476 = vmatprep.mubr.bf16.mxu0 0
      %477 = vmatmul.mubr.bf16.gmra.mrb[0].mxu0 %v397
      %v478 = vpop.f32.mrb[0].mxu0
      %v479 = vadd.f32 %v301, %v478
      %v480 = vpop.f32.mrb[0].mxu0
      %v481 = vpop.f32.mrb[0].mxu0
      %v482 = vadd.f32 %v301, %v481
      %v483 = vpop.f32.mrb[0].mxu0
      %484 = vmatprep.mubr.bf16.mxu0 0
      %485 = vmatmul.mubr.bf16.gmra.mrb[0].mxu0 %v400
      %v486 = vpop.f32.mrb[0].mxu0
      %v487 = vadd.f32 %v301, %v486
      %v488 = vpop.f32.mrb[0].mxu0
      %v489 = vpop.f32.mrb[0].mxu0
      %v490 = vadd.f32 %v301, %v489
      %v491 = vpop.f32.mrb[0].mxu0
      %492 = vmatprep.mubr.bf16.mxu0 0
      %493 = vmatmul.mubr.bf16.gmra.mrb[0].mxu0 %v403
      %v494 = vpop.f32.mrb[0].mxu0
      %v495 = vadd.f32 %v301, %v494
      %v496 = vpop.f32.mrb[0].mxu0
      %v497 = vpop.f32.mrb[0].mxu0
      %v498 = vadd.f32 %v301, %v497
      %v499 = vpop.f32.mrb[0].mxu0
      %500 = vmatprep.mubr.bf16.mxu0 0
      %501 = vmatmul.mubr.bf16.gmra.mrb[0].mxu0 %v406
      %v502 = vpop.f32.mrb[0].mxu0
      %v503 = vadd.f32 %v301, %v502
      %v504 = vpop.f32.mrb[0].mxu0
      %v505 = vpop.f32.mrb[0].mxu0
      %v506 = vadd.f32 %v301, %v505
      %v507 = vpop.f32.mrb[0].mxu0
      %508 = vmatprep.mubr.bf16.mxu0 0
      %509 = vmatmul.mubr.bf16.gmra.mrb[0].mxu0 %v409
      %v510 = vpop.f32.mrb[0].mxu0
      %v511 = vadd.f32 %v301, %v510
      %v512 = vpop.f32.mrb[0].mxu0
      %v513 = vpop.f32.mrb[0].mxu0
      %v514 = vadd.f32 %v301, %v513
      %v515 = vpop.f32.mrb[0].mxu0
      %516 = vmatprep.mubr.bf16.mxu0 0
      %517 = vmatmul.mubr.bf16.gmra.mrb[0].mxu0 %v412
      %v518 = vpop.f32.mrb[0].mxu0
      %v519 = vadd.f32 %v301, %v518
      %v520 = vpop.f32.mrb[0].mxu0
      %v521 = vpop.f32.mrb[0].mxu0
      %v522 = vadd.f32 %v301, %v521
      %v523 = vpop.f32.mrb[0].mxu0
      %524 = vmatprep.mubr.bf16.mxu0 0
      %525 = vmatmul.mubr.bf16.gmra.mrb[0].mxu0 %v415
      %v526 = vpop.f32.mrb[0].mxu0
      %v527 = vadd.f32 %v301, %v526
      %v528 = vpop.f32.mrb[0].mxu0
      %v529 = vpop.f32.mrb[0].mxu0
      %v530 = vadd.f32 %v301, %v529
      %v531 = vpop.f32.mrb[0].mxu0
      %532 = vmatprep.mubr.bf16.mxu0 0
      %533 = vmatmul.mubr.bf16.gmra.mrb[0].mxu0 %v418
      %v534 = vpop.f32.mrb[0].mxu0
      %v535 = vadd.f32 %v301, %v534
      %v536 = vpop.f32.mrb[0].mxu0
      %v537 = vpop.f32.mrb[0].mxu0
      %v538 = vadd.f32 %v301, %v537
      %v539 = vpop.f32.mrb[0].mxu0
      %540 = vmatprep.mubr.bf16.mxu0 0
      %541 = vmatmul.mubr.bf16.gmra.mrb[0].mxu0 %v421
      %v542 = vpop.f32.mrb[0].mxu0
      %v543 = vadd.f32 %v301, %v542
      %v544 = vpop.f32.mrb[0].mxu0
      %v545 = vpop.f32.mrb[0].mxu0
      %v546 = vadd.f32 %v301, %v545
      %v547 = vpop.f32.mrb[0].mxu0
      %548 = vmatprep.mubr.bf16.mxu0 0
      %549 = vmatmul.mubr.bf16.gmra.mrb[0].mxu0 %v424
      %v550 = vpop.f32.mrb[0].mxu0
      %v551 = vadd.f32 %v301, %v550
      %v552 = vpop.f32.mrb[0].mxu0
      %v553 = vpop.f32.mrb[0].mxu0
      %v554 = vadd.f32 %v301, %v553
      %v555 = vpop.f32.mrb[0].mxu0
      %556 = vmatprep.mubr.bf16.mxu0 0
      %557 = vmatmul.mubr.bf16.gmra.mrb[0].mxu0 %v427
      %v558 = vpop.f32.mrb[0].mxu0
      %v559 = vadd.f32 %v301, %v558
      %v560 = vpop.f32.mrb[0].mxu0
      %v561 = vpop.f32.mrb[0].mxu0
      %v562 = vadd.f32 %v301, %v561
      %v563 = vpop.f32.mrb[0].mxu0
      %564 = vmatprep.mubr.bf16.mxu0 0
      %565 = vmatmul.mubr.bf16.gmra.mrb[0].mxu0 %v430
      %v566 = vpop.f32.mrb[0].mxu0
      %v567 = vadd.f32 %v301, %v566
      %v568 = vpop.f32.mrb[0].mxu0
      %v569 = vpop.f32.mrb[0].mxu0
      %v570 = vadd.f32 %v301, %v569
      %v571 = vpop.f32.mrb[0].mxu0
      %572 = vmatprep.mubr.bf16.mxu0 0
      %573 = vmatmul.mubr.bf16.gmra.mrb[0].mxu0 %v433
      %v574 = vpop.f32.mrb[0].mxu0
      %v575 = vadd.f32 %v301, %v574
      %v576 = vpop.f32.mrb[0].mxu0
      %v577 = vpop.f32.mrb[0].mxu0
      %v578 = vadd.f32 %v301, %v577
      %v579 = vpop.f32.mrb[0].mxu0
      %580 = vmatprep.mubr.bf16.mxu0 0
      %581 = vmatmul.mubr.bf16.gmra.mrb[0].mxu0 %v436
      %v582 = vpop.f32.mrb[0].mxu0
      %v583 = vadd.f32 %v301, %v582
      %v584 = vpop.f32.mrb[0].mxu0
      %v585 = vpop.f32.mrb[0].mxu0
      %v586 = vadd.f32 %v301, %v585
      %v587 = vpop.f32.mrb[0].mxu0
      %588 = vmatprep.mubr.bf16.mxu0 0
      %589 = vmatmul.mubr.bf16.gmra.mrb[0].mxu0 %v439
      %v590 = vpop.f32.mrb[0].mxu0
      %v591 = vadd.f32 %v301, %v590
      %v592 = vpop.f32.mrb[0].mxu0
      %v593 = vpop.f32.mrb[0].mxu0
      %v594 = vadd.f32 %v301, %v593
      %v595 = vpop.f32.mrb[0].mxu0
      %596 = vmatprep.mubr.bf16.mxu0 0
      %597 = vmatmul.mubr.bf16.gmra.mrb[0].mxu0 %v442
      %v598 = vpop.f32.mrb[0].mxu0
      %v599 = vadd.f32 %v301, %v598
      %v600 = vpop.f32.mrb[0].mxu0
      %v601 = vpop.f32.mrb[0].mxu0
      %v602 = vadd.f32 %v301, %v601
      %v603 = vpop.f32.mrb[0].mxu0
      %604 = vdwg.mxu0
      %605 = vst [vmem:[%s257] sm:$0xff] %v479
      %606 = vst [vmem:[%s257 + $0x8] sm:$0xff] %v482
      %607 = vst [vmem:[%s257 + $0x10] sm:$0xff] %v487
      %608 = vst [vmem:[%s257 + $0x18] sm:$0xff] %v490
      %609 = vst [vmem:[%s257 + $0x20] sm:$0xff] %v495
      %610 = vst [vmem:[%s257 + $0x28] sm:$0xff] %v498
      %611 = vst [vmem:[%s257 + $0x30] sm:$0xff] %v503
      %612 = vst [vmem:[%s257 + $0x38] sm:$0xff] %v506
      %613 = vst [vmem:[%s257 + $0x40] sm:$0xff] %v511
      %614 = vst [vmem:[%s257 + $0x48] sm:$0xff] %v514
      %615 = vst [vmem:[%s257 + $0x50] sm:$0xff] %v519
      %616 = vst [vmem:[%s257 + $0x58] sm:$0xff] %v522
      %617 = vst [vmem:[%s257 + $0x60] sm:$0xff] %v527
      %618 = vst [vmem:[%s257 + $0x68] sm:$0xff] %v530
      %619 = vst [vmem:[%s257 + $0x70] sm:$0xff] %v535
      %620 = vst [vmem:[%s257 + $0x78] sm:$0xff] %v538
      %621 = vst [vmem:[%s257 + $0x80] sm:$0xff] %v543
      %622 = vst [vmem:[%s257 + $0x88] sm:$0xff] %v546
      %623 = vst [vmem:[%s257 + $0x90] sm:$0xff] %v551
      %624 = vst [vmem:[%s257 + $0x98] sm:$0xff] %v554
      %625 = vst [vmem:[%s257 + $0xa0] sm:$0xff] %v559
      %626 = vst [vmem:[%s257 + $0xa8] sm:$0xff] %v562
      %627 = vst [vmem:[%s257 + $0xb0] sm:$0xff] %v567
      %628 = vst [vmem:[%s257 + $0xb8] sm:$0xff] %v570
      %629 = vst [vmem:[%s257 + $0xc0] sm:$0xff] %v575
      %630 = vst [vmem:[%s257 + $0xc8] sm:$0xff] %v578
      %631 = vst [vmem:[%s257 + $0xd0] sm:$0xff] %v583
      %632 = vst [vmem:[%s257 + $0xd8] sm:$0xff] %v586
      %633 = vst [vmem:[%s257 + $0xe0] sm:$0xff] %v591
      %634 = vst [vmem:[%s257 + $0xe8] sm:$0xff] %v594
      %635 = vst [vmem:[%s257 + $0xf0] sm:$0xff] %v599
      %636 = vst [vmem:[%s257 + $0xf8] sm:$0xff] %v602
      %s637 = smul.u32 32, %s19
      %p638 = scmp.lt.s32.totalorder %s637, 63
      %s639 = scalar_select %p638, %s637, 63
      %p640 = scmp.lt.s32.totalorder %s20, 0
      %s641 = scalar_select %p640, %s20, 0
      %s642 = sadd.s32 %s641, %s639
      %s643 = smul.addr %s642, 8
      %s644 = scalar_lea.vmem %s3, %s643
      // Predicated region
      $region33: #{ocr_forward.13} parent=31 // pred_check
        %p645 = pneg %p135
      $region34: #{ocr_forward.13} parent=31 // pred_check_branch
        %647 = sbr.rel (%p645) target = $region36
      $region35: #{ocr_forward.13} parent=31 // pred_region
        %s648 = smul.u32 32, %s19
      $region36: #{ocr_forward.13} parent=31 // pred_fallthru
        _
    $region32: #{ocr_forward.13} parent=5 // pred_fallthru
      _
    %p649 = scmp.le.s32.totalorder 2, %s9
    // Predicated region
    $region37: #{ocr_forward.13} parent=5 // pred_check
      %p650 = pneg %p649
    $region38: #{ocr_forward.13} parent=5 // pred_check_branch
      %652 = sbr.rel (%p650) target = $region40
    $region39: #{ocr_forward.13} parent=5 // pred_region
      %s653 = ssub.s32 %s9, 2
      // Predicated region
      $region41: #{ocr_forward.13} parent=39 // pred_check
        %p654 = pneg %p141
      $region42: #{ocr_forward.13} parent=39 // pred_check_branch
        %656 = sbr.rel (%p654) target = $region44
      $region43: #{ocr_forward.13} parent=39 // pred_region
        %s657 = smul.u32 32, %s22
        %p658 = scmp.lt.s32.totalorder %s657, 63
        %s659 = scalar_select %p658, %s657, 63
        %p660 = scmp.lt.s32.totalorder %s23, 0
        %s661 = scalar_select %p660, %s23, 0
        %s662 = sadd.s32 %s661, %s659
        %s663 = smul.addr %s662, 8
        %s664 = scalar_lea.vmem %s3, %s663
      $region44: #{ocr_forward.13} parent=39 // pred_fallthru
        _
    $region40: #{ocr_forward.13} parent=5 // pred_fallthru
      _
  $region6: #{ocr_forward.13} parent=0 // loop_footer
    %s13 = sadd.s32 1, %s9
  $region7: #{ocr_forward.13} parent=0 // loop_footer_branch
    %8 = sbr.rel target = $region3
  $region8: #{ocr_forward.13} parent=0 // loop_exit
    _

// kernel: ocr_forward.12
$region0: #{ocr_forward.12}
  #allocation0 [shape = 'u32[]', space=smem, size = 0x4, offset = 0x4, fixed_abs, tag = 'smem constant byte address 0x4 - core index']
  #allocation1 [shape = 'u32[144,128]{1,0:T(1,128)}', space=vmem, size = 0x12000, scoped, tag = 'internal scratch']
  #allocation2 [shape = 'f32[256,128]{1,0:T(8,128)}', space=vmem, size = 0x20000, scoped, tag = 'scratch operand']
  %s0 = inlined_call_operand.vmem [shape: bf16[512,32], index: 0, kind: input, shape index: {}]
  %s1 = inlined_call_operand.vmem [shape: bf16[32,128], index: 1, kind: input, shape index: {}]
  %s2 = inlined_call_operand.vmem [shape: f32[1,128], index: 2, kind: input, shape index: {}]
  %s3 = inlined_call_operand.vmem [shape: f32[512,128], index: 3, kind: output, shape index: {}]
  %s4 = sld [smem:[#allocation0]]
  $region45: #{ocr_forward.12} parent=0
    _
  %s6 = ssub.s32 1, %s4
  %s7 = scalar_select 0, %s6, %s4
  loop: start=0, step=1, limit=4
  $region2: #{ocr_forward.12} parent=0 // loop_pre_header
    _
  $region3: #{ocr_forward.12} parent=0 // loop_header
    %s9 = sphi 0, %s13
    %p10 = scmp.ge.s32.totalorder %s9, 4
    %s16 = sphi 0, %s35
    %s17 = sphi 0, %s31
    %s18 = sphi 0, %s27
    %s19 = sphi 0, %s16
    %s20 = sphi 0, %s17
    %s21 = sphi 0, %s18
    %s22 = sphi 0, %s19
    %s23 = sphi 0, %s20
    %s24 = sphi 0, %s21
    %s40 = sphi 0, %s42
    %s43 = sphi 0, %s40
    %s44 = sphi 0, %s43
    %s60 = sphi 0, %s44
    %s68 = sphi 0, %s70
    %s71 = sphi 0, %s68
    %s72 = sphi 0, %s71
    %s88 = sphi 0, %s72
    %s94 = sphi 0, %s96
    %s97 = sphi 0, %s94
    %s98 = sphi 0, %s97
    %s114 = sphi 0, %s98
    %s122 = sphi 0, %s124
    %s125 = sphi 0, %s122
    %s126 = sphi 0, %s125
    %s142 = sphi 0, %s126
  $region4: #{ocr_forward.12} parent=0 // loop_header_branch
    %12 = sbr.rel (%p10) target = $region8
  $region5: #{ocr_forward.12} parent=0 // loop_body
    %s14 = ssub.s32 %s9, 1
    %s15 = ssub.s32 %s9, 2
    %s25 = sadd.s32 1, %s18
    %p26 = scmp.ge.s32.totalorder %s25, 1
    %s27 = scalar_select %p26, 0, %s25
    %s28 = sadd.s32 1, %s17
    %s29 = scalar_select %p26, %s28, %s17
    %p30 = scmp.ge.s32.totalorder %s29, 1
    %s31 = scalar_select %p30, 0, %s29
    %s32 = sadd.s32 1, %s16
    %s33 = scalar_select %p30, %s32, %s16
    %p34 = scmp.ge.s32.totalorder %s33, 2
    %s35 = scalar_select %p34, 0, %s33
    %s36 = ssub.s32 %s16, %s35
    %s37 = ssub.s32 %s18, %s27
    %s38 = sor.u32 %s36, %s37
    %p39 = scmp.eq.s32.totalorder %s38, 0
    %s41 = sadd.s32 %s40, 1
    %s42 = scalar_select %p39, %s40, %s41
    %p45 = pneg %p39
    %p46 = scmp.eq.s32.totalorder %s9, 1
    %p47 = por %p45, %p46
    %p48 = scmp.ne.s32.totalorder %s40, %s43
    %p49 = scmp.eq.s32.totalorder %s9, 0
    %p50 = por %p48, %p49
    %p51 = scmp.ne.s32.totalorder %s40, %s43
    %p52 = scmp.eq.s32.totalorder %s14, 1
    %p53 = por %p51, %p52
    %p54 = scmp.ne.s32.totalorder %s43, %s44
    %p55 = scmp.eq.s32.totalorder %s14, 0
    %p56 = por %p54, %p55
    %p57 = scmp.ne.s32.totalorder %s43, %s44
    %p58 = scmp.eq.s32.totalorder %s15, 1
    %p59 = por %p57, %p58
    %p61 = scmp.ne.s32.totalorder %s44, %s60
    %p62 = scmp.eq.s32.totalorder %s15, 0
    %p63 = por %p61, %p62
    %s64 = ssub.s32 %s18, %s27
    %s65 = ssub.s32 %s17, %s31
    %s66 = sor.u32 %s64, %s65
    %p67 = scmp.eq.s32.totalorder %s66, 0
    %s69 = sadd.s32 %s68, 1
    %s70 = scalar_select %p67, %s68, %s69
    %p73 = pneg %p67
    %p74 = scmp.eq.s32.totalorder %s9, 1
    %p75 = por %p73, %p74
    %p76 = scmp.ne.s32.totalorder %s68, %s71
    %p77 = scmp.eq.s32.totalorder %s9, 0
    %p78 = por %p76, %p77
    %p79 = scmp.ne.s32.totalorder %s68, %s71
    %p80 = scmp.eq.s32.totalorder %s14, 1
    %p81 = por %p79, %p80
    %p82 = scmp.ne.s32.totalorder %s71, %s72
    %p83 = scmp.eq.s32.totalorder %s14, 0
    %p84 = por %p82, %p83
    %p85 = scmp.ne.s32.totalorder %s71, %s72
    %p86 = scmp.eq.s32.totalorder %s15, 1
    %p87 = por %p85, %p86
    %p89 = scmp.ne.s32.totalorder %s72, %s88
    %p90 = scmp.eq.s32.totalorder %s15, 0
    %p91 = por %p89, %p90
    %s92 = ssub.s32 %s17, %s31
    %p93 = scmp.eq.s32.totalorder %s92, 0
    %s95 = sadd.s32 %s94, 1
    %s96 = scalar_select %p93, %s94, %s95
    %p99 = pneg %p93
    %p100 = scmp.eq.s32.totalorder %s9, 1
    %p101 = por %p99, %p100
    %p102 = scmp.ne.s32.totalorder %s94, %s97
    %p103 = scmp.eq.s32.totalorder %s9, 0
    %p104 = por %p102, %p103
    %p105 = scmp.ne.s32.totalorder %s94, %s97
    %p106 = scmp.eq.s32.totalorder %s14, 1
    %p107 = por %p105, %p106
    %p108 = scmp.ne.s32.totalorder %s97, %s98
    %p109 = scmp.eq.s32.totalorder %s14, 0
    %p110 = por %p108, %p109
    %p111 = scmp.ne.s32.totalorder %s97, %s98
    %p112 = scmp.eq.s32.totalorder %s15, 1
    %p113 = por %p111, %p112
    %p115 = scmp.ne.s32.totalorder %s98, %s114
    %p116 = scmp.eq.s32.totalorder %s15, 0
    %p117 = por %p115, %p116
    %s118 = ssub.s32 %s16, %s35
    %s119 = ssub.s32 %s17, %s31
    %s120 = sor.u32 %s118, %s119
    %p121 = scmp.eq.s32.totalorder %s120, 0
    %s123 = sadd.s32 %s122, 1
    %s124 = scalar_select %p121, %s122, %s123
    %p127 = pneg %p121
    %p128 = scmp.eq.s32.totalorder %s9, 1
    %p129 = por %p127, %p128
    %p130 = scmp.ne.s32.totalorder %s122, %s125
    %p131 = scmp.eq.s32.totalorder %s9, 0
    %p132 = por %p130, %p131
    %p133 = scmp.ne.s32.totalorder %s122, %s125
    %p134 = scmp.eq.s32.totalorder %s14, 1
    %p135 = por %p133, %p134
    %p136 = scmp.ne.s32.totalorder %s125, %s126
    %p137 = scmp.eq.s32.totalorder %s14, 0
    %p138 = por %p136, %p137
    %p139 = scmp.ne.s32.totalorder %s125, %s126
    %p140 = scmp.eq.s32.totalorder %s15, 1
    %p141 = por %p139, %p140
    %p143 = scmp.ne.s32.totalorder %s126, %s142
    %p144 = scmp.eq.s32.totalorder %s15, 0
    %p145 = por %p143, %p144
    %p146 = scmp.le.s32.totalorder 1, %s9
    %p147 = scmp.lt.s32.totalorder %s9, 3
    %p148 = pnand %p146, %p147
    %p149 = pneg %p148
    // Predicated region
    $region9: #{ocr_forward.12} parent=5 // pred_check
      _
    $region10: #{ocr_forward.12} parent=5 // pred_check_branch
      %151 = sbr.rel (%p148) target = $region12
    $region11: #{ocr_forward.12} parent=5 // pred_region
      %s152 = ssub.s32 %s9, 1
      // Predicated region
      $region13: #{ocr_forward.12} parent=11 // pred_check
        %p153 = pneg %p84
      $region14: #{ocr_forward.12} parent=11 // pred_check_branch
        %155 = sbr.rel (%p153) target = $region16
      $region15: #{ocr_forward.12} parent=11 // pred_region
        %s156 = smul.u32 4, %s21
        %p157 = scmp.lt.s32.totalorder %s156, 3
        %s158 = scalar_select %p157, %s156, 3
        %p159 = scmp.lt.s32.totalorder %s20, 0
        %s160 = scalar_select %p159, %s20, 0
        %s161 = sadd.s32 %s160, %s158
        %s162 = smul.addr %s161, 4
        %s163 = scalar_lea.vmem %s1, %s162
        %s164 = smul.u32 4, %s21
      $region16: #{ocr_forward.12} parent=11 // pred_fallthru
        _
      // Predicated region
      $region17: #{ocr_forward.12} parent=11 // pred_check
        %p165 = pneg %p110
      $region18: #{ocr_forward.12} parent=11 // pred_check_branch
        %167 = sbr.rel (%p165) target = $region20
      $region19: #{ocr_forward.12} parent=11 // pred_region
        %p168 = scmp.lt.s32.totalorder %s20, 0
        %s169 = scalar_select %p168, %s20, 0
        %s170 = scalar_lea.vmem %s2, %s169
      $region20: #{ocr_forward.12} parent=11 // pred_fallthru
        _
    $region12: #{ocr_forward.12} parent=5 // pred_fallthru
      _
    %p171 = scmp.lt.s32.totalorder %s9, 2
    // Predicated region
    $region21: #{ocr_forward.12} parent=5 // pred_check
      %p172 = pneg %p171
    $region22: #{ocr_forward.12} parent=5 // pred_check_branch
      %174 = sbr.rel (%p172) target = $region24
    $region23: #{ocr_forward.12} parent=5 // pred_region
      // Predicated region
      $region25: #{ocr_forward.12} parent=23 // pred_check
        %p175 = pneg %p50
      $region26: #{ocr_forward.12} parent=23 // pred_check_branch
        %177 = sbr.rel (%p175) target = $region28
      $region27: #{ocr_forward.12} parent=23 // pred_region
        %s178 = smul.u32 32, %s16
        %p179 = scmp.lt.s32.totalorder %s178, 63
        %s180 = scalar_select %p179, %s178, 63
        %p181 = scmp.lt.s32.totalorder %s18, 0
        %s182 = scalar_select %p181, %s18, 0
        %s183 = sadd.s32 %s182, %s180
        %s184 = smul.addr %s183, 4
        %s185 = scalar_lea.vmem %s0, %s184
        %s186 = smul.u32 32, %s16
      $region28: #{ocr_forward.12} parent=23 // pred_fallthru
        _
    $region24: #{ocr_forward.12} parent=5 // pred_fallthru
      _
    %p187 = scmp.le.s32.totalorder 1, %s9
    %p188 = scmp.lt.s32.totalorder %s9, 3
    %p189 = pnand %p187, %p188
    %p190 = pneg %p189
    // Predicated region
    $region29: #{ocr_forward.12} parent=5 // pred_check
      _
    $region30: #{ocr_forward.12} parent=5 // pred_check_branch
      %192 = sbr.rel (%p189) target = $region32
    $region31: #{ocr_forward.12} parent=5 // pred_region
      %s193 = ssub.s32 %s9, 1
      %s194 = smul.u32 32, %s19
      %p195 = scmp.lt.s32.totalorder %s194, 63
      %s196 = scalar_select %p195, %s194, 63
      %p197 = scmp.lt.s32.totalorder %s21, 0
      %s198 = scalar_select %p197, %s21, 0
      %s199 = sadd.s32 %s198, %s196
      %s200 = smul.addr %s199, 4
      %s201 = scalar_lea.vmem %s0, %s200
      %p202 = pneg %p56
      %p203 = pneg %p53
      %s204 = smul.u32 4, %s21
      %p205 = scmp.lt.s32.totalorder %s204, 3
      %s206 = scalar_select %p205, %s204, 3
      %p207 = scmp.lt.s32.totalorder %s20, 0
      %s208 = scalar_select %p207, %s20, 0
      %s209 = sadd.s32 %s208, %s206
      %s210 = smul.addr %s209, 4
      %s211 = scalar_lea.vmem %s1, %s210
      %p212 = pneg %p84
      %p213 = pneg %p81
      %p214 = scmp.lt.s32.totalorder %s20, 0
      %s215 = scalar_select %p214, %s20, 0
      %s216 = scalar_lea.vmem %s2, %s215
      %p217 = pneg %p110
      %p218 = pneg %p107
      %p219 = pneg %p138
      %p220 = pneg %p135
      %s221 = smul.u32 32, %s19
      %p222 = scmp.lt.s32.totalorder %s221, 63
      %s223 = scalar_select %p222, %s221, 63
      %p224 = scmp.lt.s32.totalorder %s20, 0
      %s225 = scalar_select %p224, %s20, 0
      %s226 = sadd.s32 %s225, %s223
      %s227 = smul.addr %s226, 8
      %s228 = scalar_lea.vmem %s3, %s227
      %s229 = smul.u32 32, %s19
      %p230 = scmp.lt.s32.totalorder %s229, 63
      %s231 = scalar_select %p230, %s229, 63
      %p232 = scmp.lt.s32.totalorder %s21, 0
      %s233 = scalar_select %p232, %s21, 0
      %s234 = sadd.s32 %s233, %s231
      %s235 = smul.addr %s234, 4
      %s236 = scalar_lea.vmem %s0, %s235
      %s237 = smul.u32 32, %s19
      %s238 = smul.u32 4, %s21
      %p239 = scmp.lt.s32.totalorder %s238, 3
      %s240 = scalar_select %p239, %s238, 3
      %p241 = scmp.lt.s32.totalorder %s20, 0
      %s242 = scalar_select %p241, %s20, 0
      %s243 = sadd.s32 %s242, %s240
      %s244 = smul.addr %s243, 4
      %s245 = scalar_lea.vmem %s1, %s244
      %s246 = smul.u32 4, %s21
      %p247 = scmp.lt.s32.totalorder %s20, 0
      %s248 = scalar_select %p247, %s20, 0
      %s249 = scalar_lea.vmem %s2, %s248
      %s250 = smul.u32 32, %s19
      %p251 = scmp.lt.s32.totalorder %s250, 63
      %s252 = scalar_select %p251, %s250, 63
      %p253 = scmp.lt.s32.totalorder %s20, 0
      %s254 = scalar_select %p253, %s20, 0
      %s255 = sadd.s32 %s254, %s252
      %s256 = smul.addr %s255, 8
      %s257 = scalar_lea.vmem %s3, %s256
      %s258 = smul.u32 32, %s19
      %v260 = vld [vmem:[%s236] sm:$0xf]
      %v261 = vld [vmem:[%s236 + $0x4] sm:$0xf]
      %v262 = vld [vmem:[%s236 + $0x8] sm:$0xf]
      %v263 = vld [vmem:[%s236 + $0xc] sm:$0xf]
      %v264 = vld [vmem:[%s236 + $0x10] sm:$0xf]
      %v265 = vld [vmem:[%s236 + $0x14] sm:$0xf]
      %v266 = vld [vmem:[%s236 + $0x18] sm:$0xf]
      %v267 = vld [vmem:[%s236 + $0x1c] sm:$0xf]
      %v268 = vld [vmem:[%s236 + $0x20] sm:$0xf]
      %v269 = vld [vmem:[%s236 + $0x24] sm:$0xf]
      %v270 = vld [vmem:[%s236 + $0x28] sm:$0xf]
      %v271 = vld [vmem:[%s236 + $0x2c] sm:$0xf]
      %v272 = vld [vmem:[%s236 + $0x30] sm:$0xf]
      %v273 = vld [vmem:[%s236 + $0x34] sm:$0xf]
      %v274 = vld [vmem:[%s236 + $0x38] sm:$0xf]
      %v275 = vld [vmem:[%s236 + $0x3c] sm:$0xf]
      %v276 = vld [vmem:[%s236 + $0x40] sm:$0xf]
      %v277 = vld [vmem:[%s236 + $0x44] sm:$0xf]
      %v278 = vld [vmem:[%s236 + $0x48] sm:$0xf]
      %v279 = vld [vmem:[%s236 + $0x4c] sm:$0xf]
      %v280 = vld [vmem:[%s236 + $0x50] sm:$0xf]
      %v281 = vld [vmem:[%s236 + $0x54] sm:$0xf]
      %v282 = vld [vmem:[%s236 + $0x58] sm:$0xf]
      %v283 = vld [vmem:[%s236 + $0x5c] sm:$0xf]
      %v284 = vld [vmem:[%s236 + $0x60] sm:$0xf]
      %v285 = vld [vmem:[%s236 + $0x64] sm:$0xf]
      %v286 = vld [vmem:[%s236 + $0x68] sm:$0xf]
      %v287 = vld [vmem:[%s236 + $0x6c] sm:$0xf]
      %v288 = vld [vmem:[%s236 + $0x70] sm:$0xf]
      %v289 = vld [vmem:[%s236 + $0x74] sm:$0xf]
      %v290 = vld [vmem:[%s236 + $0x78] sm:$0xf]
      %v291 = vld [vmem:[%s236 + $0x7c] sm:$0xf]
      %v292 = vld [vmem:[%s245] sm:$0xf]
      %v293 = vld [vmem:[%s245 + $0x4] sm:$0xf]
      %v294 = vld [vmem:[%s245 + $0x8] sm:$0xf]
      %v295 = vld [vmem:[%s245 + $0xc] sm:$0xf]
      %v296 = vld [vmem:[%s249] sm:$0x1]
      %v298 = vlaneseq
      %v299 = vshrl.u32 %v298, 7
      %v300 = vsub.s32 0, %v299
      %v301 = vrot.slane %v296, %v300
      %v335 = vunpack.c.l.b16 %v260
      %v336 = vunpack.c.l.b16 %v261
      %v337 = vunpack.c.l.b16 %v262
      %v338 = vunpack.c.l.b16 %v263
      %v339 = vunpack.c.l.b16 %v264
      %v340 = vunpack.c.l.b16 %v265
      %v341 = vunpack.c.l.b16 %v266
      %v342 = vunpack.c.l.b16 %v267
      %v343 = vunpack.c.l.b16 %v268
      %v344 = vunpack.c.l.b16 %v269
      %v345 = vunpack.c.l.b16 %v270
      %v346 = vunpack.c.l.b16 %v271
      %v347 = vunpack.c.l.b16 %v272
      %v348 = vunpack.c.l.b16 %v273
      %v349 = vunpack.c.l.b16 %v274
      %v350 = vunpack.c.l.b16 %v275
      %v351 = vunpack.c.l.b16 %v276
      %v352 = vunpack.c.l.b16 %v277
      %v353 = vunpack.c.l.b16 %v278
      %v354 = vunpack.c.l.b16 %v279
      %v355 = vunpack.c.l.b16 %v280
      %v356 = vunpack.c.l.b16 %v281
      %v357 = vunpack.c.l.b16 %v282
      %v358 = vunpack.c.l.b16 %v283
      %v359 = vunpack.c.l.b16 %v284
      %v360 = vunpack.c.l.b16 %v285
      %v361 = vunpack.c.l.b16 %v286
      %v362 = vunpack.c.l.b16 %v287
      %v363 = vunpack.c.l.b16 %v288
      %v364 = vunpack.c.l.b16 %v289
      %v365 = vunpack.c.l.b16 %v290
      %v366 = vunpack.c.l.b16 %v291
      %v367 = vpack.c.b16 %v336, %v335
      %v368 = vpack.c.b16 %v338, %v337
      %v369 = vpack.c.b16 %v340, %v339
      %v370 = vpack.c.b16 %v342, %v341
      %v371 = vpack.c.b16 %v344, %v343
      %v372 = vpack.c.b16 %v346, %v345
      %v373 = vpack.c.b16 %v348, %v347
      %v374 = vpack.c.b16 %v350, %v349
      %v375 = vpack.c.b16 %v352, %v351
      %v376 = vpack.c.b16 %v354, %v353
      %v377 = vpack.c.b16 %v356, %v355
      %v378 = vpack.c.b16 %v358, %v357
      %v379 = vpack.c.b16 %v360, %v359
      %v380 = vpack.c.b16 %v362, %v361
      %v381 = vpack.c.b16 %v364, %v363
      %v382 = vpack.c.b16 %v366, %v365
      %v387 = vunpack.c.l.b16 %v292
      %v388 = vunpack.c.l.b16 %v293
      %v389 = vunpack.c.l.b16 %v294
      %v390 = vunpack.c.l.b16 %v295
      %v391 = vpack.c.b16 %v388, %v387
      %v392 = vpack.c.b16 %v390, %v389
      %vm395 = vcmask 261120
      %v397 = vsel %vm395, %v367, 0
      %v400 = vsel %vm395, %v368, 0
      %v403 = vsel %vm395, %v369, 0
      %v406 = vsel %vm395, %v370, 0
      %v409 = vsel %vm395, %v371, 0
      %v412 = vsel %vm395, %v372, 0
      %v415 = vsel %vm395, %v373, 0
      %v418 = vsel %vm395, %v374, 0
      %v421 = vsel %vm395, %v375, 0
      %v424 = vsel %vm395, %v376, 0
      %v427 = vsel %vm395, %v377, 0
      %v430 = vsel %vm395, %v378, 0
      %v433 = vsel %vm395, %v379, 0
      %v436 = vsel %vm395, %v380, 0
      %v439 = vsel %vm395, %v381, 0
      %v442 = vsel %vm395, %v382, 0
      %444 = vmatprep.subr.bf16.mxu0 0
      %445 = vmatpush1.bf16.msra.mxu0 %v391
      %446 = vmatprep.subr.bf16.mxu0 0
      %447 = vmatpush1.bf16.msra.mxu0 %v392
      %448 = vmatprep.subr.bf16.mxu0 0
      %449 = vmatpush1.bf16.msra.mxu0 0
      %450 = vmatprep.subr.bf16.mxu0 0
      %451 = vmatpush1.bf16.msra.mxu0 0
      %452 = vmatprep.subr.bf16.mxu0 0
      %453 = vmatpush1.bf16.msra.mxu0 0
      %454 = vmatprep.subr.bf16.mxu0 0
      %455 = vmatpush1.bf16.msra.mxu0 0
      %456 = vmatprep.subr.bf16.mxu0 0
      %457 = vmatpush1.bf16.msra.mxu0 0
      %458 = vmatprep.subr.bf16.mxu0 0
      %459 = vmatpush1.bf16.msra.mxu0 0
      %460 = vmatprep.subr.bf16.mxu0 0
      %461 = vmatpush1.bf16.msra.mxu0 0
      %462 = vmatprep.subr.bf16.mxu0 0
      %463 = vmatpush1.bf16.msra.mxu0 0
      %464 = vmatprep.subr.bf16.mxu0 0
      %465 = vmatpush1.bf16.msra.mxu0 0
      %466 = vmatprep.subr.bf16.mxu0 0
      %467 = vmatpush1.bf16.msra.mxu0 0
      %468 = vmatprep.subr.bf16.mxu0 0
      %469 = vmatpush1.bf16.msra.mxu0 0
      %470 = vmatprep.subr.bf16.mxu0 0
      %471 = vmatpush1.bf16.msra.mxu0 0
      %472 = vmatprep.subr.bf16.mxu0 0
      %473 = vmatpush1.bf16.msra.mxu0 0
      %474 = vmatprep.subr.bf16.mxu0 0
      %475 = vmatpush1.bf16.msra.mxu0 0
      %476 = vmatprep.mubr.bf16.mxu0 0
      %477 = vmatmul.mubr.bf16.gmra.mrb[0].mxu0 %v397
      %v478 = vpop.f32.mrb[0].mxu0
      %v479 = vadd.f32 %v301, %v478
      %v480 = vpop.f32.mrb[0].mxu0
      %v481 = vpop.f32.mrb[0].mxu0
      %v482 = vadd.f32 %v301, %v481
      %v483 = vpop.f32.mrb[0].mxu0
      %484 = vmatprep.mubr.bf16.mxu0 0
      %485 = vmatmul.mubr.bf16.gmra.mrb[0].mxu0 %v400
      %v486 = vpop.f32.mrb[0].mxu0
      %v487 = vadd.f32 %v301, %v486
      %v488 = vpop.f32.mrb[0].mxu0
      %v489 = vpop.f32.mrb[0].mxu0
      %v490 = vadd.f32 %v301, %v489
      %v491 = vpop.f32.mrb[0].mxu0
      %492 = vmatprep.mubr.bf16.mxu0 0
      %493 = vmatmul.mubr.bf16.gmra.mrb[0].mxu0 %v403
      %v494 = vpop.f32.mrb[0].mxu0
      %v495 = vadd.f32 %v301, %v494
      %v496 = vpop.f32.mrb[0].mxu0
      %v497 = vpop.f32.mrb[0].mxu0
      %v498 = vadd.f32 %v301, %v497
      %v499 = vpop.f32.mrb[0].mxu0
      %500 = vmatprep.mubr.bf16.mxu0 0
      %501 = vmatmul.mubr.bf16.gmra.mrb[0].mxu0 %v406
      %v502 = vpop.f32.mrb[0].mxu0
      %v503 = vadd.f32 %v301, %v502
      %v504 = vpop.f32.mrb[0].mxu0
      %v505 = vpop.f32.mrb[0].mxu0
      %v506 = vadd.f32 %v301, %v505
      %v507 = vpop.f32.mrb[0].mxu0
      %508 = vmatprep.mubr.bf16.mxu0 0
      %509 = vmatmul.mubr.bf16.gmra.mrb[0].mxu0 %v409
      %v510 = vpop.f32.mrb[0].mxu0
      %v511 = vadd.f32 %v301, %v510
      %v512 = vpop.f32.mrb[0].mxu0
      %v513 = vpop.f32.mrb[0].mxu0
      %v514 = vadd.f32 %v301, %v513
      %v515 = vpop.f32.mrb[0].mxu0
      %516 = vmatprep.mubr.bf16.mxu0 0
      %517 = vmatmul.mubr.bf16.gmra.mrb[0].mxu0 %v412
      %v518 = vpop.f32.mrb[0].mxu0
      %v519 = vadd.f32 %v301, %v518
      %v520 = vpop.f32.mrb[0].mxu0
      %v521 = vpop.f32.mrb[0].mxu0
      %v522 = vadd.f32 %v301, %v521
      %v523 = vpop.f32.mrb[0].mxu0
      %524 = vmatprep.mubr.bf16.mxu0 0
      %525 = vmatmul.mubr.bf16.gmra.mrb[0].mxu0 %v415
      %v526 = vpop.f32.mrb[0].mxu0
      %v527 = vadd.f32 %v301, %v526
      %v528 = vpop.f32.mrb[0].mxu0
      %v529 = vpop.f32.mrb[0].mxu0
      %v530 = vadd.f32 %v301, %v529
      %v531 = vpop.f32.mrb[0].mxu0
      %532 = vmatprep.mubr.bf16.mxu0 0
      %533 = vmatmul.mubr.bf16.gmra.mrb[0].mxu0 %v418
      %v534 = vpop.f32.mrb[0].mxu0
      %v535 = vadd.f32 %v301, %v534
      %v536 = vpop.f32.mrb[0].mxu0
      %v537 = vpop.f32.mrb[0].mxu0
      %v538 = vadd.f32 %v301, %v537
      %v539 = vpop.f32.mrb[0].mxu0
      %540 = vmatprep.mubr.bf16.mxu0 0
      %541 = vmatmul.mubr.bf16.gmra.mrb[0].mxu0 %v421
      %v542 = vpop.f32.mrb[0].mxu0
      %v543 = vadd.f32 %v301, %v542
      %v544 = vpop.f32.mrb[0].mxu0
      %v545 = vpop.f32.mrb[0].mxu0
      %v546 = vadd.f32 %v301, %v545
      %v547 = vpop.f32.mrb[0].mxu0
      %548 = vmatprep.mubr.bf16.mxu0 0
      %549 = vmatmul.mubr.bf16.gmra.mrb[0].mxu0 %v424
      %v550 = vpop.f32.mrb[0].mxu0
      %v551 = vadd.f32 %v301, %v550
      %v552 = vpop.f32.mrb[0].mxu0
      %v553 = vpop.f32.mrb[0].mxu0
      %v554 = vadd.f32 %v301, %v553
      %v555 = vpop.f32.mrb[0].mxu0
      %556 = vmatprep.mubr.bf16.mxu0 0
      %557 = vmatmul.mubr.bf16.gmra.mrb[0].mxu0 %v427
      %v558 = vpop.f32.mrb[0].mxu0
      %v559 = vadd.f32 %v301, %v558
      %v560 = vpop.f32.mrb[0].mxu0
      %v561 = vpop.f32.mrb[0].mxu0
      %v562 = vadd.f32 %v301, %v561
      %v563 = vpop.f32.mrb[0].mxu0
      %564 = vmatprep.mubr.bf16.mxu0 0
      %565 = vmatmul.mubr.bf16.gmra.mrb[0].mxu0 %v430
      %v566 = vpop.f32.mrb[0].mxu0
      %v567 = vadd.f32 %v301, %v566
      %v568 = vpop.f32.mrb[0].mxu0
      %v569 = vpop.f32.mrb[0].mxu0
      %v570 = vadd.f32 %v301, %v569
      %v571 = vpop.f32.mrb[0].mxu0
      %572 = vmatprep.mubr.bf16.mxu0 0
      %573 = vmatmul.mubr.bf16.gmra.mrb[0].mxu0 %v433
      %v574 = vpop.f32.mrb[0].mxu0
      %v575 = vadd.f32 %v301, %v574
      %v576 = vpop.f32.mrb[0].mxu0
      %v577 = vpop.f32.mrb[0].mxu0
      %v578 = vadd.f32 %v301, %v577
      %v579 = vpop.f32.mrb[0].mxu0
      %580 = vmatprep.mubr.bf16.mxu0 0
      %581 = vmatmul.mubr.bf16.gmra.mrb[0].mxu0 %v436
      %v582 = vpop.f32.mrb[0].mxu0
      %v583 = vadd.f32 %v301, %v582
      %v584 = vpop.f32.mrb[0].mxu0
      %v585 = vpop.f32.mrb[0].mxu0
      %v586 = vadd.f32 %v301, %v585
      %v587 = vpop.f32.mrb[0].mxu0
      %588 = vmatprep.mubr.bf16.mxu0 0
      %589 = vmatmul.mubr.bf16.gmra.mrb[0].mxu0 %v439
      %v590 = vpop.f32.mrb[0].mxu0
      %v591 = vadd.f32 %v301, %v590
      %v592 = vpop.f32.mrb[0].mxu0
      %v593 = vpop.f32.mrb[0].mxu0
      %v594 = vadd.f32 %v301, %v593
      %v595 = vpop.f32.mrb[0].mxu0
      %596 = vmatprep.mubr.bf16.mxu0 0
      %597 = vmatmul.mubr.bf16.gmra.mrb[0].mxu0 %v442
      %v598 = vpop.f32.mrb[0].mxu0
      %v599 = vadd.f32 %v301, %v598
      %v600 = vpop.f32.mrb[0].mxu0
      %v601 = vpop.f32.mrb[0].mxu0
      %v602 = vadd.f32 %v301, %v601
      %v603 = vpop.f32.mrb[0].mxu0
      %604 = vdwg.mxu0
      %v605 = vmax.f32 %v479, 0.0
      %v606 = vmax.f32 %v482, 0.0
      %v607 = vmax.f32 %v487, 0.0
      %v608 = vmax.f32 %v490, 0.0
      %v609 = vmax.f32 %v495, 0.0
      %v610 = vmax.f32 %v498, 0.0
      %v611 = vmax.f32 %v503, 0.0
      %v612 = vmax.f32 %v506, 0.0
      %v613 = vmax.f32 %v511, 0.0
      %v614 = vmax.f32 %v514, 0.0
      %v615 = vmax.f32 %v519, 0.0
      %v616 = vmax.f32 %v522, 0.0
      %v617 = vmax.f32 %v527, 0.0
      %v618 = vmax.f32 %v530, 0.0
      %v619 = vmax.f32 %v535, 0.0
      %v620 = vmax.f32 %v538, 0.0
      %v621 = vmax.f32 %v543, 0.0
      %v622 = vmax.f32 %v546, 0.0
      %v623 = vmax.f32 %v551, 0.0
      %v624 = vmax.f32 %v554, 0.0
      %v625 = vmax.f32 %v559, 0.0
      %v626 = vmax.f32 %v562, 0.0
      %v627 = vmax.f32 %v567, 0.0
      %v628 = vmax.f32 %v570, 0.0
      %v629 = vmax.f32 %v575, 0.0
      %v630 = vmax.f32 %v578, 0.0
      %v631 = vmax.f32 %v583, 0.0
      %v632 = vmax.f32 %v586, 0.0
      %v633 = vmax.f32 %v591, 0.0
      %v634 = vmax.f32 %v594, 0.0
      %v635 = vmax.f32 %v599, 0.0
      %v636 = vmax.f32 %v602, 0.0
      %637 = vst [vmem:[%s257] sm:$0xff] %v605
      %638 = vst [vmem:[%s257 + $0x8] sm:$0xff] %v606
      %639 = vst [vmem:[%s257 + $0x10] sm:$0xff] %v607
      %640 = vst [vmem:[%s257 + $0x18] sm:$0xff] %v608
      %641 = vst [vmem:[%s257 + $0x20] sm:$0xff] %v609
      %642 = vst [vmem:[%s257 + $0x28] sm:$0xff] %v610
      %643 = vst [vmem:[%s257 + $0x30] sm:$0xff] %v611
      %644 = vst [vmem:[%s257 + $0x38] sm:$0xff] %v612
      %645 = vst [vmem:[%s257 + $0x40] sm:$0xff] %v613
      %646 = vst [vmem:[%s257 + $0x48] sm:$0xff] %v614
      %647 = vst [vmem:[%s257 + $0x50] sm:$0xff] %v615
      %648 = vst [vmem:[%s257 + $0x58] sm:$0xff] %v616
      %649 = vst [vmem:[%s257 + $0x60] sm:$0xff] %v617
      %650 = vst [vmem:[%s257 + $0x68] sm:$0xff] %v618
      %651 = vst [vmem:[%s257 + $0x70] sm:$0xff] %v619
      %652 = vst [vmem:[%s257 + $0x78] sm:$0xff] %v620
      %653 = vst [vmem:[%s257 + $0x80] sm:$0xff] %v621
      %654 = vst [vmem:[%s257 + $0x88] sm:$0xff] %v622
      %655 = vst [vmem:[%s257 + $0x90] sm:$0xff] %v623
      %656 = vst [vmem:[%s257 + $0x98] sm:$0xff] %v624
      %657 = vst [vmem:[%s257 + $0xa0] sm:$0xff] %v625
      %658 = vst [vmem:[%s257 + $0xa8] sm:$0xff] %v626
      %659 = vst [vmem:[%s257 + $0xb0] sm:$0xff] %v627
      %660 = vst [vmem:[%s257 + $0xb8] sm:$0xff] %v628
      %661 = vst [vmem:[%s257 + $0xc0] sm:$0xff] %v629
      %662 = vst [vmem:[%s257 + $0xc8] sm:$0xff] %v630
      %663 = vst [vmem:[%s257 + $0xd0] sm:$0xff] %v631
      %664 = vst [vmem:[%s257 + $0xd8] sm:$0xff] %v632
      %665 = vst [vmem:[%s257 + $0xe0] sm:$0xff] %v633
      %666 = vst [vmem:[%s257 + $0xe8] sm:$0xff] %v634
      %667 = vst [vmem:[%s257 + $0xf0] sm:$0xff] %v635
      %668 = vst [vmem:[%s257 + $0xf8] sm:$0xff] %v636
      %s669 = smul.u32 32, %s19
      %p670 = scmp.lt.s32.totalorder %s669, 63
      %s671 = scalar_select %p670, %s669, 63
      %p672 = scmp.lt.s32.totalorder %s20, 0
      %s673 = scalar_select %p672, %s20, 0
      %s674 = sadd.s32 %s673, %s671
      %s675 = smul.addr %s674, 8
      %s676 = scalar_lea.vmem %s3, %s675
      // Predicated region
      $region33: #{ocr_forward.12} parent=31 // pred_check
        %p677 = pneg %p135
      $region34: #{ocr_forward.12} parent=31 // pred_check_branch
        %679 = sbr.rel (%p677) target = $region36
      $region35: #{ocr_forward.12} parent=31 // pred_region
        %s680 = smul.u32 32, %s19
      $region36: #{ocr_forward.12} parent=31 // pred_fallthru
        _
    $region32: #{ocr_forward.12} parent=5 // pred_fallthru
      _
    %p681 = scmp.le.s32.totalorder 2, %s9
    // Predicated region
    $region37: #{ocr_forward.12} parent=5 // pred_check
      %p682 = pneg %p681
    $region38: #{ocr_forward.12} parent=5 // pred_check_branch
      %684 = sbr.rel (%p682) target = $region40
    $region39: #{ocr_forward.12} parent=5 // pred_region
      %s685 = ssub.s32 %s9, 2
      // Predicated region
      $region41: #{ocr_forward.12} parent=39 // pred_check
        %p686 = pneg %p141
      $region42: #{ocr_forward.12} parent=39 // pred_check_branch
        %688 = sbr.rel (%p686) target = $region44
      $region43: #{ocr_forward.12} parent=39 // pred_region
        %s689 = smul.u32 32, %s22
        %p690 = scmp.lt.s32.totalorder %s689, 63
        %s691 = scalar_select %p690, %s689, 63
        %p692 = scmp.lt.s32.totalorder %s23, 0
        %s693 = scalar_select %p692, %s23, 0
        %s694 = sadd.s32 %s693, %s691
        %s695 = smul.addr %s694, 8
        %s696 = scalar_lea.vmem %s3, %s695
      $region44: #{ocr_forward.12} parent=39 // pred_fallthru
        _
    $region40: #{ocr_forward.12} parent=5 // pred_fallthru
      _
  $region6: #{ocr_forward.12} parent=0 // loop_footer
    %s13 = sadd.s32 1, %s9
  $region7: #{ocr_forward.12} parent=0 // loop_footer_branch
    %8 = sbr.rel target = $region3
  $region8: #{ocr_forward.12} parent=0 // loop_exit
    _

// kernel: ocr_forward.15
$region0: #{ocr_forward.15}
  #allocation0 [shape = 'u32[]', space=smem, size = 0x4, offset = 0x4, fixed_abs, tag = 'smem constant byte address 0x4 - core index']
  #allocation1 [shape = 'u32[144,128]{1,0:T(1,128)}', space=vmem, size = 0x12000, scoped, tag = 'internal scratch']
  #allocation2 [shape = 'f32[19,1]{1,0:T(8,128)}', space=vmem, size = 0x3000, scoped, tag = 'scratch operand']
  #allocation3 [shape = 'f32[19,1]{1,0:T(8,128)}', space=vmem, size = 0x3000, scoped, tag = 'scratch operand']
  #allocation4 [shape = 'f32[19,128]{1,0:T(8,128)}', space=vmem, size = 0x3000, scoped, tag = 'scratch operand']
  %s0 = inlined_call_operand.vmem [shape: f32[2,19,256], index: 0, kind: input, shape index: {}]
  %s1 = inlined_call_operand.vmem [shape: bf16[2,256,128], index: 1, kind: input, shape index: {}]
  %s2 = inlined_call_operand.vmem [shape: f32[2,19,128], index: 2, kind: output, shape index: {}]
  %s3 = sld [smem:[#allocation0]]
  $region49: #{ocr_forward.15} parent=0
    _
  %s5 = ssub.s32 1, %s3
  %s6 = scalar_select 0, %s5, %s3
  loop: start=0, step=1, limit=4
  $region2: #{ocr_forward.15} parent=0 // loop_pre_header
    _
  $region3: #{ocr_forward.15} parent=0 // loop_header
    %s8 = sphi 0, %s12
    %p9 = scmp.ge.s32.totalorder %s8, 4
    %s15 = sphi 0, %s27
    %s16 = sphi 0, %s23
    %s17 = sphi 0, %s15
    %s18 = sphi 0, %s16
    %s19 = sphi 0, %s17
    %s20 = sphi 0, %s18
    %s32 = sphi 0, %s34
    %s35 = sphi 0, %s32
    %s36 = sphi 0, %s35
    %s52 = sphi 0, %s36
    %s60 = sphi 0, %s62
    %s63 = sphi 0, %s60
    %s64 = sphi 0, %s63
    %s80 = sphi 0, %s64
    %s86 = sphi 0, %s88
    %s89 = sphi 0, %s86
    %s90 = sphi 0, %s89
    %s106 = sphi 0, %s90
  $region4: #{ocr_forward.15} parent=0 // loop_header_branch
    %11 = sbr.rel (%p9) target = $region8
  $region5: #{ocr_forward.15} parent=0 // loop_body
    %s13 = ssub.s32 %s8, 1
    %s14 = ssub.s32 %s8, 2
    %s21 = sadd.s32 1, %s16
    %p22 = scmp.ge.s32.totalorder %s21, 1
    %s23 = scalar_select %p22, 0, %s21
    %s24 = sadd.s32 1, %s15
    %s25 = scalar_select %p22, %s24, %s15
    %p26 = scmp.ge.s32.totalorder %s25, 2
    %s27 = scalar_select %p26, 0, %s25
    %s28 = ssub.s32 %s15, %s27
    %s29 = ssub.s32 %s16, %s23
    %s30 = sor.u32 %s28, %s29
    %p31 = scmp.eq.s32.totalorder %s30, 0
    %s33 = sadd.s32 %s32, 1
    %s34 = scalar_select %p31, %s32, %s33
    %p37 = pneg %p31
    %p38 = scmp.eq.s32.totalorder %s8, 1
    %p39 = por %p37, %p38
    %p40 = scmp.ne.s32.totalorder %s32, %s35
    %p41 = scmp.eq.s32.totalorder %s8, 0
    %p42 = por %p40, %p41
    %p43 = scmp.ne.s32.totalorder %s32, %s35
    %p44 = scmp.eq.s32.totalorder %s13, 1
    %p45 = por %p43, %p44
    %p46 = scmp.ne.s32.totalorder %s35, %s36
    %p47 = scmp.eq.s32.totalorder %s13, 0
    %p48 = por %p46, %p47
    %p49 = scmp.ne.s32.totalorder %s35, %s36
    %p50 = scmp.eq.s32.totalorder %s14, 1
    %p51 = por %p49, %p50
    %p53 = scmp.ne.s32.totalorder %s36, %s52
    %p54 = scmp.eq.s32.totalorder %s14, 0
    %p55 = por %p53, %p54
    %s56 = ssub.s32 %s15, %s27
    %s57 = ssub.s32 %s16, %s23
    %s58 = sor.u32 %s56, %s57
    %p59 = scmp.eq.s32.totalorder %s58, 0
    %s61 = sadd.s32 %s60, 1
    %s62 = scalar_select %p59, %s60, %s61
    %p65 = pneg %p59
    %p66 = scmp.eq.s32.totalorder %s8, 1
    %p67 = por %p65, %p66
    %p68 = scmp.ne.s32.totalorder %s60, %s63
    %p69 = scmp.eq.s32.totalorder %s8, 0
    %p70 = por %p68, %p69
    %p71 = scmp.ne.s32.totalorder %s60, %s63
    %p72 = scmp.eq.s32.totalorder %s13, 1
    %p73 = por %p71, %p72
    %p74 = scmp.ne.s32.totalorder %s63, %s64
    %p75 = scmp.eq.s32.totalorder %s13, 0
    %p76 = por %p74, %p75
    %p77 = scmp.ne.s32.totalorder %s63, %s64
    %p78 = scmp.eq.s32.totalorder %s14, 1
    %p79 = por %p77, %p78
    %p81 = scmp.ne.s32.totalorder %s64, %s80
    %p82 = scmp.eq.s32.totalorder %s14, 0
    %p83 = por %p81, %p82
    %s84 = ssub.s32 %s15, %s27
    %p85 = scmp.eq.s32.totalorder %s84, 0
    %s87 = sadd.s32 %s86, 1
    %s88 = scalar_select %p85, %s86, %s87
    %p91 = pneg %p85
    %p92 = scmp.eq.s32.totalorder %s8, 1
    %p93 = por %p91, %p92
    %p94 = scmp.ne.s32.totalorder %s86, %s89
    %p95 = scmp.eq.s32.totalorder %s8, 0
    %p96 = por %p94, %p95
    %p97 = scmp.ne.s32.totalorder %s86, %s89
    %p98 = scmp.eq.s32.totalorder %s13, 1
    %p99 = por %p97, %p98
    %p100 = scmp.ne.s32.totalorder %s89, %s90
    %p101 = scmp.eq.s32.totalorder %s13, 0
    %p102 = por %p100, %p101
    %p103 = scmp.ne.s32.totalorder %s89, %s90
    %p104 = scmp.eq.s32.totalorder %s14, 1
    %p105 = por %p103, %p104
    %p107 = scmp.ne.s32.totalorder %s90, %s106
    %p108 = scmp.eq.s32.totalorder %s14, 0
    %p109 = por %p107, %p108
    %p110 = scmp.le.s32.totalorder 1, %s8
    %p111 = scmp.lt.s32.totalorder %s8, 3
    %p112 = pnand %p110, %p111
    %p113 = pneg %p112
    // Predicated region
    $region9: #{ocr_forward.15} parent=5 // pred_check
      _
    $region10: #{ocr_forward.15} parent=5 // pred_check_branch
      %115 = sbr.rel (%p112) target = $region12
    $region11: #{ocr_forward.15} parent=5 // pred_region
      %s116 = ssub.s32 %s8, 1
    $region12: #{ocr_forward.15} parent=5 // pred_fallthru
      _
    %p117 = scmp.lt.s32.totalorder %s8, 2
    // Predicated region
    $region13: #{ocr_forward.15} parent=5 // pred_check
      %p118 = pneg %p117
    $region14: #{ocr_forward.15} parent=5 // pred_check_branch
      %120 = sbr.rel (%p118) target = $region16
    $region15: #{ocr_forward.15} parent=5 // pred_region
      // Predicated region
      $region17: #{ocr_forward.15} parent=15 // pred_check
        %p121 = pneg %p42
      $region18: #{ocr_forward.15} parent=15 // pred_check_branch
        %123 = sbr.rel (%p121) target = $region20
      $region19: #{ocr_forward.15} parent=15 // pred_region
        %s124 = smul.u32 2, %s16
        %p125 = scmp.lt.s32.totalorder %s15, 1
        %s126 = scalar_select %p125, %s15, 1
        %p127 = scmp.lt.s32.totalorder %s124, 1
        %s128 = scalar_select %p127, %s124, 1
        %s129 = smul.addr %s126, 6
        %s130 = sadd.s32 %s128, %s129
        %s131 = smul.addr %s130, 8
        %s132 = scalar_lea.vmem %s0, %s131
        %s133 = smul.u32 2, %s16
      $region20: #{ocr_forward.15} parent=15 // pred_fallthru
        _
      // Predicated region
      $region21: #{ocr_forward.15} parent=15 // pred_check
        %p134 = pneg %p70
      $region22: #{ocr_forward.15} parent=15 // pred_check_branch
        %136 = sbr.rel (%p134) target = $region24
      $region23: #{ocr_forward.15} parent=15 // pred_region
        %s137 = smul.u32 32, %s16
        %p138 = scmp.lt.s32.totalorder %s15, 1
        %s139 = scalar_select %p138, %s15, 1
        %p140 = scmp.lt.s32.totalorder %s137, 31
        %s141 = scalar_select %p140, %s137, 31
        %s142 = smul.addr %s139, 32
        %s143 = sadd.s32 %s141, %s142
        %s144 = smul.addr %s143, 4
        %s145 = scalar_lea.vmem %s1, %s144
        %s146 = smul.u32 32, %s16
      $region24: #{ocr_forward.15} parent=15 // pred_fallthru
        _
    $region16: #{ocr_forward.15} parent=5 // pred_fallthru
      _
    %p147 = scmp.le.s32.totalorder 1, %s8
    %p148 = scmp.lt.s32.totalorder %s8, 3
    %p149 = pnand %p147, %p148
    %p150 = pneg %p149
    // Predicated region
    $region25: #{ocr_forward.15} parent=5 // pred_check
      _
    $region26: #{ocr_forward.15} parent=5 // pred_check_branch
      %152 = sbr.rel (%p149) target = $region28
    $region27: #{ocr_forward.15} parent=5 // pred_region
      %s153 = ssub.s32 %s8, 1
      %s154 = smul.u32 2, %s18
      %p155 = scmp.lt.s32.totalorder %s17, 1
      %s156 = scalar_select %p155, %s17, 1
      %p157 = scmp.lt.s32.totalorder %s154, 1
      %s158 = scalar_select %p157, %s154, 1
      %s159 = smul.addr %s156, 6
      %s160 = sadd.s32 %s158, %s159
      %s161 = smul.addr %s160, 8
      %s162 = scalar_lea.vmem %s0, %s161
      %p163 = pneg %p48
      %p164 = pneg %p45
      %s165 = smul.u32 32, %s18
      %p166 = scmp.lt.s32.totalorder %s17, 1
      %s167 = scalar_select %p166, %s17, 1
      %p168 = scmp.lt.s32.totalorder %s165, 31
      %s169 = scalar_select %p168, %s165, 31
      %s170 = smul.addr %s167, 32
      %s171 = sadd.s32 %s169, %s170
      %s172 = smul.addr %s171, 4
      %s173 = scalar_lea.vmem %s1, %s172
      %p174 = pneg %p76
      %p175 = pneg %p73
      %p176 = pneg %p102
      %p177 = pneg %p99
      %p178 = scmp.lt.s32.totalorder %s17, 1
      %s179 = scalar_select %p178, %s17, 1
      %s180 = smul.addr %s179, 3
      %s181 = smul.addr %s180, 8
      %s182 = scalar_lea.vmem %s2, %s181
      %s183 = smul.u32 2, %s18
      %p184 = scmp.lt.s32.totalorder %s17, 1
      %s185 = scalar_select %p184, %s17, 1
      %p186 = scmp.lt.s32.totalorder %s183, 1
      %s187 = scalar_select %p186, %s183, 1
      %s188 = smul.addr %s185, 6
      %s189 = sadd.s32 %s187, %s188
      %s190 = smul.addr %s189, 8
      %s191 = scalar_lea.vmem %s0, %s190
      %s192 = smul.u32 2, %s18
      %s193 = smul.u32 32, %s18
      %p194 = scmp.lt.s32.totalorder %s17, 1
      %s195 = scalar_select %p194, %s17, 1
      %p196 = scmp.lt.s32.totalorder %s193, 31
      %s197 = scalar_select %p196, %s193, 31
      %s198 = smul.addr %s195, 32
      %s199 = sadd.s32 %s197, %s198
      %s200 = smul.addr %s199, 4
      %s201 = scalar_lea.vmem %s1, %s200
      %s202 = smul.u32 32, %s18
      %p203 = scmp.lt.s32.totalorder %s17, 1
      %s204 = scalar_select %p203, %s17, 1
      %s205 = smul.addr %s204, 3
      %s206 = smul.addr %s205, 8
      %s207 = scalar_lea.vmem %s2, %s206
      %p209 = scmp.eq.s32.totalorder %s18, 0
      // Predicated region
      $region29: #{ocr_forward.15} parent=27 // pred_check
        %p210 = pneg %p209
      $region30: #{ocr_forward.15} parent=27 // pred_check_branch
        %212 = sbr.rel (%p210) target = $region32
      $region31: #{ocr_forward.15} parent=27 // pred_region
        %vm213 = vcmask 7168
        %214 = vst.msk [vmem:[#allocation2] sm:$0xff] %vm213, -1e+30
        %215 = vst.msk [vmem:[#allocation2 + $0x8] sm:$0xff] %vm213, -1e+30
        %vm216 = vcmask 2048
        %217 = vst.msk [vmem:[#allocation2 + $0x10] sm:$0x7] %vm216, -1e+30
        %218 = vst.msk [vmem:[#allocation3] sm:$0xff] %vm213, 0.0
        %219 = vst.msk [vmem:[#allocation3 + $0x8] sm:$0xff] %vm213, 0.0
        %220 = vst.msk [vmem:[#allocation3 + $0x10] sm:$0x7] %vm216, 0.0
        %221 = vst [vmem:[#allocation4] sm:$0xff] 0.0
        %222 = vst [vmem:[#allocation4 + $0x8] sm:$0xff] 0.0
        %223 = vst [vmem:[#allocation4 + $0x10] sm:$0x7] 0.0
      $region32: #{ocr_forward.15} parent=27 // pred_fallthru
        _
      %v224 = vld [vmem:[%s191] sm:$0xff]
      %v225 = vld [vmem:[%s191 + $0x8] sm:$0xff]
      %v226 = vld [vmem:[%s191 + $0x10] sm:$0xff]
      %v227 = vld [vmem:[%s191 + $0x18] sm:$0xff]
      %v228 = vld [vmem:[%s191 + $0x20] sm:$0x7]
      %v229 = vld [vmem:[%s191 + $0x28] sm:$0x7]
      %v230 = vld [vmem:[#allocation2] sm:$0xff]
      %v231 = vld [vmem:[#allocation2 + $0x8] sm:$0xff]
      %v232 = vld [vmem:[#allocation2 + $0x10] sm:$0x7]
      %v233 = vmax.f32 %v224, %v225
      %234 = vmax.xlane.f32.xlu0 %v233
      %v235 = vpop.xlane.xlu0 %234
      %v236 = vmax.f32 %v226, %v227
      %237 = vmax.xlane.f32.xlu0 %v236
      %v238 = vpop.xlane.xlu0 %237
      %vm239 = vcmask 1042432
      %v240 = vsel %vm239, %v228, -inf
      %v241 = vsel %vm239, %v229, -inf
      %v242 = vmax.f32 %v240, %v241
      %243 = vmax.xlane.f32.xlu0 %v242
      %v244 = vpop.xlane.xlu0 %243
      %v245 = vmax.f32 %v230, %v235
      %v246 = vmax.f32 %v231, %v238
      %v247 = vmax.f32 %v232, %v244
      %v248 = vsub.f32 %v230, %v245
      %v249 = vsub.f32 %v231, %v246
      %v250 = vsub.f32 %v232, %v247
      %v251 = vmul.f32 %v248, 1.442695
      %v252 = vpow.pop %v251
      %v253 = vmul.f32 %v249, 1.442695
      %v254 = vpow.pop %v253
      %v255 = vmul.f32 %v250, 1.442695
      %v256 = vpow.pop %v255
      %258 = vset.pattern.permute.xlu0 0
      %259 = vperm.xlu0 %258, %v245
      %v260 = vpop.permute.xlu0 %259
      %263 = vset.pattern.permute.xlu0 0
      %264 = vperm.xlu0 %263, %v246
      %v265 = vpop.permute.xlu0 %264
      %268 = vset.pattern.permute.xlu0 0
      %269 = vperm.xlu0 %268, %v247
      %v270 = vpop.permute.xlu0 %269
      %v272 = vsub.f32 %v224, %v260
      %v273 = vsub.f32 %v225, %v260
      %v274 = vsub.f32 %v226, %v265
      %v275 = vsub.f32 %v227, %v265
      %v276 = vsub.f32 %v228, %v270
      %v277 = vsub.f32 %v229, %v270
      %v278 = vmul.f32 %v272, 1.442695
      %v279 = vpow.pop %v278
      %v280 = vmul.f32 %v273, 1.442695
      %v281 = vpow.pop %v280
      %v282 = vmul.f32 %v274, 1.442695
      %v283 = vpow.pop %v282
      %v284 = vmul.f32 %v275, 1.442695
      %v285 = vpow.pop %v284
      %v286 = vmul.f32 %v276, 1.442695
      %v287 = vpow.pop %v286
      %v288 = vmul.f32 %v277, 1.442695
      %v289 = vpow.pop %v288
      %v290 = vld [vmem:[#allocation3] sm:$0xff]
      %v291 = vld [vmem:[#allocation3 + $0x8] sm:$0xff]
      %v292 = vld [vmem:[#allocation3 + $0x10] sm:$0x7]
      %v293 = vmul.f32 %v252, %v290
      %v294 = vmul.f32 %v254, %v291
      %v295 = vmul.f32 %v256, %v292
      %v296 = vadd.f32 %v279, %v281
      %297 = vadd.xlane.f32.xlu0 %v296
      %v298 = vpop.xlane.xlu0 %297
      %v299 = vadd.f32 %v283, %v285
      %300 = vadd.xlane.f32.xlu0 %v299
      %v301 = vpop.xlane.xlu0 %300
      %v302 = vsel %vm239, %v287, 0.0
      %v303 = vsel %vm239, %v289, 0.0
      %v304 = vadd.f32 %v302, %v303
      %305 = vadd.xlane.f32.xlu0 %v304
      %v306 = vpop.xlane.xlu0 %305
      %v307 = vadd.f32 %v293, %v298
      %v308 = vadd.f32 %v294, %v301
      %v309 = vadd.f32 %v295, %v306
      %vm310 = vcmask 7168
      %311 = vst.msk [vmem:[#allocation3] sm:$0xff] %vm310, %v307
      %312 = vst.msk [vmem:[#allocation3 + $0x8] sm:$0xff] %vm310, %v308
      %vm313 = vcmask 2048
      %314 = vst.msk [vmem:[#allocation3 + $0x10] sm:$0x7] %vm313, %v309
      %v315 = vld [vmem:[#allocation4] sm:$0xff]
      %v316 = vld [vmem:[#allocation4 + $0x8] sm:$0xff]
      %v317 = vld [vmem:[#allocation4 + $0x10] sm:$0x7]
      %319 = vset.pattern.permute.xlu0 0
      %320 = vperm.xlu0 %319, %v252
      %v321 = vpop.permute.xlu0 %320
      %324 = vset.pattern.permute.xlu0 0
      %325 = vperm.xlu0 %324, %v254
      %v326 = vpop.permute.xlu0 %325
      %329 = vset.pattern.permute.xlu0 0
      %330 = vperm.xlu0 %329, %v256
      %v331 = vpop.permute.xlu0 %330
      %v333 = vmul.f32 %v321, %v315
      %v334 = vmul.f32 %v326, %v316
      %v335 = vmul.f32 %v331, %v317
      %v336 = vpack.c.bf16 %v283, %v279
      %v337 = vpack.c.bf16 %v285, %v281
      %v338 = vpack.c.bf16 %v287, %v287
      %v339 = vpack.c.bf16 %v289, %v289
      %v340 = vld [vmem:[%s201] sm:$0xf]
      %v341 = vld [vmem:[%s201 + $0x4] sm:$0xf]
      %v342 = vld [vmem:[%s201 + $0x8] sm:$0xf]
      %v343 = vld [vmem:[%s201 + $0xc] sm:$0xf]
      %v344 = vld [vmem:[%s201 + $0x10] sm:$0xf]
      %v345 = vld [vmem:[%s201 + $0x14] sm:$0xf]
      %v346 = vld [vmem:[%s201 + $0x18] sm:$0xf]
      %v347 = vld [vmem:[%s201 + $0x1c] sm:$0xf]
      %v348 = vld [vmem:[%s201 + $0x20] sm:$0xf]
      %v349 = vld [vmem:[%s201 + $0x24] sm:$0xf]
      %v350 = vld [vmem:[%s201 + $0x28] sm:$0xf]
      %v351 = vld [vmem:[%s201 + $0x2c] sm:$0xf]
      %v352 = vld [vmem:[%s201 + $0x30] sm:$0xf]
      %v353 = vld [vmem:[%s201 + $0x34] sm:$0xf]
      %v354 = vld [vmem:[%s201 + $0x38] sm:$0xf]
      %v355 = vld [vmem:[%s201 + $0x3c] sm:$0xf]
      %v356 = vld [vmem:[%s201 + $0x40] sm:$0xf]
      %v357 = vld [vmem:[%s201 + $0x44] sm:$0xf]
      %v358 = vld [vmem:[%s201 + $0x48] sm:$0xf]
      %v359 = vld [vmem:[%s201 + $0x4c] sm:$0xf]
      %v360 = vld [vmem:[%s201 + $0x50] sm:$0xf]
      %v361 = vld [vmem:[%s201 + $0x54] sm:$0xf]
      %v362 = vld [vmem:[%s201 + $0x58] sm:$0xf]
      %v363 = vld [vmem:[%s201 + $0x5c] sm:$0xf]
      %v364 = vld [vmem:[%s201 + $0x60] sm:$0xf]
      %v365 = vld [vmem:[%s201 + $0x64] sm:$0xf]
      %v366 = vld [vmem:[%s201 + $0x68] sm:$0xf]
      %v367 = vld [vmem:[%s201 + $0x6c] sm:$0xf]
      %v368 = vld [vmem:[%s201 + $0x70] sm:$0xf]
      %v369 = vld [vmem:[%s201 + $0x74] sm:$0xf]
      %v370 = vld [vmem:[%s201 + $0x78] sm:$0xf]
      %v371 = vld [vmem:[%s201 + $0x7c] sm:$0xf]
      %v404 = vunpack.c.l.b16 %v340
      %v405 = vunpack.c.l.b16 %v341
      %v406 = vunpack.c.l.b16 %v342
      %v407 = vunpack.c.l.b16 %v343
      %v408 = vunpack.c.l.b16 %v344
      %v409 = vunpack.c.l.b16 %v345
      %v410 = vunpack.c.l.b16 %v346
      %v411 = vunpack.c.l.b16 %v347
      %v412 = vunpack.c.l.b16 %v348
      %v413 = vunpack.c.l.b16 %v349
      %v414 = vunpack.c.l.b16 %v350
      %v415 = vunpack.c.l.b16 %v351
      %v416 = vunpack.c.l.b16 %v352
      %v417 = vunpack.c.l.b16 %v353
      %v418 = vunpack.c.l.b16 %v354
      %v419 = vunpack.c.l.b16 %v355
      %v420 = vunpack.c.l.b16 %v356
      %v421 = vunpack.c.l.b16 %v357
      %v422 = vunpack.c.l.b16 %v358
      %v423 = vunpack.c.l.b16 %v359
      %v424 = vunpack.c.l.b16 %v360
      %v425 = vunpack.c.l.b16 %v361
      %v426 = vunpack.c.l.b16 %v362
      %v427 = vunpack.c.l.b16 %v363
      %v428 = vunpack.c.l.b16 %v364
      %v429 = vunpack.c.l.b16 %v365
      %v430 = vunpack.c.l.b16 %v366
      %v431 = vunpack.c.l.b16 %v367
      %v432 = vunpack.c.l.b16 %v368
      %v433 = vunpack.c.l.b16 %v369
      %v434 = vunpack.c.l.b16 %v370
      %v435 = vunpack.c.l.b16 %v371
      %v436 = vpack.c.b16 %v405, %v404
      %v437 = vpack.c.b16 %v407, %v406
      %v438 = vpack.c.b16 %v409, %v408
      %v439 = vpack.c.b16 %v411, %v410
      %v440 = vpack.c.b16 %v413, %v412
      %v441 = vpack.c.b16 %v415, %v414
      %v442 = vpack.c.b16 %v417, %v416
      %v443 = vpack.c.b16 %v419, %v418
      %v444 = vpack.c.b16 %v421, %v420
      %v445 = vpack.c.b16 %v423, %v422
      %v446 = vpack.c.b16 %v425, %v424
      %v447 = vpack.c.b16 %v427, %v426
      %v448 = vpack.c.b16 %v429, %v428
      %v449 = vpack.c.b16 %v431, %v430
      %v450 = vpack.c.b16 %v433, %v432
      %v451 = vpack.c.b16 %v435, %v434
      %468 = vmatprep.subr.bf16.mxu0 0
      %469 = vmatpush1.bf16.msra.mxu0 %v436
      %470 = vmatprep.subr.bf16.mxu0 0
      %471 = vmatpush1.bf16.msra.mxu0 %v437
      %472 = vmatprep.subr.bf16.mxu0 0
      %473 = vmatpush1.bf16.msra.mxu0 %v438
      %474 = vmatprep.subr.bf16.mxu0 0
      %475 = vmatpush1.bf16.msra.mxu0 %v439
      %476 = vmatprep.subr.bf16.mxu0 0
      %477 = vmatpush1.bf16.msra.mxu0 %v440
      %478 = vmatprep.subr.bf16.mxu0 0
      %479 = vmatpush1.bf16.msra.mxu0 %v441
      %480 = vmatprep.subr.bf16.mxu0 0
      %481 = vmatpush1.bf16.msra.mxu0 %v442
      %482 = vmatprep.subr.bf16.mxu0 0
      %483 = vmatpush1.bf16.msra.mxu0 %v443
      %484 = vmatprep.subr.bf16.mxu0 0
      %485 = vmatpush1.bf16.msra.mxu0 %v444
      %486 = vmatprep.subr.bf16.mxu0 0
      %487 = vmatpush1.bf16.msra.mxu0 %v445
      %488 = vmatprep.subr.bf16.mxu0 0
      %489 = vmatpush1.bf16.msra.mxu0 %v446
      %490 = vmatprep.subr.bf16.mxu0 0
      %491 = vmatpush1.bf16.msra.mxu0 %v447
      %492 = vmatprep.subr.bf16.mxu0 0
      %493 = vmatpush1.bf16.msra.mxu0 %v448
      %494 = vmatprep.subr.bf16.mxu0 0
      %495 = vmatpush1.bf16.msra.mxu0 %v449
      %496 = vmatprep.subr.bf16.mxu0 0
      %497 = vmatpush1.bf16.msra.mxu0 %v450
      %498 = vmatprep.subr.bf16.mxu0 0
      %499 = vmatpush1.bf16.msra.mxu0 %v451
      %500 = vmatprep.mubr.bf16.mxu0 %v337
      %501 = vmatmul.mubr.bf16.gmra.mrb[0].mxu0 %v336
      %v502 = vpop.f32.mrb[0].mxu0
      %v503 = vadd.f32 0.0, %v502
      %v504 = vpop.f32.mrb[0].mxu0
      %v505 = vpop.f32.mrb[0].mxu0
      %v506 = vadd.f32 0.0, %v505
      %v507 = vpop.f32.mrb[0].mxu0
      %508 = vmatprep.mubr.bf16.mxu0 %v339
      %509 = vmatmul.mubr.bf16.gmra.mrb[0].mxu0 %v338
      %v510 = vpop.f32.mrb[0].mxu0
      %v511 = vadd.f32 0.0, %v510
      %v512 = vpop.f32.mrb[0].mxu0
      %v513 = vpop.f32.mrb[0].mxu0
      %v514 = vpop.f32.mrb[0].mxu0
      %515 = vdwg.mxu0
      %v516 = vadd.f32 %v333, %v503
      %v517 = vadd.f32 %v334, %v506
      %v518 = vadd.f32 %v335, %v511
      %519 = vst [vmem:[#allocation4] sm:$0xff] %v516
      %520 = vst [vmem:[#allocation4 + $0x8] sm:$0xff] %v517
      %521 = vst [vmem:[#allocation4 + $0x10] sm:$0x7] %v518
      %522 = vst.msk [vmem:[#allocation2] sm:$0xff] %vm310, %v245
      %523 = vst.msk [vmem:[#allocation2 + $0x8] sm:$0xff] %vm310, %v246
      %524 = vst.msk [vmem:[#allocation2 + $0x10] sm:$0x7] %vm313, %v247
      // Predicated region
      $region33: #{ocr_forward.15} parent=27 // pred_check
        %p525 = pneg %p209
      $region34: #{ocr_forward.15} parent=27 // pred_check_branch
        %527 = sbr.rel (%p525) target = $region36
      $region35: #{ocr_forward.15} parent=27 // pred_region
        %v528 = vld [vmem:[#allocation4] sm:$0xff]
        %v529 = vld [vmem:[#allocation4 + $0x8] sm:$0xff]
        %v530 = vld [vmem:[#allocation4 + $0x10] sm:$0x7]
        %v531 = vld [vmem:[#allocation3] sm:$0xff]
        %v532 = vld [vmem:[#allocation3 + $0x8] sm:$0xff]
        %v533 = vld [vmem:[#allocation3 + $0x10] sm:$0x7]
        %v534 = vrcp.pop %v531
        %v535 = vrcp.pop %v532
        %v536 = vrcp.pop %v533
        %538 = vset.pattern.permute.xlu0 0
        %539 = vperm.xlu0 %538, %v534
        %v540 = vpop.permute.xlu0 %539
        %543 = vset.pattern.permute.xlu0 0
        %544 = vperm.xlu0 %543, %v535
        %v545 = vpop.permute.xlu0 %544
        %548 = vset.pattern.permute.xlu0 0
        %549 = vperm.xlu0 %548, %v536
        %v550 = vpop.permute.xlu0 %549
        %v552 = vmul.f32 %v528, %v540
        %v553 = vmul.f32 %v529, %v545
        %v554 = vmul.f32 %v530, %v550
        %555 = vst [vmem:[%s207] sm:$0xff] %v552
        %556 = vst [vmem:[%s207 + $0x8] sm:$0xff] %v553
        %557 = vst [vmem:[%s207 + $0x10] sm:$0x7] %v554
      $region36: #{ocr_forward.15} parent=27 // pred_fallthru
        _
      %p558 = scmp.lt.s32.totalorder %s17, 1
      %s559 = scalar_select %p558, %s17, 1
      %s560 = smul.addr %s559, 3
      %s561 = smul.addr %s560, 8
      %s562 = scalar_lea.vmem %s2, %s561
      // Predicated region
      $region37: #{ocr_forward.15} parent=27 // pred_check
        %p563 = pneg %p99
      $region38: #{ocr_forward.15} parent=27 // pred_check_branch
        %565 = sbr.rel (%p563) target = $region40
      $region39: #{ocr_forward.15} parent=27 // pred_region
        _
      $region40: #{ocr_forward.15} parent=27 // pred_fallthru
        _
    $region28: #{ocr_forward.15} parent=5 // pred_fallthru
      _
    %p566 = scmp.le.s32.totalorder 2, %s8
    // Predicated region
    $region41: #{ocr_forward.15} parent=5 // pred_check
      %p567 = pneg %p566
    $region42: #{ocr_forward.15} parent=5 // pred_check_branch
      %569 = sbr.rel (%p567) target = $region44
    $region43: #{ocr_forward.15} parent=5 // pred_region
      %s570 = ssub.s32 %s8, 2
      // Predicated region
      $region45: #{ocr_forward.15} parent=43 // pred_check
        %p571 = pneg %p105
      $region46: #{ocr_forward.15} parent=43 // pred_check_branch
        %573 = sbr.rel (%p571) target = $region48
      $region47: #{ocr_forward.15} parent=43 // pred_region
        %p574 = scmp.lt.s32.totalorder %s19, 1
        %s575 = scalar_select %p574, %s19, 1
        %s576 = smul.addr %s575, 3
        %s577 = smul.addr %s576, 8
        %s578 = scalar_lea.vmem %s2, %s577
      $region48: #{ocr_forward.15} parent=43 // pred_fallthru
        _
    $region44: #{ocr_forward.15} parent=5 // pred_fallthru
      _
  $region6: #{ocr_forward.15} parent=0 // loop_footer
    %s12 = sadd.s32 1, %s8
  $region7: #{ocr_forward.15} parent=0 // loop_footer_branch
    %7 = sbr.rel target = $region3
  $region8: #{ocr_forward.15} parent=0 // loop_exit
    _

// kernel: ocr_forward.18
$region0: #{ocr_forward.18}
  #allocation0 [shape = 'u32[]', space=smem, size = 0x4, offset = 0x4, fixed_abs, tag = 'smem constant byte address 0x4 - core index']
  #allocation1 [shape = 'u32[144,128]{1,0:T(1,128)}', space=vmem, size = 0x12000, scoped, tag = 'internal scratch']
  %s0 = inlined_call_operand.vmem [shape: bf16[38,128], index: 0, kind: input, shape index: {}]
  %s1 = inlined_call_operand.vmem [shape: bf16[128,128], index: 1, kind: input, shape index: {}]
  %s2 = inlined_call_operand.vmem [shape: f32[1,128], index: 2, kind: input, shape index: {}]
  %s3 = inlined_call_operand.vmem [shape: bf16[128,128], index: 3, kind: input, shape index: {}]
  %s4 = inlined_call_operand.vmem [shape: f32[1,128], index: 4, kind: input, shape index: {}]
  %s5 = inlined_call_operand.vmem [shape: bf16[128,128], index: 5, kind: input, shape index: {}]
  %s6 = inlined_call_operand.vmem [shape: f32[1,128], index: 6, kind: input, shape index: {}]
  %s7 = inlined_call_operand.vmem [shape: f32[38,128], index: 7, kind: output, shape index: {0}]
  %s8 = inlined_call_operand.vmem [shape: f32[38,128], index: 8, kind: output, shape index: {1}]
  %9 = xla_tuple %s7, %s8
  %s10 = sld [smem:[#allocation0]]
  $region46: #{ocr_forward.18} parent=0
    _
  %s12 = ssub.s32 1, %s10
  %s13 = scalar_select 0, %s12, %s10
  // Predicated region
  $region2: #{ocr_forward.18} parent=0 // pred_check
    _
  $region3: #{ocr_forward.18} parent=0 // pred_check_branch
    %15 = sbr.rel (0) target = $region5
  $region4: #{ocr_forward.18} parent=0 // pred_region
    _
  $region5: #{ocr_forward.18} parent=0 // pred_fallthru
    _
  // Predicated region
  $region6: #{ocr_forward.18} parent=0 // pred_check
    _
  $region7: #{ocr_forward.18} parent=0 // pred_check_branch
    %17 = sbr.rel (0) target = $region9
  $region8: #{ocr_forward.18} parent=0 // pred_region
    _
  $region9: #{ocr_forward.18} parent=0 // pred_fallthru
    _
  // Predicated region
  $region10: #{ocr_forward.18} parent=0 // pred_check
    _
  $region11: #{ocr_forward.18} parent=0 // pred_check_branch
    %19 = sbr.rel (0) target = $region13
  $region12: #{ocr_forward.18} parent=0 // pred_region
    _
  $region13: #{ocr_forward.18} parent=0 // pred_fallthru
    _
  // Predicated region
  $region14: #{ocr_forward.18} parent=0 // pred_check
    _
  $region15: #{ocr_forward.18} parent=0 // pred_check_branch
    %21 = sbr.rel (0) target = $region17
  $region16: #{ocr_forward.18} parent=0 // pred_region
    _
  $region17: #{ocr_forward.18} parent=0 // pred_fallthru
    _
  // Predicated region
  $region18: #{ocr_forward.18} parent=0 // pred_check
    _
  $region19: #{ocr_forward.18} parent=0 // pred_check_branch
    %23 = sbr.rel (0) target = $region21
  $region20: #{ocr_forward.18} parent=0 // pred_region
    _
  $region21: #{ocr_forward.18} parent=0 // pred_fallthru
    _
  // Predicated region
  $region22: #{ocr_forward.18} parent=0 // pred_check
    _
  $region23: #{ocr_forward.18} parent=0 // pred_check_branch
    %25 = sbr.rel (0) target = $region25
  $region24: #{ocr_forward.18} parent=0 // pred_region
    _
  $region25: #{ocr_forward.18} parent=0 // pred_fallthru
    _
  // Predicated region
  $region26: #{ocr_forward.18} parent=0 // pred_check
    _
  $region27: #{ocr_forward.18} parent=0 // pred_check_branch
    %27 = sbr.rel (0) target = $region29
  $region28: #{ocr_forward.18} parent=0 // pred_region
    _
  $region29: #{ocr_forward.18} parent=0 // pred_fallthru
    _
  %v29 = vld [vmem:[%s0] sm:$0xf]
  %v30 = vld [vmem:[%s0 + $0x4] sm:$0xf]
  %v31 = vld [vmem:[%s0 + $0x8] sm:$0xf]
  %v32 = vld [vmem:[%s0 + $0xc] sm:$0xf]
  %v33 = vld [vmem:[%s0 + $0x10] sm:$0x7]
  %v34 = vld [vmem:[%s1] sm:$0xf]
  %v35 = vld [vmem:[%s1 + $0x4] sm:$0xf]
  %v36 = vld [vmem:[%s1 + $0x8] sm:$0xf]
  %v37 = vld [vmem:[%s1 + $0xc] sm:$0xf]
  %v38 = vld [vmem:[%s1 + $0x10] sm:$0xf]
  %v39 = vld [vmem:[%s1 + $0x14] sm:$0xf]
  %v40 = vld [vmem:[%s1 + $0x18] sm:$0xf]
  %v41 = vld [vmem:[%s1 + $0x1c] sm:$0xf]
  %v42 = vld [vmem:[%s1 + $0x20] sm:$0xf]
  %v43 = vld [vmem:[%s1 + $0x24] sm:$0xf]
  %v44 = vld [vmem:[%s1 + $0x28] sm:$0xf]
  %v45 = vld [vmem:[%s1 + $0x2c] sm:$0xf]
  %v46 = vld [vmem:[%s1 + $0x30] sm:$0xf]
  %v47 = vld [vmem:[%s1 + $0x34] sm:$0xf]
  %v48 = vld [vmem:[%s1 + $0x38] sm:$0xf]
  %v49 = vld [vmem:[%s1 + $0x3c] sm:$0xf]
  %v50 = vld [vmem:[%s2] sm:$0x1]
  %v52 = vlaneseq
  %v53 = vshrl.u32 %v52, 7
  %v54 = vsub.s32 0, %v53
  %v55 = vrot.slane %v50, %v54
  %v62 = vunpack.c.l.b16 %v29
  %v63 = vunpack.c.l.b16 %v30
  %v64 = vunpack.c.l.b16 %v31
  %v65 = vunpack.c.l.b16 %v32
  %v66 = vunpack.c.l.b16 %v33
  %v67 = vpack.c.b16 %v63, %v62
  %v68 = vpack.c.b16 %v65, %v64
  %v69 = vpack.c.b16 %v66, %v66
  %v89 = vunpack.c.l.b16 %v34
  %v90 = vunpack.c.l.b16 %v35
  %v91 = vunpack.c.l.b16 %v36
  %v92 = vunpack.c.l.b16 %v37
  %v93 = vunpack.c.l.b16 %v38
  %v94 = vunpack.c.l.b16 %v39
  %v95 = vunpack.c.l.b16 %v40
  %v96 = vunpack.c.l.b16 %v41
  %v97 = vunpack.c.l.b16 %v42
  %v98 = vunpack.c.l.b16 %v43
  %v99 = vunpack.c.l.b16 %v44
  %v100 = vunpack.c.l.b16 %v45
  %v101 = vunpack.c.l.b16 %v46
  %v102 = vunpack.c.l.b16 %v47
  %v103 = vunpack.c.l.b16 %v48
  %v104 = vunpack.c.l.b16 %v49
  %v105 = vpack.c.b16 %v90, %v89
  %v106 = vpack.c.b16 %v92, %v91
  %v107 = vpack.c.b16 %v94, %v93
  %v108 = vpack.c.b16 %v96, %v95
  %v109 = vpack.c.b16 %v98, %v97
  %v110 = vpack.c.b16 %v100, %v99
  %v111 = vpack.c.b16 %v102, %v101
  %v112 = vpack.c.b16 %v104, %v103
  %121 = vmatprep.subr.bf16.mxu0 0
  %122 = vmatpush1.bf16.msra.mxu0 %v105
  %123 = vmatprep.subr.bf16.mxu0 0
  %124 = vmatpush1.bf16.msra.mxu0 %v106
  %125 = vmatprep.subr.bf16.mxu0 0
  %126 = vmatpush1.bf16.msra.mxu0 %v107
  %127 = vmatprep.subr.bf16.mxu0 0
  %128 = vmatpush1.bf16.msra.mxu0 %v108
  %129 = vmatprep.subr.bf16.mxu0 0
  %130 = vmatpush1.bf16.msra.mxu0 %v109
  %131 = vmatprep.subr.bf16.mxu0 0
  %132 = vmatpush1.bf16.msra.mxu0 %v110
  %133 = vmatprep.subr.bf16.mxu0 0
  %134 = vmatpush1.bf16.msra.mxu0 %v111
  %135 = vmatprep.subr.bf16.mxu0 0
  %136 = vmatpush1.bf16.msra.mxu0 %v112
  %137 = vmatprep.subr.bf16.mxu0 0
  %138 = vmatpush1.bf16.msra.mxu0 0
  %139 = vmatprep.subr.bf16.mxu0 0
  %140 = vmatpush1.bf16.msra.mxu0 0
  %141 = vmatprep.subr.bf16.mxu0 0
  %142 = vmatpush1.bf16.msra.mxu0 0
  %143 = vmatprep.subr.bf16.mxu0 0
  %144 = vmatpush1.bf16.msra.mxu0 0
  %145 = vmatprep.subr.bf16.mxu0 0
  %146 = vmatpush1.bf16.msra.mxu0 0
  %147 = vmatprep.subr.bf16.mxu0 0
  %148 = vmatpush1.bf16.msra.mxu0 0
  %149 = vmatprep.subr.bf16.mxu0 0
  %150 = vmatpush1.bf16.msra.mxu0 0
  %151 = vmatprep.subr.bf16.mxu0 0
  %152 = vmatpush1.bf16.msra.mxu0 0
  %153 = vmatprep.mubr.bf16.mxu0 0
  %154 = vmatmul.mubr.bf16.gmra.mrb[0].mxu0 %v67
  %v155 = vpop.f32.mrb[0].mxu0
  %v156 = vadd.f32 %v55, %v155
  %v157 = vpop.f32.mrb[0].mxu0
  %v158 = vpop.f32.mrb[0].mxu0
  %v159 = vadd.f32 %v55, %v158
  %v160 = vpop.f32.mrb[0].mxu0
  %161 = vmatprep.mubr.bf16.mxu0 0
  %162 = vmatmul.mubr.bf16.gmra.mrb[0].mxu0 %v68
  %v163 = vpop.f32.mrb[0].mxu0
  %v164 = vadd.f32 %v55, %v163
  %v165 = vpop.f32.mrb[0].mxu0
  %v166 = vpop.f32.mrb[0].mxu0
  %v167 = vadd.f32 %v55, %v166
  %v168 = vpop.f32.mrb[0].mxu0
  %169 = vmatprep.mubr.bf16.mxu0 0
  %170 = vmatmul.mubr.bf16.gmra.mrb[0].mxu0 %v69
  %v171 = vpop.f32.mrb[0].mxu0
  %v172 = vadd.f32 %v55, %v171
  %v173 = vpop.f32.mrb[0].mxu0
  %v174 = vpop.f32.mrb[0].mxu0
  %v175 = vpop.f32.mrb[0].mxu0
  %176 = vdwg.mxu0
  %v177 = vmax.f32 %v156, 0.0
  %v178 = vmax.f32 %v159, 0.0
  %v179 = vmax.f32 %v164, 0.0
  %v180 = vmax.f32 %v167, 0.0
  %v181 = vmax.f32 %v172, 0.0
  %v182 = vpack.c.bf16 %v178, %v177
  %v183 = vpack.c.bf16 %v180, %v179
  %v184 = vpack.c.bf16 %v181, %v181
  %v185 = vld [vmem:[%s3] sm:$0xf]
  %v186 = vld [vmem:[%s3 + $0x4] sm:$0xf]
  %v187 = vld [vmem:[%s3 + $0x8] sm:$0xf]
  %v188 = vld [vmem:[%s3 + $0xc] sm:$0xf]
  %v189 = vld [vmem:[%s3 + $0x10] sm:$0xf]
  %v190 = vld [vmem:[%s3 + $0x14] sm:$0xf]
  %v191 = vld [vmem:[%s3 + $0x18] sm:$0xf]
  %v192 = vld [vmem:[%s3 + $0x1c] sm:$0xf]
  %v193 = vld [vmem:[%s3 + $0x20] sm:$0xf]
  %v194 = vld [vmem:[%s3 + $0x24] sm:$0xf]
  %v195 = vld [vmem:[%s3 + $0x28] sm:$0xf]
  %v196 = vld [vmem:[%s3 + $0x2c] sm:$0xf]
  %v197 = vld [vmem:[%s3 + $0x30] sm:$0xf]
  %v198 = vld [vmem:[%s3 + $0x34] sm:$0xf]
  %v199 = vld [vmem:[%s3 + $0x38] sm:$0xf]
  %v200 = vld [vmem:[%s3 + $0x3c] sm:$0xf]
  %v201 = vld [vmem:[%s4] sm:$0x1]
  %v203 = vlaneseq
  %v204 = vshrl.u32 %v203, 7
  %v205 = vsub.s32 0, %v204
  %v206 = vrot.slane %v201, %v205
  %v224 = vunpack.c.l.b16 %v185
  %v225 = vunpack.c.l.b16 %v186
  %v226 = vunpack.c.l.b16 %v187
  %v227 = vunpack.c.l.b16 %v188
  %v228 = vunpack.c.l.b16 %v189
  %v229 = vunpack.c.l.b16 %v190
  %v230 = vunpack.c.l.b16 %v191
  %v231 = vunpack.c.l.b16 %v192
  %v232 = vunpack.c.l.b16 %v193
  %v233 = vunpack.c.l.b16 %v194
  %v234 = vunpack.c.l.b16 %v195
  %v235 = vunpack.c.l.b16 %v196
  %v236 = vunpack.c.l.b16 %v197
  %v237 = vunpack.c.l.b16 %v198
  %v238 = vunpack.c.l.b16 %v199
  %v239 = vunpack.c.l.b16 %v200
  %v240 = vpack.c.b16 %v225, %v224
  %v241 = vpack.c.b16 %v227, %v226
  %v242 = vpack.c.b16 %v229, %v228
  %v243 = vpack.c.b16 %v231, %v230
  %v244 = vpack.c.b16 %v233, %v232
  %v245 = vpack.c.b16 %v235, %v234
  %v246 = vpack.c.b16 %v237, %v236
  %v247 = vpack.c.b16 %v239, %v238
  %256 = vmatprep.subr.bf16.mxu0 0
  %257 = vmatpush1.bf16.msra.mxu0 %v240
  %258 = vmatprep.subr.bf16.mxu0 0
  %259 = vmatpush1.bf16.msra.mxu0 %v241
  %260 = vmatprep.subr.bf16.mxu0 0
  %261 = vmatpush1.bf16.msra.mxu0 %v242
  %262 = vmatprep.subr.bf16.mxu0 0
  %263 = vmatpush1.bf16.msra.mxu0 %v243
  %264 = vmatprep.subr.bf16.mxu0 0
  %265 = vmatpush1.bf16.msra.mxu0 %v244
  %266 = vmatprep.subr.bf16.mxu0 0
  %267 = vmatpush1.bf16.msra.mxu0 %v245
  %268 = vmatprep.subr.bf16.mxu0 0
  %269 = vmatpush1.bf16.msra.mxu0 %v246
  %270 = vmatprep.subr.bf16.mxu0 0
  %271 = vmatpush1.bf16.msra.mxu0 %v247
  %272 = vmatprep.subr.bf16.mxu0 0
  %273 = vmatpush1.bf16.msra.mxu0 0
  %274 = vmatprep.subr.bf16.mxu0 0
  %275 = vmatpush1.bf16.msra.mxu0 0
  %276 = vmatprep.subr.bf16.mxu0 0
  %277 = vmatpush1.bf16.msra.mxu0 0
  %278 = vmatprep.subr.bf16.mxu0 0
  %279 = vmatpush1.bf16.msra.mxu0 0
  %280 = vmatprep.subr.bf16.mxu0 0
  %281 = vmatpush1.bf16.msra.mxu0 0
  %282 = vmatprep.subr.bf16.mxu0 0
  %283 = vmatpush1.bf16.msra.mxu0 0
  %284 = vmatprep.subr.bf16.mxu0 0
  %285 = vmatpush1.bf16.msra.mxu0 0
  %286 = vmatprep.subr.bf16.mxu0 0
  %287 = vmatpush1.bf16.msra.mxu0 0
  %288 = vmatprep.mubr.bf16.mxu0 0
  %289 = vmatmul.mubr.bf16.gmra.mrb[0].mxu0 %v182
  %v290 = vpop.f32.mrb[0].mxu0
  %v291 = vadd.f32 %v206, %v290
  %v292 = vpop.f32.mrb[0].mxu0
  %v293 = vpop.f32.mrb[0].mxu0
  %v294 = vadd.f32 %v206, %v293
  %v295 = vpop.f32.mrb[0].mxu0
  %296 = vmatprep.mubr.bf16.mxu0 0
  %297 = vmatmul.mubr.bf16.gmra.mrb[0].mxu0 %v183
  %v298 = vpop.f32.mrb[0].mxu0
  %v299 = vadd.f32 %v206, %v298
  %v300 = vpop.f32.mrb[0].mxu0
  %v301 = vpop.f32.mrb[0].mxu0
  %v302 = vadd.f32 %v206, %v301
  %v303 = vpop.f32.mrb[0].mxu0
  %304 = vmatprep.mubr.bf16.mxu0 0
  %305 = vmatmul.mubr.bf16.gmra.mrb[0].mxu0 %v184
  %v306 = vpop.f32.mrb[0].mxu0
  %v307 = vadd.f32 %v206, %v306
  %v308 = vpop.f32.mrb[0].mxu0
  %v309 = vpop.f32.mrb[0].mxu0
  %v310 = vpop.f32.mrb[0].mxu0
  %311 = vdwg.mxu0
  %v312 = vmax.f32 %v291, 0.0
  %v313 = vmax.f32 %v294, 0.0
  %v314 = vmax.f32 %v299, 0.0
  %v315 = vmax.f32 %v302, 0.0
  %v316 = vmax.f32 %v307, 0.0
  %317 = vst [vmem:[%s7] sm:$0xff] %v312
  %318 = vst [vmem:[%s7 + $0x8] sm:$0xff] %v313
  %319 = vst [vmem:[%s7 + $0x10] sm:$0xff] %v314
  %320 = vst [vmem:[%s7 + $0x18] sm:$0xff] %v315
  %321 = vst [vmem:[%s7 + $0x20] sm:$0x3f] %v316
  %v322 = vld [vmem:[%s5] sm:$0xf]
  %v323 = vld [vmem:[%s5 + $0x4] sm:$0xf]
  %v324 = vld [vmem:[%s5 + $0x8] sm:$0xf]
  %v325 = vld [vmem:[%s5 + $0xc] sm:$0xf]
  %v326 = vld [vmem:[%s5 + $0x10] sm:$0xf]
  %v327 = vld [vmem:[%s5 + $0x14] sm:$0xf]
  %v328 = vld [vmem:[%s5 + $0x18] sm:$0xf]
  %v329 = vld [vmem:[%s5 + $0x1c] sm:$0xf]
  %v330 = vld [vmem:[%s5 + $0x20] sm:$0xf]
  %v331 = vld [vmem:[%s5 + $0x24] sm:$0xf]
  %v332 = vld [vmem:[%s5 + $0x28] sm:$0xf]
  %v333 = vld [vmem:[%s5 + $0x2c] sm:$0xf]
  %v334 = vld [vmem:[%s5 + $0x30] sm:$0xf]
  %v335 = vld [vmem:[%s5 + $0x34] sm:$0xf]
  %v336 = vld [vmem:[%s5 + $0x38] sm:$0xf]
  %v337 = vld [vmem:[%s5 + $0x3c] sm:$0xf]
  %v338 = vld [vmem:[%s6] sm:$0x1]
  %v340 = vlaneseq
  %v341 = vshrl.u32 %v340, 7
  %v342 = vsub.s32 0, %v341
  %v343 = vrot.slane %v338, %v342
  %v361 = vunpack.c.l.b16 %v322
  %v362 = vunpack.c.l.b16 %v323
  %v363 = vunpack.c.l.b16 %v324
  %v364 = vunpack.c.l.b16 %v325
  %v365 = vunpack.c.l.b16 %v326
  %v366 = vunpack.c.l.b16 %v327
  %v367 = vunpack.c.l.b16 %v328
  %v368 = vunpack.c.l.b16 %v329
  %v369 = vunpack.c.l.b16 %v330
  %v370 = vunpack.c.l.b16 %v331
  %v371 = vunpack.c.l.b16 %v332
  %v372 = vunpack.c.l.b16 %v333
  %v373 = vunpack.c.l.b16 %v334
  %v374 = vunpack.c.l.b16 %v335
  %v375 = vunpack.c.l.b16 %v336
  %v376 = vunpack.c.l.b16 %v337
  %v377 = vpack.c.b16 %v362, %v361
  %v378 = vpack.c.b16 %v364, %v363
  %v379 = vpack.c.b16 %v366, %v365
  %v380 = vpack.c.b16 %v368, %v367
  %v381 = vpack.c.b16 %v370, %v369
  %v382 = vpack.c.b16 %v372, %v371
  %v383 = vpack.c.b16 %v374, %v373
  %v384 = vpack.c.b16 %v376, %v375
  %393 = vmatprep.subr.bf16.mxu0 0
  %394 = vmatpush1.bf16.msra.mxu0 %v377
  %395 = vmatprep.subr.bf16.mxu0 0
  %396 = vmatpush1.bf16.msra.mxu0 %v378
  %397 = vmatprep.subr.bf16.mxu0 0
  %398 = vmatpush1.bf16.msra.mxu0 %v379
  %399 = vmatprep.subr.bf16.mxu0 0
  %400 = vmatpush1.bf16.msra.mxu0 %v380
  %401 = vmatprep.subr.bf16.mxu0 0
  %402 = vmatpush1.bf16.msra.mxu0 %v381
  %403 = vmatprep.subr.bf16.mxu0 0
  %404 = vmatpush1.bf16.msra.mxu0 %v382
  %405 = vmatprep.subr.bf16.mxu0 0
  %406 = vmatpush1.bf16.msra.mxu0 %v383
  %407 = vmatprep.subr.bf16.mxu0 0
  %408 = vmatpush1.bf16.msra.mxu0 %v384
  %409 = vmatprep.subr.bf16.mxu0 0
  %410 = vmatpush1.bf16.msra.mxu0 0
  %411 = vmatprep.subr.bf16.mxu0 0
  %412 = vmatpush1.bf16.msra.mxu0 0
  %413 = vmatprep.subr.bf16.mxu0 0
  %414 = vmatpush1.bf16.msra.mxu0 0
  %415 = vmatprep.subr.bf16.mxu0 0
  %416 = vmatpush1.bf16.msra.mxu0 0
  %417 = vmatprep.subr.bf16.mxu0 0
  %418 = vmatpush1.bf16.msra.mxu0 0
  %419 = vmatprep.subr.bf16.mxu0 0
  %420 = vmatpush1.bf16.msra.mxu0 0
  %421 = vmatprep.subr.bf16.mxu0 0
  %422 = vmatpush1.bf16.msra.mxu0 0
  %423 = vmatprep.subr.bf16.mxu0 0
  %424 = vmatpush1.bf16.msra.mxu0 0
  %425 = vmatprep.mubr.bf16.mxu0 0
  %426 = vmatmul.mubr.bf16.gmra.mrb[0].mxu0 %v67
  %v427 = vpop.f32.mrb[0].mxu0
  %v428 = vadd.f32 %v343, %v427
  %v429 = vpop.f32.mrb[0].mxu0
  %v430 = vpop.f32.mrb[0].mxu0
  %v431 = vadd.f32 %v343, %v430
  %v432 = vpop.f32.mrb[0].mxu0
  %433 = vmatprep.mubr.bf16.mxu0 0
  %434 = vmatmul.mubr.bf16.gmra.mrb[0].mxu0 %v68
  %v435 = vpop.f32.mrb[0].mxu0
  %v436 = vadd.f32 %v343, %v435
  %v437 = vpop.f32.mrb[0].mxu0
  %v438 = vpop.f32.mrb[0].mxu0
  %v439 = vadd.f32 %v343, %v438
  %v440 = vpop.f32.mrb[0].mxu0
  %441 = vmatprep.mubr.bf16.mxu0 0
  %442 = vmatmul.mubr.bf16.gmra.mrb[0].mxu0 %v69
  %v443 = vpop.f32.mrb[0].mxu0
  %v444 = vadd.f32 %v343, %v443
  %v445 = vpop.f32.mrb[0].mxu0
  %v446 = vpop.f32.mrb[0].mxu0
  %v447 = vpop.f32.mrb[0].mxu0
  %448 = vdwg.mxu0
  %v449 = vmax.f32 %v428, 0.0
  %v450 = vmax.f32 %v431, 0.0
  %v451 = vmax.f32 %v436, 0.0
  %v452 = vmax.f32 %v439, 0.0
  %v453 = vmax.f32 %v444, 0.0
  %454 = vst [vmem:[%s8] sm:$0xff] %v449
  %455 = vst [vmem:[%s8 + $0x8] sm:$0xff] %v450
  %456 = vst [vmem:[%s8 + $0x10] sm:$0xff] %v451
  %457 = vst [vmem:[%s8 + $0x18] sm:$0xff] %v452
  %458 = vst [vmem:[%s8 + $0x20] sm:$0x3f] %v453
  // Predicated region
  $region30: #{ocr_forward.18} parent=0 // pred_check
    _
  $region31: #{ocr_forward.18} parent=0 // pred_check_branch
    %460 = sbr.rel (0) target = $region33
  $region32: #{ocr_forward.18} parent=0 // pred_region
    _
  $region33: #{ocr_forward.18} parent=0 // pred_fallthru
    _
  // Predicated region
  $region34: #{ocr_forward.18} parent=0 // pred_check
    _
  $region35: #{ocr_forward.18} parent=0 // pred_check_branch
    %462 = sbr.rel (0) target = $region37
  $region36: #{ocr_forward.18} parent=0 // pred_region
    _
  $region37: #{ocr_forward.18} parent=0 // pred_fallthru
    _
  // Predicated region
  $region38: #{ocr_forward.18} parent=0 // pred_check
    _
  $region39: #{ocr_forward.18} parent=0 // pred_check_branch
    %464 = sbr.rel (0) target = $region41
  $region40: #{ocr_forward.18} parent=0 // pred_region
    _
  $region41: #{ocr_forward.18} parent=0 // pred_fallthru
    _
  // Predicated region
  $region42: #{ocr_forward.18} parent=0 // pred_check
    _
  $region43: #{ocr_forward.18} parent=0 // pred_check_branch
    %466 = sbr.rel (0) target = $region45
  $region44: #{ocr_forward.18} parent=0 // pred_region
    _
  $region45: #{ocr_forward.18} parent=0 // pred_fallthru
    _

// kernel: ocr_forward.16
$region0: #{ocr_forward.16}
  #allocation0 [shape = 'u32[]', space=smem, size = 0x4, offset = 0x4, fixed_abs, tag = 'smem constant byte address 0x4 - core index']
  #allocation1 [shape = 'u32[144,128]{1,0:T(1,128)}', space=vmem, size = 0x12000, scoped, tag = 'internal scratch']
  #allocation2 [shape = 'f32[256,128]{1,0:T(8,128)}', space=vmem, size = 0x20000, scoped, tag = 'scratch operand']
  %s0 = inlined_call_operand.vmem [shape: bf16[512,128], index: 0, kind: input, shape index: {}]
  %s1 = inlined_call_operand.vmem [shape: bf16[128,128], index: 1, kind: input, shape index: {}]
  %s2 = inlined_call_operand.vmem [shape: f32[1,128], index: 2, kind: input, shape index: {}]
  %s3 = inlined_call_operand.vmem [shape: f32[512,128], index: 3, kind: output, shape index: {}]
  %s4 = sld [smem:[#allocation0]]
  $region45: #{ocr_forward.16} parent=0
    _
  %s6 = ssub.s32 1, %s4
  %s7 = scalar_select 0, %s6, %s4
  loop: start=0, step=1, limit=4
  $region2: #{ocr_forward.16} parent=0 // loop_pre_header
    _
  $region3: #{ocr_forward.16} parent=0 // loop_header
    %s9 = sphi 0, %s13
    %p10 = scmp.ge.s32.totalorder %s9, 4
    %s16 = sphi 0, %s35
    %s17 = sphi 0, %s31
    %s18 = sphi 0, %s27
    %s19 = sphi 0, %s16
    %s20 = sphi 0, %s17
    %s21 = sphi 0, %s18
    %s22 = sphi 0, %s19
    %s23 = sphi 0, %s20
    %s24 = sphi 0, %s21
    %s40 = sphi 0, %s42
    %s43 = sphi 0, %s40
    %s44 = sphi 0, %s43
    %s60 = sphi 0, %s44
    %s68 = sphi 0, %s70
    %s71 = sphi 0, %s68
    %s72 = sphi 0, %s71
    %s88 = sphi 0, %s72
    %s94 = sphi 0, %s96
    %s97 = sphi 0, %s94
    %s98 = sphi 0, %s97
    %s114 = sphi 0, %s98
    %s122 = sphi 0, %s124
    %s125 = sphi 0, %s122
    %s126 = sphi 0, %s125
    %s142 = sphi 0, %s126
  $region4: #{ocr_forward.16} parent=0 // loop_header_branch
    %12 = sbr.rel (%p10) target = $region8
  $region5: #{ocr_forward.16} parent=0 // loop_body
    %s14 = ssub.s32 %s9, 1
    %s15 = ssub.s32 %s9, 2
    %s25 = sadd.s32 1, %s18
    %p26 = scmp.ge.s32.totalorder %s25, 1
    %s27 = scalar_select %p26, 0, %s25
    %s28 = sadd.s32 1, %s17
    %s29 = scalar_select %p26, %s28, %s17
    %p30 = scmp.ge.s32.totalorder %s29, 1
    %s31 = scalar_select %p30, 0, %s29
    %s32 = sadd.s32 1, %s16
    %s33 = scalar_select %p30, %s32, %s16
    %p34 = scmp.ge.s32.totalorder %s33, 2
    %s35 = scalar_select %p34, 0, %s33
    %s36 = ssub.s32 %s16, %s35
    %s37 = ssub.s32 %s18, %s27
    %s38 = sor.u32 %s36, %s37
    %p39 = scmp.eq.s32.totalorder %s38, 0
    %s41 = sadd.s32 %s40, 1
    %s42 = scalar_select %p39, %s40, %s41
    %p45 = pneg %p39
    %p46 = scmp.eq.s32.totalorder %s9, 1
    %p47 = por %p45, %p46
    %p48 = scmp.ne.s32.totalorder %s40, %s43
    %p49 = scmp.eq.s32.totalorder %s9, 0
    %p50 = por %p48, %p49
    %p51 = scmp.ne.s32.totalorder %s40, %s43
    %p52 = scmp.eq.s32.totalorder %s14, 1
    %p53 = por %p51, %p52
    %p54 = scmp.ne.s32.totalorder %s43, %s44
    %p55 = scmp.eq.s32.totalorder %s14, 0
    %p56 = por %p54, %p55
    %p57 = scmp.ne.s32.totalorder %s43, %s44
    %p58 = scmp.eq.s32.totalorder %s15, 1
    %p59 = por %p57, %p58
    %p61 = scmp.ne.s32.totalorder %s44, %s60
    %p62 = scmp.eq.s32.totalorder %s15, 0
    %p63 = por %p61, %p62
    %s64 = ssub.s32 %s18, %s27
    %s65 = ssub.s32 %s17, %s31
    %s66 = sor.u32 %s64, %s65
    %p67 = scmp.eq.s32.totalorder %s66, 0
    %s69 = sadd.s32 %s68, 1
    %s70 = scalar_select %p67, %s68, %s69
    %p73 = pneg %p67
    %p74 = scmp.eq.s32.totalorder %s9, 1
    %p75 = por %p73, %p74
    %p76 = scmp.ne.s32.totalorder %s68, %s71
    %p77 = scmp.eq.s32.totalorder %s9, 0
    %p78 = por %p76, %p77
    %p79 = scmp.ne.s32.totalorder %s68, %s71
    %p80 = scmp.eq.s32.totalorder %s14, 1
    %p81 = por %p79, %p80
    %p82 = scmp.ne.s32.totalorder %s71, %s72
    %p83 = scmp.eq.s32.totalorder %s14, 0
    %p84 = por %p82, %p83
    %p85 = scmp.ne.s32.totalorder %s71, %s72
    %p86 = scmp.eq.s32.totalorder %s15, 1
    %p87 = por %p85, %p86
    %p89 = scmp.ne.s32.totalorder %s72, %s88
    %p90 = scmp.eq.s32.totalorder %s15, 0
    %p91 = por %p89, %p90
    %s92 = ssub.s32 %s17, %s31
    %p93 = scmp.eq.s32.totalorder %s92, 0
    %s95 = sadd.s32 %s94, 1
    %s96 = scalar_select %p93, %s94, %s95
    %p99 = pneg %p93
    %p100 = scmp.eq.s32.totalorder %s9, 1
    %p101 = por %p99, %p100
    %p102 = scmp.ne.s32.totalorder %s94, %s97
    %p103 = scmp.eq.s32.totalorder %s9, 0
    %p104 = por %p102, %p103
    %p105 = scmp.ne.s32.totalorder %s94, %s97
    %p106 = scmp.eq.s32.totalorder %s14, 1
    %p107 = por %p105, %p106
    %p108 = scmp.ne.s32.totalorder %s97, %s98
    %p109 = scmp.eq.s32.totalorder %s14, 0
    %p110 = por %p108, %p109
    %p111 = scmp.ne.s32.totalorder %s97, %s98
    %p112 = scmp.eq.s32.totalorder %s15, 1
    %p113 = por %p111, %p112
    %p115 = scmp.ne.s32.totalorder %s98, %s114
    %p116 = scmp.eq.s32.totalorder %s15, 0
    %p117 = por %p115, %p116
    %s118 = ssub.s32 %s16, %s35
    %s119 = ssub.s32 %s17, %s31
    %s120 = sor.u32 %s118, %s119
    %p121 = scmp.eq.s32.totalorder %s120, 0
    %s123 = sadd.s32 %s122, 1
    %s124 = scalar_select %p121, %s122, %s123
    %p127 = pneg %p121
    %p128 = scmp.eq.s32.totalorder %s9, 1
    %p129 = por %p127, %p128
    %p130 = scmp.ne.s32.totalorder %s122, %s125
    %p131 = scmp.eq.s32.totalorder %s9, 0
    %p132 = por %p130, %p131
    %p133 = scmp.ne.s32.totalorder %s122, %s125
    %p134 = scmp.eq.s32.totalorder %s14, 1
    %p135 = por %p133, %p134
    %p136 = scmp.ne.s32.totalorder %s125, %s126
    %p137 = scmp.eq.s32.totalorder %s14, 0
    %p138 = por %p136, %p137
    %p139 = scmp.ne.s32.totalorder %s125, %s126
    %p140 = scmp.eq.s32.totalorder %s15, 1
    %p141 = por %p139, %p140
    %p143 = scmp.ne.s32.totalorder %s126, %s142
    %p144 = scmp.eq.s32.totalorder %s15, 0
    %p145 = por %p143, %p144
    %p146 = scmp.le.s32.totalorder 1, %s9
    %p147 = scmp.lt.s32.totalorder %s9, 3
    %p148 = pnand %p146, %p147
    %p149 = pneg %p148
    // Predicated region
    $region9: #{ocr_forward.16} parent=5 // pred_check
      _
    $region10: #{ocr_forward.16} parent=5 // pred_check_branch
      %151 = sbr.rel (%p148) target = $region12
    $region11: #{ocr_forward.16} parent=5 // pred_region
      %s152 = ssub.s32 %s9, 1
      // Predicated region
      $region13: #{ocr_forward.16} parent=11 // pred_check
        %p153 = pneg %p84
      $region14: #{ocr_forward.16} parent=11 // pred_check_branch
        %155 = sbr.rel (%p153) target = $region16
      $region15: #{ocr_forward.16} parent=11 // pred_region
        %s156 = smul.u32 16, %s21
        %p157 = scmp.lt.s32.totalorder %s156, 15
        %s158 = scalar_select %p157, %s156, 15
        %p159 = scmp.lt.s32.totalorder %s20, 0
        %s160 = scalar_select %p159, %s20, 0
        %s161 = sadd.s32 %s160, %s158
        %s162 = smul.addr %s161, 4
        %s163 = scalar_lea.vmem %s1, %s162
        %s164 = smul.u32 16, %s21
      $region16: #{ocr_forward.16} parent=11 // pred_fallthru
        _
      // Predicated region
      $region17: #{ocr_forward.16} parent=11 // pred_check
        %p165 = pneg %p110
      $region18: #{ocr_forward.16} parent=11 // pred_check_branch
        %167 = sbr.rel (%p165) target = $region20
      $region19: #{ocr_forward.16} parent=11 // pred_region
        %p168 = scmp.lt.s32.totalorder %s20, 0
        %s169 = scalar_select %p168, %s20, 0
        %s170 = scalar_lea.vmem %s2, %s169
      $region20: #{ocr_forward.16} parent=11 // pred_fallthru
        _
    $region12: #{ocr_forward.16} parent=5 // pred_fallthru
      _
    %p171 = scmp.lt.s32.totalorder %s9, 2
    // Predicated region
    $region21: #{ocr_forward.16} parent=5 // pred_check
      %p172 = pneg %p171
    $region22: #{ocr_forward.16} parent=5 // pred_check_branch
      %174 = sbr.rel (%p172) target = $region24
    $region23: #{ocr_forward.16} parent=5 // pred_region
      // Predicated region
      $region25: #{ocr_forward.16} parent=23 // pred_check
        %p175 = pneg %p50
      $region26: #{ocr_forward.16} parent=23 // pred_check_branch
        %177 = sbr.rel (%p175) target = $region28
      $region27: #{ocr_forward.16} parent=23 // pred_region
        %s178 = smul.u32 32, %s16
        %p179 = scmp.lt.s32.totalorder %s178, 63
        %s180 = scalar_select %p179, %s178, 63
        %p181 = scmp.lt.s32.totalorder %s18, 0
        %s182 = scalar_select %p181, %s18, 0
        %s183 = sadd.s32 %s182, %s180
        %s184 = smul.addr %s183, 4
        %s185 = scalar_lea.vmem %s0, %s184
        %s186 = smul.u32 32, %s16
      $region28: #{ocr_forward.16} parent=23 // pred_fallthru
        _
    $region24: #{ocr_forward.16} parent=5 // pred_fallthru
      _
    %p187 = scmp.le.s32.totalorder 1, %s9
    %p188 = scmp.lt.s32.totalorder %s9, 3
    %p189 = pnand %p187, %p188
    %p190 = pneg %p189
    // Predicated region
    $region29: #{ocr_forward.16} parent=5 // pred_check
      _
    $region30: #{ocr_forward.16} parent=5 // pred_check_branch
      %192 = sbr.rel (%p189) target = $region32
    $region31: #{ocr_forward.16} parent=5 // pred_region
      %s193 = ssub.s32 %s9, 1
      %s194 = smul.u32 32, %s19
      %p195 = scmp.lt.s32.totalorder %s194, 63
      %s196 = scalar_select %p195, %s194, 63
      %p197 = scmp.lt.s32.totalorder %s21, 0
      %s198 = scalar_select %p197, %s21, 0
      %s199 = sadd.s32 %s198, %s196
      %s200 = smul.addr %s199, 4
      %s201 = scalar_lea.vmem %s0, %s200
      %p202 = pneg %p56
      %p203 = pneg %p53
      %s204 = smul.u32 16, %s21
      %p205 = scmp.lt.s32.totalorder %s204, 15
      %s206 = scalar_select %p205, %s204, 15
      %p207 = scmp.lt.s32.totalorder %s20, 0
      %s208 = scalar_select %p207, %s20, 0
      %s209 = sadd.s32 %s208, %s206
      %s210 = smul.addr %s209, 4
      %s211 = scalar_lea.vmem %s1, %s210
      %p212 = pneg %p84
      %p213 = pneg %p81
      %p214 = scmp.lt.s32.totalorder %s20, 0
      %s215 = scalar_select %p214, %s20, 0
      %s216 = scalar_lea.vmem %s2, %s215
      %p217 = pneg %p110
      %p218 = pneg %p107
      %p219 = pneg %p138
      %p220 = pneg %p135
      %s221 = smul.u32 32, %s19
      %p222 = scmp.lt.s32.totalorder %s221, 63
      %s223 = scalar_select %p222, %s221, 63
      %p224 = scmp.lt.s32.totalorder %s20, 0
      %s225 = scalar_select %p224, %s20, 0
      %s226 = sadd.s32 %s225, %s223
      %s227 = smul.addr %s226, 8
      %s228 = scalar_lea.vmem %s3, %s227
      %s229 = smul.u32 32, %s19
      %p230 = scmp.lt.s32.totalorder %s229, 63
      %s231 = scalar_select %p230, %s229, 63
      %p232 = scmp.lt.s32.totalorder %s21, 0
      %s233 = scalar_select %p232, %s21, 0
      %s234 = sadd.s32 %s233, %s231
      %s235 = smul.addr %s234, 4
      %s236 = scalar_lea.vmem %s0, %s235
      %s237 = smul.u32 32, %s19
      %s238 = smul.u32 16, %s21
      %p239 = scmp.lt.s32.totalorder %s238, 15
      %s240 = scalar_select %p239, %s238, 15
      %p241 = scmp.lt.s32.totalorder %s20, 0
      %s242 = scalar_select %p241, %s20, 0
      %s243 = sadd.s32 %s242, %s240
      %s244 = smul.addr %s243, 4
      %s245 = scalar_lea.vmem %s1, %s244
      %s246 = smul.u32 16, %s21
      %p247 = scmp.lt.s32.totalorder %s20, 0
      %s248 = scalar_select %p247, %s20, 0
      %s249 = scalar_lea.vmem %s2, %s248
      %s250 = smul.u32 32, %s19
      %p251 = scmp.lt.s32.totalorder %s250, 63
      %s252 = scalar_select %p251, %s250, 63
      %p253 = scmp.lt.s32.totalorder %s20, 0
      %s254 = scalar_select %p253, %s20, 0
      %s255 = sadd.s32 %s254, %s252
      %s256 = smul.addr %s255, 8
      %s257 = scalar_lea.vmem %s3, %s256
      %s258 = smul.u32 32, %s19
      %v260 = vld [vmem:[%s236] sm:$0xf]
      %v261 = vld [vmem:[%s236 + $0x4] sm:$0xf]
      %v262 = vld [vmem:[%s236 + $0x8] sm:$0xf]
      %v263 = vld [vmem:[%s236 + $0xc] sm:$0xf]
      %v264 = vld [vmem:[%s236 + $0x10] sm:$0xf]
      %v265 = vld [vmem:[%s236 + $0x14] sm:$0xf]
      %v266 = vld [vmem:[%s236 + $0x18] sm:$0xf]
      %v267 = vld [vmem:[%s236 + $0x1c] sm:$0xf]
      %v268 = vld [vmem:[%s236 + $0x20] sm:$0xf]
      %v269 = vld [vmem:[%s236 + $0x24] sm:$0xf]
      %v270 = vld [vmem:[%s236 + $0x28] sm:$0xf]
      %v271 = vld [vmem:[%s236 + $0x2c] sm:$0xf]
      %v272 = vld [vmem:[%s236 + $0x30] sm:$0xf]
      %v273 = vld [vmem:[%s236 + $0x34] sm:$0xf]
      %v274 = vld [vmem:[%s236 + $0x38] sm:$0xf]
      %v275 = vld [vmem:[%s236 + $0x3c] sm:$0xf]
      %v276 = vld [vmem:[%s236 + $0x40] sm:$0xf]
      %v277 = vld [vmem:[%s236 + $0x44] sm:$0xf]
      %v278 = vld [vmem:[%s236 + $0x48] sm:$0xf]
      %v279 = vld [vmem:[%s236 + $0x4c] sm:$0xf]
      %v280 = vld [vmem:[%s236 + $0x50] sm:$0xf]
      %v281 = vld [vmem:[%s236 + $0x54] sm:$0xf]
      %v282 = vld [vmem:[%s236 + $0x58] sm:$0xf]
      %v283 = vld [vmem:[%s236 + $0x5c] sm:$0xf]
      %v284 = vld [vmem:[%s236 + $0x60] sm:$0xf]
      %v285 = vld [vmem:[%s236 + $0x64] sm:$0xf]
      %v286 = vld [vmem:[%s236 + $0x68] sm:$0xf]
      %v287 = vld [vmem:[%s236 + $0x6c] sm:$0xf]
      %v288 = vld [vmem:[%s236 + $0x70] sm:$0xf]
      %v289 = vld [vmem:[%s236 + $0x74] sm:$0xf]
      %v290 = vld [vmem:[%s236 + $0x78] sm:$0xf]
      %v291 = vld [vmem:[%s236 + $0x7c] sm:$0xf]
      %v292 = vld [vmem:[%s245] sm:$0xf]
      %v293 = vld [vmem:[%s245 + $0x4] sm:$0xf]
      %v294 = vld [vmem:[%s245 + $0x8] sm:$0xf]
      %v295 = vld [vmem:[%s245 + $0xc] sm:$0xf]
      %v296 = vld [vmem:[%s245 + $0x10] sm:$0xf]
      %v297 = vld [vmem:[%s245 + $0x14] sm:$0xf]
      %v298 = vld [vmem:[%s245 + $0x18] sm:$0xf]
      %v299 = vld [vmem:[%s245 + $0x1c] sm:$0xf]
      %v300 = vld [vmem:[%s245 + $0x20] sm:$0xf]
      %v301 = vld [vmem:[%s245 + $0x24] sm:$0xf]
      %v302 = vld [vmem:[%s245 + $0x28] sm:$0xf]
      %v303 = vld [vmem:[%s245 + $0x2c] sm:$0xf]
      %v304 = vld [vmem:[%s245 + $0x30] sm:$0xf]
      %v305 = vld [vmem:[%s245 + $0x34] sm:$0xf]
      %v306 = vld [vmem:[%s245 + $0x38] sm:$0xf]
      %v307 = vld [vmem:[%s245 + $0x3c] sm:$0xf]
      %v308 = vld [vmem:[%s249] sm:$0x1]
      %v310 = vlaneseq
      %v311 = vshrl.u32 %v310, 7
      %v312 = vsub.s32 0, %v311
      %v313 = vrot.slane %v308, %v312
      %v347 = vunpack.c.l.b16 %v260
      %v348 = vunpack.c.l.b16 %v261
      %v349 = vunpack.c.l.b16 %v262
      %v350 = vunpack.c.l.b16 %v263
      %v351 = vunpack.c.l.b16 %v264
      %v352 = vunpack.c.l.b16 %v265
      %v353 = vunpack.c.l.b16 %v266
      %v354 = vunpack.c.l.b16 %v267
      %v355 = vunpack.c.l.b16 %v268
      %v356 = vunpack.c.l.b16 %v269
      %v357 = vunpack.c.l.b16 %v270
      %v358 = vunpack.c.l.b16 %v271
      %v359 = vunpack.c.l.b16 %v272
      %v360 = vunpack.c.l.b16 %v273
      %v361 = vunpack.c.l.b16 %v274
      %v362 = vunpack.c.l.b16 %v275
      %v363 = vunpack.c.l.b16 %v276
      %v364 = vunpack.c.l.b16 %v277
      %v365 = vunpack.c.l.b16 %v278
      %v366 = vunpack.c.l.b16 %v279
      %v367 = vunpack.c.l.b16 %v280
      %v368 = vunpack.c.l.b16 %v281
      %v369 = vunpack.c.l.b16 %v282
      %v370 = vunpack.c.l.b16 %v283
      %v371 = vunpack.c.l.b16 %v284
      %v372 = vunpack.c.l.b16 %v285
      %v373 = vunpack.c.l.b16 %v286
      %v374 = vunpack.c.l.b16 %v287
      %v375 = vunpack.c.l.b16 %v288
      %v376 = vunpack.c.l.b16 %v289
      %v377 = vunpack.c.l.b16 %v290
      %v378 = vunpack.c.l.b16 %v291
      %v379 = vpack.c.b16 %v348, %v347
      %v380 = vpack.c.b16 %v350, %v349
      %v381 = vpack.c.b16 %v352, %v351
      %v382 = vpack.c.b16 %v354, %v353
      %v383 = vpack.c.b16 %v356, %v355
      %v384 = vpack.c.b16 %v358, %v357
      %v385 = vpack.c.b16 %v360, %v359
      %v386 = vpack.c.b16 %v362, %v361
      %v387 = vpack.c.b16 %v364, %v363
      %v388 = vpack.c.b16 %v366, %v365
      %v389 = vpack.c.b16 %v368, %v367
      %v390 = vpack.c.b16 %v370, %v369
      %v391 = vpack.c.b16 %v372, %v371
      %v392 = vpack.c.b16 %v374, %v373
      %v393 = vpack.c.b16 %v376, %v375
      %v394 = vpack.c.b16 %v378, %v377
      %v427 = vunpack.c.l.b16 %v292
      %v428 = vunpack.c.l.b16 %v293
      %v429 = vunpack.c.l.b16 %v294
      %v430 = vunpack.c.l.b16 %v295
      %v431 = vunpack.c.l.b16 %v296
      %v432 = vunpack.c.l.b16 %v297
      %v433 = vunpack.c.l.b16 %v298
      %v434 = vunpack.c.l.b16 %v299
      %v435 = vunpack.c.l.b16 %v300
      %v436 = vunpack.c.l.b16 %v301
      %v437 = vunpack.c.l.b16 %v302
      %v438 = vunpack.c.l.b16 %v303
      %v439 = vunpack.c.l.b16 %v304
      %v440 = vunpack.c.l.b16 %v305
      %v441 = vunpack.c.l.b16 %v306
      %v442 = vunpack.c.l.b16 %v307
      %v443 = vpack.c.b16 %v428, %v427
      %v444 = vpack.c.b16 %v430, %v429
      %v445 = vpack.c.b16 %v432, %v431
      %v446 = vpack.c.b16 %v434, %v433
      %v447 = vpack.c.b16 %v436, %v435
      %v448 = vpack.c.b16 %v438, %v437
      %v449 = vpack.c.b16 %v440, %v439
      %v450 = vpack.c.b16 %v442, %v441
      %459 = vmatprep.subr.bf16.mxu0 0
      %460 = vmatpush1.bf16.msra.mxu0 %v443
      %461 = vmatprep.subr.bf16.mxu0 0
      %462 = vmatpush1.bf16.msra.mxu0 %v444
      %463 = vmatprep.subr.bf16.mxu0 0
      %464 = vmatpush1.bf16.msra.mxu0 %v445
      %465 = vmatprep.subr.bf16.mxu0 0
      %466 = vmatpush1.bf16.msra.mxu0 %v446
      %467 = vmatprep.subr.bf16.mxu0 0
      %468 = vmatpush1.bf16.msra.mxu0 %v447
      %469 = vmatprep.subr.bf16.mxu0 0
      %470 = vmatpush1.bf16.msra.mxu0 %v448
      %471 = vmatprep.subr.bf16.mxu0 0
      %472 = vmatpush1.bf16.msra.mxu0 %v449
      %473 = vmatprep.subr.bf16.mxu0 0
      %474 = vmatpush1.bf16.msra.mxu0 %v450
      %475 = vmatprep.subr.bf16.mxu0 0
      %476 = vmatpush1.bf16.msra.mxu0 0
      %477 = vmatprep.subr.bf16.mxu0 0
      %478 = vmatpush1.bf16.msra.mxu0 0
      %479 = vmatprep.subr.bf16.mxu0 0
      %480 = vmatpush1.bf16.msra.mxu0 0
      %481 = vmatprep.subr.bf16.mxu0 0
      %482 = vmatpush1.bf16.msra.mxu0 0
      %483 = vmatprep.subr.bf16.mxu0 0
      %484 = vmatpush1.bf16.msra.mxu0 0
      %485 = vmatprep.subr.bf16.mxu0 0
      %486 = vmatpush1.bf16.msra.mxu0 0
      %487 = vmatprep.subr.bf16.mxu0 0
      %488 = vmatpush1.bf16.msra.mxu0 0
      %489 = vmatprep.subr.bf16.mxu0 0
      %490 = vmatpush1.bf16.msra.mxu0 0
      %491 = vmatprep.mubr.bf16.mxu0 0
      %492 = vmatmul.mubr.bf16.gmra.mrb[0].mxu0 %v379
      %v493 = vpop.f32.mrb[0].mxu0
      %v494 = vadd.f32 %v313, %v493
      %v495 = vpop.f32.mrb[0].mxu0
      %v496 = vpop.f32.mrb[0].mxu0
      %v497 = vadd.f32 %v313, %v496
      %v498 = vpop.f32.mrb[0].mxu0
      %499 = vmatprep.mubr.bf16.mxu0 0
      %500 = vmatmul.mubr.bf16.gmra.mrb[0].mxu0 %v380
      %v501 = vpop.f32.mrb[0].mxu0
      %v502 = vadd.f32 %v313, %v501
      %v503 = vpop.f32.mrb[0].mxu0
      %v504 = vpop.f32.mrb[0].mxu0
      %v505 = vadd.f32 %v313, %v504
      %v506 = vpop.f32.mrb[0].mxu0
      %507 = vmatprep.mubr.bf16.mxu0 0
      %508 = vmatmul.mubr.bf16.gmra.mrb[0].mxu0 %v381
      %v509 = vpop.f32.mrb[0].mxu0
      %v510 = vadd.f32 %v313, %v509
      %v511 = vpop.f32.mrb[0].mxu0
      %v512 = vpop.f32.mrb[0].mxu0
      %v513 = vadd.f32 %v313, %v512
      %v514 = vpop.f32.mrb[0].mxu0
      %515 = vmatprep.mubr.bf16.mxu0 0
      %516 = vmatmul.mubr.bf16.gmra.mrb[0].mxu0 %v382
      %v517 = vpop.f32.mrb[0].mxu0
      %v518 = vadd.f32 %v313, %v517
      %v519 = vpop.f32.mrb[0].mxu0
      %v520 = vpop.f32.mrb[0].mxu0
      %v521 = vadd.f32 %v313, %v520
      %v522 = vpop.f32.mrb[0].mxu0
      %523 = vmatprep.mubr.bf16.mxu0 0
      %524 = vmatmul.mubr.bf16.gmra.mrb[0].mxu0 %v383
      %v525 = vpop.f32.mrb[0].mxu0
      %v526 = vadd.f32 %v313, %v525
      %v527 = vpop.f32.mrb[0].mxu0
      %v528 = vpop.f32.mrb[0].mxu0
      %v529 = vadd.f32 %v313, %v528
      %v530 = vpop.f32.mrb[0].mxu0
      %531 = vmatprep.mubr.bf16.mxu0 0
      %532 = vmatmul.mubr.bf16.gmra.mrb[0].mxu0 %v384
      %v533 = vpop.f32.mrb[0].mxu0
      %v534 = vadd.f32 %v313, %v533
      %v535 = vpop.f32.mrb[0].mxu0
      %v536 = vpop.f32.mrb[0].mxu0
      %v537 = vadd.f32 %v313, %v536
      %v538 = vpop.f32.mrb[0].mxu0
      %539 = vmatprep.mubr.bf16.mxu0 0
      %540 = vmatmul.mubr.bf16.gmra.mrb[0].mxu0 %v385
      %v541 = vpop.f32.mrb[0].mxu0
      %v542 = vadd.f32 %v313, %v541
      %v543 = vpop.f32.mrb[0].mxu0
      %v544 = vpop.f32.mrb[0].mxu0
      %v545 = vadd.f32 %v313, %v544
      %v546 = vpop.f32.mrb[0].mxu0
      %547 = vmatprep.mubr.bf16.mxu0 0
      %548 = vmatmul.mubr.bf16.gmra.mrb[0].mxu0 %v386
      %v549 = vpop.f32.mrb[0].mxu0
      %v550 = vadd.f32 %v313, %v549
      %v551 = vpop.f32.mrb[0].mxu0
      %v552 = vpop.f32.mrb[0].mxu0
      %v553 = vadd.f32 %v313, %v552
      %v554 = vpop.f32.mrb[0].mxu0
      %555 = vmatprep.mubr.bf16.mxu0 0
      %556 = vmatmul.mubr.bf16.gmra.mrb[0].mxu0 %v387
      %v557 = vpop.f32.mrb[0].mxu0
      %v558 = vadd.f32 %v313, %v557
      %v559 = vpop.f32.mrb[0].mxu0
      %v560 = vpop.f32.mrb[0].mxu0
      %v561 = vadd.f32 %v313, %v560
      %v562 = vpop.f32.mrb[0].mxu0
      %563 = vmatprep.mubr.bf16.mxu0 0
      %564 = vmatmul.mubr.bf16.gmra.mrb[0].mxu0 %v388
      %v565 = vpop.f32.mrb[0].mxu0
      %v566 = vadd.f32 %v313, %v565
      %v567 = vpop.f32.mrb[0].mxu0
      %v568 = vpop.f32.mrb[0].mxu0
      %v569 = vadd.f32 %v313, %v568
      %v570 = vpop.f32.mrb[0].mxu0
      %571 = vmatprep.mubr.bf16.mxu0 0
      %572 = vmatmul.mubr.bf16.gmra.mrb[0].mxu0 %v389
      %v573 = vpop.f32.mrb[0].mxu0
      %v574 = vadd.f32 %v313, %v573
      %v575 = vpop.f32.mrb[0].mxu0
      %v576 = vpop.f32.mrb[0].mxu0
      %v577 = vadd.f32 %v313, %v576
      %v578 = vpop.f32.mrb[0].mxu0
      %579 = vmatprep.mubr.bf16.mxu0 0
      %580 = vmatmul.mubr.bf16.gmra.mrb[0].mxu0 %v390
      %v581 = vpop.f32.mrb[0].mxu0
      %v582 = vadd.f32 %v313, %v581
      %v583 = vpop.f32.mrb[0].mxu0
      %v584 = vpop.f32.mrb[0].mxu0
      %v585 = vadd.f32 %v313, %v584
      %v586 = vpop.f32.mrb[0].mxu0
      %587 = vmatprep.mubr.bf16.mxu0 0
      %588 = vmatmul.mubr.bf16.gmra.mrb[0].mxu0 %v391
      %v589 = vpop.f32.mrb[0].mxu0
      %v590 = vadd.f32 %v313, %v589
      %v591 = vpop.f32.mrb[0].mxu0
      %v592 = vpop.f32.mrb[0].mxu0
      %v593 = vadd.f32 %v313, %v592
      %v594 = vpop.f32.mrb[0].mxu0
      %595 = vmatprep.mubr.bf16.mxu0 0
      %596 = vmatmul.mubr.bf16.gmra.mrb[0].mxu0 %v392
      %v597 = vpop.f32.mrb[0].mxu0
      %v598 = vadd.f32 %v313, %v597
      %v599 = vpop.f32.mrb[0].mxu0
      %v600 = vpop.f32.mrb[0].mxu0
      %v601 = vadd.f32 %v313, %v600
      %v602 = vpop.f32.mrb[0].mxu0
      %603 = vmatprep.mubr.bf16.mxu0 0
      %604 = vmatmul.mubr.bf16.gmra.mrb[0].mxu0 %v393
      %v605 = vpop.f32.mrb[0].mxu0
      %v606 = vadd.f32 %v313, %v605
      %v607 = vpop.f32.mrb[0].mxu0
      %v608 = vpop.f32.mrb[0].mxu0
      %v609 = vadd.f32 %v313, %v608
      %v610 = vpop.f32.mrb[0].mxu0
      %611 = vmatprep.mubr.bf16.mxu0 0
      %612 = vmatmul.mubr.bf16.gmra.mrb[0].mxu0 %v394
      %v613 = vpop.f32.mrb[0].mxu0
      %v614 = vadd.f32 %v313, %v613
      %v615 = vpop.f32.mrb[0].mxu0
      %v616 = vpop.f32.mrb[0].mxu0
      %v617 = vadd.f32 %v313, %v616
      %v618 = vpop.f32.mrb[0].mxu0
      %619 = vdwg.mxu0
      %v620 = vmax.f32 %v494, 0.0
      %v621 = vmax.f32 %v497, 0.0
      %v622 = vmax.f32 %v502, 0.0
      %v623 = vmax.f32 %v505, 0.0
      %v624 = vmax.f32 %v510, 0.0
      %v625 = vmax.f32 %v513, 0.0
      %v626 = vmax.f32 %v518, 0.0
      %v627 = vmax.f32 %v521, 0.0
      %v628 = vmax.f32 %v526, 0.0
      %v629 = vmax.f32 %v529, 0.0
      %v630 = vmax.f32 %v534, 0.0
      %v631 = vmax.f32 %v537, 0.0
      %v632 = vmax.f32 %v542, 0.0
      %v633 = vmax.f32 %v545, 0.0
      %v634 = vmax.f32 %v550, 0.0
      %v635 = vmax.f32 %v553, 0.0
      %v636 = vmax.f32 %v558, 0.0
      %v637 = vmax.f32 %v561, 0.0
      %v638 = vmax.f32 %v566, 0.0
      %v639 = vmax.f32 %v569, 0.0
      %v640 = vmax.f32 %v574, 0.0
      %v641 = vmax.f32 %v577, 0.0
      %v642 = vmax.f32 %v582, 0.0
      %v643 = vmax.f32 %v585, 0.0
      %v644 = vmax.f32 %v590, 0.0
      %v645 = vmax.f32 %v593, 0.0
      %v646 = vmax.f32 %v598, 0.0
      %v647 = vmax.f32 %v601, 0.0
      %v648 = vmax.f32 %v606, 0.0
      %v649 = vmax.f32 %v609, 0.0
      %v650 = vmax.f32 %v614, 0.0
      %v651 = vmax.f32 %v617, 0.0
      %652 = vst [vmem:[%s257] sm:$0xff] %v620
      %653 = vst [vmem:[%s257 + $0x8] sm:$0xff] %v621
      %654 = vst [vmem:[%s257 + $0x10] sm:$0xff] %v622
      %655 = vst [vmem:[%s257 + $0x18] sm:$0xff] %v623
      %656 = vst [vmem:[%s257 + $0x20] sm:$0xff] %v624
      %657 = vst [vmem:[%s257 + $0x28] sm:$0xff] %v625
      %658 = vst [vmem:[%s257 + $0x30] sm:$0xff] %v626
      %659 = vst [vmem:[%s257 + $0x38] sm:$0xff] %v627
      %660 = vst [vmem:[%s257 + $0x40] sm:$0xff] %v628
      %661 = vst [vmem:[%s257 + $0x48] sm:$0xff] %v629
      %662 = vst [vmem:[%s257 + $0x50] sm:$0xff] %v630
      %663 = vst [vmem:[%s257 + $0x58] sm:$0xff] %v631
      %664 = vst [vmem:[%s257 + $0x60] sm:$0xff] %v632
      %665 = vst [vmem:[%s257 + $0x68] sm:$0xff] %v633
      %666 = vst [vmem:[%s257 + $0x70] sm:$0xff] %v634
      %667 = vst [vmem:[%s257 + $0x78] sm:$0xff] %v635
      %668 = vst [vmem:[%s257 + $0x80] sm:$0xff] %v636
      %669 = vst [vmem:[%s257 + $0x88] sm:$0xff] %v637
      %670 = vst [vmem:[%s257 + $0x90] sm:$0xff] %v638
      %671 = vst [vmem:[%s257 + $0x98] sm:$0xff] %v639
      %672 = vst [vmem:[%s257 + $0xa0] sm:$0xff] %v640
      %673 = vst [vmem:[%s257 + $0xa8] sm:$0xff] %v641
      %674 = vst [vmem:[%s257 + $0xb0] sm:$0xff] %v642
      %675 = vst [vmem:[%s257 + $0xb8] sm:$0xff] %v643
      %676 = vst [vmem:[%s257 + $0xc0] sm:$0xff] %v644
      %677 = vst [vmem:[%s257 + $0xc8] sm:$0xff] %v645
      %678 = vst [vmem:[%s257 + $0xd0] sm:$0xff] %v646
      %679 = vst [vmem:[%s257 + $0xd8] sm:$0xff] %v647
      %680 = vst [vmem:[%s257 + $0xe0] sm:$0xff] %v648
      %681 = vst [vmem:[%s257 + $0xe8] sm:$0xff] %v649
      %682 = vst [vmem:[%s257 + $0xf0] sm:$0xff] %v650
      %683 = vst [vmem:[%s257 + $0xf8] sm:$0xff] %v651
      %s684 = smul.u32 32, %s19
      %p685 = scmp.lt.s32.totalorder %s684, 63
      %s686 = scalar_select %p685, %s684, 63
      %p687 = scmp.lt.s32.totalorder %s20, 0
      %s688 = scalar_select %p687, %s20, 0
      %s689 = sadd.s32 %s688, %s686
      %s690 = smul.addr %s689, 8
      %s691 = scalar_lea.vmem %s3, %s690
      // Predicated region
      $region33: #{ocr_forward.16} parent=31 // pred_check
        %p692 = pneg %p135
      $region34: #{ocr_forward.16} parent=31 // pred_check_branch
        %694 = sbr.rel (%p692) target = $region36
      $region35: #{ocr_forward.16} parent=31 // pred_region
        %s695 = smul.u32 32, %s19
      $region36: #{ocr_forward.16} parent=31 // pred_fallthru
        _
    $region32: #{ocr_forward.16} parent=5 // pred_fallthru
      _
    %p696 = scmp.le.s32.totalorder 2, %s9
    // Predicated region
    $region37: #{ocr_forward.16} parent=5 // pred_check
      %p697 = pneg %p696
    $region38: #{ocr_forward.16} parent=5 // pred_check_branch
      %699 = sbr.rel (%p697) target = $region40
    $region39: #{ocr_forward.16} parent=5 // pred_region
      %s700 = ssub.s32 %s9, 2
      // Predicated region
      $region41: #{ocr_forward.16} parent=39 // pred_check
        %p701 = pneg %p141
      $region42: #{ocr_forward.16} parent=39 // pred_check_branch
        %703 = sbr.rel (%p701) target = $region44
      $region43: #{ocr_forward.16} parent=39 // pred_region
        %s704 = smul.u32 32, %s22
        %p705 = scmp.lt.s32.totalorder %s704, 63
        %s706 = scalar_select %p705, %s704, 63
        %p707 = scmp.lt.s32.totalorder %s23, 0
        %s708 = scalar_select %p707, %s23, 0
        %s709 = sadd.s32 %s708, %s706
        %s710 = smul.addr %s709, 8
        %s711 = scalar_lea.vmem %s3, %s710
      $region44: #{ocr_forward.16} parent=39 // pred_fallthru
        _
    $region40: #{ocr_forward.16} parent=5 // pred_fallthru
      _
  $region6: #{ocr_forward.16} parent=0 // loop_footer
    %s13 = sadd.s32 1, %s9
  $region7: #{ocr_forward.16} parent=0 // loop_footer_branch
    %8 = sbr.rel target = $region3
  $region8: #{ocr_forward.16} parent=0 // loop_exit
    _

// kernel: ocr_forward.14
$region0: #{ocr_forward.14}
  #allocation0 [shape = 'u32[]', space=smem, size = 0x4, offset = 0x4, fixed_abs, tag = 'smem constant byte address 0x4 - core index']
  #allocation1 [shape = 'u32[144,128]{1,0:T(1,128)}', space=vmem, size = 0x12000, scoped, tag = 'internal scratch']
  %s0 = inlined_call_operand.vmem [shape: bf16[2,18,18,32], index: 0, kind: input, shape index: {}]
  %s1 = inlined_call_operand.vmem [shape: bf16[9,32,128], index: 1, kind: input, shape index: {}]
  %s2 = inlined_call_operand.vmem [shape: f32[1,128], index: 2, kind: input, shape index: {}]
  %s3 = inlined_call_operand.vmem [shape: f32[2,256,128], index: 3, kind: output, shape index: {}]
  %s4 = sld [smem:[#allocation0]]
  $region45: #{ocr_forward.14} parent=0
    _
  %s6 = ssub.s32 1, %s4
  %s7 = scalar_select 0, %s6, %s4
  loop: start=0, step=1, limit=4
  $region2: #{ocr_forward.14} parent=0 // loop_pre_header
    _
  $region3: #{ocr_forward.14} parent=0 // loop_header
    %s9 = sphi 0, %s13
    %p10 = scmp.ge.s32.totalorder %s9, 4
    %s19 = sphi 0, %s21
    %s22 = sphi 0, %s19
    %s23 = sphi 0, %s22
    %s39 = sphi 0, %s23
    %s43 = sphi 0, %s43
    %s45 = sphi 0, %s43
    %s46 = sphi 0, %s45
    %s60 = sphi 0, %s46
    %s64 = sphi 0, %s64
    %s66 = sphi 0, %s64
    %s67 = sphi 0, %s66
    %s81 = sphi 0, %s67
    %s87 = sphi 0, %s89
    %s90 = sphi 0, %s87
    %s91 = sphi 0, %s90
    %s107 = sphi 0, %s91
  $region4: #{ocr_forward.14} parent=0 // loop_header_branch
    %12 = sbr.rel (%p10) target = $region8
  $region5: #{ocr_forward.14} parent=0 // loop_body
    %s14 = ssub.s32 %s9, 1
    %s15 = ssub.s32 %s9, 2
    %s16 = sadd.s32 %s9, 1
    %s17 = ssub.s32 %s9, %s16
    %p18 = scmp.eq.s32.totalorder %s17, 0
    %s20 = sadd.s32 %s19, 1
    %s21 = scalar_select %p18, %s19, %s20
    %p24 = pneg %p18
    %p25 = scmp.eq.s32.totalorder %s9, 1
    %p26 = por %p24, %p25
    %p27 = scmp.ne.s32.totalorder %s19, %s22
    %p28 = scmp.eq.s32.totalorder %s9, 0
    %p29 = por %p27, %p28
    %p30 = scmp.ne.s32.totalorder %s19, %s22
    %p31 = scmp.eq.s32.totalorder %s14, 1
    %p32 = por %p30, %p31
    %p33 = scmp.ne.s32.totalorder %s22, %s23
    %p34 = scmp.eq.s32.totalorder %s14, 0
    %p35 = por %p33, %p34
    %p36 = scmp.ne.s32.totalorder %s22, %s23
    %p37 = scmp.eq.s32.totalorder %s15, 1
    %p38 = por %p36, %p37
    %p40 = scmp.ne.s32.totalorder %s23, %s39
    %p41 = scmp.eq.s32.totalorder %s15, 0
    %p42 = por %p40, %p41
    %s44 = sadd.s32 %s43, 1
    %p47 = scmp.eq.s32.totalorder %s9, 1
    %p48 = scmp.ne.s32.totalorder %s43, %s45
    %p49 = scmp.eq.s32.totalorder %s9, 0
    %p50 = por %p48, %p49
    %p51 = scmp.ne.s32.totalorder %s43, %s45
    %p52 = scmp.eq.s32.totalorder %s14, 1
    %p53 = por %p51, %p52
    %p54 = scmp.ne.s32.totalorder %s45, %s46
    %p55 = scmp.eq.s32.totalorder %s14, 0
    %p56 = por %p54, %p55
    %p57 = scmp.ne.s32.totalorder %s45, %s46
    %p58 = scmp.eq.s32.totalorder %s15, 1
    %p59 = por %p57, %p58
    %p61 = scmp.ne.s32.totalorder %s46, %s60
    %p62 = scmp.eq.s32.totalorder %s15, 0
    %p63 = por %p61, %p62
    %s65 = sadd.s32 %s64, 1
    %p68 = scmp.eq.s32.totalorder %s9, 1
    %p69 = scmp.ne.s32.totalorder %s64, %s66
    %p70 = scmp.eq.s32.totalorder %s9, 0
    %p71 = por %p69, %p70
    %p72 = scmp.ne.s32.totalorder %s64, %s66
    %p73 = scmp.eq.s32.totalorder %s14, 1
    %p74 = por %p72, %p73
    %p75 = scmp.ne.s32.totalorder %s66, %s67
    %p76 = scmp.eq.s32.totalorder %s14, 0
    %p77 = por %p75, %p76
    %p78 = scmp.ne.s32.totalorder %s66, %s67
    %p79 = scmp.eq.s32.totalorder %s15, 1
    %p80 = por %p78, %p79
    %p82 = scmp.ne.s32.totalorder %s67, %s81
    %p83 = scmp.eq.s32.totalorder %s15, 0
    %p84 = por %p82, %p83
    %s85 = ssub.s32 %s9, %s16
    %p86 = scmp.eq.s32.totalorder %s85, 0
    %s88 = sadd.s32 %s87, 1
    %s89 = scalar_select %p86, %s87, %s88
    %p92 = pneg %p86
    %p93 = scmp.eq.s32.totalorder %s9, 1
    %p94 = por %p92, %p93
    %p95 = scmp.ne.s32.totalorder %s87, %s90
    %p96 = scmp.eq.s32.totalorder %s9, 0
    %p97 = por %p95, %p96
    %p98 = scmp.ne.s32.totalorder %s87, %s90
    %p99 = scmp.eq.s32.totalorder %s14, 1
    %p100 = por %p98, %p99
    %p101 = scmp.ne.s32.totalorder %s90, %s91
    %p102 = scmp.eq.s32.totalorder %s14, 0
    %p103 = por %p101, %p102
    %p104 = scmp.ne.s32.totalorder %s90, %s91
    %p105 = scmp.eq.s32.totalorder %s15, 1
    %p106 = por %p104, %p105
    %p108 = scmp.ne.s32.totalorder %s91, %s107
    %p109 = scmp.eq.s32.totalorder %s15, 0
    %p110 = por %p108, %p109
    %p111 = scmp.le.s32.totalorder 1, %s9
    %p112 = scmp.lt.s32.totalorder %s9, 3
    %p113 = pnand %p111, %p112
    %p114 = pneg %p113
    // Predicated region
    $region9: #{ocr_forward.14} parent=5 // pred_check
      _
    $region10: #{ocr_forward.14} parent=5 // pred_check_branch
      %116 = sbr.rel (%p113) target = $region12
    $region11: #{ocr_forward.14} parent=5 // pred_region
      %s117 = ssub.s32 %s9, 1
      // Predicated region
      $region13: #{ocr_forward.14} parent=11 // pred_check
        %p118 = pneg %p56
      $region14: #{ocr_forward.14} parent=11 // pred_check_branch
        %120 = sbr.rel (%p118) target = $region16
      $region15: #{ocr_forward.14} parent=11 // pred_region
        _
      $region16: #{ocr_forward.14} parent=11 // pred_fallthru
        _
      // Predicated region
      $region17: #{ocr_forward.14} parent=11 // pred_check
        %p121 = pneg %p77
      $region18: #{ocr_forward.14} parent=11 // pred_check_branch
        %123 = sbr.rel (%p121) target = $region20
      $region19: #{ocr_forward.14} parent=11 // pred_region
        _
      $region20: #{ocr_forward.14} parent=11 // pred_fallthru
        _
    $region12: #{ocr_forward.14} parent=5 // pred_fallthru
      _
    %p124 = scmp.lt.s32.totalorder %s9, 2
    // Predicated region
    $region21: #{ocr_forward.14} parent=5 // pred_check
      %p125 = pneg %p124
    $region22: #{ocr_forward.14} parent=5 // pred_check_branch
      %127 = sbr.rel (%p125) target = $region24
    $region23: #{ocr_forward.14} parent=5 // pred_region
      // Predicated region
      $region25: #{ocr_forward.14} parent=23 // pred_check
        %p128 = pneg %p29
      $region26: #{ocr_forward.14} parent=23 // pred_check_branch
        %130 = sbr.rel (%p128) target = $region28
      $region27: #{ocr_forward.14} parent=23 // pred_region
        %p131 = scmp.lt.s32.totalorder %s9, 1
        %s132 = scalar_select %p131, %s9, 1
        %s133 = smul.addr %s132, 54
        %s134 = smul.addr %s133, 4
        %s135 = scalar_lea.vmem %s0, %s134
      $region28: #{ocr_forward.14} parent=23 // pred_fallthru
        _
    $region24: #{ocr_forward.14} parent=5 // pred_fallthru
      _
    %p136 = scmp.le.s32.totalorder 1, %s9
    %p137 = scmp.lt.s32.totalorder %s9, 3
    %p138 = pnand %p136, %p137
    %p139 = pneg %p138
    // Predicated region
    $region29: #{ocr_forward.14} parent=5 // pred_check
      _
    $region30: #{ocr_forward.14} parent=5 // pred_check_branch
      %141 = sbr.rel (%p138) target = $region32
    $region31: #{ocr_forward.14} parent=5 // pred_region
      %s142 = ssub.s32 %s9, 1
      %p143 = scmp.lt.s32.totalorder %s14, 1
      %s144 = scalar_select %p143, %s14, 1
      %s145 = smul.addr %s144, 54
      %s146 = smul.addr %s145, 4
      %s147 = scalar_lea.vmem %s0, %s146
      %p148 = pneg %p35
      %p149 = pneg %p32
      %p150 = pneg %p56
      %p151 = pneg %p53
      %p152 = pneg %p77
      %p153 = pneg %p74
      %p154 = pneg %p103
      %p155 = pneg %p100
      %p156 = scmp.lt.s32.totalorder %s14, 1
      %s157 = scalar_select %p156, %s14, 1
      %s158 = smul.addr %s157, 32
      %s159 = smul.addr %s158, 8
      %s160 = scalar_lea.vmem %s3, %s159
      %p161 = scmp.lt.s32.totalorder %s14, 1
      %s162 = scalar_select %p161, %s14, 1
      %s163 = smul.addr %s162, 54
      %s164 = smul.addr %s163, 4
      %s165 = scalar_lea.vmem %s0, %s164
      %p166 = scmp.lt.s32.totalorder %s14, 1
      %s167 = scalar_select %p166, %s14, 1
      %s168 = smul.addr %s167, 32
      %s169 = smul.addr %s168, 8
      %s170 = scalar_lea.vmem %s3, %s169
      %v172 = vld [vmem:[%s165] sm:$0xf]
      %v173 = vld [vmem:[%s165 + $0x4] sm:$0xf]
      %v174 = vld [vmem:[%s165 + $0x8] sm:$0x1]
      %v175 = vld [vmem:[%s165 + $0xc] sm:$0xf]
      %v176 = vld [vmem:[%s165 + $0x10] sm:$0xf]
      %v177 = vld [vmem:[%s165 + $0x14] sm:$0x1]
      %v178 = vld [vmem:[%s165 + $0x18] sm:$0xf]
      %v179 = vld [vmem:[%s165 + $0x1c] sm:$0xf]
      %v180 = vld [vmem:[%s165 + $0x20] sm:$0x1]
      %v181 = vld [vmem:[%s165 + $0x24] sm:$0xf]
      %v182 = vld [vmem:[%s165 + $0x28] sm:$0xf]
      %v183 = vld [vmem:[%s165 + $0x2c] sm:$0x1]
      %v184 = vld [vmem:[%s165 + $0x30] sm:$0xf]
      %v185 = vld [vmem:[%s165 + $0x34] sm:$0xf]
      %v186 = vld [vmem:[%s165 + $0x38] sm:$0x1]
      %v187 = vld [vmem:[%s165 + $0x3c] sm:$0xf]
      %v188 = vld [vmem:[%s165 + $0x40] sm:$0xf]
      %v189 = vld [vmem:[%s165 + $0x44] sm:$0x1]
      %v190 = vld [vmem:[%s165 + $0x48] sm:$0xf]
      %v191 = vld [vmem:[%s165 + $0x4c] sm:$0xf]
      %v192 = vld [vmem:[%s165 + $0x50] sm:$0x1]
      %v193 = vld [vmem:[%s165 + $0x54] sm:$0xf]
      %v194 = vld [vmem:[%s165 + $0x58] sm:$0xf]
      %v195 = vld [vmem:[%s165 + $0x5c] sm:$0x1]
      %v196 = vld [vmem:[%s165 + $0x60] sm:$0xf]
      %v197 = vld [vmem:[%s165 + $0x64] sm:$0xf]
      %v198 = vld [vmem:[%s165 + $0x68] sm:$0x1]
      %v199 = vld [vmem:[%s165 + $0x6c] sm:$0xf]
      %v200 = vld [vmem:[%s165 + $0x70] sm:$0xf]
      %v201 = vld [vmem:[%s165 + $0x74] sm:$0x1]
      %v202 = vld [vmem:[%s165 + $0x78] sm:$0xf]
      %v203 = vld [vmem:[%s165 + $0x7c] sm:$0xf]
      %v204 = vld [vmem:[%s165 + $0x80] sm:$0x1]
      %v205 = vld [vmem:[%s165 + $0x84] sm:$0xf]
      %v206 = vld [vmem:[%s165 + $0x88] sm:$0xf]
      %v207 = vld [vmem:[%s165 + $0x8c] sm:$0x1]
      %v208 = vld [vmem:[%s165 + $0x90] sm:$0xf]
      %v209 = vld [vmem:[%s165 + $0x94] sm:$0xf]
      %v210 = vld [vmem:[%s165 + $0x98] sm:$0x1]
      %v211 = vld [vmem:[%s165 + $0x9c] sm:$0xf]
      %v212 = vld [vmem:[%s165 + $0xa0] sm:$0xf]
      %v213 = vld [vmem:[%s165 + $0xa4] sm:$0x1]
      %v214 = vld [vmem:[%s165 + $0xa8] sm:$0xf]
      %v215 = vld [vmem:[%s165 + $0xac] sm:$0xf]
      %v216 = vld [vmem:[%s165 + $0xb0] sm:$0x1]
      %v217 = vld [vmem:[%s165 + $0xb4] sm:$0xf]
      %v218 = vld [vmem:[%s165 + $0xb8] sm:$0xf]
      %v219 = vld [vmem:[%s165 + $0xbc] sm:$0x1]
      %v220 = vld [vmem:[%s165 + $0xc0] sm:$0xf]
      %v221 = vld [vmem:[%s165 + $0xc4] sm:$0xf]
      %v222 = vld [vmem:[%s165 + $0xc8] sm:$0x1]
      %v223 = vld [vmem:[%s165 + $0xcc] sm:$0xf]
      %v224 = vld [vmem:[%s165 + $0xd0] sm:$0xf]
      %v225 = vld [vmem:[%s165 + $0xd4] sm:$0x1]
      %v226 = vld [vmem:[%s1] sm:$0xf]
      %v227 = vld [vmem:[%s1 + $0x4] sm:$0xf]
      %v228 = vld [vmem:[%s1 + $0x8] sm:$0xf]
      %v229 = vld [vmem:[%s1 + $0xc] sm:$0xf]
      %vm230 = vsmask.f32 3328
      %vm231 = vsmask.f32 7440
      %vm232 = vmor %vm230, %vm231
      %v234 = vshrl.u32 %v172, 16
      %v236 = vrot.slane %v234, 4
      %v237 = vshll.u32 %v172, 16
      %v239 = vrot.slane %v237, 5
      %v240 = vor.u32 %v236, %v239
      %v241 = vrot.slane %v240, 4
      %v243 = vshll.u32 %v173, 16
      %v245 = vrot.slane %v243, 5
      %v246 = vsel %vm232, %v241, %v245
      %v247 = vshrl.u32 %v173, 16
      %v249 = vrot.slane %v247, 4
      %v250 = vor.u32 %v249, %v245
      %v251 = vrot.slane %v250, 4
      %v253 = vshll.u32 %v174, 16
      %v255 = vrot.slane %v253, 5
      %v256 = vsel %vm232, %v251, %v255
      %v258 = vshrl.u32 %v175, 16
      %v260 = vrot.slane %v258, 4
      %v261 = vshll.u32 %v175, 16
      %v263 = vrot.slane %v261, 5
      %v264 = vor.u32 %v260, %v263
      %v265 = vrot.slane %v264, 4
      %v267 = vshll.u32 %v176, 16
      %v269 = vrot.slane %v267, 5
      %v270 = vsel %vm232, %v265, %v269
      %v271 = vshrl.u32 %v176, 16
      %v273 = vrot.slane %v271, 4
      %v274 = vor.u32 %v273, %v269
      %v275 = vrot.slane %v274, 4
      %v277 = vshll.u32 %v177, 16
      %v279 = vrot.slane %v277, 5
      %v280 = vsel %vm232, %v275, %v279
      %v282 = vshrl.u32 %v178, 16
      %v284 = vrot.slane %v282, 4
      %v285 = vshll.u32 %v178, 16
      %v287 = vrot.slane %v285, 5
      %v288 = vor.u32 %v284, %v287
      %v289 = vrot.slane %v288, 4
      %v291 = vshll.u32 %v179, 16
      %v293 = vrot.slane %v291, 5
      %v294 = vsel %vm232, %v289, %v293
      %v295 = vshrl.u32 %v179, 16
      %v297 = vrot.slane %v295, 4
      %v298 = vor.u32 %v297, %v293
      %v299 = vrot.slane %v298, 4
      %v301 = vshll.u32 %v180, 16
      %v303 = vrot.slane %v301, 5
      %v304 = vsel %vm232, %v299, %v303
      %v306 = vshrl.u32 %v181, 16
      %v308 = vrot.slane %v306, 4
      %v309 = vshll.u32 %v181, 16
      %v311 = vrot.slane %v309, 5
      %v312 = vor.u32 %v308, %v311
      %v313 = vrot.slane %v312, 4
      %v315 = vshll.u32 %v182, 16
      %v317 = vrot.slane %v315, 5
      %v318 = vsel %vm232, %v313, %v317
      %v319 = vshrl.u32 %v182, 16
      %v321 = vrot.slane %v319, 4
      %v322 = vor.u32 %v321, %v317
      %v323 = vrot.slane %v322, 4
      %v325 = vshll.u32 %v183, 16
      %v327 = vrot.slane %v325, 5
      %v328 = vsel %vm232, %v323, %v327
      %v330 = vshrl.u32 %v184, 16
      %v332 = vrot.slane %v330, 4
      %v333 = vshll.u32 %v184, 16
      %v335 = vrot.slane %v333, 5
      %v336 = vor.u32 %v332, %v335
      %v337 = vrot.slane %v336, 4
      %v339 = vshll.u32 %v185, 16
      %v341 = vrot.slane %v339, 5
      %v342 = vsel %vm232, %v337, %v341
      %v343 = vshrl.u32 %v185, 16
      %v345 = vrot.slane %v343, 4
      %v346 = vor.u32 %v345, %v341
      %v347 = vrot.slane %v346, 4
      %v349 = vshll.u32 %v186, 16
      %v351 = vrot.slane %v349, 5
      %v352 = vsel %vm232, %v347, %v351
      %v354 = vshrl.u32 %v187, 16
      %v356 = vrot.slane %v354, 4
      %v357 = vshll.u32 %v187, 16
      %v359 = vrot.slane %v357, 5
      %v360 = vor.u32 %v356, %v359
      %v361 = vrot.slane %v360, 4
      %v363 = vshll.u32 %v188, 16
      %v365 = vrot.slane %v363, 5
      %v366 = vsel %vm232, %v361, %v365
      %v367 = vshrl.u32 %v188, 16
      %v369 = vrot.slane %v367, 4
      %v370 = vor.u32 %v369, %v365
      %v371 = vrot.slane %v370, 4
      %v373 = vshll.u32 %v189, 16
      %v375 = vrot.slane %v373, 5
      %v376 = vsel %vm232, %v371, %v375
      %v378 = vshrl.u32 %v190, 16
      %v380 = vrot.slane %v378, 4
      %v381 = vshll.u32 %v190, 16
      %v383 = vrot.slane %v381, 5
      %v384 = vor.u32 %v380, %v383
      %v385 = vrot.slane %v384, 4
      %v387 = vshll.u32 %v191, 16
      %v389 = vrot.slane %v387, 5
      %v390 = vsel %vm232, %v385, %v389
      %v391 = vshrl.u32 %v191, 16
      %v393 = vrot.slane %v391, 4
      %v394 = vor.u32 %v393, %v389
      %v395 = vrot.slane %v394, 4
      %v397 = vshll.u32 %v192, 16
      %v399 = vrot.slane %v397, 5
      %v400 = vsel %vm232, %v395, %v399
      %v402 = vshrl.u32 %v193, 16
      %v404 = vrot.slane %v402, 4
      %v405 = vshll.u32 %v193, 16
      %v407 = vrot.slane %v405, 5
      %v408 = vor.u32 %v404, %v407
      %v409 = vrot.slane %v408, 4
      %v411 = vshll.u32 %v194, 16
      %v413 = vrot.slane %v411, 5
      %v414 = vsel %vm232, %v409, %v413
      %v415 = vshrl.u32 %v194, 16
      %v417 = vrot.slane %v415, 4
      %v418 = vor.u32 %v417, %v413
      %v419 = vrot.slane %v418, 4
      %v421 = vshll.u32 %v195, 16
      %v423 = vrot.slane %v421, 5
      %v424 = vsel %vm232, %v419, %v423
      %v426 = vshrl.u32 %v196, 16
      %v428 = vrot.slane %v426, 4
      %v429 = vshll.u32 %v196, 16
      %v431 = vrot.slane %v429, 5
      %v432 = vor.u32 %v428, %v431
      %v433 = vrot.slane %v432, 4
      %v435 = vshll.u32 %v197, 16
      %v437 = vrot.slane %v435, 5
      %v438 = vsel %vm232, %v433, %v437
      %v439 = vshrl.u32 %v197, 16
      %v441 = vrot.slane %v439, 4
      %v442 = vor.u32 %v441, %v437
      %v443 = vrot.slane %v442, 4
      %v445 = vshll.u32 %v198, 16
      %v447 = vrot.slane %v445, 5
      %v448 = vsel %vm232, %v443, %v447
      %v450 = vshrl.u32 %v199, 16
      %v452 = vrot.slane %v450, 4
      %v453 = vshll.u32 %v199, 16
      %v455 = vrot.slane %v453, 5
      %v456 = vor.u32 %v452, %v455
      %v457 = vrot.slane %v456, 4
      %v459 = vshll.u32 %v200, 16
      %v461 = vrot.slane %v459, 5
      %v462 = vsel %vm232, %v457, %v461
      %v463 = vshrl.u32 %v200, 16
      %v465 = vrot.slane %v463, 4
      %v466 = vor.u32 %v465, %v461
      %v467 = vrot.slane %v466, 4
      %v469 = vshll.u32 %v201, 16
      %v471 = vrot.slane %v469, 5
      %v472 = vsel %vm232, %v467, %v471
      %v474 = vshrl.u32 %v202, 16
      %v476 = vrot.slane %v474, 4
      %v477 = vshll.u32 %v202, 16
      %v479 = vrot.slane %v477, 5
      %v480 = vor.u32 %v476, %v479
      %v481 = vrot.slane %v480, 4
      %v483 = vshll.u32 %v203, 16
      %v485 = vrot.slane %v483, 5
      %v486 = vsel %vm232, %v481, %v485
      %v487 = vshrl.u32 %v203, 16
      %v489 = vrot.slane %v487, 4
      %v490 = vor.u32 %v489, %v485
      %v491 = vrot.slane %v490, 4
      %v493 = vshll.u32 %v204, 16
      %v495 = vrot.slane %v493, 5
      %v496 = vsel %vm232, %v491, %v495
      %v498 = vshrl.u32 %v205, 16
      %v500 = vrot.slane %v498, 4
      %v501 = vshll.u32 %v205, 16
      %v503 = vrot.slane %v501, 5
      %v504 = vor.u32 %v500, %v503
      %v505 = vrot.slane %v504, 4
      %v507 = vshll.u32 %v206, 16
      %v509 = vrot.slane %v507, 5
      %v510 = vsel %vm232, %v505, %v509
      %v511 = vshrl.u32 %v206, 16
      %v513 = vrot.slane %v511, 4
      %v514 = vor.u32 %v513, %v509
      %v515 = vrot.slane %v514, 4
      %v517 = vshll.u32 %v207, 16
      %v519 = vrot.slane %v517, 5
      %v520 = vsel %vm232, %v515, %v519
      %v522 = vshrl.u32 %v208, 16
      %v524 = vrot.slane %v522, 4
      %v525 = vshll.u32 %v208, 16
      %v527 = vrot.slane %v525, 5
      %v528 = vor.u32 %v524, %v527
      %v529 = vrot.slane %v528, 4
      %v531 = vshll.u32 %v209, 16
      %v533 = vrot.slane %v531, 5
      %v534 = vsel %vm232, %v529, %v533
      %v535 = vshrl.u32 %v209, 16
      %v537 = vrot.slane %v535, 4
      %v538 = vor.u32 %v537, %v533
      %v539 = vrot.slane %v538, 4
      %v541 = vshll.u32 %v210, 16
      %v543 = vrot.slane %v541, 5
      %v544 = vsel %vm232, %v539, %v543
      %v546 = vshrl.u32 %v211, 16
      %v548 = vrot.slane %v546, 4
      %v549 = vshll.u32 %v211, 16
      %v551 = vrot.slane %v549, 5
      %v552 = vor.u32 %v548, %v551
      %v553 = vrot.slane %v552, 4
      %v555 = vshll.u32 %v212, 16
      %v557 = vrot.slane %v555, 5
      %v558 = vsel %vm232, %v553, %v557
      %v559 = vshrl.u32 %v212, 16
      %v561 = vrot.slane %v559, 4
      %v562 = vor.u32 %v561, %v557
      %v563 = vrot.slane %v562, 4
      %v565 = vshll.u32 %v213, 16
      %v567 = vrot.slane %v565, 5
      %v568 = vsel %vm232, %v563, %v567
      %v570 = vshrl.u32 %v214, 16
      %v572 = vrot.slane %v570, 4
      %v573 = vshll.u32 %v214, 16
      %v575 = vrot.slane %v573, 5
      %v576 = vor.u32 %v572, %v575
      %v577 = vrot.slane %v576, 4
      %v579 = vshll.u32 %v215, 16
      %v581 = vrot.slane %v579, 5
      %v582 = vsel %vm232, %v577, %v581
      %v583 = vshrl.u32 %v215, 16
      %v585 = vrot.slane %v583, 4
      %v586 = vor.u32 %v585, %v581
      %v587 = vrot.slane %v586, 4
      %v589 = vshll.u32 %v216, 16
      %v591 = vrot.slane %v589, 5
      %v592 = vsel %vm232, %v587, %v591
      %v594 = vshrl.u32 %v217, 16
      %v596 = vrot.slane %v594, 4
      %v597 = vshll.u32 %v217, 16
      %v599 = vrot.slane %v597, 5
      %v600 = vor.u32 %v596, %v599
      %v601 = vrot.slane %v600, 4
      %v603 = vshll.u32 %v218, 16
      %v605 = vrot.slane %v603, 5
      %v606 = vsel %vm232, %v601, %v605
      %v607 = vshrl.u32 %v218, 16
      %v609 = vrot.slane %v607, 4
      %v610 = vor.u32 %v609, %v605
      %v611 = vrot.slane %v610, 4
      %v613 = vshll.u32 %v219, 16
      %v615 = vrot.slane %v613, 5
      %v616 = vsel %vm232, %v611, %v615
      %s617 = scalar_lea.vmem %s1, 16
      %v618 = vld [vmem:[%s617] sm:$0xf]
      %v619 = vld [vmem:[%s617 + $0x4] sm:$0xf]
      %v620 = vld [vmem:[%s617 + $0x8] sm:$0xf]
      %v621 = vld [vmem:[%s617 + $0xc] sm:$0xf]
      %v622 = vunpack.c.l.b16 %v246
      %v623 = vunpack.c.l.b16 %v256
      %v624 = vunpack.c.l.b16 %v270
      %v625 = vunpack.c.l.b16 %v280
      %v626 = vunpack.c.l.b16 %v294
      %v627 = vunpack.c.l.b16 %v304
      %v628 = vunpack.c.l.b16 %v318
      %v629 = vunpack.c.l.b16 %v328
      %v630 = vunpack.c.l.b16 %v342
      %v631 = vunpack.c.l.b16 %v352
      %v632 = vunpack.c.l.b16 %v366
      %v633 = vunpack.c.l.b16 %v376
      %v634 = vunpack.c.l.b16 %v390
      %v635 = vunpack.c.l.b16 %v400
      %v636 = vunpack.c.l.b16 %v414
      %v637 = vunpack.c.l.b16 %v424
      %v638 = vunpack.c.l.b16 %v438
      %v639 = vunpack.c.l.b16 %v448
      %v640 = vunpack.c.l.b16 %v462
      %v641 = vunpack.c.l.b16 %v472
      %v642 = vunpack.c.l.b16 %v486
      %v643 = vunpack.c.l.b16 %v496
      %v644 = vunpack.c.l.b16 %v510
      %v645 = vunpack.c.l.b16 %v520
      %v646 = vunpack.c.l.b16 %v534
      %v647 = vunpack.c.l.b16 %v544
      %v648 = vunpack.c.l.b16 %v558
      %v649 = vunpack.c.l.b16 %v568
      %v650 = vunpack.c.l.b16 %v582
      %v651 = vunpack.c.l.b16 %v592
      %v652 = vunpack.c.l.b16 %v606
      %v653 = vunpack.c.l.b16 %v616
      %v654 = vpack.c.b16 %v623, %v622
      %v655 = vpack.c.b16 %v625, %v624
      %v656 = vpack.c.b16 %v627, %v626
      %v657 = vpack.c.b16 %v629, %v628
      %v658 = vpack.c.b16 %v631, %v630
      %v659 = vpack.c.b16 %v633, %v632
      %v660 = vpack.c.b16 %v635, %v634
      %v661 = vpack.c.b16 %v637, %v636
      %v662 = vpack.c.b16 %v639, %v638
      %v663 = vpack.c.b16 %v641, %v640
      %v664 = vpack.c.b16 %v643, %v642
      %v665 = vpack.c.b16 %v645, %v644
      %v666 = vpack.c.b16 %v647, %v646
      %v667 = vpack.c.b16 %v649, %v648
      %v668 = vpack.c.b16 %v651, %v650
      %v669 = vpack.c.b16 %v653, %v652
      %v674 = vunpack.c.l.b16 %v618
      %v675 = vunpack.c.l.b16 %v619
      %v676 = vunpack.c.l.b16 %v620
      %v677 = vunpack.c.l.b16 %v621
      %v678 = vpack.c.b16 %v675, %v674
      %v679 = vpack.c.b16 %v677, %v676
      %vm682 = vcmask 261120
      %v684 = vsel %vm682, %v654, 0
      %v687 = vsel %vm682, %v655, 0
      %v690 = vsel %vm682, %v656, 0
      %v693 = vsel %vm682, %v657, 0
      %v696 = vsel %vm682, %v658, 0
      %v699 = vsel %vm682, %v659, 0
      %v702 = vsel %vm682, %v660, 0
      %v705 = vsel %vm682, %v661, 0
      %v708 = vsel %vm682, %v662, 0
      %v711 = vsel %vm682, %v663, 0
      %v714 = vsel %vm682, %v664, 0
      %v717 = vsel %vm682, %v665, 0
      %v720 = vsel %vm682, %v666, 0
      %v723 = vsel %vm682, %v667, 0
      %v726 = vsel %vm682, %v668, 0
      %v729 = vsel %vm682, %v669, 0
      %731 = vmatprep.subr.bf16.mxu0 0
      %732 = vmatpush1.bf16.msra.mxu0 %v678
      %733 = vmatprep.subr.bf16.mxu0 0
      %734 = vmatpush1.bf16.msra.mxu0 %v679
      %735 = vmatprep.subr.bf16.mxu0 0
      %736 = vmatpush1.bf16.msra.mxu0 0
      %737 = vmatprep.subr.bf16.mxu0 0
      %738 = vmatpush1.bf16.msra.mxu0 0
      %739 = vmatprep.subr.bf16.mxu0 0
      %740 = vmatpush1.bf16.msra.mxu0 0
      %741 = vmatprep.subr.bf16.mxu0 0
      %742 = vmatpush1.bf16.msra.mxu0 0
      %743 = vmatprep.subr.bf16.mxu0 0
      %744 = vmatpush1.bf16.msra.mxu0 0
      %745 = vmatprep.subr.bf16.mxu0 0
      %746 = vmatpush1.bf16.msra.mxu0 0
      %747 = vmatprep.subr.bf16.mxu0 0
      %748 = vmatpush1.bf16.msra.mxu0 0
      %749 = vmatprep.subr.bf16.mxu0 0
      %750 = vmatpush1.bf16.msra.mxu0 0
      %751 = vmatprep.subr.bf16.mxu0 0
      %752 = vmatpush1.bf16.msra.mxu0 0
      %753 = vmatprep.subr.bf16.mxu0 0
      %754 = vmatpush1.bf16.msra.mxu0 0
      %755 = vmatprep.subr.bf16.mxu0 0
      %756 = vmatpush1.bf16.msra.mxu0 0
      %757 = vmatprep.subr.bf16.mxu0 0
      %758 = vmatpush1.bf16.msra.mxu0 0
      %759 = vmatprep.subr.bf16.mxu0 0
      %760 = vmatpush1.bf16.msra.mxu0 0
      %761 = vmatprep.subr.bf16.mxu0 0
      %762 = vmatpush1.bf16.msra.mxu0 0
      %763 = vmatprep.mubr.bf16.mxu0 0
      %764 = vmatmul.mubr.bf16.gmra.mrb[0].mxu0 %v684
      %v765 = vpop.f32.mrb[0].mxu0
      %v766 = vadd.f32 0.0, %v765
      %v767 = vpop.f32.mrb[0].mxu0
      %v768 = vpop.f32.mrb[0].mxu0
      %v769 = vadd.f32 0.0, %v768
      %v770 = vpop.f32.mrb[0].mxu0
      %771 = vmatprep.mubr.bf16.mxu0 0
      %772 = vmatmul.mubr.bf16.gmra.mrb[0].mxu0 %v687
      %v773 = vpop.f32.mrb[0].mxu0
      %v774 = vadd.f32 0.0, %v773
      %v775 = vpop.f32.mrb[0].mxu0
      %v776 = vpop.f32.mrb[0].mxu0
      %v777 = vadd.f32 0.0, %v776
      %v778 = vpop.f32.mrb[0].mxu0
      %779 = vmatprep.mubr.bf16.mxu0 0
      %780 = vmatmul.mubr.bf16.gmra.mrb[0].mxu0 %v690
      %v781 = vpop.f32.mrb[0].mxu0
      %v782 = vadd.f32 0.0, %v781
      %v783 = vpop.f32.mrb[0].mxu0
      %v784 = vpop.f32.mrb[0].mxu0
      %v785 = vadd.f32 0.0, %v784
      %v786 = vpop.f32.mrb[0].mxu0
      %787 = vmatprep.mubr.bf16.mxu0 0
      %788 = vmatmul.mubr.bf16.gmra.mrb[0].mxu0 %v693
      %v789 = vpop.f32.mrb[0].mxu0
      %v790 = vadd.f32 0.0, %v789
      %v791 = vpop.f32.mrb[0].mxu0
      %v792 = vpop.f32.mrb[0].mxu0
      %v793 = vadd.f32 0.0, %v792
      %v794 = vpop.f32.mrb[0].mxu0
      %795 = vmatprep.mubr.bf16.mxu0 0
      %796 = vmatmul.mubr.bf16.gmra.mrb[0].mxu0 %v696
      %v797 = vpop.f32.mrb[0].mxu0
      %v798 = vadd.f32 0.0, %v797
      %v799 = vpop.f32.mrb[0].mxu0
      %v800 = vpop.f32.mrb[0].mxu0
      %v801 = vadd.f32 0.0, %v800
      %v802 = vpop.f32.mrb[0].mxu0
      %803 = vmatprep.mubr.bf16.mxu0 0
      %804 = vmatmul.mubr.bf16.gmra.mrb[0].mxu0 %v699
      %v805 = vpop.f32.mrb[0].mxu0
      %v806 = vadd.f32 0.0, %v805
      %v807 = vpop.f32.mrb[0].mxu0
      %v808 = vpop.f32.mrb[0].mxu0
      %v809 = vadd.f32 0.0, %v808
      %v810 = vpop.f32.mrb[0].mxu0
      %811 = vmatprep.mubr.bf16.mxu0 0
      %812 = vmatmul.mubr.bf16.gmra.mrb[0].mxu0 %v702
      %v813 = vpop.f32.mrb[0].mxu0
      %v814 = vadd.f32 0.0, %v813
      %v815 = vpop.f32.mrb[0].mxu0
      %v816 = vpop.f32.mrb[0].mxu0
      %v817 = vadd.f32 0.0, %v816
      %v818 = vpop.f32.mrb[0].mxu0
      %819 = vmatprep.mubr.bf16.mxu0 0
      %820 = vmatmul.mubr.bf16.gmra.mrb[0].mxu0 %v705
      %v821 = vpop.f32.mrb[0].mxu0
      %v822 = vadd.f32 0.0, %v821
      %v823 = vpop.f32.mrb[0].mxu0
      %v824 = vpop.f32.mrb[0].mxu0
      %v825 = vadd.f32 0.0, %v824
      %v826 = vpop.f32.mrb[0].mxu0
      %827 = vmatprep.mubr.bf16.mxu0 0
      %828 = vmatmul.mubr.bf16.gmra.mrb[0].mxu0 %v708
      %v829 = vpop.f32.mrb[0].mxu0
      %v830 = vadd.f32 0.0, %v829
      %v831 = vpop.f32.mrb[0].mxu0
      %v832 = vpop.f32.mrb[0].mxu0
      %v833 = vadd.f32 0.0, %v832
      %v834 = vpop.f32.mrb[0].mxu0
      %835 = vmatprep.mubr.bf16.mxu0 0
      %836 = vmatmul.mubr.bf16.gmra.mrb[0].mxu0 %v711
      %v837 = vpop.f32.mrb[0].mxu0
      %v838 = vadd.f32 0.0, %v837
      %v839 = vpop.f32.mrb[0].mxu0
      %v840 = vpop.f32.mrb[0].mxu0
      %v841 = vadd.f32 0.0, %v840
      %v842 = vpop.f32.mrb[0].mxu0
      %843 = vmatprep.mubr.bf16.mxu0 0
      %844 = vmatmul.mubr.bf16.gmra.mrb[0].mxu0 %v714
      %v845 = vpop.f32.mrb[0].mxu0
      %v846 = vadd.f32 0.0, %v845
      %v847 = vpop.f32.mrb[0].mxu0
      %v848 = vpop.f32.mrb[0].mxu0
      %v849 = vadd.f32 0.0, %v848
      %v850 = vpop.f32.mrb[0].mxu0
      %851 = vmatprep.mubr.bf16.mxu0 0
      %852 = vmatmul.mubr.bf16.gmra.mrb[0].mxu0 %v717
      %v853 = vpop.f32.mrb[0].mxu0
      %v854 = vadd.f32 0.0, %v853
      %v855 = vpop.f32.mrb[0].mxu0
      %v856 = vpop.f32.mrb[0].mxu0
      %v857 = vadd.f32 0.0, %v856
      %v858 = vpop.f32.mrb[0].mxu0
      %859 = vmatprep.mubr.bf16.mxu0 0
      %860 = vmatmul.mubr.bf16.gmra.mrb[0].mxu0 %v720
      %v861 = vpop.f32.mrb[0].mxu0
      %v862 = vadd.f32 0.0, %v861
      %v863 = vpop.f32.mrb[0].mxu0
      %v864 = vpop.f32.mrb[0].mxu0
      %v865 = vadd.f32 0.0, %v864
      %v866 = vpop.f32.mrb[0].mxu0
      %867 = vmatprep.mubr.bf16.mxu0 0
      %868 = vmatmul.mubr.bf16.gmra.mrb[0].mxu0 %v723
      %v869 = vpop.f32.mrb[0].mxu0
      %v870 = vadd.f32 0.0, %v869
      %v871 = vpop.f32.mrb[0].mxu0
      %v872 = vpop.f32.mrb[0].mxu0
      %v873 = vadd.f32 0.0, %v872
      %v874 = vpop.f32.mrb[0].mxu0
      %875 = vmatprep.mubr.bf16.mxu0 0
      %876 = vmatmul.mubr.bf16.gmra.mrb[0].mxu0 %v726
      %v877 = vpop.f32.mrb[0].mxu0
      %v878 = vadd.f32 0.0, %v877
      %v879 = vpop.f32.mrb[0].mxu0
      %v880 = vpop.f32.mrb[0].mxu0
      %v881 = vadd.f32 0.0, %v880
      %v882 = vpop.f32.mrb[0].mxu0
      %883 = vmatprep.mubr.bf16.mxu0 0
      %884 = vmatmul.mubr.bf16.gmra.mrb[0].mxu0 %v729
      %v885 = vpop.f32.mrb[0].mxu0
      %v886 = vadd.f32 0.0, %v885
      %v887 = vpop.f32.mrb[0].mxu0
      %v888 = vpop.f32.mrb[0].mxu0
      %v889 = vadd.f32 0.0, %v888
      %v890 = vpop.f32.mrb[0].mxu0
      %891 = vdwg.mxu0
      %v924 = vunpack.c.l.b16 %v172
      %v925 = vunpack.c.l.b16 %v173
      %v926 = vunpack.c.l.b16 %v175
      %v927 = vunpack.c.l.b16 %v176
      %v928 = vunpack.c.l.b16 %v178
      %v929 = vunpack.c.l.b16 %v179
      %v930 = vunpack.c.l.b16 %v181
      %v931 = vunpack.c.l.b16 %v182
      %v932 = vunpack.c.l.b16 %v184
      %v933 = vunpack.c.l.b16 %v185
      %v934 = vunpack.c.l.b16 %v187
      %v935 = vunpack.c.l.b16 %v188
      %v936 = vunpack.c.l.b16 %v190
      %v937 = vunpack.c.l.b16 %v191
      %v938 = vunpack.c.l.b16 %v193
      %v939 = vunpack.c.l.b16 %v194
      %v940 = vunpack.c.l.b16 %v196
      %v941 = vunpack.c.l.b16 %v197
      %v942 = vunpack.c.l.b16 %v199
      %v943 = vunpack.c.l.b16 %v200
      %v944 = vunpack.c.l.b16 %v202
      %v945 = vunpack.c.l.b16 %v203
      %v946 = vunpack.c.l.b16 %v205
      %v947 = vunpack.c.l.b16 %v206
      %v948 = vunpack.c.l.b16 %v208
      %v949 = vunpack.c.l.b16 %v209
      %v950 = vunpack.c.l.b16 %v211
      %v951 = vunpack.c.l.b16 %v212
      %v952 = vunpack.c.l.b16 %v214
      %v953 = vunpack.c.l.b16 %v215
      %v954 = vunpack.c.l.b16 %v217
      %v955 = vunpack.c.l.b16 %v218
      %v956 = vpack.c.b16 %v925, %v924
      %v957 = vpack.c.b16 %v927, %v926
      %v958 = vpack.c.b16 %v929, %v928
      %v959 = vpack.c.b16 %v931, %v930
      %v960 = vpack.c.b16 %v933, %v932
      %v961 = vpack.c.b16 %v935, %v934
      %v962 = vpack.c.b16 %v937, %v936
      %v963 = vpack.c.b16 %v939, %v938
      %v964 = vpack.c.b16 %v941, %v940
      %v965 = vpack.c.b16 %v943, %v942
      %v966 = vpack.c.b16 %v945, %v944
      %v967 = vpack.c.b16 %v947, %v946
      %v968 = vpack.c.b16 %v949, %v948
      %v969 = vpack.c.b16 %v951, %v950
      %v970 = vpack.c.b16 %v953, %v952
      %v971 = vpack.c.b16 %v955, %v954
      %v976 = vunpack.c.l.b16 %v226
      %v977 = vunpack.c.l.b16 %v227
      %v978 = vunpack.c.l.b16 %v228
      %v979 = vunpack.c.l.b16 %v229
      %v980 = vpack.c.b16 %v977, %v976
      %v981 = vpack.c.b16 %v979, %v978
      %v985 = vsel %vm682, %v956, 0
      %v988 = vsel %vm682, %v957, 0
      %v991 = vsel %vm682, %v958, 0
      %v994 = vsel %vm682, %v959, 0
      %v997 = vsel %vm682, %v960, 0
      %v1000 = vsel %vm682, %v961, 0
      %v1003 = vsel %vm682, %v962, 0
      %v1006 = vsel %vm682, %v963, 0
      %v1009 = vsel %vm682, %v964, 0
      %v1012 = vsel %vm682, %v965, 0
      %v1015 = vsel %vm682, %v966, 0
      %v1018 = vsel %vm682, %v967, 0
      %v1021 = vsel %vm682, %v968, 0
      %v1024 = vsel %vm682, %v969, 0
      %v1027 = vsel %vm682, %v970, 0
      %v1030 = vsel %vm682, %v971, 0
      %1032 = vmatprep.subr.bf16.mxu0 0
      %1033 = vmatpush1.bf16.msra.mxu0 %v980
      %1034 = vmatprep.subr.bf16.mxu0 0
      %1035 = vmatpush1.bf16.msra.mxu0 %v981
      %1036 = vmatprep.subr.bf16.mxu0 0
      %1037 = vmatpush1.bf16.msra.mxu0 0
      %1038 = vmatprep.subr.bf16.mxu0 0
      %1039 = vmatpush1.bf16.msra.mxu0 0
      %1040 = vmatprep.subr.bf16.mxu0 0
      %1041 = vmatpush1.bf16.msra.mxu0 0
      %1042 = vmatprep.subr.bf16.mxu0 0
      %1043 = vmatpush1.bf16.msra.mxu0 0
      %1044 = vmatprep.subr.bf16.mxu0 0
      %1045 = vmatpush1.bf16.msra.mxu0 0
      %1046 = vmatprep.subr.bf16.mxu0 0
      %1047 = vmatpush1.bf16.msra.mxu0 0
      %1048 = vmatprep.subr.bf16.mxu0 0
      %1049 = vmatpush1.bf16.msra.mxu0 0
      %1050 = vmatprep.subr.bf16.mxu0 0
      %1051 = vmatpush1.bf16.msra.mxu0 0
      %1052 = vmatprep.subr.bf16.mxu0 0
      %1053 = vmatpush1.bf16.msra.mxu0 0
      %1054 = vmatprep.subr.bf16.mxu0 0
      %1055 = vmatpush1.bf16.msra.mxu0 0
      %1056 = vmatprep.subr.bf16.mxu0 0
      %1057 = vmatpush1.bf16.msra.mxu0 0
      %1058 = vmatprep.subr.bf16.mxu0 0
      %1059 = vmatpush1.bf16.msra.mxu0 0
      %1060 = vmatprep.subr.bf16.mxu0 0
      %1061 = vmatpush1.bf16.msra.mxu0 0
      %1062 = vmatprep.subr.bf16.mxu0 0
      %1063 = vmatpush1.bf16.msra.mxu0 0
      %1064 = vmatprep.mubr.bf16.mxu0 0
      %1065 = vmatmul.mubr.bf16.gmra.mrb[0].mxu0 %v985
      %v1066 = vpop.f32.mrb[0].mxu0
      %v1067 = vadd.f32 %v766, %v1066
      %v1068 = vpop.f32.mrb[0].mxu0
      %v1069 = vpop.f32.mrb[0].mxu0
      %v1070 = vadd.f32 %v769, %v1069
      %v1071 = vpop.f32.mrb[0].mxu0
      %1072 = vmatprep.mubr.bf16.mxu0 0
      %1073 = vmatmul.mubr.bf16.gmra.mrb[0].mxu0 %v988
      %v1074 = vpop.f32.mrb[0].mxu0
      %v1075 = vadd.f32 %v774, %v1074
      %v1076 = vpop.f32.mrb[0].mxu0
      %v1077 = vpop.f32.mrb[0].mxu0
      %v1078 = vadd.f32 %v777, %v1077
      %v1079 = vpop.f32.mrb[0].mxu0
      %1080 = vmatprep.mubr.bf16.mxu0 0
      %1081 = vmatmul.mubr.bf16.gmra.mrb[0].mxu0 %v991
      %v1082 = vpop.f32.mrb[0].mxu0
      %v1083 = vadd.f32 %v782, %v1082
      %v1084 = vpop.f32.mrb[0].mxu0
      %v1085 = vpop.f32.mrb[0].mxu0
      %v1086 = vadd.f32 %v785, %v1085
      %v1087 = vpop.f32.mrb[0].mxu0
      %1088 = vmatprep.mubr.bf16.mxu0 0
      %1089 = vmatmul.mubr.bf16.gmra.mrb[0].mxu0 %v994
      %v1090 = vpop.f32.mrb[0].mxu0
      %v1091 = vadd.f32 %v790, %v1090
      %v1092 = vpop.f32.mrb[0].mxu0
      %v1093 = vpop.f32.mrb[0].mxu0
      %v1094 = vadd.f32 %v793, %v1093
      %v1095 = vpop.f32.mrb[0].mxu0
      %1096 = vmatprep.mubr.bf16.mxu0 0
      %1097 = vmatmul.mubr.bf16.gmra.mrb[0].mxu0 %v997
      %v1098 = vpop.f32.mrb[0].mxu0
      %v1099 = vadd.f32 %v798, %v1098
      %v1100 = vpop.f32.mrb[0].mxu0
      %v1101 = vpop.f32.mrb[0].mxu0
      %v1102 = vadd.f32 %v801, %v1101
      %v1103 = vpop.f32.mrb[0].mxu0
      %1104 = vmatprep.mubr.bf16.mxu0 0
      %1105 = vmatmul.mubr.bf16.gmra.mrb[0].mxu0 %v1000
      %v1106 = vpop.f32.mrb[0].mxu0
      %v1107 = vadd.f32 %v806, %v1106
      %v1108 = vpop.f32.mrb[0].mxu0
      %v1109 = vpop.f32.mrb[0].mxu0
      %v1110 = vadd.f32 %v809, %v1109
      %v1111 = vpop.f32.mrb[0].mxu0
      %1112 = vmatprep.mubr.bf16.mxu0 0
      %1113 = vmatmul.mubr.bf16.gmra.mrb[0].mxu0 %v1003
      %v1114 = vpop.f32.mrb[0].mxu0
      %v1115 = vadd.f32 %v814, %v1114
      %v1116 = vpop.f32.mrb[0].mxu0
      %v1117 = vpop.f32.mrb[0].mxu0
      %v1118 = vadd.f32 %v817, %v1117
      %v1119 = vpop.f32.mrb[0].mxu0
      %1120 = vmatprep.mubr.bf16.mxu0 0
      %1121 = vmatmul.mubr.bf16.gmra.mrb[0].mxu0 %v1006
      %v1122 = vpop.f32.mrb[0].mxu0
      %v1123 = vadd.f32 %v822, %v1122
      %v1124 = vpop.f32.mrb[0].mxu0
      %v1125 = vpop.f32.mrb[0].mxu0
      %v1126 = vadd.f32 %v825, %v1125
      %v1127 = vpop.f32.mrb[0].mxu0
      %1128 = vmatprep.mubr.bf16.mxu0 0
      %1129 = vmatmul.mubr.bf16.gmra.mrb[0].mxu0 %v1009
      %v1130 = vpop.f32.mrb[0].mxu0
      %v1131 = vadd.f32 %v830, %v1130
      %v1132 = vpop.f32.mrb[0].mxu0
      %v1133 = vpop.f32.mrb[0].mxu0
      %v1134 = vadd.f32 %v833, %v1133
      %v1135 = vpop.f32.mrb[0].mxu0
      %1136 = vmatprep.mubr.bf16.mxu0 0
      %1137 = vmatmul.mubr.bf16.gmra.mrb[0].mxu0 %v1012
      %v1138 = vpop.f32.mrb[0].mxu0
      %v1139 = vadd.f32 %v838, %v1138
      %v1140 = vpop.f32.mrb[0].mxu0
      %v1141 = vpop.f32.mrb[0].mxu0
      %v1142 = vadd.f32 %v841, %v1141
      %v1143 = vpop.f32.mrb[0].mxu0
      %1144 = vmatprep.mubr.bf16.mxu0 0
      %1145 = vmatmul.mubr.bf16.gmra.mrb[0].mxu0 %v1015
      %v1146 = vpop.f32.mrb[0].mxu0
      %v1147 = vadd.f32 %v846, %v1146
      %v1148 = vpop.f32.mrb[0].mxu0
      %v1149 = vpop.f32.mrb[0].mxu0
      %v1150 = vadd.f32 %v849, %v1149
      %v1151 = vpop.f32.mrb[0].mxu0
      %1152 = vmatprep.mubr.bf16.mxu0 0
      %1153 = vmatmul.mubr.bf16.gmra.mrb[0].mxu0 %v1018
      %v1154 = vpop.f32.mrb[0].mxu0
      %v1155 = vadd.f32 %v854, %v1154
      %v1156 = vpop.f32.mrb[0].mxu0
      %v1157 = vpop.f32.mrb[0].mxu0
      %v1158 = vadd.f32 %v857, %v1157
      %v1159 = vpop.f32.mrb[0].mxu0
      %1160 = vmatprep.mubr.bf16.mxu0 0
      %1161 = vmatmul.mubr.bf16.gmra.mrb[0].mxu0 %v1021
      %v1162 = vpop.f32.mrb[0].mxu0
      %v1163 = vadd.f32 %v862, %v1162
      %v1164 = vpop.f32.mrb[0].mxu0
      %v1165 = vpop.f32.mrb[0].mxu0
      %v1166 = vadd.f32 %v865, %v1165
      %v1167 = vpop.f32.mrb[0].mxu0
      %1168 = vmatprep.mubr.bf16.mxu0 0
      %1169 = vmatmul.mubr.bf16.gmra.mrb[0].mxu0 %v1024
      %v1170 = vpop.f32.mrb[0].mxu0
      %v1171 = vadd.f32 %v870, %v1170
      %v1172 = vpop.f32.mrb[0].mxu0
      %v1173 = vpop.f32.mrb[0].mxu0
      %v1174 = vadd.f32 %v873, %v1173
      %v1175 = vpop.f32.mrb[0].mxu0
      %1176 = vmatprep.mubr.bf16.mxu0 0
      %1177 = vmatmul.mubr.bf16.gmra.mrb[0].mxu0 %v1027
      %v1178 = vpop.f32.mrb[0].mxu0
      %v1179 = vadd.f32 %v878, %v1178
      %v1180 = vpop.f32.mrb[0].mxu0
      %v1181 = vpop.f32.mrb[0].mxu0
      %v1182 = vadd.f32 %v881, %v1181
      %v1183 = vpop.f32.mrb[0].mxu0
      %1184 = vmatprep.mubr.bf16.mxu0 0
      %1185 = vmatmul.mubr.bf16.gmra.mrb[0].mxu0 %v1030
      %v1186 = vpop.f32.mrb[0].mxu0
      %v1187 = vadd.f32 %v886, %v1186
      %v1188 = vpop.f32.mrb[0].mxu0
      %v1189 = vpop.f32.mrb[0].mxu0
      %v1190 = vadd.f32 %v889, %v1189
      %v1191 = vpop.f32.mrb[0].mxu0
      %1192 = vdwg.mxu0
      %vm1209 = vcmask 1042432
      %vm1210 = vcmask 1046532
      %vm1211 = vmor %vm1209, %vm1210
      %v1212 = vrot.slane %v172, 5
      %v1213 = vrot.slane %v1212, 4
      %v1214 = vrot.slane %v173, 5
      %v1215 = vsel %vm1211, %v1213, %v1214
      %v1216 = vrot.slane %v1214, 4
      %v1217 = vrot.slane %v174, 5
      %v1218 = vsel %vm1211, %v1216, %v1217
      %v1219 = vrot.slane %v175, 5
      %v1220 = vrot.slane %v1219, 4
      %v1221 = vrot.slane %v176, 5
      %v1222 = vsel %vm1211, %v1220, %v1221
      %v1223 = vrot.slane %v1221, 4
      %v1224 = vrot.slane %v177, 5
      %v1225 = vsel %vm1211, %v1223, %v1224
      %v1226 = vrot.slane %v178, 5
      %v1227 = vrot.slane %v1226, 4
      %v1228 = vrot.slane %v179, 5
      %v1229 = vsel %vm1211, %v1227, %v1228
      %v1230 = vrot.slane %v1228, 4
      %v1231 = vrot.slane %v180, 5
      %v1232 = vsel %vm1211, %v1230, %v1231
      %v1233 = vrot.slane %v181, 5
      %v1234 = vrot.slane %v1233, 4
      %v1235 = vrot.slane %v182, 5
      %v1236 = vsel %vm1211, %v1234, %v1235
      %v1237 = vrot.slane %v1235, 4
      %v1238 = vrot.slane %v183, 5
      %v1239 = vsel %vm1211, %v1237, %v1238
      %v1240 = vrot.slane %v184, 5
      %v1241 = vrot.slane %v1240, 4
      %v1242 = vrot.slane %v185, 5
      %v1243 = vsel %vm1211, %v1241, %v1242
      %v1244 = vrot.slane %v1242, 4
      %v1245 = vrot.slane %v186, 5
      %v1246 = vsel %vm1211, %v1244, %v1245
      %v1247 = vrot.slane %v187, 5
      %v1248 = vrot.slane %v1247, 4
      %v1249 = vrot.slane %v188, 5
      %v1250 = vsel %vm1211, %v1248, %v1249
      %v1251 = vrot.slane %v1249, 4
      %v1252 = vrot.slane %v189, 5
      %v1253 = vsel %vm1211, %v1251, %v1252
      %v1254 = vrot.slane %v190, 5
      %v1255 = vrot.slane %v1254, 4
      %v1256 = vrot.slane %v191, 5
      %v1257 = vsel %vm1211, %v1255, %v1256
      %v1258 = vrot.slane %v1256, 4
      %v1259 = vrot.slane %v192, 5
      %v1260 = vsel %vm1211, %v1258, %v1259
      %v1261 = vrot.slane %v193, 5
      %v1262 = vrot.slane %v1261, 4
      %v1263 = vrot.slane %v194, 5
      %v1264 = vsel %vm1211, %v1262, %v1263
      %v1265 = vrot.slane %v1263, 4
      %v1266 = vrot.slane %v195, 5
      %v1267 = vsel %vm1211, %v1265, %v1266
      %v1268 = vrot.slane %v196, 5
      %v1269 = vrot.slane %v1268, 4
      %v1270 = vrot.slane %v197, 5
      %v1271 = vsel %vm1211, %v1269, %v1270
      %v1272 = vrot.slane %v1270, 4
      %v1273 = vrot.slane %v198, 5
      %v1274 = vsel %vm1211, %v1272, %v1273
      %v1275 = vrot.slane %v199, 5
      %v1276 = vrot.slane %v1275, 4
      %v1277 = vrot.slane %v200, 5
      %v1278 = vsel %vm1211, %v1276, %v1277
      %v1279 = vrot.slane %v1277, 4
      %v1280 = vrot.slane %v201, 5
      %v1281 = vsel %vm1211, %v1279, %v1280
      %v1282 = vrot.slane %v202, 5
      %v1283 = vrot.slane %v1282, 4
      %v1284 = vrot.slane %v203, 5
      %v1285 = vsel %vm1211, %v1283, %v1284
      %v1286 = vrot.slane %v1284, 4
      %v1287 = vrot.slane %v204, 5
      %v1288 = vsel %vm1211, %v1286, %v1287
      %v1289 = vrot.slane %v205, 5
      %v1290 = vrot.slane %v1289, 4
      %v1291 = vrot.slane %v206, 5
      %v1292 = vsel %vm1211, %v1290, %v1291
      %v1293 = vrot.slane %v1291, 4
      %v1294 = vrot.slane %v207, 5
      %v1295 = vsel %vm1211, %v1293, %v1294
      %v1296 = vrot.slane %v208, 5
      %v1297 = vrot.slane %v1296, 4
      %v1298 = vrot.slane %v209, 5
      %v1299 = vsel %vm1211, %v1297, %v1298
      %v1300 = vrot.slane %v1298, 4
      %v1301 = vrot.slane %v210, 5
      %v1302 = vsel %vm1211, %v1300, %v1301
      %v1303 = vrot.slane %v211, 5
      %v1304 = vrot.slane %v1303, 4
      %v1305 = vrot.slane %v212, 5
      %v1306 = vsel %vm1211, %v1304, %v1305
      %v1307 = vrot.slane %v1305, 4
      %v1308 = vrot.slane %v213, 5
      %v1309 = vsel %vm1211, %v1307, %v1308
      %v1310 = vrot.slane %v214, 5
      %v1311 = vrot.slane %v1310, 4
      %v1312 = vrot.slane %v215, 5
      %v1313 = vsel %vm1211, %v1311, %v1312
      %v1314 = vrot.slane %v1312, 4
      %v1315 = vrot.slane %v216, 5
      %v1316 = vsel %vm1211, %v1314, %v1315
      %v1317 = vrot.slane %v217, 5
      %v1318 = vrot.slane %v1317, 4
      %v1319 = vrot.slane %v218, 5
      %v1320 = vsel %vm1211, %v1318, %v1319
      %v1321 = vrot.slane %v1319, 4
      %v1322 = vrot.slane %v219, 5
      %v1323 = vsel %vm1211, %v1321, %v1322
      %s1324 = scalar_lea.vmem %s1, 32
      %v1325 = vld [vmem:[%s1324] sm:$0xf]
      %v1326 = vld [vmem:[%s1324 + $0x4] sm:$0xf]
      %v1327 = vld [vmem:[%s1324 + $0x8] sm:$0xf]
      %v1328 = vld [vmem:[%s1324 + $0xc] sm:$0xf]
      %v1329 = vunpack.c.l.b16 %v1215
      %v1330 = vunpack.c.l.b16 %v1218
      %v1331 = vunpack.c.l.b16 %v1222
      %v1332 = vunpack.c.l.b16 %v1225
      %v1333 = vunpack.c.l.b16 %v1229
      %v1334 = vunpack.c.l.b16 %v1232
      %v1335 = vunpack.c.l.b16 %v1236
      %v1336 = vunpack.c.l.b16 %v1239
      %v1337 = vunpack.c.l.b16 %v1243
      %v1338 = vunpack.c.l.b16 %v1246
      %v1339 = vunpack.c.l.b16 %v1250
      %v1340 = vunpack.c.l.b16 %v1253
      %v1341 = vunpack.c.l.b16 %v1257
      %v1342 = vunpack.c.l.b16 %v1260
      %v1343 = vunpack.c.l.b16 %v1264
      %v1344 = vunpack.c.l.b16 %v1267
      %v1345 = vunpack.c.l.b16 %v1271
      %v1346 = vunpack.c.l.b16 %v1274
      %v1347 = vunpack.c.l.b16 %v1278
      %v1348 = vunpack.c.l.b16 %v1281
      %v1349 = vunpack.c.l.b16 %v1285
      %v1350 = vunpack.c.l.b16 %v1288
      %v1351 = vunpack.c.l.b16 %v1292
      %v1352 = vunpack.c.l.b16 %v1295
      %v1353 = vunpack.c.l.b16 %v1299
      %v1354 = vunpack.c.l.b16 %v1302
      %v1355 = vunpack.c.l.b16 %v1306
      %v1356 = vunpack.c.l.b16 %v1309
      %v1357 = vunpack.c.l.b16 %v1313
      %v1358 = vunpack.c.l.b16 %v1316
      %v1359 = vunpack.c.l.b16 %v1320
      %v1360 = vunpack.c.l.b16 %v1323
      %v1361 = vpack.c.b16 %v1330, %v1329
      %v1362 = vpack.c.b16 %v1332, %v1331
      %v1363 = vpack.c.b16 %v1334, %v1333
      %v1364 = vpack.c.b16 %v1336, %v1335
      %v1365 = vpack.c.b16 %v1338, %v1337
      %v1366 = vpack.c.b16 %v1340, %v1339
      %v1367 = vpack.c.b16 %v1342, %v1341
      %v1368 = vpack.c.b16 %v1344, %v1343
      %v1369 = vpack.c.b16 %v1346, %v1345
      %v1370 = vpack.c.b16 %v1348, %v1347
      %v1371 = vpack.c.b16 %v1350, %v1349
      %v1372 = vpack.c.b16 %v1352, %v1351
      %v1373 = vpack.c.b16 %v1354, %v1353
      %v1374 = vpack.c.b16 %v1356, %v1355
      %v1375 = vpack.c.b16 %v1358, %v1357
      %v1376 = vpack.c.b16 %v1360, %v1359
      %v1381 = vunpack.c.l.b16 %v1325
      %v1382 = vunpack.c.l.b16 %v1326
      %v1383 = vunpack.c.l.b16 %v1327
      %v1384 = vunpack.c.l.b16 %v1328
      %v1385 = vpack.c.b16 %v1382, %v1381
      %v1386 = vpack.c.b16 %v1384, %v1383
      %v1390 = vsel %vm682, %v1361, 0
      %v1393 = vsel %vm682, %v1362, 0
      %v1396 = vsel %vm682, %v1363, 0
      %v1399 = vsel %vm682, %v1364, 0
      %v1402 = vsel %vm682, %v1365, 0
      %v1405 = vsel %vm682, %v1366, 0
      %v1408 = vsel %vm682, %v1367, 0
      %v1411 = vsel %vm682, %v1368, 0
      %v1414 = vsel %vm682, %v1369, 0
      %v1417 = vsel %vm682, %v1370, 0
      %v1420 = vsel %vm682, %v1371, 0
      %v1423 = vsel %vm682, %v1372, 0
      %v1426 = vsel %vm682, %v1373, 0
      %v1429 = vsel %vm682, %v1374, 0
      %v1432 = vsel %vm682, %v1375, 0
      %v1435 = vsel %vm682, %v1376, 0
      %1437 = vmatprep.subr.bf16.mxu0 0
      %1438 = vmatpush1.bf16.msra.mxu0 %v1385
      %1439 = vmatprep.subr.bf16.mxu0 0
      %1440 = vmatpush1.bf16.msra.mxu0 %v1386
      %1441 = vmatprep.subr.bf16.mxu0 0
      %1442 = vmatpush1.bf16.msra.mxu0 0
      %1443 = vmatprep.subr.bf16.mxu0 0
      %1444 = vmatpush1.bf16.msra.mxu0 0
      %1445 = vmatprep.subr.bf16.mxu0 0
      %1446 = vmatpush1.bf16.msra.mxu0 0
      %1447 = vmatprep.subr.bf16.mxu0 0
      %1448 = vmatpush1.bf16.msra.mxu0 0
      %1449 = vmatprep.subr.bf16.mxu0 0
      %1450 = vmatpush1.bf16.msra.mxu0 0
      %1451 = vmatprep.subr.bf16.mxu0 0
      %1452 = vmatpush1.bf16.msra.mxu0 0
      %1453 = vmatprep.subr.bf16.mxu0 0
      %1454 = vmatpush1.bf16.msra.mxu0 0
      %1455 = vmatprep.subr.bf16.mxu0 0
      %1456 = vmatpush1.bf16.msra.mxu0 0
      %1457 = vmatprep.subr.bf16.mxu0 0
      %1458 = vmatpush1.bf16.msra.mxu0 0
      %1459 = vmatprep.subr.bf16.mxu0 0
      %1460 = vmatpush1.bf16.msra.mxu0 0
      %1461 = vmatprep.subr.bf16.mxu0 0
      %1462 = vmatpush1.bf16.msra.mxu0 0
      %1463 = vmatprep.subr.bf16.mxu0 0
      %1464 = vmatpush1.bf16.msra.mxu0 0
      %1465 = vmatprep.subr.bf16.mxu0 0
      %1466 = vmatpush1.bf16.msra.mxu0 0
      %1467 = vmatprep.subr.bf16.mxu0 0
      %1468 = vmatpush1.bf16.msra.mxu0 0
      %1469 = vmatprep.mubr.bf16.mxu0 0
      %1470 = vmatmul.mubr.bf16.gmra.mrb[0].mxu0 %v1390
      %v1471 = vpop.f32.mrb[0].mxu0
      %v1472 = vadd.f32 0.0, %v1471
      %v1473 = vpop.f32.mrb[0].mxu0
      %v1474 = vpop.f32.mrb[0].mxu0
      %v1475 = vadd.f32 0.0, %v1474
      %v1476 = vpop.f32.mrb[0].mxu0
      %1477 = vmatprep.mubr.bf16.mxu0 0
      %1478 = vmatmul.mubr.bf16.gmra.mrb[0].mxu0 %v1393
      %v1479 = vpop.f32.mrb[0].mxu0
      %v1480 = vadd.f32 0.0, %v1479
      %v1481 = vpop.f32.mrb[0].mxu0
      %v1482 = vpop.f32.mrb[0].mxu0
      %v1483 = vadd.f32 0.0, %v1482
      %v1484 = vpop.f32.mrb[0].mxu0
      %1485 = vmatprep.mubr.bf16.mxu0 0
      %1486 = vmatmul.mubr.bf16.gmra.mrb[0].mxu0 %v1396
      %v1487 = vpop.f32.mrb[0].mxu0
      %v1488 = vadd.f32 0.0, %v1487
      %v1489 = vpop.f32.mrb[0].mxu0
      %v1490 = vpop.f32.mrb[0].mxu0
      %v1491 = vadd.f32 0.0, %v1490
      %v1492 = vpop.f32.mrb[0].mxu0
      %1493 = vmatprep.mubr.bf16.mxu0 0
      %1494 = vmatmul.mubr.bf16.gmra.mrb[0].mxu0 %v1399
      %v1495 = vpop.f32.mrb[0].mxu0
      %v1496 = vadd.f32 0.0, %v1495
      %v1497 = vpop.f32.mrb[0].mxu0
      %v1498 = vpop.f32.mrb[0].mxu0
      %v1499 = vadd.f32 0.0, %v1498
      %v1500 = vpop.f32.mrb[0].mxu0
      %1501 = vmatprep.mubr.bf16.mxu0 0
      %1502 = vmatmul.mubr.bf16.gmra.mrb[0].mxu0 %v1402
      %v1503 = vpop.f32.mrb[0].mxu0
      %v1504 = vadd.f32 0.0, %v1503
      %v1505 = vpop.f32.mrb[0].mxu0
      %v1506 = vpop.f32.mrb[0].mxu0
      %v1507 = vadd.f32 0.0, %v1506
      %v1508 = vpop.f32.mrb[0].mxu0
      %1509 = vmatprep.mubr.bf16.mxu0 0
      %1510 = vmatmul.mubr.bf16.gmra.mrb[0].mxu0 %v1405
      %v1511 = vpop.f32.mrb[0].mxu0
      %v1512 = vadd.f32 0.0, %v1511
      %v1513 = vpop.f32.mrb[0].mxu0
      %v1514 = vpop.f32.mrb[0].mxu0
      %v1515 = vadd.f32 0.0, %v1514
      %v1516 = vpop.f32.mrb[0].mxu0
      %1517 = vmatprep.mubr.bf16.mxu0 0
      %1518 = vmatmul.mubr.bf16.gmra.mrb[0].mxu0 %v1408
      %v1519 = vpop.f32.mrb[0].mxu0
      %v1520 = vadd.f32 0.0, %v1519
      %v1521 = vpop.f32.mrb[0].mxu0
      %v1522 = vpop.f32.mrb[0].mxu0
      %v1523 = vadd.f32 0.0, %v1522
      %v1524 = vpop.f32.mrb[0].mxu0
      %1525 = vmatprep.mubr.bf16.mxu0 0
      %1526 = vmatmul.mubr.bf16.gmra.mrb[0].mxu0 %v1411
      %v1527 = vpop.f32.mrb[0].mxu0
      %v1528 = vadd.f32 0.0, %v1527
      %v1529 = vpop.f32.mrb[0].mxu0
      %v1530 = vpop.f32.mrb[0].mxu0
      %v1531 = vadd.f32 0.0, %v1530
      %v1532 = vpop.f32.mrb[0].mxu0
      %1533 = vmatprep.mubr.bf16.mxu0 0
      %1534 = vmatmul.mubr.bf16.gmra.mrb[0].mxu0 %v1414
      %v1535 = vpop.f32.mrb[0].mxu0
      %v1536 = vadd.f32 0.0, %v1535
      %v1537 = vpop.f32.mrb[0].mxu0
      %v1538 = vpop.f32.mrb[0].mxu0
      %v1539 = vadd.f32 0.0, %v1538
      %v1540 = vpop.f32.mrb[0].mxu0
      %1541 = vmatprep.mubr.bf16.mxu0 0
      %1542 = vmatmul.mubr.bf16.gmra.mrb[0].mxu0 %v1417
      %v1543 = vpop.f32.mrb[0].mxu0
      %v1544 = vadd.f32 0.0, %v1543
      %v1545 = vpop.f32.mrb[0].mxu0
      %v1546 = vpop.f32.mrb[0].mxu0
      %v1547 = vadd.f32 0.0, %v1546
      %v1548 = vpop.f32.mrb[0].mxu0
      %1549 = vmatprep.mubr.bf16.mxu0 0
      %1550 = vmatmul.mubr.bf16.gmra.mrb[0].mxu0 %v1420
      %v1551 = vpop.f32.mrb[0].mxu0
      %v1552 = vadd.f32 0.0, %v1551
      %v1553 = vpop.f32.mrb[0].mxu0
      %v1554 = vpop.f32.mrb[0].mxu0
      %v1555 = vadd.f32 0.0, %v1554
      %v1556 = vpop.f32.mrb[0].mxu0
      %1557 = vmatprep.mubr.bf16.mxu0 0
      %1558 = vmatmul.mubr.bf16.gmra.mrb[0].mxu0 %v1423
      %v1559 = vpop.f32.mrb[0].mxu0
      %v1560 = vadd.f32 0.0, %v1559
      %v1561 = vpop.f32.mrb[0].mxu0
      %v1562 = vpop.f32.mrb[0].mxu0
      %v1563 = vadd.f32 0.0, %v1562
      %v1564 = vpop.f32.mrb[0].mxu0
      %1565 = vmatprep.mubr.bf16.mxu0 0
      %1566 = vmatmul.mubr.bf16.gmra.mrb[0].mxu0 %v1426
      %v1567 = vpop.f32.mrb[0].mxu0
      %v1568 = vadd.f32 0.0, %v1567
      %v1569 = vpop.f32.mrb[0].mxu0
      %v1570 = vpop.f32.mrb[0].mxu0
      %v1571 = vadd.f32 0.0, %v1570
      %v1572 = vpop.f32.mrb[0].mxu0
      %1573 = vmatprep.mubr.bf16.mxu0 0
      %1574 = vmatmul.mubr.bf16.gmra.mrb[0].mxu0 %v1429
      %v1575 = vpop.f32.mrb[0].mxu0
      %v1576 = vadd.f32 0.0, %v1575
      %v1577 = vpop.f32.mrb[0].mxu0
      %v1578 = vpop.f32.mrb[0].mxu0
      %v1579 = vadd.f32 0.0, %v1578
      %v1580 = vpop.f32.mrb[0].mxu0
      %1581 = vmatprep.mubr.bf16.mxu0 0
      %1582 = vmatmul.mubr.bf16.gmra.mrb[0].mxu0 %v1432
      %v1583 = vpop.f32.mrb[0].mxu0
      %v1584 = vadd.f32 0.0, %v1583
      %v1585 = vpop.f32.mrb[0].mxu0
      %v1586 = vpop.f32.mrb[0].mxu0
      %v1587 = vadd.f32 0.0, %v1586
      %v1588 = vpop.f32.mrb[0].mxu0
      %1589 = vmatprep.mubr.bf16.mxu0 0
      %1590 = vmatmul.mubr.bf16.gmra.mrb[0].mxu0 %v1435
      %v1591 = vpop.f32.mrb[0].mxu0
      %v1592 = vadd.f32 0.0, %v1591
      %v1593 = vpop.f32.mrb[0].mxu0
      %v1594 = vpop.f32.mrb[0].mxu0
      %v1595 = vadd.f32 0.0, %v1594
      %v1596 = vpop.f32.mrb[0].mxu0
      %1597 = vdwg.mxu0
      %v1598 = vadd.f32 %v1067, %v1472
      %v1599 = vadd.f32 %v1070, %v1475
      %v1600 = vadd.f32 %v1075, %v1480
      %v1601 = vadd.f32 %v1078, %v1483
      %v1602 = vadd.f32 %v1083, %v1488
      %v1603 = vadd.f32 %v1086, %v1491
      %v1604 = vadd.f32 %v1091, %v1496
      %v1605 = vadd.f32 %v1094, %v1499
      %v1606 = vadd.f32 %v1099, %v1504
      %v1607 = vadd.f32 %v1102, %v1507
      %v1608 = vadd.f32 %v1107, %v1512
      %v1609 = vadd.f32 %v1110, %v1515
      %v1610 = vadd.f32 %v1115, %v1520
      %v1611 = vadd.f32 %v1118, %v1523
      %v1612 = vadd.f32 %v1123, %v1528
      %v1613 = vadd.f32 %v1126, %v1531
      %v1614 = vadd.f32 %v1131, %v1536
      %v1615 = vadd.f32 %v1134, %v1539
      %v1616 = vadd.f32 %v1139, %v1544
      %v1617 = vadd.f32 %v1142, %v1547
      %v1618 = vadd.f32 %v1147, %v1552
      %v1619 = vadd.f32 %v1150, %v1555
      %v1620 = vadd.f32 %v1155, %v1560
      %v1621 = vadd.f32 %v1158, %v1563
      %v1622 = vadd.f32 %v1163, %v1568
      %v1623 = vadd.f32 %v1166, %v1571
      %v1624 = vadd.f32 %v1171, %v1576
      %v1625 = vadd.f32 %v1174, %v1579
      %v1626 = vadd.f32 %v1179, %v1584
      %v1627 = vadd.f32 %v1182, %v1587
      %v1628 = vadd.f32 %v1187, %v1592
      %v1629 = vadd.f32 %v1190, %v1595
      %s1630 = scalar_lea.vmem %s1, 48
      %v1631 = vld [vmem:[%s1630] sm:$0xf]
      %v1632 = vld [vmem:[%s1630 + $0x4] sm:$0xf]
      %v1633 = vld [vmem:[%s1630 + $0x8] sm:$0xf]
      %v1634 = vld [vmem:[%s1630 + $0xc] sm:$0xf]
      %v1637 = vunpack.c.l.b16 %v220
      %v1638 = vunpack.c.l.b16 %v221
      %v1639 = vpack.c.b16 %v1638, %v1637
      %v1644 = vunpack.c.l.b16 %v1631
      %v1645 = vunpack.c.l.b16 %v1632
      %v1646 = vunpack.c.l.b16 %v1633
      %v1647 = vunpack.c.l.b16 %v1634
      %v1648 = vpack.c.b16 %v1645, %v1644
      %v1649 = vpack.c.b16 %v1647, %v1646
      %v1653 = vsel %vm682, %v1639, 0
      %1655 = vmatprep.subr.bf16.mxu0 0
      %1656 = vmatpush1.bf16.msra.mxu0 %v1648
      %1657 = vmatprep.subr.bf16.mxu0 0
      %1658 = vmatpush1.bf16.msra.mxu0 %v1649
      %1659 = vmatprep.subr.bf16.mxu0 0
      %1660 = vmatpush1.bf16.msra.mxu0 0
      %1661 = vmatprep.subr.bf16.mxu0 0
      %1662 = vmatpush1.bf16.msra.mxu0 0
      %1663 = vmatprep.subr.bf16.mxu0 0
      %1664 = vmatpush1.bf16.msra.mxu0 0
      %1665 = vmatprep.subr.bf16.mxu0 0
      %1666 = vmatpush1.bf16.msra.mxu0 0
      %1667 = vmatprep.subr.bf16.mxu0 0
      %1668 = vmatpush1.bf16.msra.mxu0 0
      %1669 = vmatprep.subr.bf16.mxu0 0
      %1670 = vmatpush1.bf16.msra.mxu0 0
      %1671 = vmatprep.subr.bf16.mxu0 0
      %1672 = vmatpush1.bf16.msra.mxu0 0
      %1673 = vmatprep.subr.bf16.mxu0 0
      %1674 = vmatpush1.bf16.msra.mxu0 0
      %1675 = vmatprep.subr.bf16.mxu0 0
      %1676 = vmatpush1.bf16.msra.mxu0 0
      %1677 = vmatprep.subr.bf16.mxu0 0
      %1678 = vmatpush1.bf16.msra.mxu0 0
      %1679 = vmatprep.subr.bf16.mxu0 0
      %1680 = vmatpush1.bf16.msra.mxu0 0
      %1681 = vmatprep.subr.bf16.mxu0 0
      %1682 = vmatpush1.bf16.msra.mxu0 0
      %1683 = vmatprep.subr.bf16.mxu0 0
      %1684 = vmatpush1.bf16.msra.mxu0 0
      %1685 = vmatprep.subr.bf16.mxu0 0
      %1686 = vmatpush1.bf16.msra.mxu0 0
      %1687 = vmatprep.mubr.bf16.mxu0 0
      %1688 = vmatmul.mubr.bf16.gmra.mrb[0].mxu0 %v988
      %v1689 = vpop.f32.mrb[0].mxu0
      %v1690 = vadd.f32 0.0, %v1689
      %v1691 = vpop.f32.mrb[0].mxu0
      %v1692 = vpop.f32.mrb[0].mxu0
      %v1693 = vadd.f32 0.0, %v1692
      %v1694 = vpop.f32.mrb[0].mxu0
      %1695 = vmatprep.mubr.bf16.mxu0 0
      %1696 = vmatmul.mubr.bf16.gmra.mrb[0].mxu0 %v991
      %v1697 = vpop.f32.mrb[0].mxu0
      %v1698 = vadd.f32 0.0, %v1697
      %v1699 = vpop.f32.mrb[0].mxu0
      %v1700 = vpop.f32.mrb[0].mxu0
      %v1701 = vadd.f32 0.0, %v1700
      %v1702 = vpop.f32.mrb[0].mxu0
      %1703 = vmatprep.mubr.bf16.mxu0 0
      %1704 = vmatmul.mubr.bf16.gmra.mrb[0].mxu0 %v994
      %v1705 = vpop.f32.mrb[0].mxu0
      %v1706 = vadd.f32 0.0, %v1705
      %v1707 = vpop.f32.mrb[0].mxu0
      %v1708 = vpop.f32.mrb[0].mxu0
      %v1709 = vadd.f32 0.0, %v1708
      %v1710 = vpop.f32.mrb[0].mxu0
      %1711 = vmatprep.mubr.bf16.mxu0 0
      %1712 = vmatmul.mubr.bf16.gmra.mrb[0].mxu0 %v997
      %v1713 = vpop.f32.mrb[0].mxu0
      %v1714 = vadd.f32 0.0, %v1713
      %v1715 = vpop.f32.mrb[0].mxu0
      %v1716 = vpop.f32.mrb[0].mxu0
      %v1717 = vadd.f32 0.0, %v1716
      %v1718 = vpop.f32.mrb[0].mxu0
      %1719 = vmatprep.mubr.bf16.mxu0 0
      %1720 = vmatmul.mubr.bf16.gmra.mrb[0].mxu0 %v1000
      %v1721 = vpop.f32.mrb[0].mxu0
      %v1722 = vadd.f32 0.0, %v1721
      %v1723 = vpop.f32.mrb[0].mxu0
      %v1724 = vpop.f32.mrb[0].mxu0
      %v1725 = vadd.f32 0.0, %v1724
      %v1726 = vpop.f32.mrb[0].mxu0
      %1727 = vmatprep.mubr.bf16.mxu0 0
      %1728 = vmatmul.mubr.bf16.gmra.mrb[0].mxu0 %v1003
      %v1729 = vpop.f32.mrb[0].mxu0
      %v1730 = vadd.f32 0.0, %v1729
      %v1731 = vpop.f32.mrb[0].mxu0
      %v1732 = vpop.f32.mrb[0].mxu0
      %v1733 = vadd.f32 0.0, %v1732
      %v1734 = vpop.f32.mrb[0].mxu0
      %1735 = vmatprep.mubr.bf16.mxu0 0
      %1736 = vmatmul.mubr.bf16.gmra.mrb[0].mxu0 %v1006
      %v1737 = vpop.f32.mrb[0].mxu0
      %v1738 = vadd.f32 0.0, %v1737
      %v1739 = vpop.f32.mrb[0].mxu0
      %v1740 = vpop.f32.mrb[0].mxu0
      %v1741 = vadd.f32 0.0, %v1740
      %v1742 = vpop.f32.mrb[0].mxu0
      %1743 = vmatprep.mubr.bf16.mxu0 0
      %1744 = vmatmul.mubr.bf16.gmra.mrb[0].mxu0 %v1009
      %v1745 = vpop.f32.mrb[0].mxu0
      %v1746 = vadd.f32 0.0, %v1745
      %v1747 = vpop.f32.mrb[0].mxu0
      %v1748 = vpop.f32.mrb[0].mxu0
      %v1749 = vadd.f32 0.0, %v1748
      %v1750 = vpop.f32.mrb[0].mxu0
      %1751 = vmatprep.mubr.bf16.mxu0 0
      %1752 = vmatmul.mubr.bf16.gmra.mrb[0].mxu0 %v1012
      %v1753 = vpop.f32.mrb[0].mxu0
      %v1754 = vadd.f32 0.0, %v1753
      %v1755 = vpop.f32.mrb[0].mxu0
      %v1756 = vpop.f32.mrb[0].mxu0
      %v1757 = vadd.f32 0.0, %v1756
      %v1758 = vpop.f32.mrb[0].mxu0
      %1759 = vmatprep.mubr.bf16.mxu0 0
      %1760 = vmatmul.mubr.bf16.gmra.mrb[0].mxu0 %v1015
      %v1761 = vpop.f32.mrb[0].mxu0
      %v1762 = vadd.f32 0.0, %v1761
      %v1763 = vpop.f32.mrb[0].mxu0
      %v1764 = vpop.f32.mrb[0].mxu0
      %v1765 = vadd.f32 0.0, %v1764
      %v1766 = vpop.f32.mrb[0].mxu0
      %1767 = vmatprep.mubr.bf16.mxu0 0
      %1768 = vmatmul.mubr.bf16.gmra.mrb[0].mxu0 %v1018
      %v1769 = vpop.f32.mrb[0].mxu0
      %v1770 = vadd.f32 0.0, %v1769
      %v1771 = vpop.f32.mrb[0].mxu0
      %v1772 = vpop.f32.mrb[0].mxu0
      %v1773 = vadd.f32 0.0, %v1772
      %v1774 = vpop.f32.mrb[0].mxu0
      %1775 = vmatprep.mubr.bf16.mxu0 0
      %1776 = vmatmul.mubr.bf16.gmra.mrb[0].mxu0 %v1021
      %v1777 = vpop.f32.mrb[0].mxu0
      %v1778 = vadd.f32 0.0, %v1777
      %v1779 = vpop.f32.mrb[0].mxu0
      %v1780 = vpop.f32.mrb[0].mxu0
      %v1781 = vadd.f32 0.0, %v1780
      %v1782 = vpop.f32.mrb[0].mxu0
      %1783 = vmatprep.mubr.bf16.mxu0 0
      %1784 = vmatmul.mubr.bf16.gmra.mrb[0].mxu0 %v1024
      %v1785 = vpop.f32.mrb[0].mxu0
      %v1786 = vadd.f32 0.0, %v1785
      %v1787 = vpop.f32.mrb[0].mxu0
      %v1788 = vpop.f32.mrb[0].mxu0
      %v1789 = vadd.f32 0.0, %v1788
      %v1790 = vpop.f32.mrb[0].mxu0
      %1791 = vmatprep.mubr.bf16.mxu0 0
      %1792 = vmatmul.mubr.bf16.gmra.mrb[0].mxu0 %v1027
      %v1793 = vpop.f32.mrb[0].mxu0
      %v1794 = vadd.f32 0.0, %v1793
      %v1795 = vpop.f32.mrb[0].mxu0
      %v1796 = vpop.f32.mrb[0].mxu0
      %v1797 = vadd.f32 0.0, %v1796
      %v1798 = vpop.f32.mrb[0].mxu0
      %1799 = vmatprep.mubr.bf16.mxu0 0
      %1800 = vmatmul.mubr.bf16.gmra.mrb[0].mxu0 %v1030
      %v1801 = vpop.f32.mrb[0].mxu0
      %v1802 = vadd.f32 0.0, %v1801
      %v1803 = vpop.f32.mrb[0].mxu0
      %v1804 = vpop.f32.mrb[0].mxu0
      %v1805 = vadd.f32 0.0, %v1804
      %v1806 = vpop.f32.mrb[0].mxu0
      %1807 = vmatprep.mubr.bf16.mxu0 0
      %1808 = vmatmul.mubr.bf16.gmra.mrb[0].mxu0 %v1653
      %v1809 = vpop.f32.mrb[0].mxu0
      %v1810 = vadd.f32 0.0, %v1809
      %v1811 = vpop.f32.mrb[0].mxu0
      %v1812 = vpop.f32.mrb[0].mxu0
      %v1813 = vadd.f32 0.0, %v1812
      %v1814 = vpop.f32.mrb[0].mxu0
      %1815 = vdwg.mxu0
      %v1816 = vadd.f32 %v1598, %v1690
      %v1817 = vadd.f32 %v1599, %v1693
      %v1818 = vadd.f32 %v1600, %v1698
      %v1819 = vadd.f32 %v1601, %v1701
      %v1820 = vadd.f32 %v1602, %v1706
      %v1821 = vadd.f32 %v1603, %v1709
      %v1822 = vadd.f32 %v1604, %v1714
      %v1823 = vadd.f32 %v1605, %v1717
      %v1824 = vadd.f32 %v1606, %v1722
      %v1825 = vadd.f32 %v1607, %v1725
      %v1826 = vadd.f32 %v1608, %v1730
      %v1827 = vadd.f32 %v1609, %v1733
      %v1828 = vadd.f32 %v1610, %v1738
      %v1829 = vadd.f32 %v1611, %v1741
      %v1830 = vadd.f32 %v1612, %v1746
      %v1831 = vadd.f32 %v1613, %v1749
      %v1832 = vadd.f32 %v1614, %v1754
      %v1833 = vadd.f32 %v1615, %v1757
      %v1834 = vadd.f32 %v1616, %v1762
      %v1835 = vadd.f32 %v1617, %v1765
      %v1836 = vadd.f32 %v1618, %v1770
      %v1837 = vadd.f32 %v1619, %v1773
      %v1838 = vadd.f32 %v1620, %v1778
      %v1839 = vadd.f32 %v1621, %v1781
      %v1840 = vadd.f32 %v1622, %v1786
      %v1841 = vadd.f32 %v1623, %v1789
      %v1842 = vadd.f32 %v1624, %v1794
      %v1843 = vadd.f32 %v1625, %v1797
      %v1844 = vadd.f32 %v1626, %v1802
      %v1845 = vadd.f32 %v1627, %v1805
      %v1846 = vadd.f32 %v1628, %v1810
      %v1847 = vadd.f32 %v1629, %v1813
      %v1849 = vshrl.u32 %v220, 16
      %v1851 = vrot.slane %v1849, 4
      %v1852 = vshll.u32 %v220, 16
      %v1854 = vrot.slane %v1852, 5
      %v1855 = vor.u32 %v1851, %v1854
      %v1856 = vrot.slane %v1855, 4
      %v1858 = vshll.u32 %v221, 16
      %v1860 = vrot.slane %v1858, 5
      %v1861 = vsel %vm232, %v1856, %v1860
      %v1862 = vshrl.u32 %v221, 16
      %v1864 = vrot.slane %v1862, 4
      %v1865 = vor.u32 %v1864, %v1860
      %v1866 = vrot.slane %v1865, 4
      %v1868 = vshll.u32 %v222, 16
      %v1870 = vrot.slane %v1868, 5
      %v1871 = vsel %vm232, %v1866, %v1870
      %s1872 = scalar_lea.vmem %s1, 64
      %v1873 = vld [vmem:[%s1872] sm:$0xf]
      %v1874 = vld [vmem:[%s1872 + $0x4] sm:$0xf]
      %v1875 = vld [vmem:[%s1872 + $0x8] sm:$0xf]
      %v1876 = vld [vmem:[%s1872 + $0xc] sm:$0xf]
      %v1877 = vunpack.c.l.b16 %v1861
      %v1878 = vunpack.c.l.b16 %v1871
      %v1879 = vpack.c.b16 %v1878, %v1877
      %v1884 = vunpack.c.l.b16 %v1873
      %v1885 = vunpack.c.l.b16 %v1874
      %v1886 = vunpack.c.l.b16 %v1875
      %v1887 = vunpack.c.l.b16 %v1876
      %v1888 = vpack.c.b16 %v1885, %v1884
      %v1889 = vpack.c.b16 %v1887, %v1886
      %v1893 = vsel %vm682, %v1879, 0
      %1895 = vmatprep.subr.bf16.mxu0 0
      %1896 = vmatpush1.bf16.msra.mxu0 %v1888
      %1897 = vmatprep.subr.bf16.mxu0 0
      %1898 = vmatpush1.bf16.msra.mxu0 %v1889
      %1899 = vmatprep.subr.bf16.mxu0 0
      %1900 = vmatpush1.bf16.msra.mxu0 0
      %1901 = vmatprep.subr.bf16.mxu0 0
      %1902 = vmatpush1.bf16.msra.mxu0 0
      %1903 = vmatprep.subr.bf16.mxu0 0
      %1904 = vmatpush1.bf16.msra.mxu0 0
      %1905 = vmatprep.subr.bf16.mxu0 0
      %1906 = vmatpush1.bf16.msra.mxu0 0
      %1907 = vmatprep.subr.bf16.mxu0 0
      %1908 = vmatpush1.bf16.msra.mxu0 0
      %1909 = vmatprep.subr.bf16.mxu0 0
      %1910 = vmatpush1.bf16.msra.mxu0 0
      %1911 = vmatprep.subr.bf16.mxu0 0
      %1912 = vmatpush1.bf16.msra.mxu0 0
      %1913 = vmatprep.subr.bf16.mxu0 0
      %1914 = vmatpush1.bf16.msra.mxu0 0
      %1915 = vmatprep.subr.bf16.mxu0 0
      %1916 = vmatpush1.bf16.msra.mxu0 0
      %1917 = vmatprep.subr.bf16.mxu0 0
      %1918 = vmatpush1.bf16.msra.mxu0 0
      %1919 = vmatprep.subr.bf16.mxu0 0
      %1920 = vmatpush1.bf16.msra.mxu0 0
      %1921 = vmatprep.subr.bf16.mxu0 0
      %1922 = vmatpush1.bf16.msra.mxu0 0
      %1923 = vmatprep.subr.bf16.mxu0 0
      %1924 = vmatpush1.bf16.msra.mxu0 0
      %1925 = vmatprep.subr.bf16.mxu0 0
      %1926 = vmatpush1.bf16.msra.mxu0 0
      %1927 = vmatprep.mubr.bf16.mxu0 0
      %1928 = vmatmul.mubr.bf16.gmra.mrb[0].mxu0 %v687
      %v1929 = vpop.f32.mrb[0].mxu0
      %v1930 = vadd.f32 0.0, %v1929
      %v1931 = vpop.f32.mrb[0].mxu0
      %v1932 = vpop.f32.mrb[0].mxu0
      %v1933 = vadd.f32 0.0, %v1932
      %v1934 = vpop.f32.mrb[0].mxu0
      %1935 = vmatprep.mubr.bf16.mxu0 0
      %1936 = vmatmul.mubr.bf16.gmra.mrb[0].mxu0 %v690
      %v1937 = vpop.f32.mrb[0].mxu0
      %v1938 = vadd.f32 0.0, %v1937
      %v1939 = vpop.f32.mrb[0].mxu0
      %v1940 = vpop.f32.mrb[0].mxu0
      %v1941 = vadd.f32 0.0, %v1940
      %v1942 = vpop.f32.mrb[0].mxu0
      %1943 = vmatprep.mubr.bf16.mxu0 0
      %1944 = vmatmul.mubr.bf16.gmra.mrb[0].mxu0 %v693
      %v1945 = vpop.f32.mrb[0].mxu0
      %v1946 = vadd.f32 0.0, %v1945
      %v1947 = vpop.f32.mrb[0].mxu0
      %v1948 = vpop.f32.mrb[0].mxu0
      %v1949 = vadd.f32 0.0, %v1948
      %v1950 = vpop.f32.mrb[0].mxu0
      %1951 = vmatprep.mubr.bf16.mxu0 0
      %1952 = vmatmul.mubr.bf16.gmra.mrb[0].mxu0 %v696
      %v1953 = vpop.f32.mrb[0].mxu0
      %v1954 = vadd.f32 0.0, %v1953
      %v1955 = vpop.f32.mrb[0].mxu0
      %v1956 = vpop.f32.mrb[0].mxu0
      %v1957 = vadd.f32 0.0, %v1956
      %v1958 = vpop.f32.mrb[0].mxu0
      %1959 = vmatprep.mubr.bf16.mxu0 0
      %1960 = vmatmul.mubr.bf16.gmra.mrb[0].mxu0 %v699
      %v1961 = vpop.f32.mrb[0].mxu0
      %v1962 = vadd.f32 0.0, %v1961
      %v1963 = vpop.f32.mrb[0].mxu0
      %v1964 = vpop.f32.mrb[0].mxu0
      %v1965 = vadd.f32 0.0, %v1964
      %v1966 = vpop.f32.mrb[0].mxu0
      %1967 = vmatprep.mubr.bf16.mxu0 0
      %1968 = vmatmul.mubr.bf16.gmra.mrb[0].mxu0 %v702
      %v1969 = vpop.f32.mrb[0].mxu0
      %v1970 = vadd.f32 0.0, %v1969
      %v1971 = vpop.f32.mrb[0].mxu0
      %v1972 = vpop.f32.mrb[0].mxu0
      %v1973 = vadd.f32 0.0, %v1972
      %v1974 = vpop.f32.mrb[0].mxu0
      %1975 = vmatprep.mubr.bf16.mxu0 0
      %1976 = vmatmul.mubr.bf16.gmra.mrb[0].mxu0 %v705
      %v1977 = vpop.f32.mrb[0].mxu0
      %v1978 = vadd.f32 0.0, %v1977
      %v1979 = vpop.f32.mrb[0].mxu0
      %v1980 = vpop.f32.mrb[0].mxu0
      %v1981 = vadd.f32 0.0, %v1980
      %v1982 = vpop.f32.mrb[0].mxu0
      %1983 = vmatprep.mubr.bf16.mxu0 0
      %1984 = vmatmul.mubr.bf16.gmra.mrb[0].mxu0 %v708
      %v1985 = vpop.f32.mrb[0].mxu0
      %v1986 = vadd.f32 0.0, %v1985
      %v1987 = vpop.f32.mrb[0].mxu0
      %v1988 = vpop.f32.mrb[0].mxu0
      %v1989 = vadd.f32 0.0, %v1988
      %v1990 = vpop.f32.mrb[0].mxu0
      %1991 = vmatprep.mubr.bf16.mxu0 0
      %1992 = vmatmul.mubr.bf16.gmra.mrb[0].mxu0 %v711
      %v1993 = vpop.f32.mrb[0].mxu0
      %v1994 = vadd.f32 0.0, %v1993
      %v1995 = vpop.f32.mrb[0].mxu0
      %v1996 = vpop.f32.mrb[0].mxu0
      %v1997 = vadd.f32 0.0, %v1996
      %v1998 = vpop.f32.mrb[0].mxu0
      %1999 = vmatprep.mubr.bf16.mxu0 0
      %2000 = vmatmul.mubr.bf16.gmra.mrb[0].mxu0 %v714
      %v2001 = vpop.f32.mrb[0].mxu0
      %v2002 = vadd.f32 0.0, %v2001
      %v2003 = vpop.f32.mrb[0].mxu0
      %v2004 = vpop.f32.mrb[0].mxu0
      %v2005 = vadd.f32 0.0, %v2004
      %v2006 = vpop.f32.mrb[0].mxu0
      %2007 = vmatprep.mubr.bf16.mxu0 0
      %2008 = vmatmul.mubr.bf16.gmra.mrb[0].mxu0 %v717
      %v2009 = vpop.f32.mrb[0].mxu0
      %v2010 = vadd.f32 0.0, %v2009
      %v2011 = vpop.f32.mrb[0].mxu0
      %v2012 = vpop.f32.mrb[0].mxu0
      %v2013 = vadd.f32 0.0, %v2012
      %v2014 = vpop.f32.mrb[0].mxu0
      %2015 = vmatprep.mubr.bf16.mxu0 0
      %2016 = vmatmul.mubr.bf16.gmra.mrb[0].mxu0 %v720
      %v2017 = vpop.f32.mrb[0].mxu0
      %v2018 = vadd.f32 0.0, %v2017
      %v2019 = vpop.f32.mrb[0].mxu0
      %v2020 = vpop.f32.mrb[0].mxu0
      %v2021 = vadd.f32 0.0, %v2020
      %v2022 = vpop.f32.mrb[0].mxu0
      %2023 = vmatprep.mubr.bf16.mxu0 0
      %2024 = vmatmul.mubr.bf16.gmra.mrb[0].mxu0 %v723
      %v2025 = vpop.f32.mrb[0].mxu0
      %v2026 = vadd.f32 0.0, %v2025
      %v2027 = vpop.f32.mrb[0].mxu0
      %v2028 = vpop.f32.mrb[0].mxu0
      %v2029 = vadd.f32 0.0, %v2028
      %v2030 = vpop.f32.mrb[0].mxu0
      %2031 = vmatprep.mubr.bf16.mxu0 0
      %2032 = vmatmul.mubr.bf16.gmra.mrb[0].mxu0 %v726
      %v2033 = vpop.f32.mrb[0].mxu0
      %v2034 = vadd.f32 0.0, %v2033
      %v2035 = vpop.f32.mrb[0].mxu0
      %v2036 = vpop.f32.mrb[0].mxu0
      %v2037 = vadd.f32 0.0, %v2036
      %v2038 = vpop.f32.mrb[0].mxu0
      %2039 = vmatprep.mubr.bf16.mxu0 0
      %2040 = vmatmul.mubr.bf16.gmra.mrb[0].mxu0 %v729
      %v2041 = vpop.f32.mrb[0].mxu0
      %v2042 = vadd.f32 0.0, %v2041
      %v2043 = vpop.f32.mrb[0].mxu0
      %v2044 = vpop.f32.mrb[0].mxu0
      %v2045 = vadd.f32 0.0, %v2044
      %v2046 = vpop.f32.mrb[0].mxu0
      %2047 = vmatprep.mubr.bf16.mxu0 0
      %2048 = vmatmul.mubr.bf16.gmra.mrb[0].mxu0 %v1893
      %v2049 = vpop.f32.mrb[0].mxu0
      %v2050 = vadd.f32 0.0, %v2049
      %v2051 = vpop.f32.mrb[0].mxu0
      %v2052 = vpop.f32.mrb[0].mxu0
      %v2053 = vadd.f32 0.0, %v2052
      %v2054 = vpop.f32.mrb[0].mxu0
      %2055 = vdwg.mxu0
      %v2056 = vadd.f32 %v1816, %v1930
      %v2057 = vadd.f32 %v1817, %v1933
      %v2058 = vadd.f32 %v1818, %v1938
      %v2059 = vadd.f32 %v1819, %v1941
      %v2060 = vadd.f32 %v1820, %v1946
      %v2061 = vadd.f32 %v1821, %v1949
      %v2062 = vadd.f32 %v1822, %v1954
      %v2063 = vadd.f32 %v1823, %v1957
      %v2064 = vadd.f32 %v1824, %v1962
      %v2065 = vadd.f32 %v1825, %v1965
      %v2066 = vadd.f32 %v1826, %v1970
      %v2067 = vadd.f32 %v1827, %v1973
      %v2068 = vadd.f32 %v1828, %v1978
      %v2069 = vadd.f32 %v1829, %v1981
      %v2070 = vadd.f32 %v1830, %v1986
      %v2071 = vadd.f32 %v1831, %v1989
      %v2072 = vadd.f32 %v1832, %v1994
      %v2073 = vadd.f32 %v1833, %v1997
      %v2074 = vadd.f32 %v1834, %v2002
      %v2075 = vadd.f32 %v1835, %v2005
      %v2076 = vadd.f32 %v1836, %v2010
      %v2077 = vadd.f32 %v1837, %v2013
      %v2078 = vadd.f32 %v1838, %v2018
      %v2079 = vadd.f32 %v1839, %v2021
      %v2080 = vadd.f32 %v1840, %v2026
      %v2081 = vadd.f32 %v1841, %v2029
      %v2082 = vadd.f32 %v1842, %v2034
      %v2083 = vadd.f32 %v1843, %v2037
      %v2084 = vadd.f32 %v1844, %v2042
      %v2085 = vadd.f32 %v1845, %v2045
      %v2086 = vadd.f32 %v1846, %v2050
      %v2087 = vadd.f32 %v1847, %v2053
      %v2089 = vrot.slane %v220, 5
      %v2090 = vrot.slane %v2089, 4
      %v2091 = vrot.slane %v221, 5
      %v2092 = vsel %vm1211, %v2090, %v2091
      %v2093 = vrot.slane %v2091, 4
      %v2094 = vrot.slane %v222, 5
      %v2095 = vsel %vm1211, %v2093, %v2094
      %s2096 = scalar_lea.vmem %s1, 80
      %v2097 = vld [vmem:[%s2096] sm:$0xf]
      %v2098 = vld [vmem:[%s2096 + $0x4] sm:$0xf]
      %v2099 = vld [vmem:[%s2096 + $0x8] sm:$0xf]
      %v2100 = vld [vmem:[%s2096 + $0xc] sm:$0xf]
      %v2101 = vunpack.c.l.b16 %v2092
      %v2102 = vunpack.c.l.b16 %v2095
      %v2103 = vpack.c.b16 %v2102, %v2101
      %v2108 = vunpack.c.l.b16 %v2097
      %v2109 = vunpack.c.l.b16 %v2098
      %v2110 = vunpack.c.l.b16 %v2099
      %v2111 = vunpack.c.l.b16 %v2100
      %v2112 = vpack.c.b16 %v2109, %v2108
      %v2113 = vpack.c.b16 %v2111, %v2110
      %v2117 = vsel %vm682, %v2103, 0
      %2119 = vmatprep.subr.bf16.mxu0 0
      %2120 = vmatpush1.bf16.msra.mxu0 %v2112
      %2121 = vmatprep.subr.bf16.mxu0 0
      %2122 = vmatpush1.bf16.msra.mxu0 %v2113
      %2123 = vmatprep.subr.bf16.mxu0 0
      %2124 = vmatpush1.bf16.msra.mxu0 0
      %2125 = vmatprep.subr.bf16.mxu0 0
      %2126 = vmatpush1.bf16.msra.mxu0 0
      %2127 = vmatprep.subr.bf16.mxu0 0
      %2128 = vmatpush1.bf16.msra.mxu0 0
      %2129 = vmatprep.subr.bf16.mxu0 0
      %2130 = vmatpush1.bf16.msra.mxu0 0
      %2131 = vmatprep.subr.bf16.mxu0 0
      %2132 = vmatpush1.bf16.msra.mxu0 0
      %2133 = vmatprep.subr.bf16.mxu0 0
      %2134 = vmatpush1.bf16.msra.mxu0 0
      %2135 = vmatprep.subr.bf16.mxu0 0
      %2136 = vmatpush1.bf16.msra.mxu0 0
      %2137 = vmatprep.subr.bf16.mxu0 0
      %2138 = vmatpush1.bf16.msra.mxu0 0
      %2139 = vmatprep.subr.bf16.mxu0 0
      %2140 = vmatpush1.bf16.msra.mxu0 0
      %2141 = vmatprep.subr.bf16.mxu0 0
      %2142 = vmatpush1.bf16.msra.mxu0 0
      %2143 = vmatprep.subr.bf16.mxu0 0
      %2144 = vmatpush1.bf16.msra.mxu0 0
      %2145 = vmatprep.subr.bf16.mxu0 0
      %2146 = vmatpush1.bf16.msra.mxu0 0
      %2147 = vmatprep.subr.bf16.mxu0 0
      %2148 = vmatpush1.bf16.msra.mxu0 0
      %2149 = vmatprep.subr.bf16.mxu0 0
      %2150 = vmatpush1.bf16.msra.mxu0 0
      %2151 = vmatprep.mubr.bf16.mxu0 0
      %2152 = vmatmul.mubr.bf16.gmra.mrb[0].mxu0 %v1393
      %v2153 = vpop.f32.mrb[0].mxu0
      %v2154 = vadd.f32 0.0, %v2153
      %v2155 = vpop.f32.mrb[0].mxu0
      %v2156 = vpop.f32.mrb[0].mxu0
      %v2157 = vadd.f32 0.0, %v2156
      %v2158 = vpop.f32.mrb[0].mxu0
      %2159 = vmatprep.mubr.bf16.mxu0 0
      %2160 = vmatmul.mubr.bf16.gmra.mrb[0].mxu0 %v1396
      %v2161 = vpop.f32.mrb[0].mxu0
      %v2162 = vadd.f32 0.0, %v2161
      %v2163 = vpop.f32.mrb[0].mxu0
      %v2164 = vpop.f32.mrb[0].mxu0
      %v2165 = vadd.f32 0.0, %v2164
      %v2166 = vpop.f32.mrb[0].mxu0
      %2167 = vmatprep.mubr.bf16.mxu0 0
      %2168 = vmatmul.mubr.bf16.gmra.mrb[0].mxu0 %v1399
      %v2169 = vpop.f32.mrb[0].mxu0
      %v2170 = vadd.f32 0.0, %v2169
      %v2171 = vpop.f32.mrb[0].mxu0
      %v2172 = vpop.f32.mrb[0].mxu0
      %v2173 = vadd.f32 0.0, %v2172
      %v2174 = vpop.f32.mrb[0].mxu0
      %2175 = vmatprep.mubr.bf16.mxu0 0
      %2176 = vmatmul.mubr.bf16.gmra.mrb[0].mxu0 %v1402
      %v2177 = vpop.f32.mrb[0].mxu0
      %v2178 = vadd.f32 0.0, %v2177
      %v2179 = vpop.f32.mrb[0].mxu0
      %v2180 = vpop.f32.mrb[0].mxu0
      %v2181 = vadd.f32 0.0, %v2180
      %v2182 = vpop.f32.mrb[0].mxu0
      %2183 = vmatprep.mubr.bf16.mxu0 0
      %2184 = vmatmul.mubr.bf16.gmra.mrb[0].mxu0 %v1405
      %v2185 = vpop.f32.mrb[0].mxu0
      %v2186 = vadd.f32 0.0, %v2185
      %v2187 = vpop.f32.mrb[0].mxu0
      %v2188 = vpop.f32.mrb[0].mxu0
      %v2189 = vadd.f32 0.0, %v2188
      %v2190 = vpop.f32.mrb[0].mxu0
      %2191 = vmatprep.mubr.bf16.mxu0 0
      %2192 = vmatmul.mubr.bf16.gmra.mrb[0].mxu0 %v1408
      %v2193 = vpop.f32.mrb[0].mxu0
      %v2194 = vadd.f32 0.0, %v2193
      %v2195 = vpop.f32.mrb[0].mxu0
      %v2196 = vpop.f32.mrb[0].mxu0
      %v2197 = vadd.f32 0.0, %v2196
      %v2198 = vpop.f32.mrb[0].mxu0
      %2199 = vmatprep.mubr.bf16.mxu0 0
      %2200 = vmatmul.mubr.bf16.gmra.mrb[0].mxu0 %v1411
      %v2201 = vpop.f32.mrb[0].mxu0
      %v2202 = vadd.f32 0.0, %v2201
      %v2203 = vpop.f32.mrb[0].mxu0
      %v2204 = vpop.f32.mrb[0].mxu0
      %v2205 = vadd.f32 0.0, %v2204
      %v2206 = vpop.f32.mrb[0].mxu0
      %2207 = vmatprep.mubr.bf16.mxu0 0
      %2208 = vmatmul.mubr.bf16.gmra.mrb[0].mxu0 %v1414
      %v2209 = vpop.f32.mrb[0].mxu0
      %v2210 = vadd.f32 0.0, %v2209
      %v2211 = vpop.f32.mrb[0].mxu0
      %v2212 = vpop.f32.mrb[0].mxu0
      %v2213 = vadd.f32 0.0, %v2212
      %v2214 = vpop.f32.mrb[0].mxu0
      %2215 = vmatprep.mubr.bf16.mxu0 0
      %2216 = vmatmul.mubr.bf16.gmra.mrb[0].mxu0 %v1417
      %v2217 = vpop.f32.mrb[0].mxu0
      %v2218 = vadd.f32 0.0, %v2217
      %v2219 = vpop.f32.mrb[0].mxu0
      %v2220 = vpop.f32.mrb[0].mxu0
      %v2221 = vadd.f32 0.0, %v2220
      %v2222 = vpop.f32.mrb[0].mxu0
      %2223 = vmatprep.mubr.bf16.mxu0 0
      %2224 = vmatmul.mubr.bf16.gmra.mrb[0].mxu0 %v1420
      %v2225 = vpop.f32.mrb[0].mxu0
      %v2226 = vadd.f32 0.0, %v2225
      %v2227 = vpop.f32.mrb[0].mxu0
      %v2228 = vpop.f32.mrb[0].mxu0
      %v2229 = vadd.f32 0.0, %v2228
      %v2230 = vpop.f32.mrb[0].mxu0
      %2231 = vmatprep.mubr.bf16.mxu0 0
      %2232 = vmatmul.mubr.bf16.gmra.mrb[0].mxu0 %v1423
      %v2233 = vpop.f32.mrb[0].mxu0
      %v2234 = vadd.f32 0.0, %v2233
      %v2235 = vpop.f32.mrb[0].mxu0
      %v2236 = vpop.f32.mrb[0].mxu0
      %v2237 = vadd.f32 0.0, %v2236
      %v2238 = vpop.f32.mrb[0].mxu0
      %2239 = vmatprep.mubr.bf16.mxu0 0
      %2240 = vmatmul.mubr.bf16.gmra.mrb[0].mxu0 %v1426
      %v2241 = vpop.f32.mrb[0].mxu0
      %v2242 = vadd.f32 0.0, %v2241
      %v2243 = vpop.f32.mrb[0].mxu0
      %v2244 = vpop.f32.mrb[0].mxu0
      %v2245 = vadd.f32 0.0, %v2244
      %v2246 = vpop.f32.mrb[0].mxu0
      %2247 = vmatprep.mubr.bf16.mxu0 0
      %2248 = vmatmul.mubr.bf16.gmra.mrb[0].mxu0 %v1429
      %v2249 = vpop.f32.mrb[0].mxu0
      %v2250 = vadd.f32 0.0, %v2249
      %v2251 = vpop.f32.mrb[0].mxu0
      %v2252 = vpop.f32.mrb[0].mxu0
      %v2253 = vadd.f32 0.0, %v2252
      %v2254 = vpop.f32.mrb[0].mxu0
      %2255 = vmatprep.mubr.bf16.mxu0 0
      %2256 = vmatmul.mubr.bf16.gmra.mrb[0].mxu0 %v1432
      %v2257 = vpop.f32.mrb[0].mxu0
      %v2258 = vadd.f32 0.0, %v2257
      %v2259 = vpop.f32.mrb[0].mxu0
      %v2260 = vpop.f32.mrb[0].mxu0
      %v2261 = vadd.f32 0.0, %v2260
      %v2262 = vpop.f32.mrb[0].mxu0
      %2263 = vmatprep.mubr.bf16.mxu0 0
      %2264 = vmatmul.mubr.bf16.gmra.mrb[0].mxu0 %v1435
      %v2265 = vpop.f32.mrb[0].mxu0
      %v2266 = vadd.f32 0.0, %v2265
      %v2267 = vpop.f32.mrb[0].mxu0
      %v2268 = vpop.f32.mrb[0].mxu0
      %v2269 = vadd.f32 0.0, %v2268
      %v2270 = vpop.f32.mrb[0].mxu0
      %2271 = vmatprep.mubr.bf16.mxu0 0
      %2272 = vmatmul.mubr.bf16.gmra.mrb[0].mxu0 %v2117
      %v2273 = vpop.f32.mrb[0].mxu0
      %v2274 = vadd.f32 0.0, %v2273
      %v2275 = vpop.f32.mrb[0].mxu0
      %v2276 = vpop.f32.mrb[0].mxu0
      %v2277 = vadd.f32 0.0, %v2276
      %v2278 = vpop.f32.mrb[0].mxu0
      %2279 = vdwg.mxu0
      %v2280 = vadd.f32 %v2056, %v2154
      %v2281 = vadd.f32 %v2057, %v2157
      %v2282 = vadd.f32 %v2058, %v2162
      %v2283 = vadd.f32 %v2059, %v2165
      %v2284 = vadd.f32 %v2060, %v2170
      %v2285 = vadd.f32 %v2061, %v2173
      %v2286 = vadd.f32 %v2062, %v2178
      %v2287 = vadd.f32 %v2063, %v2181
      %v2288 = vadd.f32 %v2064, %v2186
      %v2289 = vadd.f32 %v2065, %v2189
      %v2290 = vadd.f32 %v2066, %v2194
      %v2291 = vadd.f32 %v2067, %v2197
      %v2292 = vadd.f32 %v2068, %v2202
      %v2293 = vadd.f32 %v2069, %v2205
      %v2294 = vadd.f32 %v2070, %v2210
      %v2295 = vadd.f32 %v2071, %v2213
      %v2296 = vadd.f32 %v2072, %v2218
      %v2297 = vadd.f32 %v2073, %v2221
      %v2298 = vadd.f32 %v2074, %v2226
      %v2299 = vadd.f32 %v2075, %v2229
      %v2300 = vadd.f32 %v2076, %v2234
      %v2301 = vadd.f32 %v2077, %v2237
      %v2302 = vadd.f32 %v2078, %v2242
      %v2303 = vadd.f32 %v2079, %v2245
      %v2304 = vadd.f32 %v2080, %v2250
      %v2305 = vadd.f32 %v2081, %v2253
      %v2306 = vadd.f32 %v2082, %v2258
      %v2307 = vadd.f32 %v2083, %v2261
      %v2308 = vadd.f32 %v2084, %v2266
      %v2309 = vadd.f32 %v2085, %v2269
      %v2310 = vadd.f32 %v2086, %v2274
      %v2311 = vadd.f32 %v2087, %v2277
      %s2312 = scalar_lea.vmem %s1, 96
      %v2313 = vld [vmem:[%s2312] sm:$0xf]
      %v2314 = vld [vmem:[%s2312 + $0x4] sm:$0xf]
      %v2315 = vld [vmem:[%s2312 + $0x8] sm:$0xf]
      %v2316 = vld [vmem:[%s2312 + $0xc] sm:$0xf]
      %v2319 = vunpack.c.l.b16 %v223
      %v2320 = vunpack.c.l.b16 %v224
      %v2321 = vpack.c.b16 %v2320, %v2319
      %v2326 = vunpack.c.l.b16 %v2313
      %v2327 = vunpack.c.l.b16 %v2314
      %v2328 = vunpack.c.l.b16 %v2315
      %v2329 = vunpack.c.l.b16 %v2316
      %v2330 = vpack.c.b16 %v2327, %v2326
      %v2331 = vpack.c.b16 %v2329, %v2328
      %v2335 = vsel %vm682, %v2321, 0
      %2337 = vmatprep.subr.bf16.mxu0 0
      %2338 = vmatpush1.bf16.msra.mxu0 %v2330
      %2339 = vmatprep.subr.bf16.mxu0 0
      %2340 = vmatpush1.bf16.msra.mxu0 %v2331
      %2341 = vmatprep.subr.bf16.mxu0 0
      %2342 = vmatpush1.bf16.msra.mxu0 0
      %2343 = vmatprep.subr.bf16.mxu0 0
      %2344 = vmatpush1.bf16.msra.mxu0 0
      %2345 = vmatprep.subr.bf16.mxu0 0
      %2346 = vmatpush1.bf16.msra.mxu0 0
      %2347 = vmatprep.subr.bf16.mxu0 0
      %2348 = vmatpush1.bf16.msra.mxu0 0
      %2349 = vmatprep.subr.bf16.mxu0 0
      %2350 = vmatpush1.bf16.msra.mxu0 0
      %2351 = vmatprep.subr.bf16.mxu0 0
      %2352 = vmatpush1.bf16.msra.mxu0 0
      %2353 = vmatprep.subr.bf16.mxu0 0
      %2354 = vmatpush1.bf16.msra.mxu0 0
      %2355 = vmatprep.subr.bf16.mxu0 0
      %2356 = vmatpush1.bf16.msra.mxu0 0
      %2357 = vmatprep.subr.bf16.mxu0 0
      %2358 = vmatpush1.bf16.msra.mxu0 0
      %2359 = vmatprep.subr.bf16.mxu0 0
      %2360 = vmatpush1.bf16.msra.mxu0 0
      %2361 = vmatprep.subr.bf16.mxu0 0
      %2362 = vmatpush1.bf16.msra.mxu0 0
      %2363 = vmatprep.subr.bf16.mxu0 0
      %2364 = vmatpush1.bf16.msra.mxu0 0
      %2365 = vmatprep.subr.bf16.mxu0 0
      %2366 = vmatpush1.bf16.msra.mxu0 0
      %2367 = vmatprep.subr.bf16.mxu0 0
      %2368 = vmatpush1.bf16.msra.mxu0 0
      %2369 = vmatprep.mubr.bf16.mxu0 0
      %2370 = vmatmul.mubr.bf16.gmra.mrb[0].mxu0 %v991
      %v2371 = vpop.f32.mrb[0].mxu0
      %v2372 = vadd.f32 0.0, %v2371
      %v2373 = vpop.f32.mrb[0].mxu0
      %v2374 = vpop.f32.mrb[0].mxu0
      %v2375 = vadd.f32 0.0, %v2374
      %v2376 = vpop.f32.mrb[0].mxu0
      %2377 = vmatprep.mubr.bf16.mxu0 0
      %2378 = vmatmul.mubr.bf16.gmra.mrb[0].mxu0 %v994
      %v2379 = vpop.f32.mrb[0].mxu0
      %v2380 = vadd.f32 0.0, %v2379
      %v2381 = vpop.f32.mrb[0].mxu0
      %v2382 = vpop.f32.mrb[0].mxu0
      %v2383 = vadd.f32 0.0, %v2382
      %v2384 = vpop.f32.mrb[0].mxu0
      %2385 = vmatprep.mubr.bf16.mxu0 0
      %2386 = vmatmul.mubr.bf16.gmra.mrb[0].mxu0 %v997
      %v2387 = vpop.f32.mrb[0].mxu0
      %v2388 = vadd.f32 0.0, %v2387
      %v2389 = vpop.f32.mrb[0].mxu0
      %v2390 = vpop.f32.mrb[0].mxu0
      %v2391 = vadd.f32 0.0, %v2390
      %v2392 = vpop.f32.mrb[0].mxu0
      %2393 = vmatprep.mubr.bf16.mxu0 0
      %2394 = vmatmul.mubr.bf16.gmra.mrb[0].mxu0 %v1000
      %v2395 = vpop.f32.mrb[0].mxu0
      %v2396 = vadd.f32 0.0, %v2395
      %v2397 = vpop.f32.mrb[0].mxu0
      %v2398 = vpop.f32.mrb[0].mxu0
      %v2399 = vadd.f32 0.0, %v2398
      %v2400 = vpop.f32.mrb[0].mxu0
      %2401 = vmatprep.mubr.bf16.mxu0 0
      %2402 = vmatmul.mubr.bf16.gmra.mrb[0].mxu0 %v1003
      %v2403 = vpop.f32.mrb[0].mxu0
      %v2404 = vadd.f32 0.0, %v2403
      %v2405 = vpop.f32.mrb[0].mxu0
      %v2406 = vpop.f32.mrb[0].mxu0
      %v2407 = vadd.f32 0.0, %v2406
      %v2408 = vpop.f32.mrb[0].mxu0
      %2409 = vmatprep.mubr.bf16.mxu0 0
      %2410 = vmatmul.mubr.bf16.gmra.mrb[0].mxu0 %v1006
      %v2411 = vpop.f32.mrb[0].mxu0
      %v2412 = vadd.f32 0.0, %v2411
      %v2413 = vpop.f32.mrb[0].mxu0
      %v2414 = vpop.f32.mrb[0].mxu0
      %v2415 = vadd.f32 0.0, %v2414
      %v2416 = vpop.f32.mrb[0].mxu0
      %2417 = vmatprep.mubr.bf16.mxu0 0
      %2418 = vmatmul.mubr.bf16.gmra.mrb[0].mxu0 %v1009
      %v2419 = vpop.f32.mrb[0].mxu0
      %v2420 = vadd.f32 0.0, %v2419
      %v2421 = vpop.f32.mrb[0].mxu0
      %v2422 = vpop.f32.mrb[0].mxu0
      %v2423 = vadd.f32 0.0, %v2422
      %v2424 = vpop.f32.mrb[0].mxu0
      %2425 = vmatprep.mubr.bf16.mxu0 0
      %2426 = vmatmul.mubr.bf16.gmra.mrb[0].mxu0 %v1012
      %v2427 = vpop.f32.mrb[0].mxu0
      %v2428 = vadd.f32 0.0, %v2427
      %v2429 = vpop.f32.mrb[0].mxu0
      %v2430 = vpop.f32.mrb[0].mxu0
      %v2431 = vadd.f32 0.0, %v2430
      %v2432 = vpop.f32.mrb[0].mxu0
      %2433 = vmatprep.mubr.bf16.mxu0 0
      %2434 = vmatmul.mubr.bf16.gmra.mrb[0].mxu0 %v1015
      %v2435 = vpop.f32.mrb[0].mxu0
      %v2436 = vadd.f32 0.0, %v2435
      %v2437 = vpop.f32.mrb[0].mxu0
      %v2438 = vpop.f32.mrb[0].mxu0
      %v2439 = vadd.f32 0.0, %v2438
      %v2440 = vpop.f32.mrb[0].mxu0
      %2441 = vmatprep.mubr.bf16.mxu0 0
      %2442 = vmatmul.mubr.bf16.gmra.mrb[0].mxu0 %v1018
      %v2443 = vpop.f32.mrb[0].mxu0
      %v2444 = vadd.f32 0.0, %v2443
      %v2445 = vpop.f32.mrb[0].mxu0
      %v2446 = vpop.f32.mrb[0].mxu0
      %v2447 = vadd.f32 0.0, %v2446
      %v2448 = vpop.f32.mrb[0].mxu0
      %2449 = vmatprep.mubr.bf16.mxu0 0
      %2450 = vmatmul.mubr.bf16.gmra.mrb[0].mxu0 %v1021
      %v2451 = vpop.f32.mrb[0].mxu0
      %v2452 = vadd.f32 0.0, %v2451
      %v2453 = vpop.f32.mrb[0].mxu0
      %v2454 = vpop.f32.mrb[0].mxu0
      %v2455 = vadd.f32 0.0, %v2454
      %v2456 = vpop.f32.mrb[0].mxu0
      %2457 = vmatprep.mubr.bf16.mxu0 0
      %2458 = vmatmul.mubr.bf16.gmra.mrb[0].mxu0 %v1024
      %v2459 = vpop.f32.mrb[0].mxu0
      %v2460 = vadd.f32 0.0, %v2459
      %v2461 = vpop.f32.mrb[0].mxu0
      %v2462 = vpop.f32.mrb[0].mxu0
      %v2463 = vadd.f32 0.0, %v2462
      %v2464 = vpop.f32.mrb[0].mxu0
      %2465 = vmatprep.mubr.bf16.mxu0 0
      %2466 = vmatmul.mubr.bf16.gmra.mrb[0].mxu0 %v1027
      %v2467 = vpop.f32.mrb[0].mxu0
      %v2468 = vadd.f32 0.0, %v2467
      %v2469 = vpop.f32.mrb[0].mxu0
      %v2470 = vpop.f32.mrb[0].mxu0
      %v2471 = vadd.f32 0.0, %v2470
      %v2472 = vpop.f32.mrb[0].mxu0
      %2473 = vmatprep.mubr.bf16.mxu0 0
      %2474 = vmatmul.mubr.bf16.gmra.mrb[0].mxu0 %v1030
      %v2475 = vpop.f32.mrb[0].mxu0
      %v2476 = vadd.f32 0.0, %v2475
      %v2477 = vpop.f32.mrb[0].mxu0
      %v2478 = vpop.f32.mrb[0].mxu0
      %v2479 = vadd.f32 0.0, %v2478
      %v2480 = vpop.f32.mrb[0].mxu0
      %2481 = vmatprep.mubr.bf16.mxu0 0
      %2482 = vmatmul.mubr.bf16.gmra.mrb[0].mxu0 %v1653
      %v2483 = vpop.f32.mrb[0].mxu0
      %v2484 = vadd.f32 0.0, %v2483
      %v2485 = vpop.f32.mrb[0].mxu0
      %v2486 = vpop.f32.mrb[0].mxu0
      %v2487 = vadd.f32 0.0, %v2486
      %v2488 = vpop.f32.mrb[0].mxu0
      %2489 = vmatprep.mubr.bf16.mxu0 0
      %2490 = vmatmul.mubr.bf16.gmra.mrb[0].mxu0 %v2335
      %v2491 = vpop.f32.mrb[0].mxu0
      %v2492 = vadd.f32 0.0, %v2491
      %v2493 = vpop.f32.mrb[0].mxu0
      %v2494 = vpop.f32.mrb[0].mxu0
      %v2495 = vadd.f32 0.0, %v2494
      %v2496 = vpop.f32.mrb[0].mxu0
      %2497 = vdwg.mxu0
      %v2498 = vadd.f32 %v2280, %v2372
      %v2499 = vadd.f32 %v2281, %v2375
      %v2500 = vadd.f32 %v2282, %v2380
      %v2501 = vadd.f32 %v2283, %v2383
      %v2502 = vadd.f32 %v2284, %v2388
      %v2503 = vadd.f32 %v2285, %v2391
      %v2504 = vadd.f32 %v2286, %v2396
      %v2505 = vadd.f32 %v2287, %v2399
      %v2506 = vadd.f32 %v2288, %v2404
      %v2507 = vadd.f32 %v2289, %v2407
      %v2508 = vadd.f32 %v2290, %v2412
      %v2509 = vadd.f32 %v2291, %v2415
      %v2510 = vadd.f32 %v2292, %v2420
      %v2511 = vadd.f32 %v2293, %v2423
      %v2512 = vadd.f32 %v2294, %v2428
      %v2513 = vadd.f32 %v2295, %v2431
      %v2514 = vadd.f32 %v2296, %v2436
      %v2515 = vadd.f32 %v2297, %v2439
      %v2516 = vadd.f32 %v2298, %v2444
      %v2517 = vadd.f32 %v2299, %v2447
      %v2518 = vadd.f32 %v2300, %v2452
      %v2519 = vadd.f32 %v2301, %v2455
      %v2520 = vadd.f32 %v2302, %v2460
      %v2521 = vadd.f32 %v2303, %v2463
      %v2522 = vadd.f32 %v2304, %v2468
      %v2523 = vadd.f32 %v2305, %v2471
      %v2524 = vadd.f32 %v2306, %v2476
      %v2525 = vadd.f32 %v2307, %v2479
      %v2526 = vadd.f32 %v2308, %v2484
      %v2527 = vadd.f32 %v2309, %v2487
      %v2528 = vadd.f32 %v2310, %v2492
      %v2529 = vadd.f32 %v2311, %v2495
      %v2531 = vshrl.u32 %v223, 16
      %v2533 = vrot.slane %v2531, 4
      %v2534 = vshll.u32 %v223, 16
      %v2536 = vrot.slane %v2534, 5
      %v2537 = vor.u32 %v2533, %v2536
      %v2538 = vrot.slane %v2537, 4
      %v2540 = vshll.u32 %v224, 16
      %v2542 = vrot.slane %v2540, 5
      %v2543 = vsel %vm232, %v2538, %v2542
      %v2544 = vshrl.u32 %v224, 16
      %v2546 = vrot.slane %v2544, 4
      %v2547 = vor.u32 %v2546, %v2542
      %v2548 = vrot.slane %v2547, 4
      %v2550 = vshll.u32 %v225, 16
      %v2552 = vrot.slane %v2550, 5
      %v2553 = vsel %vm232, %v2548, %v2552
      %s2554 = scalar_lea.vmem %s1, 112
      %v2555 = vld [vmem:[%s2554] sm:$0xf]
      %v2556 = vld [vmem:[%s2554 + $0x4] sm:$0xf]
      %v2557 = vld [vmem:[%s2554 + $0x8] sm:$0xf]
      %v2558 = vld [vmem:[%s2554 + $0xc] sm:$0xf]
      %v2559 = vunpack.c.l.b16 %v2543
      %v2560 = vunpack.c.l.b16 %v2553
      %v2561 = vpack.c.b16 %v2560, %v2559
      %v2566 = vunpack.c.l.b16 %v2555
      %v2567 = vunpack.c.l.b16 %v2556
      %v2568 = vunpack.c.l.b16 %v2557
      %v2569 = vunpack.c.l.b16 %v2558
      %v2570 = vpack.c.b16 %v2567, %v2566
      %v2571 = vpack.c.b16 %v2569, %v2568
      %v2575 = vsel %vm682, %v2561, 0
      %2577 = vmatprep.subr.bf16.mxu0 0
      %2578 = vmatpush1.bf16.msra.mxu0 %v2570
      %2579 = vmatprep.subr.bf16.mxu0 0
      %2580 = vmatpush1.bf16.msra.mxu0 %v2571
      %2581 = vmatprep.subr.bf16.mxu0 0
      %2582 = vmatpush1.bf16.msra.mxu0 0
      %2583 = vmatprep.subr.bf16.mxu0 0
      %2584 = vmatpush1.bf16.msra.mxu0 0
      %2585 = vmatprep.subr.bf16.mxu0 0
      %2586 = vmatpush1.bf16.msra.mxu0 0
      %2587 = vmatprep.subr.bf16.mxu0 0
      %2588 = vmatpush1.bf16.msra.mxu0 0
      %2589 = vmatprep.subr.bf16.mxu0 0
      %2590 = vmatpush1.bf16.msra.mxu0 0
      %2591 = vmatprep.subr.bf16.mxu0 0
      %2592 = vmatpush1.bf16.msra.mxu0 0
      %2593 = vmatprep.subr.bf16.mxu0 0
      %2594 = vmatpush1.bf16.msra.mxu0 0
      %2595 = vmatprep.subr.bf16.mxu0 0
      %2596 = vmatpush1.bf16.msra.mxu0 0
      %2597 = vmatprep.subr.bf16.mxu0 0
      %2598 = vmatpush1.bf16.msra.mxu0 0
      %2599 = vmatprep.subr.bf16.mxu0 0
      %2600 = vmatpush1.bf16.msra.mxu0 0
      %2601 = vmatprep.subr.bf16.mxu0 0
      %2602 = vmatpush1.bf16.msra.mxu0 0
      %2603 = vmatprep.subr.bf16.mxu0 0
      %2604 = vmatpush1.bf16.msra.mxu0 0
      %2605 = vmatprep.subr.bf16.mxu0 0
      %2606 = vmatpush1.bf16.msra.mxu0 0
      %2607 = vmatprep.subr.bf16.mxu0 0
      %2608 = vmatpush1.bf16.msra.mxu0 0
      %2609 = vmatprep.mubr.bf16.mxu0 0
      %2610 = vmatmul.mubr.bf16.gmra.mrb[0].mxu0 %v690
      %v2611 = vpop.f32.mrb[0].mxu0
      %v2612 = vadd.f32 0.0, %v2611
      %v2613 = vpop.f32.mrb[0].mxu0
      %v2614 = vpop.f32.mrb[0].mxu0
      %v2615 = vadd.f32 0.0, %v2614
      %v2616 = vpop.f32.mrb[0].mxu0
      %2617 = vmatprep.mubr.bf16.mxu0 0
      %2618 = vmatmul.mubr.bf16.gmra.mrb[0].mxu0 %v693
      %v2619 = vpop.f32.mrb[0].mxu0
      %v2620 = vadd.f32 0.0, %v2619
      %v2621 = vpop.f32.mrb[0].mxu0
      %v2622 = vpop.f32.mrb[0].mxu0
      %v2623 = vadd.f32 0.0, %v2622
      %v2624 = vpop.f32.mrb[0].mxu0
      %2625 = vmatprep.mubr.bf16.mxu0 0
      %2626 = vmatmul.mubr.bf16.gmra.mrb[0].mxu0 %v696
      %v2627 = vpop.f32.mrb[0].mxu0
      %v2628 = vadd.f32 0.0, %v2627
      %v2629 = vpop.f32.mrb[0].mxu0
      %v2630 = vpop.f32.mrb[0].mxu0
      %v2631 = vadd.f32 0.0, %v2630
      %v2632 = vpop.f32.mrb[0].mxu0
      %2633 = vmatprep.mubr.bf16.mxu0 0
      %2634 = vmatmul.mubr.bf16.gmra.mrb[0].mxu0 %v699
      %v2635 = vpop.f32.mrb[0].mxu0
      %v2636 = vadd.f32 0.0, %v2635
      %v2637 = vpop.f32.mrb[0].mxu0
      %v2638 = vpop.f32.mrb[0].mxu0
      %v2639 = vadd.f32 0.0, %v2638
      %v2640 = vpop.f32.mrb[0].mxu0
      %2641 = vmatprep.mubr.bf16.mxu0 0
      %2642 = vmatmul.mubr.bf16.gmra.mrb[0].mxu0 %v702
      %v2643 = vpop.f32.mrb[0].mxu0
      %v2644 = vadd.f32 0.0, %v2643
      %v2645 = vpop.f32.mrb[0].mxu0
      %v2646 = vpop.f32.mrb[0].mxu0
      %v2647 = vadd.f32 0.0, %v2646
      %v2648 = vpop.f32.mrb[0].mxu0
      %2649 = vmatprep.mubr.bf16.mxu0 0
      %2650 = vmatmul.mubr.bf16.gmra.mrb[0].mxu0 %v705
      %v2651 = vpop.f32.mrb[0].mxu0
      %v2652 = vadd.f32 0.0, %v2651
      %v2653 = vpop.f32.mrb[0].mxu0
      %v2654 = vpop.f32.mrb[0].mxu0
      %v2655 = vadd.f32 0.0, %v2654
      %v2656 = vpop.f32.mrb[0].mxu0
      %2657 = vmatprep.mubr.bf16.mxu0 0
      %2658 = vmatmul.mubr.bf16.gmra.mrb[0].mxu0 %v708
      %v2659 = vpop.f32.mrb[0].mxu0
      %v2660 = vadd.f32 0.0, %v2659
      %v2661 = vpop.f32.mrb[0].mxu0
      %v2662 = vpop.f32.mrb[0].mxu0
      %v2663 = vadd.f32 0.0, %v2662
      %v2664 = vpop.f32.mrb[0].mxu0
      %2665 = vmatprep.mubr.bf16.mxu0 0
      %2666 = vmatmul.mubr.bf16.gmra.mrb[0].mxu0 %v711
      %v2667 = vpop.f32.mrb[0].mxu0
      %v2668 = vadd.f32 0.0, %v2667
      %v2669 = vpop.f32.mrb[0].mxu0
      %v2670 = vpop.f32.mrb[0].mxu0
      %v2671 = vadd.f32 0.0, %v2670
      %v2672 = vpop.f32.mrb[0].mxu0
      %2673 = vmatprep.mubr.bf16.mxu0 0
      %2674 = vmatmul.mubr.bf16.gmra.mrb[0].mxu0 %v714
      %v2675 = vpop.f32.mrb[0].mxu0
      %v2676 = vadd.f32 0.0, %v2675
      %v2677 = vpop.f32.mrb[0].mxu0
      %v2678 = vpop.f32.mrb[0].mxu0
      %v2679 = vadd.f32 0.0, %v2678
      %v2680 = vpop.f32.mrb[0].mxu0
      %2681 = vmatprep.mubr.bf16.mxu0 0
      %2682 = vmatmul.mubr.bf16.gmra.mrb[0].mxu0 %v717
      %v2683 = vpop.f32.mrb[0].mxu0
      %v2684 = vadd.f32 0.0, %v2683
      %v2685 = vpop.f32.mrb[0].mxu0
      %v2686 = vpop.f32.mrb[0].mxu0
      %v2687 = vadd.f32 0.0, %v2686
      %v2688 = vpop.f32.mrb[0].mxu0
      %2689 = vmatprep.mubr.bf16.mxu0 0
      %2690 = vmatmul.mubr.bf16.gmra.mrb[0].mxu0 %v720
      %v2691 = vpop.f32.mrb[0].mxu0
      %v2692 = vadd.f32 0.0, %v2691
      %v2693 = vpop.f32.mrb[0].mxu0
      %v2694 = vpop.f32.mrb[0].mxu0
      %v2695 = vadd.f32 0.0, %v2694
      %v2696 = vpop.f32.mrb[0].mxu0
      %2697 = vmatprep.mubr.bf16.mxu0 0
      %2698 = vmatmul.mubr.bf16.gmra.mrb[0].mxu0 %v723
      %v2699 = vpop.f32.mrb[0].mxu0
      %v2700 = vadd.f32 0.0, %v2699
      %v2701 = vpop.f32.mrb[0].mxu0
      %v2702 = vpop.f32.mrb[0].mxu0
      %v2703 = vadd.f32 0.0, %v2702
      %v2704 = vpop.f32.mrb[0].mxu0
      %2705 = vmatprep.mubr.bf16.mxu0 0
      %2706 = vmatmul.mubr.bf16.gmra.mrb[0].mxu0 %v726
      %v2707 = vpop.f32.mrb[0].mxu0
      %v2708 = vadd.f32 0.0, %v2707
      %v2709 = vpop.f32.mrb[0].mxu0
      %v2710 = vpop.f32.mrb[0].mxu0
      %v2711 = vadd.f32 0.0, %v2710
      %v2712 = vpop.f32.mrb[0].mxu0
      %2713 = vmatprep.mubr.bf16.mxu0 0
      %2714 = vmatmul.mubr.bf16.gmra.mrb[0].mxu0 %v729
      %v2715 = vpop.f32.mrb[0].mxu0
      %v2716 = vadd.f32 0.0, %v2715
      %v2717 = vpop.f32.mrb[0].mxu0
      %v2718 = vpop.f32.mrb[0].mxu0
      %v2719 = vadd.f32 0.0, %v2718
      %v2720 = vpop.f32.mrb[0].mxu0
      %2721 = vmatprep.mubr.bf16.mxu0 0
      %2722 = vmatmul.mubr.bf16.gmra.mrb[0].mxu0 %v1893
      %v2723 = vpop.f32.mrb[0].mxu0
      %v2724 = vadd.f32 0.0, %v2723
      %v2725 = vpop.f32.mrb[0].mxu0
      %v2726 = vpop.f32.mrb[0].mxu0
      %v2727 = vadd.f32 0.0, %v2726
      %v2728 = vpop.f32.mrb[0].mxu0
      %2729 = vmatprep.mubr.bf16.mxu0 0
      %2730 = vmatmul.mubr.bf16.gmra.mrb[0].mxu0 %v2575
      %v2731 = vpop.f32.mrb[0].mxu0
      %v2732 = vadd.f32 0.0, %v2731
      %v2733 = vpop.f32.mrb[0].mxu0
      %v2734 = vpop.f32.mrb[0].mxu0
      %v2735 = vadd.f32 0.0, %v2734
      %v2736 = vpop.f32.mrb[0].mxu0
      %2737 = vdwg.mxu0
      %v2738 = vadd.f32 %v2498, %v2612
      %v2739 = vadd.f32 %v2499, %v2615
      %v2740 = vadd.f32 %v2500, %v2620
      %v2741 = vadd.f32 %v2501, %v2623
      %v2742 = vadd.f32 %v2502, %v2628
      %v2743 = vadd.f32 %v2503, %v2631
      %v2744 = vadd.f32 %v2504, %v2636
      %v2745 = vadd.f32 %v2505, %v2639
      %v2746 = vadd.f32 %v2506, %v2644
      %v2747 = vadd.f32 %v2507, %v2647
      %v2748 = vadd.f32 %v2508, %v2652
      %v2749 = vadd.f32 %v2509, %v2655
      %v2750 = vadd.f32 %v2510, %v2660
      %v2751 = vadd.f32 %v2511, %v2663
      %v2752 = vadd.f32 %v2512, %v2668
      %v2753 = vadd.f32 %v2513, %v2671
      %v2754 = vadd.f32 %v2514, %v2676
      %v2755 = vadd.f32 %v2515, %v2679
      %v2756 = vadd.f32 %v2516, %v2684
      %v2757 = vadd.f32 %v2517, %v2687
      %v2758 = vadd.f32 %v2518, %v2692
      %v2759 = vadd.f32 %v2519, %v2695
      %v2760 = vadd.f32 %v2520, %v2700
      %v2761 = vadd.f32 %v2521, %v2703
      %v2762 = vadd.f32 %v2522, %v2708
      %v2763 = vadd.f32 %v2523, %v2711
      %v2764 = vadd.f32 %v2524, %v2716
      %v2765 = vadd.f32 %v2525, %v2719
      %v2766 = vadd.f32 %v2526, %v2724
      %v2767 = vadd.f32 %v2527, %v2727
      %v2768 = vadd.f32 %v2528, %v2732
      %v2769 = vadd.f32 %v2529, %v2735
      %v2771 = vrot.slane %v223, 5
      %v2772 = vrot.slane %v2771, 4
      %v2773 = vrot.slane %v224, 5
      %v2774 = vsel %vm1211, %v2772, %v2773
      %v2775 = vrot.slane %v2773, 4
      %v2776 = vrot.slane %v225, 5
      %v2777 = vsel %vm1211, %v2775, %v2776
      %s2778 = scalar_lea.vmem %s1, 128
      %v2779 = vld [vmem:[%s2778] sm:$0xf]
      %v2780 = vld [vmem:[%s2778 + $0x4] sm:$0xf]
      %v2781 = vld [vmem:[%s2778 + $0x8] sm:$0xf]
      %v2782 = vld [vmem:[%s2778 + $0xc] sm:$0xf]
      %v2783 = vunpack.c.l.b16 %v2774
      %v2784 = vunpack.c.l.b16 %v2777
      %v2785 = vpack.c.b16 %v2784, %v2783
      %v2790 = vunpack.c.l.b16 %v2779
      %v2791 = vunpack.c.l.b16 %v2780
      %v2792 = vunpack.c.l.b16 %v2781
      %v2793 = vunpack.c.l.b16 %v2782
      %v2794 = vpack.c.b16 %v2791, %v2790
      %v2795 = vpack.c.b16 %v2793, %v2792
      %v2799 = vsel %vm682, %v2785, 0
      %2801 = vmatprep.subr.bf16.mxu0 0
      %2802 = vmatpush1.bf16.msra.mxu0 %v2794
      %2803 = vmatprep.subr.bf16.mxu0 0
      %2804 = vmatpush1.bf16.msra.mxu0 %v2795
      %2805 = vmatprep.subr.bf16.mxu0 0
      %2806 = vmatpush1.bf16.msra.mxu0 0
      %2807 = vmatprep.subr.bf16.mxu0 0
      %2808 = vmatpush1.bf16.msra.mxu0 0
      %2809 = vmatprep.subr.bf16.mxu0 0
      %2810 = vmatpush1.bf16.msra.mxu0 0
      %2811 = vmatprep.subr.bf16.mxu0 0
      %2812 = vmatpush1.bf16.msra.mxu0 0
      %2813 = vmatprep.subr.bf16.mxu0 0
      %2814 = vmatpush1.bf16.msra.mxu0 0
      %2815 = vmatprep.subr.bf16.mxu0 0
      %2816 = vmatpush1.bf16.msra.mxu0 0
      %2817 = vmatprep.subr.bf16.mxu0 0
      %2818 = vmatpush1.bf16.msra.mxu0 0
      %2819 = vmatprep.subr.bf16.mxu0 0
      %2820 = vmatpush1.bf16.msra.mxu0 0
      %2821 = vmatprep.subr.bf16.mxu0 0
      %2822 = vmatpush1.bf16.msra.mxu0 0
      %2823 = vmatprep.subr.bf16.mxu0 0
      %2824 = vmatpush1.bf16.msra.mxu0 0
      %2825 = vmatprep.subr.bf16.mxu0 0
      %2826 = vmatpush1.bf16.msra.mxu0 0
      %2827 = vmatprep.subr.bf16.mxu0 0
      %2828 = vmatpush1.bf16.msra.mxu0 0
      %2829 = vmatprep.subr.bf16.mxu0 0
      %2830 = vmatpush1.bf16.msra.mxu0 0
      %2831 = vmatprep.subr.bf16.mxu0 0
      %2832 = vmatpush1.bf16.msra.mxu0 0
      %2833 = vmatprep.mubr.bf16.mxu0 0
      %2834 = vmatmul.mubr.bf16.gmra.mrb[0].mxu0 %v1396
      %v2835 = vpop.f32.mrb[0].mxu0
      %v2836 = vadd.f32 0.0, %v2835
      %v2837 = vpop.f32.mrb[0].mxu0
      %v2838 = vpop.f32.mrb[0].mxu0
      %v2839 = vadd.f32 0.0, %v2838
      %v2840 = vpop.f32.mrb[0].mxu0
      %2841 = vmatprep.mubr.bf16.mxu0 0
      %2842 = vmatmul.mubr.bf16.gmra.mrb[0].mxu0 %v1399
      %v2843 = vpop.f32.mrb[0].mxu0
      %v2844 = vadd.f32 0.0, %v2843
      %v2845 = vpop.f32.mrb[0].mxu0
      %v2846 = vpop.f32.mrb[0].mxu0
      %v2847 = vadd.f32 0.0, %v2846
      %v2848 = vpop.f32.mrb[0].mxu0
      %2849 = vmatprep.mubr.bf16.mxu0 0
      %2850 = vmatmul.mubr.bf16.gmra.mrb[0].mxu0 %v1402
      %v2851 = vpop.f32.mrb[0].mxu0
      %v2852 = vadd.f32 0.0, %v2851
      %v2853 = vpop.f32.mrb[0].mxu0
      %v2854 = vpop.f32.mrb[0].mxu0
      %v2855 = vadd.f32 0.0, %v2854
      %v2856 = vpop.f32.mrb[0].mxu0
      %2857 = vmatprep.mubr.bf16.mxu0 0
      %2858 = vmatmul.mubr.bf16.gmra.mrb[0].mxu0 %v1405
      %v2859 = vpop.f32.mrb[0].mxu0
      %v2860 = vadd.f32 0.0, %v2859
      %v2861 = vpop.f32.mrb[0].mxu0
      %v2862 = vpop.f32.mrb[0].mxu0
      %v2863 = vadd.f32 0.0, %v2862
      %v2864 = vpop.f32.mrb[0].mxu0
      %2865 = vmatprep.mubr.bf16.mxu0 0
      %2866 = vmatmul.mubr.bf16.gmra.mrb[0].mxu0 %v1408
      %v2867 = vpop.f32.mrb[0].mxu0
      %v2868 = vadd.f32 0.0, %v2867
      %v2869 = vpop.f32.mrb[0].mxu0
      %v2870 = vpop.f32.mrb[0].mxu0
      %v2871 = vadd.f32 0.0, %v2870
      %v2872 = vpop.f32.mrb[0].mxu0
      %2873 = vmatprep.mubr.bf16.mxu0 0
      %2874 = vmatmul.mubr.bf16.gmra.mrb[0].mxu0 %v1411
      %v2875 = vpop.f32.mrb[0].mxu0
      %v2876 = vadd.f32 0.0, %v2875
      %v2877 = vpop.f32.mrb[0].mxu0
      %v2878 = vpop.f32.mrb[0].mxu0
      %v2879 = vadd.f32 0.0, %v2878
      %v2880 = vpop.f32.mrb[0].mxu0
      %2881 = vmatprep.mubr.bf16.mxu0 0
      %2882 = vmatmul.mubr.bf16.gmra.mrb[0].mxu0 %v1414
      %v2883 = vpop.f32.mrb[0].mxu0
      %v2884 = vadd.f32 0.0, %v2883
      %v2885 = vpop.f32.mrb[0].mxu0
      %v2886 = vpop.f32.mrb[0].mxu0
      %v2887 = vadd.f32 0.0, %v2886
      %v2888 = vpop.f32.mrb[0].mxu0
      %2889 = vmatprep.mubr.bf16.mxu0 0
      %2890 = vmatmul.mubr.bf16.gmra.mrb[0].mxu0 %v1417
      %v2891 = vpop.f32.mrb[0].mxu0
      %v2892 = vadd.f32 0.0, %v2891
      %v2893 = vpop.f32.mrb[0].mxu0
      %v2894 = vpop.f32.mrb[0].mxu0
      %v2895 = vadd.f32 0.0, %v2894
      %v2896 = vpop.f32.mrb[0].mxu0
      %2897 = vmatprep.mubr.bf16.mxu0 0
      %2898 = vmatmul.mubr.bf16.gmra.mrb[0].mxu0 %v1420
      %v2899 = vpop.f32.mrb[0].mxu0
      %v2900 = vadd.f32 0.0, %v2899
      %v2901 = vpop.f32.mrb[0].mxu0
      %v2902 = vpop.f32.mrb[0].mxu0
      %v2903 = vadd.f32 0.0, %v2902
      %v2904 = vpop.f32.mrb[0].mxu0
      %2905 = vmatprep.mubr.bf16.mxu0 0
      %2906 = vmatmul.mubr.bf16.gmra.mrb[0].mxu0 %v1423
      %v2907 = vpop.f32.mrb[0].mxu0
      %v2908 = vadd.f32 0.0, %v2907
      %v2909 = vpop.f32.mrb[0].mxu0
      %v2910 = vpop.f32.mrb[0].mxu0
      %v2911 = vadd.f32 0.0, %v2910
      %v2912 = vpop.f32.mrb[0].mxu0
      %2913 = vmatprep.mubr.bf16.mxu0 0
      %2914 = vmatmul.mubr.bf16.gmra.mrb[0].mxu0 %v1426
      %v2915 = vpop.f32.mrb[0].mxu0
      %v2916 = vadd.f32 0.0, %v2915
      %v2917 = vpop.f32.mrb[0].mxu0
      %v2918 = vpop.f32.mrb[0].mxu0
      %v2919 = vadd.f32 0.0, %v2918
      %v2920 = vpop.f32.mrb[0].mxu0
      %2921 = vmatprep.mubr.bf16.mxu0 0
      %2922 = vmatmul.mubr.bf16.gmra.mrb[0].mxu0 %v1429
      %v2923 = vpop.f32.mrb[0].mxu0
      %v2924 = vadd.f32 0.0, %v2923
      %v2925 = vpop.f32.mrb[0].mxu0
      %v2926 = vpop.f32.mrb[0].mxu0
      %v2927 = vadd.f32 0.0, %v2926
      %v2928 = vpop.f32.mrb[0].mxu0
      %2929 = vmatprep.mubr.bf16.mxu0 0
      %2930 = vmatmul.mubr.bf16.gmra.mrb[0].mxu0 %v1432
      %v2931 = vpop.f32.mrb[0].mxu0
      %v2932 = vadd.f32 0.0, %v2931
      %v2933 = vpop.f32.mrb[0].mxu0
      %v2934 = vpop.f32.mrb[0].mxu0
      %v2935 = vadd.f32 0.0, %v2934
      %v2936 = vpop.f32.mrb[0].mxu0
      %2937 = vmatprep.mubr.bf16.mxu0 0
      %2938 = vmatmul.mubr.bf16.gmra.mrb[0].mxu0 %v1435
      %v2939 = vpop.f32.mrb[0].mxu0
      %v2940 = vadd.f32 0.0, %v2939
      %v2941 = vpop.f32.mrb[0].mxu0
      %v2942 = vpop.f32.mrb[0].mxu0
      %v2943 = vadd.f32 0.0, %v2942
      %v2944 = vpop.f32.mrb[0].mxu0
      %2945 = vmatprep.mubr.bf16.mxu0 0
      %2946 = vmatmul.mubr.bf16.gmra.mrb[0].mxu0 %v2117
      %v2947 = vpop.f32.mrb[0].mxu0
      %v2948 = vadd.f32 0.0, %v2947
      %v2949 = vpop.f32.mrb[0].mxu0
      %v2950 = vpop.f32.mrb[0].mxu0
      %v2951 = vadd.f32 0.0, %v2950
      %v2952 = vpop.f32.mrb[0].mxu0
      %2953 = vmatprep.mubr.bf16.mxu0 0
      %2954 = vmatmul.mubr.bf16.gmra.mrb[0].mxu0 %v2799
      %v2955 = vpop.f32.mrb[0].mxu0
      %v2956 = vadd.f32 0.0, %v2955
      %v2957 = vpop.f32.mrb[0].mxu0
      %v2958 = vpop.f32.mrb[0].mxu0
      %v2959 = vadd.f32 0.0, %v2958
      %v2960 = vpop.f32.mrb[0].mxu0
      %2961 = vdwg.mxu0
      %v2962 = vadd.f32 %v2738, %v2836
      %v2963 = vadd.f32 %v2739, %v2839
      %v2964 = vadd.f32 %v2740, %v2844
      %v2965 = vadd.f32 %v2741, %v2847
      %v2966 = vadd.f32 %v2742, %v2852
      %v2967 = vadd.f32 %v2743, %v2855
      %v2968 = vadd.f32 %v2744, %v2860
      %v2969 = vadd.f32 %v2745, %v2863
      %v2970 = vadd.f32 %v2746, %v2868
      %v2971 = vadd.f32 %v2747, %v2871
      %v2972 = vadd.f32 %v2748, %v2876
      %v2973 = vadd.f32 %v2749, %v2879
      %v2974 = vadd.f32 %v2750, %v2884
      %v2975 = vadd.f32 %v2751, %v2887
      %v2976 = vadd.f32 %v2752, %v2892
      %v2977 = vadd.f32 %v2753, %v2895
      %v2978 = vadd.f32 %v2754, %v2900
      %v2979 = vadd.f32 %v2755, %v2903
      %v2980 = vadd.f32 %v2756, %v2908
      %v2981 = vadd.f32 %v2757, %v2911
      %v2982 = vadd.f32 %v2758, %v2916
      %v2983 = vadd.f32 %v2759, %v2919
      %v2984 = vadd.f32 %v2760, %v2924
      %v2985 = vadd.f32 %v2761, %v2927
      %v2986 = vadd.f32 %v2762, %v2932
      %v2987 = vadd.f32 %v2763, %v2935
      %v2988 = vadd.f32 %v2764, %v2940
      %v2989 = vadd.f32 %v2765, %v2943
      %v2990 = vadd.f32 %v2766, %v2948
      %v2991 = vadd.f32 %v2767, %v2951
      %v2992 = vadd.f32 %v2768, %v2956
      %v2993 = vadd.f32 %v2769, %v2959
      %v2994 = vld [vmem:[%s2] sm:$0x1]
      %v2996 = vlaneseq
      %v2997 = vshrl.u32 %v2996, 7
      %v2998 = vsub.s32 0, %v2997
      %v2999 = vrot.slane %v2994, %v2998
      %v3001 = vadd.f32 %v2962, %v2999
      %v3002 = vadd.f32 %v2963, %v2999
      %v3003 = vadd.f32 %v2964, %v2999
      %v3004 = vadd.f32 %v2965, %v2999
      %v3005 = vadd.f32 %v2966, %v2999
      %v3006 = vadd.f32 %v2967, %v2999
      %v3007 = vadd.f32 %v2968, %v2999
      %v3008 = vadd.f32 %v2969, %v2999
      %v3009 = vadd.f32 %v2970, %v2999
      %v3010 = vadd.f32 %v2971, %v2999
      %v3011 = vadd.f32 %v2972, %v2999
      %v3012 = vadd.f32 %v2973, %v2999
      %v3013 = vadd.f32 %v2974, %v2999
      %v3014 = vadd.f32 %v2975, %v2999
      %v3015 = vadd.f32 %v2976, %v2999
      %v3016 = vadd.f32 %v2977, %v2999
      %v3017 = vadd.f32 %v2978, %v2999
      %v3018 = vadd.f32 %v2979, %v2999
      %v3019 = vadd.f32 %v2980, %v2999
      %v3020 = vadd.f32 %v2981, %v2999
      %v3021 = vadd.f32 %v2982, %v2999
      %v3022 = vadd.f32 %v2983, %v2999
      %v3023 = vadd.f32 %v2984, %v2999
      %v3024 = vadd.f32 %v2985, %v2999
      %v3025 = vadd.f32 %v2986, %v2999
      %v3026 = vadd.f32 %v2987, %v2999
      %v3027 = vadd.f32 %v2988, %v2999
      %v3028 = vadd.f32 %v2989, %v2999
      %v3029 = vadd.f32 %v2990, %v2999
      %v3030 = vadd.f32 %v2991, %v2999
      %v3031 = vadd.f32 %v2992, %v2999
      %v3032 = vadd.f32 %v2993, %v2999
      %v3033 = vmax.f32 %v3001, 0.0
      %v3034 = vmax.f32 %v3002, 0.0
      %v3035 = vmax.f32 %v3003, 0.0
      %v3036 = vmax.f32 %v3004, 0.0
      %v3037 = vmax.f32 %v3005, 0.0
      %v3038 = vmax.f32 %v3006, 0.0
      %v3039 = vmax.f32 %v3007, 0.0
      %v3040 = vmax.f32 %v3008, 0.0
      %v3041 = vmax.f32 %v3009, 0.0
      %v3042 = vmax.f32 %v3010, 0.0
      %v3043 = vmax.f32 %v3011, 0.0
      %v3044 = vmax.f32 %v3012, 0.0
      %v3045 = vmax.f32 %v3013, 0.0
      %v3046 = vmax.f32 %v3014, 0.0
      %v3047 = vmax.f32 %v3015, 0.0
      %v3048 = vmax.f32 %v3016, 0.0
      %v3049 = vmax.f32 %v3017, 0.0
      %v3050 = vmax.f32 %v3018, 0.0
      %v3051 = vmax.f32 %v3019, 0.0
      %v3052 = vmax.f32 %v3020, 0.0
      %v3053 = vmax.f32 %v3021, 0.0
      %v3054 = vmax.f32 %v3022, 0.0
      %v3055 = vmax.f32 %v3023, 0.0
      %v3056 = vmax.f32 %v3024, 0.0
      %v3057 = vmax.f32 %v3025, 0.0
      %v3058 = vmax.f32 %v3026, 0.0
      %v3059 = vmax.f32 %v3027, 0.0
      %v3060 = vmax.f32 %v3028, 0.0
      %v3061 = vmax.f32 %v3029, 0.0
      %v3062 = vmax.f32 %v3030, 0.0
      %v3063 = vmax.f32 %v3031, 0.0
      %v3064 = vmax.f32 %v3032, 0.0
      %3065 = vst [vmem:[%s170] sm:$0xff] %v3033
      %3066 = vst [vmem:[%s170 + $0x8] sm:$0xff] %v3034
      %3067 = vst [vmem:[%s170 + $0x10] sm:$0xff] %v3035
      %3068 = vst [vmem:[%s170 + $0x18] sm:$0xff] %v3036
      %3069 = vst [vmem:[%s170 + $0x20] sm:$0xff] %v3037
      %3070 = vst [vmem:[%s170 + $0x28] sm:$0xff] %v3038
      %3071 = vst [vmem:[%s170 + $0x30] sm:$0xff] %v3039
      %3072 = vst [vmem:[%s170 + $0x38] sm:$0xff] %v3040
      %3073 = vst [vmem:[%s170 + $0x40] sm:$0xff] %v3041
      %3074 = vst [vmem:[%s170 + $0x48] sm:$0xff] %v3042
      %3075 = vst [vmem:[%s170 + $0x50] sm:$0xff] %v3043
      %3076 = vst [vmem:[%s170 + $0x58] sm:$0xff] %v3044
      %3077 = vst [vmem:[%s170 + $0x60] sm:$0xff] %v3045
      %3078 = vst [vmem:[%s170 + $0x68] sm:$0xff] %v3046
      %3079 = vst [vmem:[%s170 + $0x70] sm:$0xff] %v3047
      %3080 = vst [vmem:[%s170 + $0x78] sm:$0xff] %v3048
      %3081 = vst [vmem:[%s170 + $0x80] sm:$0xff] %v3049
      %3082 = vst [vmem:[%s170 + $0x88] sm:$0xff] %v3050
      %3083 = vst [vmem:[%s170 + $0x90] sm:$0xff] %v3051
      %3084 = vst [vmem:[%s170 + $0x98] sm:$0xff] %v3052
      %3085 = vst [vmem:[%s170 + $0xa0] sm:$0xff] %v3053
      %3086 = vst [vmem:[%s170 + $0xa8] sm:$0xff] %v3054
      %3087 = vst [vmem:[%s170 + $0xb0] sm:$0xff] %v3055
      %3088 = vst [vmem:[%s170 + $0xb8] sm:$0xff] %v3056
      %3089 = vst [vmem:[%s170 + $0xc0] sm:$0xff] %v3057
      %3090 = vst [vmem:[%s170 + $0xc8] sm:$0xff] %v3058
      %3091 = vst [vmem:[%s170 + $0xd0] sm:$0xff] %v3059
      %3092 = vst [vmem:[%s170 + $0xd8] sm:$0xff] %v3060
      %3093 = vst [vmem:[%s170 + $0xe0] sm:$0xff] %v3061
      %3094 = vst [vmem:[%s170 + $0xe8] sm:$0xff] %v3062
      %3095 = vst [vmem:[%s170 + $0xf0] sm:$0xff] %v3063
      %3096 = vst [vmem:[%s170 + $0xf8] sm:$0xff] %v3064
      %p3097 = scmp.lt.s32.totalorder %s14, 1
      %s3098 = scalar_select %p3097, %s14, 1
      %s3099 = smul.addr %s3098, 32
      %s3100 = smul.addr %s3099, 8
      %s3101 = scalar_lea.vmem %s3, %s3100
      // Predicated region
      $region33: #{ocr_forward.14} parent=31 // pred_check
        %p3102 = pneg %p100
      $region34: #{ocr_forward.14} parent=31 // pred_check_branch
        %3104 = sbr.rel (%p3102) target = $region36
      $region35: #{ocr_forward.14} parent=31 // pred_region
        _
      $region36: #{ocr_forward.14} parent=31 // pred_fallthru
        _
    $region32: #{ocr_forward.14} parent=5 // pred_fallthru
      _
    %p3105 = scmp.le.s32.totalorder 2, %s9
    // Predicated region
    $region37: #{ocr_forward.14} parent=5 // pred_check
      %p3106 = pneg %p3105
    $region38: #{ocr_forward.14} parent=5 // pred_check_branch
      %3108 = sbr.rel (%p3106) target = $region40
    $region39: #{ocr_forward.14} parent=5 // pred_region
      %s3109 = ssub.s32 %s9, 2
      // Predicated region
      $region41: #{ocr_forward.14} parent=39 // pred_check
        %p3110 = pneg %p106
      $region42: #{ocr_forward.14} parent=39 // pred_check_branch
        %3112 = sbr.rel (%p3110) target = $region44
      $region43: #{ocr_forward.14} parent=39 // pred_region
        %p3113 = scmp.lt.s32.totalorder %s15, 1
        %s3114 = scalar_select %p3113, %s15, 1
        %s3115 = smul.addr %s3114, 32
        %s3116 = smul.addr %s3115, 8
        %s3117 = scalar_lea.vmem %s3, %s3116
      $region44: #{ocr_forward.14} parent=39 // pred_fallthru
        _
    $region40: #{ocr_forward.14} parent=5 // pred_fallthru
      _
  $region6: #{ocr_forward.14} parent=0 // loop_footer
    %s13 = sadd.s32 1, %s9
  $region7: #{ocr_forward.14} parent=0 // loop_footer_branch
    %8 = sbr.rel target = $region3
  $region8: #{ocr_forward.14} parent=0 // loop_exit
    _

// kernel: ocr_forward.19
$region0: #{ocr_forward.19}
  #allocation0 [shape = 'u32[]', space=smem, size = 0x4, offset = 0x4, fixed_abs, tag = 'smem constant byte address 0x4 - core index']
  #allocation1 [shape = 'u32[144,128]{1,0:T(1,128)}', space=vmem, size = 0x12000, scoped, tag = 'internal scratch']
  %s0 = inlined_call_operand.vmem [shape: bf16[2,256,128], index: 0, kind: input, shape index: {}]
  %s1 = inlined_call_operand.vmem [shape: bf16[2,128,19], index: 1, kind: input, shape index: {}]
  %s2 = inlined_call_operand.vmem [shape: bf16[2,19,128], index: 2, kind: input, shape index: {}]
  %s3 = inlined_call_operand.vmem [shape: f32[2,256,128], index: 3, kind: output, shape index: {}]
  %s4 = sld [smem:[#allocation0]]
  $region45: #{ocr_forward.19} parent=0
    _
  %s6 = ssub.s32 1, %s4
  %s7 = scalar_select 0, %s6, %s4
  loop: start=0, step=1, limit=4
  $region2: #{ocr_forward.19} parent=0 // loop_pre_header
    _
  $region3: #{ocr_forward.19} parent=0 // loop_header
    %s9 = sphi 0, %s13
    %p10 = scmp.ge.s32.totalorder %s9, 4
    %s16 = sphi 0, %s28
    %s17 = sphi 0, %s24
    %s18 = sphi 0, %s16
    %s19 = sphi 0, %s17
    %s20 = sphi 0, %s18
    %s21 = sphi 0, %s19
    %s33 = sphi 0, %s35
    %s36 = sphi 0, %s33
    %s37 = sphi 0, %s36
    %s53 = sphi 0, %s37
    %s59 = sphi 0, %s61
    %s62 = sphi 0, %s59
    %s63 = sphi 0, %s62
    %s79 = sphi 0, %s63
    %s85 = sphi 0, %s87
    %s88 = sphi 0, %s85
    %s89 = sphi 0, %s88
    %s105 = sphi 0, %s89
    %s113 = sphi 0, %s115
    %s116 = sphi 0, %s113
    %s117 = sphi 0, %s116
    %s133 = sphi 0, %s117
  $region4: #{ocr_forward.19} parent=0 // loop_header_branch
    %12 = sbr.rel (%p10) target = $region8
  $region5: #{ocr_forward.19} parent=0 // loop_body
    %s14 = ssub.s32 %s9, 1
    %s15 = ssub.s32 %s9, 2
    %s22 = sadd.s32 1, %s17
    %p23 = scmp.ge.s32.totalorder %s22, 1
    %s24 = scalar_select %p23, 0, %s22
    %s25 = sadd.s32 1, %s16
    %s26 = scalar_select %p23, %s25, %s16
    %p27 = scmp.ge.s32.totalorder %s26, 2
    %s28 = scalar_select %p27, 0, %s26
    %s29 = ssub.s32 %s16, %s28
    %s30 = ssub.s32 %s17, %s24
    %s31 = sor.u32 %s29, %s30
    %p32 = scmp.eq.s32.totalorder %s31, 0
    %s34 = sadd.s32 %s33, 1
    %s35 = scalar_select %p32, %s33, %s34
    %p38 = pneg %p32
    %p39 = scmp.eq.s32.totalorder %s9, 1
    %p40 = por %p38, %p39
    %p41 = scmp.ne.s32.totalorder %s33, %s36
    %p42 = scmp.eq.s32.totalorder %s9, 0
    %p43 = por %p41, %p42
    %p44 = scmp.ne.s32.totalorder %s33, %s36
    %p45 = scmp.eq.s32.totalorder %s14, 1
    %p46 = por %p44, %p45
    %p47 = scmp.ne.s32.totalorder %s36, %s37
    %p48 = scmp.eq.s32.totalorder %s14, 0
    %p49 = por %p47, %p48
    %p50 = scmp.ne.s32.totalorder %s36, %s37
    %p51 = scmp.eq.s32.totalorder %s15, 1
    %p52 = por %p50, %p51
    %p54 = scmp.ne.s32.totalorder %s37, %s53
    %p55 = scmp.eq.s32.totalorder %s15, 0
    %p56 = por %p54, %p55
    %s57 = ssub.s32 %s16, %s28
    %p58 = scmp.eq.s32.totalorder %s57, 0
    %s60 = sadd.s32 %s59, 1
    %s61 = scalar_select %p58, %s59, %s60
    %p64 = pneg %p58
    %p65 = scmp.eq.s32.totalorder %s9, 1
    %p66 = por %p64, %p65
    %p67 = scmp.ne.s32.totalorder %s59, %s62
    %p68 = scmp.eq.s32.totalorder %s9, 0
    %p69 = por %p67, %p68
    %p70 = scmp.ne.s32.totalorder %s59, %s62
    %p71 = scmp.eq.s32.totalorder %s14, 1
    %p72 = por %p70, %p71
    %p73 = scmp.ne.s32.totalorder %s62, %s63
    %p74 = scmp.eq.s32.totalorder %s14, 0
    %p75 = por %p73, %p74
    %p76 = scmp.ne.s32.totalorder %s62, %s63
    %p77 = scmp.eq.s32.totalorder %s15, 1
    %p78 = por %p76, %p77
    %p80 = scmp.ne.s32.totalorder %s63, %s79
    %p81 = scmp.eq.s32.totalorder %s15, 0
    %p82 = por %p80, %p81
    %s83 = ssub.s32 %s16, %s28
    %p84 = scmp.eq.s32.totalorder %s83, 0
    %s86 = sadd.s32 %s85, 1
    %s87 = scalar_select %p84, %s85, %s86
    %p90 = pneg %p84
    %p91 = scmp.eq.s32.totalorder %s9, 1
    %p92 = por %p90, %p91
    %p93 = scmp.ne.s32.totalorder %s85, %s88
    %p94 = scmp.eq.s32.totalorder %s9, 0
    %p95 = por %p93, %p94
    %p96 = scmp.ne.s32.totalorder %s85, %s88
    %p97 = scmp.eq.s32.totalorder %s14, 1
    %p98 = por %p96, %p97
    %p99 = scmp.ne.s32.totalorder %s88, %s89
    %p100 = scmp.eq.s32.totalorder %s14, 0
    %p101 = por %p99, %p100
    %p102 = scmp.ne.s32.totalorder %s88, %s89
    %p103 = scmp.eq.s32.totalorder %s15, 1
    %p104 = por %p102, %p103
    %p106 = scmp.ne.s32.totalorder %s89, %s105
    %p107 = scmp.eq.s32.totalorder %s15, 0
    %p108 = por %p106, %p107
    %s109 = ssub.s32 %s16, %s28
    %s110 = ssub.s32 %s17, %s24
    %s111 = sor.u32 %s109, %s110
    %p112 = scmp.eq.s32.totalorder %s111, 0
    %s114 = sadd.s32 %s113, 1
    %s115 = scalar_select %p112, %s113, %s114
    %p118 = pneg %p112
    %p119 = scmp.eq.s32.totalorder %s9, 1
    %p120 = por %p118, %p119
    %p121 = scmp.ne.s32.totalorder %s113, %s116
    %p122 = scmp.eq.s32.totalorder %s9, 0
    %p123 = por %p121, %p122
    %p124 = scmp.ne.s32.totalorder %s113, %s116
    %p125 = scmp.eq.s32.totalorder %s14, 1
    %p126 = por %p124, %p125
    %p127 = scmp.ne.s32.totalorder %s116, %s117
    %p128 = scmp.eq.s32.totalorder %s14, 0
    %p129 = por %p127, %p128
    %p130 = scmp.ne.s32.totalorder %s116, %s117
    %p131 = scmp.eq.s32.totalorder %s15, 1
    %p132 = por %p130, %p131
    %p134 = scmp.ne.s32.totalorder %s117, %s133
    %p135 = scmp.eq.s32.totalorder %s15, 0
    %p136 = por %p134, %p135
    %p137 = scmp.le.s32.totalorder 1, %s9
    %p138 = scmp.lt.s32.totalorder %s9, 3
    %p139 = pnand %p137, %p138
    %p140 = pneg %p139
    // Predicated region
    $region9: #{ocr_forward.19} parent=5 // pred_check
      _
    $region10: #{ocr_forward.19} parent=5 // pred_check_branch
      %142 = sbr.rel (%p139) target = $region12
    $region11: #{ocr_forward.19} parent=5 // pred_region
      %s143 = ssub.s32 %s9, 1
    $region12: #{ocr_forward.19} parent=5 // pred_fallthru
      _
    %p144 = scmp.lt.s32.totalorder %s9, 2
    // Predicated region
    $region13: #{ocr_forward.19} parent=5 // pred_check
      %p145 = pneg %p144
    $region14: #{ocr_forward.19} parent=5 // pred_check_branch
      %147 = sbr.rel (%p145) target = $region16
    $region15: #{ocr_forward.19} parent=5 // pred_region
      // Predicated region
      $region17: #{ocr_forward.19} parent=15 // pred_check
        %p148 = pneg %p43
      $region18: #{ocr_forward.19} parent=15 // pred_check_branch
        %150 = sbr.rel (%p148) target = $region20
      $region19: #{ocr_forward.19} parent=15 // pred_region
        %s151 = smul.u32 32, %s17
        %p152 = scmp.lt.s32.totalorder %s16, 1
        %s153 = scalar_select %p152, %s16, 1
        %p154 = scmp.lt.s32.totalorder %s151, 31
        %s155 = scalar_select %p154, %s151, 31
        %s156 = smul.addr %s153, 32
        %s157 = sadd.s32 %s155, %s156
        %s158 = smul.addr %s157, 4
        %s159 = scalar_lea.vmem %s0, %s158
        %s160 = smul.u32 32, %s17
      $region20: #{ocr_forward.19} parent=15 // pred_fallthru
        _
      // Predicated region
      $region21: #{ocr_forward.19} parent=15 // pred_check
        %p161 = pneg %p69
      $region22: #{ocr_forward.19} parent=15 // pred_check_branch
        %163 = sbr.rel (%p161) target = $region24
      $region23: #{ocr_forward.19} parent=15 // pred_region
        %p164 = scmp.lt.s32.totalorder %s16, 1
        %s165 = scalar_select %p164, %s16, 1
        %s166 = smul.addr %s165, 16
        %s167 = smul.addr %s166, 4
        %s168 = scalar_lea.vmem %s1, %s167
      $region24: #{ocr_forward.19} parent=15 // pred_fallthru
        _
      // Predicated region
      $region25: #{ocr_forward.19} parent=15 // pred_check
        %p169 = pneg %p95
      $region26: #{ocr_forward.19} parent=15 // pred_check_branch
        %171 = sbr.rel (%p169) target = $region28
      $region27: #{ocr_forward.19} parent=15 // pred_region
        %p172 = scmp.lt.s32.totalorder %s16, 1
        %s173 = scalar_select %p172, %s16, 1
        %s174 = smul.addr %s173, 3
        %s175 = smul.addr %s174, 4
        %s176 = scalar_lea.vmem %s2, %s175
      $region28: #{ocr_forward.19} parent=15 // pred_fallthru
        _
    $region16: #{ocr_forward.19} parent=5 // pred_fallthru
      _
    %p177 = scmp.le.s32.totalorder 1, %s9
    %p178 = scmp.lt.s32.totalorder %s9, 3
    %p179 = pnand %p177, %p178
    %p180 = pneg %p179
    // Predicated region
    $region29: #{ocr_forward.19} parent=5 // pred_check
      _
    $region30: #{ocr_forward.19} parent=5 // pred_check_branch
      %182 = sbr.rel (%p179) target = $region32
    $region31: #{ocr_forward.19} parent=5 // pred_region
      %s183 = ssub.s32 %s9, 1
      %s184 = smul.u32 32, %s19
      %p185 = scmp.lt.s32.totalorder %s18, 1
      %s186 = scalar_select %p185, %s18, 1
      %p187 = scmp.lt.s32.totalorder %s184, 31
      %s188 = scalar_select %p187, %s184, 31
      %s189 = smul.addr %s186, 32
      %s190 = sadd.s32 %s188, %s189
      %s191 = smul.addr %s190, 4
      %s192 = scalar_lea.vmem %s0, %s191
      %p193 = pneg %p49
      %p194 = pneg %p46
      %p195 = scmp.lt.s32.totalorder %s18, 1
      %s196 = scalar_select %p195, %s18, 1
      %s197 = smul.addr %s196, 16
      %s198 = smul.addr %s197, 4
      %s199 = scalar_lea.vmem %s1, %s198
      %p200 = pneg %p75
      %p201 = pneg %p72
      %p202 = scmp.lt.s32.totalorder %s18, 1
      %s203 = scalar_select %p202, %s18, 1
      %s204 = smul.addr %s203, 3
      %s205 = smul.addr %s204, 4
      %s206 = scalar_lea.vmem %s2, %s205
      %p207 = pneg %p101
      %p208 = pneg %p98
      %p209 = pneg %p129
      %p210 = pneg %p126
      %s211 = smul.u32 32, %s19
      %p212 = scmp.lt.s32.totalorder %s18, 1
      %s213 = scalar_select %p212, %s18, 1
      %p214 = scmp.lt.s32.totalorder %s211, 31
      %s215 = scalar_select %p214, %s211, 31
      %s216 = smul.addr %s213, 32
      %s217 = sadd.s32 %s215, %s216
      %s218 = smul.addr %s217, 8
      %s219 = scalar_lea.vmem %s3, %s218
      %s220 = smul.u32 32, %s19
      %p221 = scmp.lt.s32.totalorder %s18, 1
      %s222 = scalar_select %p221, %s18, 1
      %p223 = scmp.lt.s32.totalorder %s220, 31
      %s224 = scalar_select %p223, %s220, 31
      %s225 = smul.addr %s222, 32
      %s226 = sadd.s32 %s224, %s225
      %s227 = smul.addr %s226, 4
      %s228 = scalar_lea.vmem %s0, %s227
      %s229 = smul.u32 32, %s19
      %p230 = scmp.lt.s32.totalorder %s18, 1
      %s231 = scalar_select %p230, %s18, 1
      %s232 = smul.addr %s231, 16
      %s233 = smul.addr %s232, 4
      %s234 = scalar_lea.vmem %s1, %s233
      %p235 = scmp.lt.s32.totalorder %s18, 1
      %s236 = scalar_select %p235, %s18, 1
      %s237 = smul.addr %s236, 3
      %s238 = smul.addr %s237, 4
      %s239 = scalar_lea.vmem %s2, %s238
      %s240 = smul.u32 32, %s19
      %p241 = scmp.lt.s32.totalorder %s18, 1
      %s242 = scalar_select %p241, %s18, 1
      %p243 = scmp.lt.s32.totalorder %s240, 31
      %s244 = scalar_select %p243, %s240, 31
      %s245 = smul.addr %s242, 32
      %s246 = sadd.s32 %s244, %s245
      %s247 = smul.addr %s246, 8
      %s248 = scalar_lea.vmem %s3, %s247
      %s249 = smul.u32 32, %s19
      %v251 = vld [vmem:[%s228] sm:$0xf]
      %v252 = vld [vmem:[%s228 + $0x4] sm:$0xf]
      %v253 = vld [vmem:[%s228 + $0x8] sm:$0xf]
      %v254 = vld [vmem:[%s228 + $0xc] sm:$0xf]
      %v255 = vld [vmem:[%s228 + $0x10] sm:$0xf]
      %v256 = vld [vmem:[%s228 + $0x14] sm:$0xf]
      %v257 = vld [vmem:[%s228 + $0x18] sm:$0xf]
      %v258 = vld [vmem:[%s228 + $0x1c] sm:$0xf]
      %v259 = vld [vmem:[%s228 + $0x20] sm:$0xf]
      %v260 = vld [vmem:[%s228 + $0x24] sm:$0xf]
      %v261 = vld [vmem:[%s228 + $0x28] sm:$0xf]
      %v262 = vld [vmem:[%s228 + $0x2c] sm:$0xf]
      %v263 = vld [vmem:[%s228 + $0x30] sm:$0xf]
      %v264 = vld [vmem:[%s228 + $0x34] sm:$0xf]
      %v265 = vld [vmem:[%s228 + $0x38] sm:$0xf]
      %v266 = vld [vmem:[%s228 + $0x3c] sm:$0xf]
      %v267 = vld [vmem:[%s228 + $0x40] sm:$0xf]
      %v268 = vld [vmem:[%s228 + $0x44] sm:$0xf]
      %v269 = vld [vmem:[%s228 + $0x48] sm:$0xf]
      %v270 = vld [vmem:[%s228 + $0x4c] sm:$0xf]
      %v271 = vld [vmem:[%s228 + $0x50] sm:$0xf]
      %v272 = vld [vmem:[%s228 + $0x54] sm:$0xf]
      %v273 = vld [vmem:[%s228 + $0x58] sm:$0xf]
      %v274 = vld [vmem:[%s228 + $0x5c] sm:$0xf]
      %v275 = vld [vmem:[%s228 + $0x60] sm:$0xf]
      %v276 = vld [vmem:[%s228 + $0x64] sm:$0xf]
      %v277 = vld [vmem:[%s228 + $0x68] sm:$0xf]
      %v278 = vld [vmem:[%s228 + $0x6c] sm:$0xf]
      %v279 = vld [vmem:[%s228 + $0x70] sm:$0xf]
      %v280 = vld [vmem:[%s228 + $0x74] sm:$0xf]
      %v281 = vld [vmem:[%s228 + $0x78] sm:$0xf]
      %v282 = vld [vmem:[%s228 + $0x7c] sm:$0xf]
      %v283 = vld [vmem:[%s234] sm:$0xf]
      %v284 = vld [vmem:[%s234 + $0x4] sm:$0xf]
      %v285 = vld [vmem:[%s234 + $0x8] sm:$0xf]
      %v286 = vld [vmem:[%s234 + $0xc] sm:$0xf]
      %v287 = vld [vmem:[%s234 + $0x10] sm:$0xf]
      %v288 = vld [vmem:[%s234 + $0x14] sm:$0xf]
      %v289 = vld [vmem:[%s234 + $0x18] sm:$0xf]
      %v290 = vld [vmem:[%s234 + $0x1c] sm:$0xf]
      %v291 = vld [vmem:[%s234 + $0x20] sm:$0xf]
      %v292 = vld [vmem:[%s234 + $0x24] sm:$0xf]
      %v293 = vld [vmem:[%s234 + $0x28] sm:$0xf]
      %v294 = vld [vmem:[%s234 + $0x2c] sm:$0xf]
      %v295 = vld [vmem:[%s234 + $0x30] sm:$0xf]
      %v296 = vld [vmem:[%s234 + $0x34] sm:$0xf]
      %v297 = vld [vmem:[%s234 + $0x38] sm:$0xf]
      %v298 = vld [vmem:[%s234 + $0x3c] sm:$0xf]
      %v331 = vunpack.c.l.b16 %v251
      %v332 = vunpack.c.l.b16 %v252
      %v333 = vunpack.c.l.b16 %v253
      %v334 = vunpack.c.l.b16 %v254
      %v335 = vunpack.c.l.b16 %v255
      %v336 = vunpack.c.l.b16 %v256
      %v337 = vunpack.c.l.b16 %v257
      %v338 = vunpack.c.l.b16 %v258
      %v339 = vunpack.c.l.b16 %v259
      %v340 = vunpack.c.l.b16 %v260
      %v341 = vunpack.c.l.b16 %v261
      %v342 = vunpack.c.l.b16 %v262
      %v343 = vunpack.c.l.b16 %v263
      %v344 = vunpack.c.l.b16 %v264
      %v345 = vunpack.c.l.b16 %v265
      %v346 = vunpack.c.l.b16 %v266
      %v347 = vunpack.c.l.b16 %v267
      %v348 = vunpack.c.l.b16 %v268
      %v349 = vunpack.c.l.b16 %v269
      %v350 = vunpack.c.l.b16 %v270
      %v351 = vunpack.c.l.b16 %v271
      %v352 = vunpack.c.l.b16 %v272
      %v353 = vunpack.c.l.b16 %v273
      %v354 = vunpack.c.l.b16 %v274
      %v355 = vunpack.c.l.b16 %v275
      %v356 = vunpack.c.l.b16 %v276
      %v357 = vunpack.c.l.b16 %v277
      %v358 = vunpack.c.l.b16 %v278
      %v359 = vunpack.c.l.b16 %v279
      %v360 = vunpack.c.l.b16 %v280
      %v361 = vunpack.c.l.b16 %v281
      %v362 = vunpack.c.l.b16 %v282
      %v363 = vpack.c.b16 %v332, %v331
      %v364 = vpack.c.b16 %v334, %v333
      %v365 = vpack.c.b16 %v336, %v335
      %v366 = vpack.c.b16 %v338, %v337
      %v367 = vpack.c.b16 %v340, %v339
      %v368 = vpack.c.b16 %v342, %v341
      %v369 = vpack.c.b16 %v344, %v343
      %v370 = vpack.c.b16 %v346, %v345
      %v371 = vpack.c.b16 %v348, %v347
      %v372 = vpack.c.b16 %v350, %v349
      %v373 = vpack.c.b16 %v352, %v351
      %v374 = vpack.c.b16 %v354, %v353
      %v375 = vpack.c.b16 %v356, %v355
      %v376 = vpack.c.b16 %v358, %v357
      %v377 = vpack.c.b16 %v360, %v359
      %v378 = vpack.c.b16 %v362, %v361
      %v411 = vunpack.c.l.b16 %v283
      %v412 = vunpack.c.l.b16 %v284
      %v413 = vunpack.c.l.b16 %v285
      %v414 = vunpack.c.l.b16 %v286
      %v415 = vunpack.c.l.b16 %v287
      %v416 = vunpack.c.l.b16 %v288
      %v417 = vunpack.c.l.b16 %v289
      %v418 = vunpack.c.l.b16 %v290
      %v419 = vunpack.c.l.b16 %v291
      %v420 = vunpack.c.l.b16 %v292
      %v421 = vunpack.c.l.b16 %v293
      %v422 = vunpack.c.l.b16 %v294
      %v423 = vunpack.c.l.b16 %v295
      %v424 = vunpack.c.l.b16 %v296
      %v425 = vunpack.c.l.b16 %v297
      %v426 = vunpack.c.l.b16 %v298
      %v427 = vpack.c.b16 %v412, %v411
      %v428 = vpack.c.b16 %v414, %v413
      %v429 = vpack.c.b16 %v416, %v415
      %v430 = vpack.c.b16 %v418, %v417
      %v431 = vpack.c.b16 %v420, %v419
      %v432 = vpack.c.b16 %v422, %v421
      %v433 = vpack.c.b16 %v424, %v423
      %v434 = vpack.c.b16 %v426, %v425
      %443 = vmatprep.subr.bf16.mxu0 0
      %444 = vmatpush1.bf16.msra.mxu0 %v427
      %445 = vmatprep.subr.bf16.mxu0 0
      %446 = vmatpush1.bf16.msra.mxu0 %v428
      %447 = vmatprep.subr.bf16.mxu0 0
      %448 = vmatpush1.bf16.msra.mxu0 %v429
      %449 = vmatprep.subr.bf16.mxu0 0
      %450 = vmatpush1.bf16.msra.mxu0 %v430
      %451 = vmatprep.subr.bf16.mxu0 0
      %452 = vmatpush1.bf16.msra.mxu0 %v431
      %453 = vmatprep.subr.bf16.mxu0 0
      %454 = vmatpush1.bf16.msra.mxu0 %v432
      %455 = vmatprep.subr.bf16.mxu0 0
      %456 = vmatpush1.bf16.msra.mxu0 %v433
      %457 = vmatprep.subr.bf16.mxu0 0
      %458 = vmatpush1.bf16.msra.mxu0 %v434
      %459 = vmatprep.subr.bf16.mxu0 0
      %460 = vmatpush1.bf16.msra.mxu0 0
      %461 = vmatprep.subr.bf16.mxu0 0
      %462 = vmatpush1.bf16.msra.mxu0 0
      %463 = vmatprep.subr.bf16.mxu0 0
      %464 = vmatpush1.bf16.msra.mxu0 0
      %465 = vmatprep.subr.bf16.mxu0 0
      %466 = vmatpush1.bf16.msra.mxu0 0
      %467 = vmatprep.subr.bf16.mxu0 0
      %468 = vmatpush1.bf16.msra.mxu0 0
      %469 = vmatprep.subr.bf16.mxu0 0
      %470 = vmatpush1.bf16.msra.mxu0 0
      %471 = vmatprep.subr.bf16.mxu0 0
      %472 = vmatpush1.bf16.msra.mxu0 0
      %473 = vmatprep.subr.bf16.mxu0 0
      %474 = vmatpush1.bf16.msra.mxu0 0
      %475 = vmatprep.mubr.bf16.mxu0 0
      %476 = vmatmul.mubr.bf16.gmra.mrb[0].mxu0 %v363
      %v477 = vpop.f32.mrb[0].mxu0
      %v478 = vadd.f32 0.0, %v477
      %v479 = vpop.f32.mrb[0].mxu0
      %v480 = vpop.f32.mrb[0].mxu0
      %v481 = vadd.f32 0.0, %v480
      %v482 = vpop.f32.mrb[0].mxu0
      %483 = vmatprep.mubr.bf16.mxu0 0
      %484 = vmatmul.mubr.bf16.gmra.mrb[0].mxu0 %v364
      %v485 = vpop.f32.mrb[0].mxu0
      %v486 = vadd.f32 0.0, %v485
      %v487 = vpop.f32.mrb[0].mxu0
      %v488 = vpop.f32.mrb[0].mxu0
      %v489 = vadd.f32 0.0, %v488
      %v490 = vpop.f32.mrb[0].mxu0
      %491 = vmatprep.mubr.bf16.mxu0 0
      %492 = vmatmul.mubr.bf16.gmra.mrb[0].mxu0 %v365
      %v493 = vpop.f32.mrb[0].mxu0
      %v494 = vadd.f32 0.0, %v493
      %v495 = vpop.f32.mrb[0].mxu0
      %v496 = vpop.f32.mrb[0].mxu0
      %v497 = vadd.f32 0.0, %v496
      %v498 = vpop.f32.mrb[0].mxu0
      %499 = vmatprep.mubr.bf16.mxu0 0
      %500 = vmatmul.mubr.bf16.gmra.mrb[0].mxu0 %v366
      %v501 = vpop.f32.mrb[0].mxu0
      %v502 = vadd.f32 0.0, %v501
      %v503 = vpop.f32.mrb[0].mxu0
      %v504 = vpop.f32.mrb[0].mxu0
      %v505 = vadd.f32 0.0, %v504
      %v506 = vpop.f32.mrb[0].mxu0
      %507 = vmatprep.mubr.bf16.mxu0 0
      %508 = vmatmul.mubr.bf16.gmra.mrb[0].mxu0 %v367
      %v509 = vpop.f32.mrb[0].mxu0
      %v510 = vadd.f32 0.0, %v509
      %v511 = vpop.f32.mrb[0].mxu0
      %v512 = vpop.f32.mrb[0].mxu0
      %v513 = vadd.f32 0.0, %v512
      %v514 = vpop.f32.mrb[0].mxu0
      %515 = vmatprep.mubr.bf16.mxu0 0
      %516 = vmatmul.mubr.bf16.gmra.mrb[0].mxu0 %v368
      %v517 = vpop.f32.mrb[0].mxu0
      %v518 = vadd.f32 0.0, %v517
      %v519 = vpop.f32.mrb[0].mxu0
      %v520 = vpop.f32.mrb[0].mxu0
      %v521 = vadd.f32 0.0, %v520
      %v522 = vpop.f32.mrb[0].mxu0
      %523 = vmatprep.mubr.bf16.mxu0 0
      %524 = vmatmul.mubr.bf16.gmra.mrb[0].mxu0 %v369
      %v525 = vpop.f32.mrb[0].mxu0
      %v526 = vadd.f32 0.0, %v525
      %v527 = vpop.f32.mrb[0].mxu0
      %v528 = vpop.f32.mrb[0].mxu0
      %v529 = vadd.f32 0.0, %v528
      %v530 = vpop.f32.mrb[0].mxu0
      %531 = vmatprep.mubr.bf16.mxu0 0
      %532 = vmatmul.mubr.bf16.gmra.mrb[0].mxu0 %v370
      %v533 = vpop.f32.mrb[0].mxu0
      %v534 = vadd.f32 0.0, %v533
      %v535 = vpop.f32.mrb[0].mxu0
      %v536 = vpop.f32.mrb[0].mxu0
      %v537 = vadd.f32 0.0, %v536
      %v538 = vpop.f32.mrb[0].mxu0
      %539 = vmatprep.mubr.bf16.mxu0 0
      %540 = vmatmul.mubr.bf16.gmra.mrb[0].mxu0 %v371
      %v541 = vpop.f32.mrb[0].mxu0
      %v542 = vadd.f32 0.0, %v541
      %v543 = vpop.f32.mrb[0].mxu0
      %v544 = vpop.f32.mrb[0].mxu0
      %v545 = vadd.f32 0.0, %v544
      %v546 = vpop.f32.mrb[0].mxu0
      %547 = vmatprep.mubr.bf16.mxu0 0
      %548 = vmatmul.mubr.bf16.gmra.mrb[0].mxu0 %v372
      %v549 = vpop.f32.mrb[0].mxu0
      %v550 = vadd.f32 0.0, %v549
      %v551 = vpop.f32.mrb[0].mxu0
      %v552 = vpop.f32.mrb[0].mxu0
      %v553 = vadd.f32 0.0, %v552
      %v554 = vpop.f32.mrb[0].mxu0
      %555 = vmatprep.mubr.bf16.mxu0 0
      %556 = vmatmul.mubr.bf16.gmra.mrb[0].mxu0 %v373
      %v557 = vpop.f32.mrb[0].mxu0
      %v558 = vadd.f32 0.0, %v557
      %v559 = vpop.f32.mrb[0].mxu0
      %v560 = vpop.f32.mrb[0].mxu0
      %v561 = vadd.f32 0.0, %v560
      %v562 = vpop.f32.mrb[0].mxu0
      %563 = vmatprep.mubr.bf16.mxu0 0
      %564 = vmatmul.mubr.bf16.gmra.mrb[0].mxu0 %v374
      %v565 = vpop.f32.mrb[0].mxu0
      %v566 = vadd.f32 0.0, %v565
      %v567 = vpop.f32.mrb[0].mxu0
      %v568 = vpop.f32.mrb[0].mxu0
      %v569 = vadd.f32 0.0, %v568
      %v570 = vpop.f32.mrb[0].mxu0
      %571 = vmatprep.mubr.bf16.mxu0 0
      %572 = vmatmul.mubr.bf16.gmra.mrb[0].mxu0 %v375
      %v573 = vpop.f32.mrb[0].mxu0
      %v574 = vadd.f32 0.0, %v573
      %v575 = vpop.f32.mrb[0].mxu0
      %v576 = vpop.f32.mrb[0].mxu0
      %v577 = vadd.f32 0.0, %v576
      %v578 = vpop.f32.mrb[0].mxu0
      %579 = vmatprep.mubr.bf16.mxu0 0
      %580 = vmatmul.mubr.bf16.gmra.mrb[0].mxu0 %v376
      %v581 = vpop.f32.mrb[0].mxu0
      %v582 = vadd.f32 0.0, %v581
      %v583 = vpop.f32.mrb[0].mxu0
      %v584 = vpop.f32.mrb[0].mxu0
      %v585 = vadd.f32 0.0, %v584
      %v586 = vpop.f32.mrb[0].mxu0
      %587 = vmatprep.mubr.bf16.mxu0 0
      %588 = vmatmul.mubr.bf16.gmra.mrb[0].mxu0 %v377
      %v589 = vpop.f32.mrb[0].mxu0
      %v590 = vadd.f32 0.0, %v589
      %v591 = vpop.f32.mrb[0].mxu0
      %v592 = vpop.f32.mrb[0].mxu0
      %v593 = vadd.f32 0.0, %v592
      %v594 = vpop.f32.mrb[0].mxu0
      %595 = vmatprep.mubr.bf16.mxu0 0
      %596 = vmatmul.mubr.bf16.gmra.mrb[0].mxu0 %v378
      %v597 = vpop.f32.mrb[0].mxu0
      %v598 = vadd.f32 0.0, %v597
      %v599 = vpop.f32.mrb[0].mxu0
      %v600 = vpop.f32.mrb[0].mxu0
      %v601 = vadd.f32 0.0, %v600
      %v602 = vpop.f32.mrb[0].mxu0
      %603 = vdwg.mxu0
      %vm604 = vcmask 154624
      %v605 = vsel %vm604, %v478, -inf
      %606 = vmax.xlane.f32.xlu0 %v605
      %v607 = vpop.xlane.xlu0 %606
      %v608 = vsel %vm604, %v481, -inf
      %609 = vmax.xlane.f32.xlu0 %v608
      %v610 = vpop.xlane.xlu0 %609
      %v611 = vsel %vm604, %v486, -inf
      %612 = vmax.xlane.f32.xlu0 %v611
      %v613 = vpop.xlane.xlu0 %612
      %v614 = vsel %vm604, %v489, -inf
      %615 = vmax.xlane.f32.xlu0 %v614
      %v616 = vpop.xlane.xlu0 %615
      %v617 = vsel %vm604, %v494, -inf
      %618 = vmax.xlane.f32.xlu0 %v617
      %v619 = vpop.xlane.xlu0 %618
      %v620 = vsel %vm604, %v497, -inf
      %621 = vmax.xlane.f32.xlu0 %v620
      %v622 = vpop.xlane.xlu0 %621
      %v623 = vsel %vm604, %v502, -inf
      %624 = vmax.xlane.f32.xlu0 %v623
      %v625 = vpop.xlane.xlu0 %624
      %v626 = vsel %vm604, %v505, -inf
      %627 = vmax.xlane.f32.xlu0 %v626
      %v628 = vpop.xlane.xlu0 %627
      %v629 = vsel %vm604, %v510, -inf
      %630 = vmax.xlane.f32.xlu0 %v629
      %v631 = vpop.xlane.xlu0 %630
      %v632 = vsel %vm604, %v513, -inf
      %633 = vmax.xlane.f32.xlu0 %v632
      %v634 = vpop.xlane.xlu0 %633
      %v635 = vsel %vm604, %v518, -inf
      %636 = vmax.xlane.f32.xlu0 %v635
      %v637 = vpop.xlane.xlu0 %636
      %v638 = vsel %vm604, %v521, -inf
      %639 = vmax.xlane.f32.xlu0 %v638
      %v640 = vpop.xlane.xlu0 %639
      %v641 = vsel %vm604, %v526, -inf
      %642 = vmax.xlane.f32.xlu0 %v641
      %v643 = vpop.xlane.xlu0 %642
      %v644 = vsel %vm604, %v529, -inf
      %645 = vmax.xlane.f32.xlu0 %v644
      %v646 = vpop.xlane.xlu0 %645
      %v647 = vsel %vm604, %v534, -inf
      %648 = vmax.xlane.f32.xlu0 %v647
      %v649 = vpop.xlane.xlu0 %648
      %v650 = vsel %vm604, %v537, -inf
      %651 = vmax.xlane.f32.xlu0 %v650
      %v652 = vpop.xlane.xlu0 %651
      %v653 = vsel %vm604, %v542, -inf
      %654 = vmax.xlane.f32.xlu0 %v653
      %v655 = vpop.xlane.xlu0 %654
      %v656 = vsel %vm604, %v545, -inf
      %657 = vmax.xlane.f32.xlu0 %v656
      %v658 = vpop.xlane.xlu0 %657
      %v659 = vsel %vm604, %v550, -inf
      %660 = vmax.xlane.f32.xlu0 %v659
      %v661 = vpop.xlane.xlu0 %660
      %v662 = vsel %vm604, %v553, -inf
      %663 = vmax.xlane.f32.xlu0 %v662
      %v664 = vpop.xlane.xlu0 %663
      %v665 = vsel %vm604, %v558, -inf
      %666 = vmax.xlane.f32.xlu0 %v665
      %v667 = vpop.xlane.xlu0 %666
      %v668 = vsel %vm604, %v561, -inf
      %669 = vmax.xlane.f32.xlu0 %v668
      %v670 = vpop.xlane.xlu0 %669
      %v671 = vsel %vm604, %v566, -inf
      %672 = vmax.xlane.f32.xlu0 %v671
      %v673 = vpop.xlane.xlu0 %672
      %v674 = vsel %vm604, %v569, -inf
      %675 = vmax.xlane.f32.xlu0 %v674
      %v676 = vpop.xlane.xlu0 %675
      %v677 = vsel %vm604, %v574, -inf
      %678 = vmax.xlane.f32.xlu0 %v677
      %v679 = vpop.xlane.xlu0 %678
      %v680 = vsel %vm604, %v577, -inf
      %681 = vmax.xlane.f32.xlu0 %v680
      %v682 = vpop.xlane.xlu0 %681
      %v683 = vsel %vm604, %v582, -inf
      %684 = vmax.xlane.f32.xlu0 %v683
      %v685 = vpop.xlane.xlu0 %684
      %v686 = vsel %vm604, %v585, -inf
      %687 = vmax.xlane.f32.xlu0 %v686
      %v688 = vpop.xlane.xlu0 %687
      %v689 = vsel %vm604, %v590, -inf
      %690 = vmax.xlane.f32.xlu0 %v689
      %v691 = vpop.xlane.xlu0 %690
      %v692 = vsel %vm604, %v593, -inf
      %693 = vmax.xlane.f32.xlu0 %v692
      %v694 = vpop.xlane.xlu0 %693
      %v695 = vsel %vm604, %v598, -inf
      %696 = vmax.xlane.f32.xlu0 %v695
      %v697 = vpop.xlane.xlu0 %696
      %v698 = vsel %vm604, %v601, -inf
      %699 = vmax.xlane.f32.xlu0 %v698
      %v700 = vpop.xlane.xlu0 %699
      %v701 = vsub.f32 %v478, %v607
      %v702 = vsub.f32 %v481, %v610
      %v703 = vsub.f32 %v486, %v613
      %v704 = vsub.f32 %v489, %v616
      %v705 = vsub.f32 %v494, %v619
      %v706 = vsub.f32 %v497, %v622
      %v707 = vsub.f32 %v502, %v625
      %v708 = vsub.f32 %v505, %v628
      %v709 = vsub.f32 %v510, %v631
      %v710 = vsub.f32 %v513, %v634
      %v711 = vsub.f32 %v518, %v637
      %v712 = vsub.f32 %v521, %v640
      %v713 = vsub.f32 %v526, %v643
      %v714 = vsub.f32 %v529, %v646
      %v715 = vsub.f32 %v534, %v649
      %v716 = vsub.f32 %v537, %v652
      %v717 = vsub.f32 %v542, %v655
      %v718 = vsub.f32 %v545, %v658
      %v719 = vsub.f32 %v550, %v661
      %v720 = vsub.f32 %v553, %v664
      %v721 = vsub.f32 %v558, %v667
      %v722 = vsub.f32 %v561, %v670
      %v723 = vsub.f32 %v566, %v673
      %v724 = vsub.f32 %v569, %v676
      %v725 = vsub.f32 %v574, %v679
      %v726 = vsub.f32 %v577, %v682
      %v727 = vsub.f32 %v582, %v685
      %v728 = vsub.f32 %v585, %v688
      %v729 = vsub.f32 %v590, %v691
      %v730 = vsub.f32 %v593, %v694
      %v731 = vsub.f32 %v598, %v697
      %v732 = vsub.f32 %v601, %v700
      %v733 = vmul.f32 %v701, 1.442695
      %v734 = vpow.pop %v733
      %v735 = vmul.f32 %v702, 1.442695
      %v736 = vpow.pop %v735
      %v737 = vmul.f32 %v703, 1.442695
      %v738 = vpow.pop %v737
      %v739 = vmul.f32 %v704, 1.442695
      %v740 = vpow.pop %v739
      %v741 = vmul.f32 %v705, 1.442695
      %v742 = vpow.pop %v741
      %v743 = vmul.f32 %v706, 1.442695
      %v744 = vpow.pop %v743
      %v745 = vmul.f32 %v707, 1.442695
      %v746 = vpow.pop %v745
      %v747 = vmul.f32 %v708, 1.442695
      %v748 = vpow.pop %v747
      %v749 = vmul.f32 %v709, 1.442695
      %v750 = vpow.pop %v749
      %v751 = vmul.f32 %v710, 1.442695
      %v752 = vpow.pop %v751
      %v753 = vmul.f32 %v711, 1.442695
      %v754 = vpow.pop %v753
      %v755 = vmul.f32 %v712, 1.442695
      %v756 = vpow.pop %v755
      %v757 = vmul.f32 %v713, 1.442695
      %v758 = vpow.pop %v757
      %v759 = vmul.f32 %v714, 1.442695
      %v760 = vpow.pop %v759
      %v761 = vmul.f32 %v715, 1.442695
      %v762 = vpow.pop %v761
      %v763 = vmul.f32 %v716, 1.442695
      %v764 = vpow.pop %v763
      %v765 = vmul.f32 %v717, 1.442695
      %v766 = vpow.pop %v765
      %v767 = vmul.f32 %v718, 1.442695
      %v768 = vpow.pop %v767
      %v769 = vmul.f32 %v719, 1.442695
      %v770 = vpow.pop %v769
      %v771 = vmul.f32 %v720, 1.442695
      %v772 = vpow.pop %v771
      %v773 = vmul.f32 %v721, 1.442695
      %v774 = vpow.pop %v773
      %v775 = vmul.f32 %v722, 1.442695
      %v776 = vpow.pop %v775
      %v777 = vmul.f32 %v723, 1.442695
      %v778 = vpow.pop %v777
      %v779 = vmul.f32 %v724, 1.442695
      %v780 = vpow.pop %v779
      %v781 = vmul.f32 %v725, 1.442695
      %v782 = vpow.pop %v781
      %v783 = vmul.f32 %v726, 1.442695
      %v784 = vpow.pop %v783
      %v785 = vmul.f32 %v727, 1.442695
      %v786 = vpow.pop %v785
      %v787 = vmul.f32 %v728, 1.442695
      %v788 = vpow.pop %v787
      %v789 = vmul.f32 %v729, 1.442695
      %v790 = vpow.pop %v789
      %v791 = vmul.f32 %v730, 1.442695
      %v792 = vpow.pop %v791
      %v793 = vmul.f32 %v731, 1.442695
      %v794 = vpow.pop %v793
      %v795 = vmul.f32 %v732, 1.442695
      %v796 = vpow.pop %v795
      %v797 = vsel %vm604, %v734, 0.0
      %798 = vadd.xlane.f32.xlu0 %v797
      %v799 = vpop.xlane.xlu0 %798
      %v800 = vsel %vm604, %v736, 0.0
      %801 = vadd.xlane.f32.xlu0 %v800
      %v802 = vpop.xlane.xlu0 %801
      %v803 = vsel %vm604, %v738, 0.0
      %804 = vadd.xlane.f32.xlu0 %v803
      %v805 = vpop.xlane.xlu0 %804
      %v806 = vsel %vm604, %v740, 0.0
      %807 = vadd.xlane.f32.xlu0 %v806
      %v808 = vpop.xlane.xlu0 %807
      %v809 = vsel %vm604, %v742, 0.0
      %810 = vadd.xlane.f32.xlu0 %v809
      %v811 = vpop.xlane.xlu0 %810
      %v812 = vsel %vm604, %v744, 0.0
      %813 = vadd.xlane.f32.xlu0 %v812
      %v814 = vpop.xlane.xlu0 %813
      %v815 = vsel %vm604, %v746, 0.0
      %816 = vadd.xlane.f32.xlu0 %v815
      %v817 = vpop.xlane.xlu0 %816
      %v818 = vsel %vm604, %v748, 0.0
      %819 = vadd.xlane.f32.xlu0 %v818
      %v820 = vpop.xlane.xlu0 %819
      %v821 = vsel %vm604, %v750, 0.0
      %822 = vadd.xlane.f32.xlu0 %v821
      %v823 = vpop.xlane.xlu0 %822
      %v824 = vsel %vm604, %v752, 0.0
      %825 = vadd.xlane.f32.xlu0 %v824
      %v826 = vpop.xlane.xlu0 %825
      %v827 = vsel %vm604, %v754, 0.0
      %828 = vadd.xlane.f32.xlu0 %v827
      %v829 = vpop.xlane.xlu0 %828
      %v830 = vsel %vm604, %v756, 0.0
      %831 = vadd.xlane.f32.xlu0 %v830
      %v832 = vpop.xlane.xlu0 %831
      %v833 = vsel %vm604, %v758, 0.0
      %834 = vadd.xlane.f32.xlu0 %v833
      %v835 = vpop.xlane.xlu0 %834
      %v836 = vsel %vm604, %v760, 0.0
      %837 = vadd.xlane.f32.xlu0 %v836
      %v838 = vpop.xlane.xlu0 %837
      %v839 = vsel %vm604, %v762, 0.0
      %840 = vadd.xlane.f32.xlu0 %v839
      %v841 = vpop.xlane.xlu0 %840
      %v842 = vsel %vm604, %v764, 0.0
      %843 = vadd.xlane.f32.xlu0 %v842
      %v844 = vpop.xlane.xlu0 %843
      %v845 = vsel %vm604, %v766, 0.0
      %846 = vadd.xlane.f32.xlu0 %v845
      %v847 = vpop.xlane.xlu0 %846
      %v848 = vsel %vm604, %v768, 0.0
      %849 = vadd.xlane.f32.xlu0 %v848
      %v850 = vpop.xlane.xlu0 %849
      %v851 = vsel %vm604, %v770, 0.0
      %852 = vadd.xlane.f32.xlu0 %v851
      %v853 = vpop.xlane.xlu0 %852
      %v854 = vsel %vm604, %v772, 0.0
      %855 = vadd.xlane.f32.xlu0 %v854
      %v856 = vpop.xlane.xlu0 %855
      %v857 = vsel %vm604, %v774, 0.0
      %858 = vadd.xlane.f32.xlu0 %v857
      %v859 = vpop.xlane.xlu0 %858
      %v860 = vsel %vm604, %v776, 0.0
      %861 = vadd.xlane.f32.xlu0 %v860
      %v862 = vpop.xlane.xlu0 %861
      %v863 = vsel %vm604, %v778, 0.0
      %864 = vadd.xlane.f32.xlu0 %v863
      %v865 = vpop.xlane.xlu0 %864
      %v866 = vsel %vm604, %v780, 0.0
      %867 = vadd.xlane.f32.xlu0 %v866
      %v868 = vpop.xlane.xlu0 %867
      %v869 = vsel %vm604, %v782, 0.0
      %870 = vadd.xlane.f32.xlu0 %v869
      %v871 = vpop.xlane.xlu0 %870
      %v872 = vsel %vm604, %v784, 0.0
      %873 = vadd.xlane.f32.xlu0 %v872
      %v874 = vpop.xlane.xlu0 %873
      %v875 = vsel %vm604, %v786, 0.0
      %876 = vadd.xlane.f32.xlu0 %v875
      %v877 = vpop.xlane.xlu0 %876
      %v878 = vsel %vm604, %v788, 0.0
      %879 = vadd.xlane.f32.xlu0 %v878
      %v880 = vpop.xlane.xlu0 %879
      %v881 = vsel %vm604, %v790, 0.0
      %882 = vadd.xlane.f32.xlu0 %v881
      %v883 = vpop.xlane.xlu0 %882
      %v884 = vsel %vm604, %v792, 0.0
      %885 = vadd.xlane.f32.xlu0 %v884
      %v886 = vpop.xlane.xlu0 %885
      %v887 = vsel %vm604, %v794, 0.0
      %888 = vadd.xlane.f32.xlu0 %v887
      %v889 = vpop.xlane.xlu0 %888
      %v890 = vsel %vm604, %v796, 0.0
      %891 = vadd.xlane.f32.xlu0 %v890
      %v892 = vpop.xlane.xlu0 %891
      %v893 = vrcp.pop %v799
      %v894 = vrcp.pop %v802
      %v895 = vrcp.pop %v805
      %v896 = vrcp.pop %v808
      %v897 = vrcp.pop %v811
      %v898 = vrcp.pop %v814
      %v899 = vrcp.pop %v817
      %v900 = vrcp.pop %v820
      %v901 = vrcp.pop %v823
      %v902 = vrcp.pop %v826
      %v903 = vrcp.pop %v829
      %v904 = vrcp.pop %v832
      %v905 = vrcp.pop %v835
      %v906 = vrcp.pop %v838
      %v907 = vrcp.pop %v841
      %v908 = vrcp.pop %v844
      %v909 = vrcp.pop %v847
      %v910 = vrcp.pop %v850
      %v911 = vrcp.pop %v853
      %v912 = vrcp.pop %v856
      %v913 = vrcp.pop %v859
      %v914 = vrcp.pop %v862
      %v915 = vrcp.pop %v865
      %v916 = vrcp.pop %v868
      %v917 = vrcp.pop %v871
      %v918 = vrcp.pop %v874
      %v919 = vrcp.pop %v877
      %v920 = vrcp.pop %v880
      %v921 = vrcp.pop %v883
      %v922 = vrcp.pop %v886
      %v923 = vrcp.pop %v889
      %v924 = vrcp.pop %v892
      %v925 = vmul.f32 %v734, %v893
      %v926 = vmul.f32 %v736, %v894
      %v927 = vmul.f32 %v738, %v895
      %v928 = vmul.f32 %v740, %v896
      %v929 = vmul.f32 %v742, %v897
      %v930 = vmul.f32 %v744, %v898
      %v931 = vmul.f32 %v746, %v899
      %v932 = vmul.f32 %v748, %v900
      %v933 = vmul.f32 %v750, %v901
      %v934 = vmul.f32 %v752, %v902
      %v935 = vmul.f32 %v754, %v903
      %v936 = vmul.f32 %v756, %v904
      %v937 = vmul.f32 %v758, %v905
      %v938 = vmul.f32 %v760, %v906
      %v939 = vmul.f32 %v762, %v907
      %v940 = vmul.f32 %v764, %v908
      %v941 = vmul.f32 %v766, %v909
      %v942 = vmul.f32 %v768, %v910
      %v943 = vmul.f32 %v770, %v911
      %v944 = vmul.f32 %v772, %v912
      %v945 = vmul.f32 %v774, %v913
      %v946 = vmul.f32 %v776, %v914
      %v947 = vmul.f32 %v778, %v915
      %v948 = vmul.f32 %v780, %v916
      %v949 = vmul.f32 %v782, %v917
      %v950 = vmul.f32 %v784, %v918
      %v951 = vmul.f32 %v786, %v919
      %v952 = vmul.f32 %v788, %v920
      %v953 = vmul.f32 %v790, %v921
      %v954 = vmul.f32 %v792, %v922
      %v955 = vmul.f32 %v794, %v923
      %v956 = vmul.f32 %v796, %v924
      %v957 = vpack.c.bf16 %v926, %v925
      %v958 = vpack.c.bf16 %v928, %v927
      %v959 = vpack.c.bf16 %v930, %v929
      %v960 = vpack.c.bf16 %v932, %v931
      %v961 = vpack.c.bf16 %v934, %v933
      %v962 = vpack.c.bf16 %v936, %v935
      %v963 = vpack.c.bf16 %v938, %v937
      %v964 = vpack.c.bf16 %v940, %v939
      %v965 = vpack.c.bf16 %v942, %v941
      %v966 = vpack.c.bf16 %v944, %v943
      %v967 = vpack.c.bf16 %v946, %v945
      %v968 = vpack.c.bf16 %v948, %v947
      %v969 = vpack.c.bf16 %v950, %v949
      %v970 = vpack.c.bf16 %v952, %v951
      %v971 = vpack.c.bf16 %v954, %v953
      %v972 = vpack.c.bf16 %v956, %v955
      %v973 = vld [vmem:[%s239] sm:$0xf]
      %v974 = vld [vmem:[%s239 + $0x4] sm:$0xf]
      %v975 = vld [vmem:[%s239 + $0x8] sm:$0x3]
      %v979 = vunpack.c.l.b16 %v973
      %v980 = vunpack.c.l.b16 %v974
      %v981 = vunpack.c.l.b16 %v975
      %v982 = vpack.c.b16 %v980, %v979
      %v983 = vpack.c.b16 %v981, %v981
      %v986 = vsel %vm604, %v957, 0
      %v989 = vsel %vm604, %v958, 0
      %v992 = vsel %vm604, %v959, 0
      %v995 = vsel %vm604, %v960, 0
      %v998 = vsel %vm604, %v961, 0
      %v1001 = vsel %vm604, %v962, 0
      %v1004 = vsel %vm604, %v963, 0
      %v1007 = vsel %vm604, %v964, 0
      %v1010 = vsel %vm604, %v965, 0
      %v1013 = vsel %vm604, %v966, 0
      %v1016 = vsel %vm604, %v967, 0
      %v1019 = vsel %vm604, %v968, 0
      %v1022 = vsel %vm604, %v969, 0
      %v1025 = vsel %vm604, %v970, 0
      %v1028 = vsel %vm604, %v971, 0
      %v1031 = vsel %vm604, %v972, 0
      %vm1033 = vcmask 1040384
      %vm1034 = vcmask 1041408
      %v1035 = vsel %vm1033, 4294967295, 65535
      %v1036 = vsel %vm1034, %v1035, 0
      %v1038 = vand.u32 %v983, %v1036
      %1040 = vmatprep.subr.bf16.mxu0 0
      %1041 = vmatpush1.bf16.msra.mxu0 %v982
      %1042 = vmatprep.subr.bf16.mxu0 0
      %1043 = vmatpush1.bf16.msra.mxu0 %v1038
      %1044 = vmatprep.subr.bf16.mxu0 0
      %1045 = vmatpush1.bf16.msra.mxu0 0
      %1046 = vmatprep.subr.bf16.mxu0 0
      %1047 = vmatpush1.bf16.msra.mxu0 0
      %1048 = vmatprep.subr.bf16.mxu0 0
      %1049 = vmatpush1.bf16.msra.mxu0 0
      %1050 = vmatprep.subr.bf16.mxu0 0
      %1051 = vmatpush1.bf16.msra.mxu0 0
      %1052 = vmatprep.subr.bf16.mxu0 0
      %1053 = vmatpush1.bf16.msra.mxu0 0
      %1054 = vmatprep.subr.bf16.mxu0 0
      %1055 = vmatpush1.bf16.msra.mxu0 0
      %1056 = vmatprep.subr.bf16.mxu0 0
      %1057 = vmatpush1.bf16.msra.mxu0 0
      %1058 = vmatprep.subr.bf16.mxu0 0
      %1059 = vmatpush1.bf16.msra.mxu0 0
      %1060 = vmatprep.subr.bf16.mxu0 0
      %1061 = vmatpush1.bf16.msra.mxu0 0
      %1062 = vmatprep.subr.bf16.mxu0 0
      %1063 = vmatpush1.bf16.msra.mxu0 0
      %1064 = vmatprep.subr.bf16.mxu0 0
      %1065 = vmatpush1.bf16.msra.mxu0 0
      %1066 = vmatprep.subr.bf16.mxu0 0
      %1067 = vmatpush1.bf16.msra.mxu0 0
      %1068 = vmatprep.subr.bf16.mxu0 0
      %1069 = vmatpush1.bf16.msra.mxu0 0
      %1070 = vmatprep.subr.bf16.mxu0 0
      %1071 = vmatpush1.bf16.msra.mxu0 0
      %1072 = vmatprep.mubr.bf16.mxu0 0
      %1073 = vmatmul.mubr.bf16.gmra.mrb[0].mxu0 %v986
      %v1074 = vpop.f32.mrb[0].mxu0
      %v1075 = vadd.f32 0.0, %v1074
      %v1076 = vpop.f32.mrb[0].mxu0
      %v1077 = vpop.f32.mrb[0].mxu0
      %v1078 = vadd.f32 0.0, %v1077
      %v1079 = vpop.f32.mrb[0].mxu0
      %1080 = vmatprep.mubr.bf16.mxu0 0
      %1081 = vmatmul.mubr.bf16.gmra.mrb[0].mxu0 %v989
      %v1082 = vpop.f32.mrb[0].mxu0
      %v1083 = vadd.f32 0.0, %v1082
      %v1084 = vpop.f32.mrb[0].mxu0
      %v1085 = vpop.f32.mrb[0].mxu0
      %v1086 = vadd.f32 0.0, %v1085
      %v1087 = vpop.f32.mrb[0].mxu0
      %1088 = vmatprep.mubr.bf16.mxu0 0
      %1089 = vmatmul.mubr.bf16.gmra.mrb[0].mxu0 %v992
      %v1090 = vpop.f32.mrb[0].mxu0
      %v1091 = vadd.f32 0.0, %v1090
      %v1092 = vpop.f32.mrb[0].mxu0
      %v1093 = vpop.f32.mrb[0].mxu0
      %v1094 = vadd.f32 0.0, %v1093
      %v1095 = vpop.f32.mrb[0].mxu0
      %1096 = vmatprep.mubr.bf16.mxu0 0
      %1097 = vmatmul.mubr.bf16.gmra.mrb[0].mxu0 %v995
      %v1098 = vpop.f32.mrb[0].mxu0
      %v1099 = vadd.f32 0.0, %v1098
      %v1100 = vpop.f32.mrb[0].mxu0
      %v1101 = vpop.f32.mrb[0].mxu0
      %v1102 = vadd.f32 0.0, %v1101
      %v1103 = vpop.f32.mrb[0].mxu0
      %1104 = vmatprep.mubr.bf16.mxu0 0
      %1105 = vmatmul.mubr.bf16.gmra.mrb[0].mxu0 %v998
      %v1106 = vpop.f32.mrb[0].mxu0
      %v1107 = vadd.f32 0.0, %v1106
      %v1108 = vpop.f32.mrb[0].mxu0
      %v1109 = vpop.f32.mrb[0].mxu0
      %v1110 = vadd.f32 0.0, %v1109
      %v1111 = vpop.f32.mrb[0].mxu0
      %1112 = vmatprep.mubr.bf16.mxu0 0
      %1113 = vmatmul.mubr.bf16.gmra.mrb[0].mxu0 %v1001
      %v1114 = vpop.f32.mrb[0].mxu0
      %v1115 = vadd.f32 0.0, %v1114
      %v1116 = vpop.f32.mrb[0].mxu0
      %v1117 = vpop.f32.mrb[0].mxu0
      %v1118 = vadd.f32 0.0, %v1117
      %v1119 = vpop.f32.mrb[0].mxu0
      %1120 = vmatprep.mubr.bf16.mxu0 0
      %1121 = vmatmul.mubr.bf16.gmra.mrb[0].mxu0 %v1004
      %v1122 = vpop.f32.mrb[0].mxu0
      %v1123 = vadd.f32 0.0, %v1122
      %v1124 = vpop.f32.mrb[0].mxu0
      %v1125 = vpop.f32.mrb[0].mxu0
      %v1126 = vadd.f32 0.0, %v1125
      %v1127 = vpop.f32.mrb[0].mxu0
      %1128 = vmatprep.mubr.bf16.mxu0 0
      %1129 = vmatmul.mubr.bf16.gmra.mrb[0].mxu0 %v1007
      %v1130 = vpop.f32.mrb[0].mxu0
      %v1131 = vadd.f32 0.0, %v1130
      %v1132 = vpop.f32.mrb[0].mxu0
      %v1133 = vpop.f32.mrb[0].mxu0
      %v1134 = vadd.f32 0.0, %v1133
      %v1135 = vpop.f32.mrb[0].mxu0
      %1136 = vmatprep.mubr.bf16.mxu0 0
      %1137 = vmatmul.mubr.bf16.gmra.mrb[0].mxu0 %v1010
      %v1138 = vpop.f32.mrb[0].mxu0
      %v1139 = vadd.f32 0.0, %v1138
      %v1140 = vpop.f32.mrb[0].mxu0
      %v1141 = vpop.f32.mrb[0].mxu0
      %v1142 = vadd.f32 0.0, %v1141
      %v1143 = vpop.f32.mrb[0].mxu0
      %1144 = vmatprep.mubr.bf16.mxu0 0
      %1145 = vmatmul.mubr.bf16.gmra.mrb[0].mxu0 %v1013
      %v1146 = vpop.f32.mrb[0].mxu0
      %v1147 = vadd.f32 0.0, %v1146
      %v1148 = vpop.f32.mrb[0].mxu0
      %v1149 = vpop.f32.mrb[0].mxu0
      %v1150 = vadd.f32 0.0, %v1149
      %v1151 = vpop.f32.mrb[0].mxu0
      %1152 = vmatprep.mubr.bf16.mxu0 0
      %1153 = vmatmul.mubr.bf16.gmra.mrb[0].mxu0 %v1016
      %v1154 = vpop.f32.mrb[0].mxu0
      %v1155 = vadd.f32 0.0, %v1154
      %v1156 = vpop.f32.mrb[0].mxu0
      %v1157 = vpop.f32.mrb[0].mxu0
      %v1158 = vadd.f32 0.0, %v1157
      %v1159 = vpop.f32.mrb[0].mxu0
      %1160 = vmatprep.mubr.bf16.mxu0 0
      %1161 = vmatmul.mubr.bf16.gmra.mrb[0].mxu0 %v1019
      %v1162 = vpop.f32.mrb[0].mxu0
      %v1163 = vadd.f32 0.0, %v1162
      %v1164 = vpop.f32.mrb[0].mxu0
      %v1165 = vpop.f32.mrb[0].mxu0
      %v1166 = vadd.f32 0.0, %v1165
      %v1167 = vpop.f32.mrb[0].mxu0
      %1168 = vmatprep.mubr.bf16.mxu0 0
      %1169 = vmatmul.mubr.bf16.gmra.mrb[0].mxu0 %v1022
      %v1170 = vpop.f32.mrb[0].mxu0
      %v1171 = vadd.f32 0.0, %v1170
      %v1172 = vpop.f32.mrb[0].mxu0
      %v1173 = vpop.f32.mrb[0].mxu0
      %v1174 = vadd.f32 0.0, %v1173
      %v1175 = vpop.f32.mrb[0].mxu0
      %1176 = vmatprep.mubr.bf16.mxu0 0
      %1177 = vmatmul.mubr.bf16.gmra.mrb[0].mxu0 %v1025
      %v1178 = vpop.f32.mrb[0].mxu0
      %v1179 = vadd.f32 0.0, %v1178
      %v1180 = vpop.f32.mrb[0].mxu0
      %v1181 = vpop.f32.mrb[0].mxu0
      %v1182 = vadd.f32 0.0, %v1181
      %v1183 = vpop.f32.mrb[0].mxu0
      %1184 = vmatprep.mubr.bf16.mxu0 0
      %1185 = vmatmul.mubr.bf16.gmra.mrb[0].mxu0 %v1028
      %v1186 = vpop.f32.mrb[0].mxu0
      %v1187 = vadd.f32 0.0, %v1186
      %v1188 = vpop.f32.mrb[0].mxu0
      %v1189 = vpop.f32.mrb[0].mxu0
      %v1190 = vadd.f32 0.0, %v1189
      %v1191 = vpop.f32.mrb[0].mxu0
      %1192 = vmatprep.mubr.bf16.mxu0 0
      %1193 = vmatmul.mubr.bf16.gmra.mrb[0].mxu0 %v1031
      %v1194 = vpop.f32.mrb[0].mxu0
      %v1195 = vadd.f32 0.0, %v1194
      %v1196 = vpop.f32.mrb[0].mxu0
      %v1197 = vpop.f32.mrb[0].mxu0
      %v1198 = vadd.f32 0.0, %v1197
      %v1199 = vpop.f32.mrb[0].mxu0
      %1200 = vdwg.mxu0
      %1201 = vst [vmem:[%s248] sm:$0xff] %v1075
      %1202 = vst [vmem:[%s248 + $0x8] sm:$0xff] %v1078
      %1203 = vst [vmem:[%s248 + $0x10] sm:$0xff] %v1083
      %1204 = vst [vmem:[%s248 + $0x18] sm:$0xff] %v1086
      %1205 = vst [vmem:[%s248 + $0x20] sm:$0xff] %v1091
      %1206 = vst [vmem:[%s248 + $0x28] sm:$0xff] %v1094
      %1207 = vst [vmem:[%s248 + $0x30] sm:$0xff] %v1099
      %1208 = vst [vmem:[%s248 + $0x38] sm:$0xff] %v1102
      %1209 = vst [vmem:[%s248 + $0x40] sm:$0xff] %v1107
      %1210 = vst [vmem:[%s248 + $0x48] sm:$0xff] %v1110
      %1211 = vst [vmem:[%s248 + $0x50] sm:$0xff] %v1115
      %1212 = vst [vmem:[%s248 + $0x58] sm:$0xff] %v1118
      %1213 = vst [vmem:[%s248 + $0x60] sm:$0xff] %v1123
      %1214 = vst [vmem:[%s248 + $0x68] sm:$0xff] %v1126
      %1215 = vst [vmem:[%s248 + $0x70] sm:$0xff] %v1131
      %1216 = vst [vmem:[%s248 + $0x78] sm:$0xff] %v1134
      %1217 = vst [vmem:[%s248 + $0x80] sm:$0xff] %v1139
      %1218 = vst [vmem:[%s248 + $0x88] sm:$0xff] %v1142
      %1219 = vst [vmem:[%s248 + $0x90] sm:$0xff] %v1147
      %1220 = vst [vmem:[%s248 + $0x98] sm:$0xff] %v1150
      %1221 = vst [vmem:[%s248 + $0xa0] sm:$0xff] %v1155
      %1222 = vst [vmem:[%s248 + $0xa8] sm:$0xff] %v1158
      %1223 = vst [vmem:[%s248 + $0xb0] sm:$0xff] %v1163
      %1224 = vst [vmem:[%s248 + $0xb8] sm:$0xff] %v1166
      %1225 = vst [vmem:[%s248 + $0xc0] sm:$0xff] %v1171
      %1226 = vst [vmem:[%s248 + $0xc8] sm:$0xff] %v1174
      %1227 = vst [vmem:[%s248 + $0xd0] sm:$0xff] %v1179
      %1228 = vst [vmem:[%s248 + $0xd8] sm:$0xff] %v1182
      %1229 = vst [vmem:[%s248 + $0xe0] sm:$0xff] %v1187
      %1230 = vst [vmem:[%s248 + $0xe8] sm:$0xff] %v1190
      %1231 = vst [vmem:[%s248 + $0xf0] sm:$0xff] %v1195
      %1232 = vst [vmem:[%s248 + $0xf8] sm:$0xff] %v1198
      %s1233 = smul.u32 32, %s19
      %p1234 = scmp.lt.s32.totalorder %s18, 1
      %s1235 = scalar_select %p1234, %s18, 1
      %p1236 = scmp.lt.s32.totalorder %s1233, 31
      %s1237 = scalar_select %p1236, %s1233, 31
      %s1238 = smul.addr %s1235, 32
      %s1239 = sadd.s32 %s1237, %s1238
      %s1240 = smul.addr %s1239, 8
      %s1241 = scalar_lea.vmem %s3, %s1240
      // Predicated region
      $region33: #{ocr_forward.19} parent=31 // pred_check
        %p1242 = pneg %p126
      $region34: #{ocr_forward.19} parent=31 // pred_check_branch
        %1244 = sbr.rel (%p1242) target = $region36
      $region35: #{ocr_forward.19} parent=31 // pred_region
        %s1245 = smul.u32 32, %s19
      $region36: #{ocr_forward.19} parent=31 // pred_fallthru
        _
    $region32: #{ocr_forward.19} parent=5 // pred_fallthru
      _
    %p1246 = scmp.le.s32.totalorder 2, %s9
    // Predicated region
    $region37: #{ocr_forward.19} parent=5 // pred_check
      %p1247 = pneg %p1246
    $region38: #{ocr_forward.19} parent=5 // pred_check_branch
      %1249 = sbr.rel (%p1247) target = $region40
    $region39: #{ocr_forward.19} parent=5 // pred_region
      %s1250 = ssub.s32 %s9, 2
      // Predicated region
      $region41: #{ocr_forward.19} parent=39 // pred_check
        %p1251 = pneg %p132
      $region42: #{ocr_forward.19} parent=39 // pred_check_branch
        %1253 = sbr.rel (%p1251) target = $region44
      $region43: #{ocr_forward.19} parent=39 // pred_region
        %s1254 = smul.u32 32, %s21
        %p1255 = scmp.lt.s32.totalorder %s20, 1
        %s1256 = scalar_select %p1255, %s20, 1
        %p1257 = scmp.lt.s32.totalorder %s1254, 31
        %s1258 = scalar_select %p1257, %s1254, 31
        %s1259 = smul.addr %s1256, 32
        %s1260 = sadd.s32 %s1258, %s1259
        %s1261 = smul.addr %s1260, 8
        %s1262 = scalar_lea.vmem %s3, %s1261
      $region44: #{ocr_forward.19} parent=39 // pred_fallthru
        _
    $region40: #{ocr_forward.19} parent=5 // pred_fallthru
      _
  $region6: #{ocr_forward.19} parent=0 // loop_footer
    %s13 = sadd.s32 1, %s9
  $region7: #{ocr_forward.19} parent=0 // loop_footer_branch
    %8 = sbr.rel target = $region3
  $region8: #{ocr_forward.19} parent=0 // loop_exit
    _

// kernel: ocr_forward.21
$region0: #{ocr_forward.21}
  #allocation0 [shape = 'u32[]', space=smem, size = 0x4, offset = 0x4, fixed_abs, tag = 'smem constant byte address 0x4 - core index']
  #allocation1 [shape = 'u32[144,128]{1,0:T(1,128)}', space=vmem, size = 0x12000, scoped, tag = 'internal scratch']
  %s0 = inlined_call_operand.vmem [shape: bf16[512,128], index: 0, kind: input, shape index: {}]
  %s1 = inlined_call_operand.vmem [shape: bf16[128,128], index: 1, kind: input, shape index: {}]
  %s2 = inlined_call_operand.vmem [shape: bf16[512,128], index: 2, kind: input, shape index: {}]
  %s3 = inlined_call_operand.vmem [shape: bf16[128,128], index: 3, kind: input, shape index: {}]
  %s4 = inlined_call_operand.vmem [shape: f32[1,128], index: 4, kind: input, shape index: {}]
  %s5 = inlined_call_operand.vmem [shape: f32[512,128], index: 5, kind: output, shape index: {}]
  %s6 = sld [smem:[#allocation0]]
  $region53: #{ocr_forward.21} parent=0
    _
  %s8 = ssub.s32 1, %s6
  %s9 = scalar_select 0, %s8, %s6
  loop: start=0, step=1, limit=4
  $region2: #{ocr_forward.21} parent=0 // loop_pre_header
    _
  $region3: #{ocr_forward.21} parent=0 // loop_header
    %s11 = sphi 0, %s15
    %p12 = scmp.ge.s32.totalorder %s11, 4
    %s18 = sphi 0, %s30
    %s19 = sphi 0, %s26
    %s20 = sphi 0, %s18
    %s21 = sphi 0, %s19
    %s22 = sphi 0, %s20
    %s23 = sphi 0, %s21
    %s33 = sphi 0, %s35
    %s36 = sphi 0, %s33
    %s37 = sphi 0, %s36
    %s53 = sphi 0, %s37
    %s59 = sphi 0, %s61
    %s62 = sphi 0, %s59
    %s63 = sphi 0, %s62
    %s79 = sphi 0, %s63
    %s85 = sphi 0, %s87
    %s88 = sphi 0, %s85
    %s89 = sphi 0, %s88
    %s105 = sphi 0, %s89
    %s111 = sphi 0, %s113
    %s114 = sphi 0, %s111
    %s115 = sphi 0, %s114
    %s131 = sphi 0, %s115
    %s137 = sphi 0, %s139
    %s140 = sphi 0, %s137
    %s141 = sphi 0, %s140
    %s157 = sphi 0, %s141
    %s165 = sphi 0, %s167
    %s168 = sphi 0, %s165
    %s169 = sphi 0, %s168
    %s185 = sphi 0, %s169
  $region4: #{ocr_forward.21} parent=0 // loop_header_branch
    %14 = sbr.rel (%p12) target = $region8
  $region5: #{ocr_forward.21} parent=0 // loop_body
    %s16 = ssub.s32 %s11, 1
    %s17 = ssub.s32 %s11, 2
    %s24 = sadd.s32 1, %s19
    %p25 = scmp.ge.s32.totalorder %s24, 1
    %s26 = scalar_select %p25, 0, %s24
    %s27 = sadd.s32 1, %s18
    %s28 = scalar_select %p25, %s27, %s18
    %p29 = scmp.ge.s32.totalorder %s28, 2
    %s30 = scalar_select %p29, 0, %s28
    %s31 = ssub.s32 %s18, %s30
    %p32 = scmp.eq.s32.totalorder %s31, 0
    %s34 = sadd.s32 %s33, 1
    %s35 = scalar_select %p32, %s33, %s34
    %p38 = pneg %p32
    %p39 = scmp.eq.s32.totalorder %s11, 1
    %p40 = por %p38, %p39
    %p41 = scmp.ne.s32.totalorder %s33, %s36
    %p42 = scmp.eq.s32.totalorder %s11, 0
    %p43 = por %p41, %p42
    %p44 = scmp.ne.s32.totalorder %s33, %s36
    %p45 = scmp.eq.s32.totalorder %s16, 1
    %p46 = por %p44, %p45
    %p47 = scmp.ne.s32.totalorder %s36, %s37
    %p48 = scmp.eq.s32.totalorder %s16, 0
    %p49 = por %p47, %p48
    %p50 = scmp.ne.s32.totalorder %s36, %s37
    %p51 = scmp.eq.s32.totalorder %s17, 1
    %p52 = por %p50, %p51
    %p54 = scmp.ne.s32.totalorder %s37, %s53
    %p55 = scmp.eq.s32.totalorder %s17, 0
    %p56 = por %p54, %p55
    %s57 = ssub.s32 %s19, %s26
    %p58 = scmp.eq.s32.totalorder %s57, 0
    %s60 = sadd.s32 %s59, 1
    %s61 = scalar_select %p58, %s59, %s60
    %p64 = pneg %p58
    %p65 = scmp.eq.s32.totalorder %s11, 1
    %p66 = por %p64, %p65
    %p67 = scmp.ne.s32.totalorder %s59, %s62
    %p68 = scmp.eq.s32.totalorder %s11, 0
    %p69 = por %p67, %p68
    %p70 = scmp.ne.s32.totalorder %s59, %s62
    %p71 = scmp.eq.s32.totalorder %s16, 1
    %p72 = por %p70, %p71
    %p73 = scmp.ne.s32.totalorder %s62, %s63
    %p74 = scmp.eq.s32.totalorder %s16, 0
    %p75 = por %p73, %p74
    %p76 = scmp.ne.s32.totalorder %s62, %s63
    %p77 = scmp.eq.s32.totalorder %s17, 1
    %p78 = por %p76, %p77
    %p80 = scmp.ne.s32.totalorder %s63, %s79
    %p81 = scmp.eq.s32.totalorder %s17, 0
    %p82 = por %p80, %p81
    %s83 = ssub.s32 %s18, %s30
    %p84 = scmp.eq.s32.totalorder %s83, 0
    %s86 = sadd.s32 %s85, 1
    %s87 = scalar_select %p84, %s85, %s86
    %p90 = pneg %p84
    %p91 = scmp.eq.s32.totalorder %s11, 1
    %p92 = por %p90, %p91
    %p93 = scmp.ne.s32.totalorder %s85, %s88
    %p94 = scmp.eq.s32.totalorder %s11, 0
    %p95 = por %p93, %p94
    %p96 = scmp.ne.s32.totalorder %s85, %s88
    %p97 = scmp.eq.s32.totalorder %s16, 1
    %p98 = por %p96, %p97
    %p99 = scmp.ne.s32.totalorder %s88, %s89
    %p100 = scmp.eq.s32.totalorder %s16, 0
    %p101 = por %p99, %p100
    %p102 = scmp.ne.s32.totalorder %s88, %s89
    %p103 = scmp.eq.s32.totalorder %s17, 1
    %p104 = por %p102, %p103
    %p106 = scmp.ne.s32.totalorder %s89, %s105
    %p107 = scmp.eq.s32.totalorder %s17, 0
    %p108 = por %p106, %p107
    %s109 = ssub.s32 %s19, %s26
    %p110 = scmp.eq.s32.totalorder %s109, 0
    %s112 = sadd.s32 %s111, 1
    %s113 = scalar_select %p110, %s111, %s112
    %p116 = pneg %p110
    %p117 = scmp.eq.s32.totalorder %s11, 1
    %p118 = por %p116, %p117
    %p119 = scmp.ne.s32.totalorder %s111, %s114
    %p120 = scmp.eq.s32.totalorder %s11, 0
    %p121 = por %p119, %p120
    %p122 = scmp.ne.s32.totalorder %s111, %s114
    %p123 = scmp.eq.s32.totalorder %s16, 1
    %p124 = por %p122, %p123
    %p125 = scmp.ne.s32.totalorder %s114, %s115
    %p126 = scmp.eq.s32.totalorder %s16, 0
    %p127 = por %p125, %p126
    %p128 = scmp.ne.s32.totalorder %s114, %s115
    %p129 = scmp.eq.s32.totalorder %s17, 1
    %p130 = por %p128, %p129
    %p132 = scmp.ne.s32.totalorder %s115, %s131
    %p133 = scmp.eq.s32.totalorder %s17, 0
    %p134 = por %p132, %p133
    %s135 = ssub.s32 %s19, %s26
    %p136 = scmp.eq.s32.totalorder %s135, 0
    %s138 = sadd.s32 %s137, 1
    %s139 = scalar_select %p136, %s137, %s138
    %p142 = pneg %p136
    %p143 = scmp.eq.s32.totalorder %s11, 1
    %p144 = por %p142, %p143
    %p145 = scmp.ne.s32.totalorder %s137, %s140
    %p146 = scmp.eq.s32.totalorder %s11, 0
    %p147 = por %p145, %p146
    %p148 = scmp.ne.s32.totalorder %s137, %s140
    %p149 = scmp.eq.s32.totalorder %s16, 1
    %p150 = por %p148, %p149
    %p151 = scmp.ne.s32.totalorder %s140, %s141
    %p152 = scmp.eq.s32.totalorder %s16, 0
    %p153 = por %p151, %p152
    %p154 = scmp.ne.s32.totalorder %s140, %s141
    %p155 = scmp.eq.s32.totalorder %s17, 1
    %p156 = por %p154, %p155
    %p158 = scmp.ne.s32.totalorder %s141, %s157
    %p159 = scmp.eq.s32.totalorder %s17, 0
    %p160 = por %p158, %p159
    %s161 = ssub.s32 %s18, %s30
    %s162 = ssub.s32 %s19, %s26
    %s163 = sor.u32 %s161, %s162
    %p164 = scmp.eq.s32.totalorder %s163, 0
    %s166 = sadd.s32 %s165, 1
    %s167 = scalar_select %p164, %s165, %s166
    %p170 = pneg %p164
    %p171 = scmp.eq.s32.totalorder %s11, 1
    %p172 = por %p170, %p171
    %p173 = scmp.ne.s32.totalorder %s165, %s168
    %p174 = scmp.eq.s32.totalorder %s11, 0
    %p175 = por %p173, %p174
    %p176 = scmp.ne.s32.totalorder %s165, %s168
    %p177 = scmp.eq.s32.totalorder %s16, 1
    %p178 = por %p176, %p177
    %p179 = scmp.ne.s32.totalorder %s168, %s169
    %p180 = scmp.eq.s32.totalorder %s16, 0
    %p181 = por %p179, %p180
    %p182 = scmp.ne.s32.totalorder %s168, %s169
    %p183 = scmp.eq.s32.totalorder %s17, 1
    %p184 = por %p182, %p183
    %p186 = scmp.ne.s32.totalorder %s169, %s185
    %p187 = scmp.eq.s32.totalorder %s17, 0
    %p188 = por %p186, %p187
    %p189 = scmp.le.s32.totalorder 1, %s11
    %p190 = scmp.lt.s32.totalorder %s11, 3
    %p191 = pnand %p189, %p190
    %p192 = pneg %p191
    // Predicated region
    $region9: #{ocr_forward.21} parent=5 // pred_check
      _
    $region10: #{ocr_forward.21} parent=5 // pred_check_branch
      %194 = sbr.rel (%p191) target = $region12
    $region11: #{ocr_forward.21} parent=5 // pred_region
      %s195 = ssub.s32 %s11, 1
      // Predicated region
      $region13: #{ocr_forward.21} parent=11 // pred_check
        %p196 = pneg %p75
      $region14: #{ocr_forward.21} parent=11 // pred_check_branch
        %198 = sbr.rel (%p196) target = $region16
      $region15: #{ocr_forward.21} parent=11 // pred_region
        %p199 = scmp.lt.s32.totalorder %s21, 0
        %s200 = scalar_select %p199, %s21, 0
        %s201 = smul.addr %s200, 4
        %s202 = scalar_lea.vmem %s1, %s201
      $region16: #{ocr_forward.21} parent=11 // pred_fallthru
        _
      // Predicated region
      $region17: #{ocr_forward.21} parent=11 // pred_check
        %p203 = pneg %p127
      $region18: #{ocr_forward.21} parent=11 // pred_check_branch
        %205 = sbr.rel (%p203) target = $region20
      $region19: #{ocr_forward.21} parent=11 // pred_region
        %p206 = scmp.lt.s32.totalorder %s21, 0
        %s207 = scalar_select %p206, %s21, 0
        %s208 = smul.addr %s207, 4
        %s209 = scalar_lea.vmem %s3, %s208
      $region20: #{ocr_forward.21} parent=11 // pred_fallthru
        _
      // Predicated region
      $region21: #{ocr_forward.21} parent=11 // pred_check
        %p210 = pneg %p153
      $region22: #{ocr_forward.21} parent=11 // pred_check_branch
        %212 = sbr.rel (%p210) target = $region24
      $region23: #{ocr_forward.21} parent=11 // pred_region
        %p213 = scmp.lt.s32.totalorder %s21, 0
        %s214 = scalar_select %p213, %s21, 0
        %s215 = scalar_lea.vmem %s4, %s214
      $region24: #{ocr_forward.21} parent=11 // pred_fallthru
        _
    $region12: #{ocr_forward.21} parent=5 // pred_fallthru
      _
    %p216 = scmp.lt.s32.totalorder %s11, 2
    // Predicated region
    $region25: #{ocr_forward.21} parent=5 // pred_check
      %p217 = pneg %p216
    $region26: #{ocr_forward.21} parent=5 // pred_check_branch
      %219 = sbr.rel (%p217) target = $region28
    $region27: #{ocr_forward.21} parent=5 // pred_region
      // Predicated region
      $region29: #{ocr_forward.21} parent=27 // pred_check
        %p220 = pneg %p43
      $region30: #{ocr_forward.21} parent=27 // pred_check_branch
        %222 = sbr.rel (%p220) target = $region32
      $region31: #{ocr_forward.21} parent=27 // pred_region
        %s223 = smul.u32 32, %s18
        %p224 = scmp.lt.s32.totalorder %s223, 63
        %s225 = scalar_select %p224, %s223, 63
        %s226 = smul.addr %s225, 4
        %s227 = scalar_lea.vmem %s0, %s226
        %s228 = smul.u32 32, %s18
      $region32: #{ocr_forward.21} parent=27 // pred_fallthru
        _
      // Predicated region
      $region33: #{ocr_forward.21} parent=27 // pred_check
        %p229 = pneg %p95
      $region34: #{ocr_forward.21} parent=27 // pred_check_branch
        %231 = sbr.rel (%p229) target = $region36
      $region35: #{ocr_forward.21} parent=27 // pred_region
        %s232 = smul.u32 32, %s18
        %p233 = scmp.lt.s32.totalorder %s232, 63
        %s234 = scalar_select %p233, %s232, 63
        %s235 = smul.addr %s234, 4
        %s236 = scalar_lea.vmem %s2, %s235
        %s237 = smul.u32 32, %s18
      $region36: #{ocr_forward.21} parent=27 // pred_fallthru
        _
    $region28: #{ocr_forward.21} parent=5 // pred_fallthru
      _
    %p238 = scmp.le.s32.totalorder 1, %s11
    %p239 = scmp.lt.s32.totalorder %s11, 3
    %p240 = pnand %p238, %p239
    %p241 = pneg %p240
    // Predicated region
    $region37: #{ocr_forward.21} parent=5 // pred_check
      _
    $region38: #{ocr_forward.21} parent=5 // pred_check_branch
      %243 = sbr.rel (%p240) target = $region40
    $region39: #{ocr_forward.21} parent=5 // pred_region
      %s244 = ssub.s32 %s11, 1
      %s245 = smul.u32 32, %s20
      %p246 = scmp.lt.s32.totalorder %s245, 63
      %s247 = scalar_select %p246, %s245, 63
      %s248 = smul.addr %s247, 4
      %s249 = scalar_lea.vmem %s0, %s248
      %p250 = pneg %p49
      %p251 = pneg %p46
      %p252 = scmp.lt.s32.totalorder %s21, 0
      %s253 = scalar_select %p252, %s21, 0
      %s254 = smul.addr %s253, 4
      %s255 = scalar_lea.vmem %s1, %s254
      %p256 = pneg %p75
      %p257 = pneg %p72
      %s258 = smul.u32 32, %s20
      %p259 = scmp.lt.s32.totalorder %s258, 63
      %s260 = scalar_select %p259, %s258, 63
      %s261 = smul.addr %s260, 4
      %s262 = scalar_lea.vmem %s2, %s261
      %p263 = pneg %p101
      %p264 = pneg %p98
      %p265 = scmp.lt.s32.totalorder %s21, 0
      %s266 = scalar_select %p265, %s21, 0
      %s267 = smul.addr %s266, 4
      %s268 = scalar_lea.vmem %s3, %s267
      %p269 = pneg %p127
      %p270 = pneg %p124
      %p271 = scmp.lt.s32.totalorder %s21, 0
      %s272 = scalar_select %p271, %s21, 0
      %s273 = scalar_lea.vmem %s4, %s272
      %p274 = pneg %p153
      %p275 = pneg %p150
      %p276 = pneg %p181
      %p277 = pneg %p178
      %s278 = smul.u32 32, %s20
      %p279 = scmp.lt.s32.totalorder %s278, 63
      %s280 = scalar_select %p279, %s278, 63
      %p281 = scmp.lt.s32.totalorder %s21, 0
      %s282 = scalar_select %p281, %s21, 0
      %s283 = sadd.s32 %s282, %s280
      %s284 = smul.addr %s283, 8
      %s285 = scalar_lea.vmem %s5, %s284
      %s286 = smul.u32 32, %s20
      %p287 = scmp.lt.s32.totalorder %s286, 63
      %s288 = scalar_select %p287, %s286, 63
      %s289 = smul.addr %s288, 4
      %s290 = scalar_lea.vmem %s0, %s289
      %s291 = smul.u32 32, %s20
      %p292 = scmp.lt.s32.totalorder %s21, 0
      %s293 = scalar_select %p292, %s21, 0
      %s294 = smul.addr %s293, 4
      %s295 = scalar_lea.vmem %s1, %s294
      %s296 = smul.u32 32, %s20
      %p297 = scmp.lt.s32.totalorder %s296, 63
      %s298 = scalar_select %p297, %s296, 63
      %s299 = smul.addr %s298, 4
      %s300 = scalar_lea.vmem %s2, %s299
      %s301 = smul.u32 32, %s20
      %p302 = scmp.lt.s32.totalorder %s21, 0
      %s303 = scalar_select %p302, %s21, 0
      %s304 = smul.addr %s303, 4
      %s305 = scalar_lea.vmem %s3, %s304
      %p306 = scmp.lt.s32.totalorder %s21, 0
      %s307 = scalar_select %p306, %s21, 0
      %s308 = scalar_lea.vmem %s4, %s307
      %s309 = smul.u32 32, %s20
      %p310 = scmp.lt.s32.totalorder %s309, 63
      %s311 = scalar_select %p310, %s309, 63
      %p312 = scmp.lt.s32.totalorder %s21, 0
      %s313 = scalar_select %p312, %s21, 0
      %s314 = sadd.s32 %s313, %s311
      %s315 = smul.addr %s314, 8
      %s316 = scalar_lea.vmem %s5, %s315
      %s317 = smul.u32 32, %s20
      %v319 = vld [vmem:[%s290] sm:$0xf]
      %v320 = vld [vmem:[%s290 + $0x4] sm:$0xf]
      %v321 = vld [vmem:[%s290 + $0x8] sm:$0xf]
      %v322 = vld [vmem:[%s290 + $0xc] sm:$0xf]
      %v323 = vld [vmem:[%s290 + $0x10] sm:$0xf]
      %v324 = vld [vmem:[%s290 + $0x14] sm:$0xf]
      %v325 = vld [vmem:[%s290 + $0x18] sm:$0xf]
      %v326 = vld [vmem:[%s290 + $0x1c] sm:$0xf]
      %v327 = vld [vmem:[%s290 + $0x20] sm:$0xf]
      %v328 = vld [vmem:[%s290 + $0x24] sm:$0xf]
      %v329 = vld [vmem:[%s290 + $0x28] sm:$0xf]
      %v330 = vld [vmem:[%s290 + $0x2c] sm:$0xf]
      %v331 = vld [vmem:[%s290 + $0x30] sm:$0xf]
      %v332 = vld [vmem:[%s290 + $0x34] sm:$0xf]
      %v333 = vld [vmem:[%s290 + $0x38] sm:$0xf]
      %v334 = vld [vmem:[%s290 + $0x3c] sm:$0xf]
      %v335 = vld [vmem:[%s290 + $0x40] sm:$0xf]
      %v336 = vld [vmem:[%s290 + $0x44] sm:$0xf]
      %v337 = vld [vmem:[%s290 + $0x48] sm:$0xf]
      %v338 = vld [vmem:[%s290 + $0x4c] sm:$0xf]
      %v339 = vld [vmem:[%s290 + $0x50] sm:$0xf]
      %v340 = vld [vmem:[%s290 + $0x54] sm:$0xf]
      %v341 = vld [vmem:[%s290 + $0x58] sm:$0xf]
      %v342 = vld [vmem:[%s290 + $0x5c] sm:$0xf]
      %v343 = vld [vmem:[%s290 + $0x60] sm:$0xf]
      %v344 = vld [vmem:[%s290 + $0x64] sm:$0xf]
      %v345 = vld [vmem:[%s290 + $0x68] sm:$0xf]
      %v346 = vld [vmem:[%s290 + $0x6c] sm:$0xf]
      %v347 = vld [vmem:[%s290 + $0x70] sm:$0xf]
      %v348 = vld [vmem:[%s290 + $0x74] sm:$0xf]
      %v349 = vld [vmem:[%s290 + $0x78] sm:$0xf]
      %v350 = vld [vmem:[%s290 + $0x7c] sm:$0xf]
      %v351 = vld [vmem:[%s295] sm:$0xf]
      %v352 = vld [vmem:[%s295 + $0x4] sm:$0xf]
      %v353 = vld [vmem:[%s295 + $0x8] sm:$0xf]
      %v354 = vld [vmem:[%s295 + $0xc] sm:$0xf]
      %v355 = vld [vmem:[%s295 + $0x10] sm:$0xf]
      %v356 = vld [vmem:[%s295 + $0x14] sm:$0xf]
      %v357 = vld [vmem:[%s295 + $0x18] sm:$0xf]
      %v358 = vld [vmem:[%s295 + $0x1c] sm:$0xf]
      %v359 = vld [vmem:[%s295 + $0x20] sm:$0xf]
      %v360 = vld [vmem:[%s295 + $0x24] sm:$0xf]
      %v361 = vld [vmem:[%s295 + $0x28] sm:$0xf]
      %v362 = vld [vmem:[%s295 + $0x2c] sm:$0xf]
      %v363 = vld [vmem:[%s295 + $0x30] sm:$0xf]
      %v364 = vld [vmem:[%s295 + $0x34] sm:$0xf]
      %v365 = vld [vmem:[%s295 + $0x38] sm:$0xf]
      %v366 = vld [vmem:[%s295 + $0x3c] sm:$0xf]
      %v367 = vld [vmem:[%s300] sm:$0xf]
      %v368 = vld [vmem:[%s300 + $0x4] sm:$0xf]
      %v369 = vld [vmem:[%s300 + $0x8] sm:$0xf]
      %v370 = vld [vmem:[%s300 + $0xc] sm:$0xf]
      %v371 = vld [vmem:[%s300 + $0x10] sm:$0xf]
      %v372 = vld [vmem:[%s300 + $0x14] sm:$0xf]
      %v373 = vld [vmem:[%s300 + $0x18] sm:$0xf]
      %v374 = vld [vmem:[%s300 + $0x1c] sm:$0xf]
      %v375 = vld [vmem:[%s300 + $0x20] sm:$0xf]
      %v376 = vld [vmem:[%s300 + $0x24] sm:$0xf]
      %v377 = vld [vmem:[%s300 + $0x28] sm:$0xf]
      %v378 = vld [vmem:[%s300 + $0x2c] sm:$0xf]
      %v379 = vld [vmem:[%s300 + $0x30] sm:$0xf]
      %v380 = vld [vmem:[%s300 + $0x34] sm:$0xf]
      %v381 = vld [vmem:[%s300 + $0x38] sm:$0xf]
      %v382 = vld [vmem:[%s300 + $0x3c] sm:$0xf]
      %v383 = vld [vmem:[%s300 + $0x40] sm:$0xf]
      %v384 = vld [vmem:[%s300 + $0x44] sm:$0xf]
      %v385 = vld [vmem:[%s300 + $0x48] sm:$0xf]
      %v386 = vld [vmem:[%s300 + $0x4c] sm:$0xf]
      %v387 = vld [vmem:[%s300 + $0x50] sm:$0xf]
      %v388 = vld [vmem:[%s300 + $0x54] sm:$0xf]
      %v389 = vld [vmem:[%s300 + $0x58] sm:$0xf]
      %v390 = vld [vmem:[%s300 + $0x5c] sm:$0xf]
      %v391 = vld [vmem:[%s300 + $0x60] sm:$0xf]
      %v392 = vld [vmem:[%s300 + $0x64] sm:$0xf]
      %v393 = vld [vmem:[%s300 + $0x68] sm:$0xf]
      %v394 = vld [vmem:[%s300 + $0x6c] sm:$0xf]
      %v395 = vld [vmem:[%s300 + $0x70] sm:$0xf]
      %v396 = vld [vmem:[%s300 + $0x74] sm:$0xf]
      %v397 = vld [vmem:[%s300 + $0x78] sm:$0xf]
      %v398 = vld [vmem:[%s300 + $0x7c] sm:$0xf]
      %v399 = vld [vmem:[%s305] sm:$0xf]
      %v400 = vld [vmem:[%s305 + $0x4] sm:$0xf]
      %v401 = vld [vmem:[%s305 + $0x8] sm:$0xf]
      %v402 = vld [vmem:[%s305 + $0xc] sm:$0xf]
      %v403 = vld [vmem:[%s305 + $0x10] sm:$0xf]
      %v404 = vld [vmem:[%s305 + $0x14] sm:$0xf]
      %v405 = vld [vmem:[%s305 + $0x18] sm:$0xf]
      %v406 = vld [vmem:[%s305 + $0x1c] sm:$0xf]
      %v407 = vld [vmem:[%s305 + $0x20] sm:$0xf]
      %v408 = vld [vmem:[%s305 + $0x24] sm:$0xf]
      %v409 = vld [vmem:[%s305 + $0x28] sm:$0xf]
      %v410 = vld [vmem:[%s305 + $0x2c] sm:$0xf]
      %v411 = vld [vmem:[%s305 + $0x30] sm:$0xf]
      %v412 = vld [vmem:[%s305 + $0x34] sm:$0xf]
      %v413 = vld [vmem:[%s305 + $0x38] sm:$0xf]
      %v414 = vld [vmem:[%s305 + $0x3c] sm:$0xf]
      %v447 = vunpack.c.l.b16 %v367
      %v448 = vunpack.c.l.b16 %v368
      %v449 = vunpack.c.l.b16 %v369
      %v450 = vunpack.c.l.b16 %v370
      %v451 = vunpack.c.l.b16 %v371
      %v452 = vunpack.c.l.b16 %v372
      %v453 = vunpack.c.l.b16 %v373
      %v454 = vunpack.c.l.b16 %v374
      %v455 = vunpack.c.l.b16 %v375
      %v456 = vunpack.c.l.b16 %v376
      %v457 = vunpack.c.l.b16 %v377
      %v458 = vunpack.c.l.b16 %v378
      %v459 = vunpack.c.l.b16 %v379
      %v460 = vunpack.c.l.b16 %v380
      %v461 = vunpack.c.l.b16 %v381
      %v462 = vunpack.c.l.b16 %v382
      %v463 = vunpack.c.l.b16 %v383
      %v464 = vunpack.c.l.b16 %v384
      %v465 = vunpack.c.l.b16 %v385
      %v466 = vunpack.c.l.b16 %v386
      %v467 = vunpack.c.l.b16 %v387
      %v468 = vunpack.c.l.b16 %v388
      %v469 = vunpack.c.l.b16 %v389
      %v470 = vunpack.c.l.b16 %v390
      %v471 = vunpack.c.l.b16 %v391
      %v472 = vunpack.c.l.b16 %v392
      %v473 = vunpack.c.l.b16 %v393
      %v474 = vunpack.c.l.b16 %v394
      %v475 = vunpack.c.l.b16 %v395
      %v476 = vunpack.c.l.b16 %v396
      %v477 = vunpack.c.l.b16 %v397
      %v478 = vunpack.c.l.b16 %v398
      %v479 = vpack.c.b16 %v448, %v447
      %v480 = vpack.c.b16 %v450, %v449
      %v481 = vpack.c.b16 %v452, %v451
      %v482 = vpack.c.b16 %v454, %v453
      %v483 = vpack.c.b16 %v456, %v455
      %v484 = vpack.c.b16 %v458, %v457
      %v485 = vpack.c.b16 %v460, %v459
      %v486 = vpack.c.b16 %v462, %v461
      %v487 = vpack.c.b16 %v464, %v463
      %v488 = vpack.c.b16 %v466, %v465
      %v489 = vpack.c.b16 %v468, %v467
      %v490 = vpack.c.b16 %v470, %v469
      %v491 = vpack.c.b16 %v472, %v471
      %v492 = vpack.c.b16 %v474, %v473
      %v493 = vpack.c.b16 %v476, %v475
      %v494 = vpack.c.b16 %v478, %v477
      %v527 = vunpack.c.l.b16 %v399
      %v528 = vunpack.c.l.b16 %v400
      %v529 = vunpack.c.l.b16 %v401
      %v530 = vunpack.c.l.b16 %v402
      %v531 = vunpack.c.l.b16 %v403
      %v532 = vunpack.c.l.b16 %v404
      %v533 = vunpack.c.l.b16 %v405
      %v534 = vunpack.c.l.b16 %v406
      %v535 = vunpack.c.l.b16 %v407
      %v536 = vunpack.c.l.b16 %v408
      %v537 = vunpack.c.l.b16 %v409
      %v538 = vunpack.c.l.b16 %v410
      %v539 = vunpack.c.l.b16 %v411
      %v540 = vunpack.c.l.b16 %v412
      %v541 = vunpack.c.l.b16 %v413
      %v542 = vunpack.c.l.b16 %v414
      %v543 = vpack.c.b16 %v528, %v527
      %v544 = vpack.c.b16 %v530, %v529
      %v545 = vpack.c.b16 %v532, %v531
      %v546 = vpack.c.b16 %v534, %v533
      %v547 = vpack.c.b16 %v536, %v535
      %v548 = vpack.c.b16 %v538, %v537
      %v549 = vpack.c.b16 %v540, %v539
      %v550 = vpack.c.b16 %v542, %v541
      %559 = vmatprep.subr.bf16.mxu0 0
      %560 = vmatpush1.bf16.msra.mxu0 %v543
      %561 = vmatprep.subr.bf16.mxu0 0
      %562 = vmatpush1.bf16.msra.mxu0 %v544
      %563 = vmatprep.subr.bf16.mxu0 0
      %564 = vmatpush1.bf16.msra.mxu0 %v545
      %565 = vmatprep.subr.bf16.mxu0 0
      %566 = vmatpush1.bf16.msra.mxu0 %v546
      %567 = vmatprep.subr.bf16.mxu0 0
      %568 = vmatpush1.bf16.msra.mxu0 %v547
      %569 = vmatprep.subr.bf16.mxu0 0
      %570 = vmatpush1.bf16.msra.mxu0 %v548
      %571 = vmatprep.subr.bf16.mxu0 0
      %572 = vmatpush1.bf16.msra.mxu0 %v549
      %573 = vmatprep.subr.bf16.mxu0 0
      %574 = vmatpush1.bf16.msra.mxu0 %v550
      %575 = vmatprep.subr.bf16.mxu0 0
      %576 = vmatpush1.bf16.msra.mxu0 0
      %577 = vmatprep.subr.bf16.mxu0 0
      %578 = vmatpush1.bf16.msra.mxu0 0
      %579 = vmatprep.subr.bf16.mxu0 0
      %580 = vmatpush1.bf16.msra.mxu0 0
      %581 = vmatprep.subr.bf16.mxu0 0
      %582 = vmatpush1.bf16.msra.mxu0 0
      %583 = vmatprep.subr.bf16.mxu0 0
      %584 = vmatpush1.bf16.msra.mxu0 0
      %585 = vmatprep.subr.bf16.mxu0 0
      %586 = vmatpush1.bf16.msra.mxu0 0
      %587 = vmatprep.subr.bf16.mxu0 0
      %588 = vmatpush1.bf16.msra.mxu0 0
      %589 = vmatprep.subr.bf16.mxu0 0
      %590 = vmatpush1.bf16.msra.mxu0 0
      %591 = vmatprep.mubr.bf16.mxu0 0
      %592 = vmatmul.mubr.bf16.gmra.mrb[0].mxu0 %v479
      %v593 = vpop.f32.mrb[0].mxu0
      %v594 = vadd.f32 0.0, %v593
      %v595 = vpop.f32.mrb[0].mxu0
      %v596 = vpop.f32.mrb[0].mxu0
      %v597 = vadd.f32 0.0, %v596
      %v598 = vpop.f32.mrb[0].mxu0
      %599 = vmatprep.mubr.bf16.mxu0 0
      %600 = vmatmul.mubr.bf16.gmra.mrb[0].mxu0 %v480
      %v601 = vpop.f32.mrb[0].mxu0
      %v602 = vadd.f32 0.0, %v601
      %v603 = vpop.f32.mrb[0].mxu0
      %v604 = vpop.f32.mrb[0].mxu0
      %v605 = vadd.f32 0.0, %v604
      %v606 = vpop.f32.mrb[0].mxu0
      %607 = vmatprep.mubr.bf16.mxu0 0
      %608 = vmatmul.mubr.bf16.gmra.mrb[0].mxu0 %v481
      %v609 = vpop.f32.mrb[0].mxu0
      %v610 = vadd.f32 0.0, %v609
      %v611 = vpop.f32.mrb[0].mxu0
      %v612 = vpop.f32.mrb[0].mxu0
      %v613 = vadd.f32 0.0, %v612
      %v614 = vpop.f32.mrb[0].mxu0
      %615 = vmatprep.mubr.bf16.mxu0 0
      %616 = vmatmul.mubr.bf16.gmra.mrb[0].mxu0 %v482
      %v617 = vpop.f32.mrb[0].mxu0
      %v618 = vadd.f32 0.0, %v617
      %v619 = vpop.f32.mrb[0].mxu0
      %v620 = vpop.f32.mrb[0].mxu0
      %v621 = vadd.f32 0.0, %v620
      %v622 = vpop.f32.mrb[0].mxu0
      %623 = vmatprep.mubr.bf16.mxu0 0
      %624 = vmatmul.mubr.bf16.gmra.mrb[0].mxu0 %v483
      %v625 = vpop.f32.mrb[0].mxu0
      %v626 = vadd.f32 0.0, %v625
      %v627 = vpop.f32.mrb[0].mxu0
      %v628 = vpop.f32.mrb[0].mxu0
      %v629 = vadd.f32 0.0, %v628
      %v630 = vpop.f32.mrb[0].mxu0
      %631 = vmatprep.mubr.bf16.mxu0 0
      %632 = vmatmul.mubr.bf16.gmra.mrb[0].mxu0 %v484
      %v633 = vpop.f32.mrb[0].mxu0
      %v634 = vadd.f32 0.0, %v633
      %v635 = vpop.f32.mrb[0].mxu0
      %v636 = vpop.f32.mrb[0].mxu0
      %v637 = vadd.f32 0.0, %v636
      %v638 = vpop.f32.mrb[0].mxu0
      %639 = vmatprep.mubr.bf16.mxu0 0
      %640 = vmatmul.mubr.bf16.gmra.mrb[0].mxu0 %v485
      %v641 = vpop.f32.mrb[0].mxu0
      %v642 = vadd.f32 0.0, %v641
      %v643 = vpop.f32.mrb[0].mxu0
      %v644 = vpop.f32.mrb[0].mxu0
      %v645 = vadd.f32 0.0, %v644
      %v646 = vpop.f32.mrb[0].mxu0
      %647 = vmatprep.mubr.bf16.mxu0 0
      %648 = vmatmul.mubr.bf16.gmra.mrb[0].mxu0 %v486
      %v649 = vpop.f32.mrb[0].mxu0
      %v650 = vadd.f32 0.0, %v649
      %v651 = vpop.f32.mrb[0].mxu0
      %v652 = vpop.f32.mrb[0].mxu0
      %v653 = vadd.f32 0.0, %v652
      %v654 = vpop.f32.mrb[0].mxu0
      %655 = vmatprep.mubr.bf16.mxu0 0
      %656 = vmatmul.mubr.bf16.gmra.mrb[0].mxu0 %v487
      %v657 = vpop.f32.mrb[0].mxu0
      %v658 = vadd.f32 0.0, %v657
      %v659 = vpop.f32.mrb[0].mxu0
      %v660 = vpop.f32.mrb[0].mxu0
      %v661 = vadd.f32 0.0, %v660
      %v662 = vpop.f32.mrb[0].mxu0
      %663 = vmatprep.mubr.bf16.mxu0 0
      %664 = vmatmul.mubr.bf16.gmra.mrb[0].mxu0 %v488
      %v665 = vpop.f32.mrb[0].mxu0
      %v666 = vadd.f32 0.0, %v665
      %v667 = vpop.f32.mrb[0].mxu0
      %v668 = vpop.f32.mrb[0].mxu0
      %v669 = vadd.f32 0.0, %v668
      %v670 = vpop.f32.mrb[0].mxu0
      %671 = vmatprep.mubr.bf16.mxu0 0
      %672 = vmatmul.mubr.bf16.gmra.mrb[0].mxu0 %v489
      %v673 = vpop.f32.mrb[0].mxu0
      %v674 = vadd.f32 0.0, %v673
      %v675 = vpop.f32.mrb[0].mxu0
      %v676 = vpop.f32.mrb[0].mxu0
      %v677 = vadd.f32 0.0, %v676
      %v678 = vpop.f32.mrb[0].mxu0
      %679 = vmatprep.mubr.bf16.mxu0 0
      %680 = vmatmul.mubr.bf16.gmra.mrb[0].mxu0 %v490
      %v681 = vpop.f32.mrb[0].mxu0
      %v682 = vadd.f32 0.0, %v681
      %v683 = vpop.f32.mrb[0].mxu0
      %v684 = vpop.f32.mrb[0].mxu0
      %v685 = vadd.f32 0.0, %v684
      %v686 = vpop.f32.mrb[0].mxu0
      %687 = vmatprep.mubr.bf16.mxu0 0
      %688 = vmatmul.mubr.bf16.gmra.mrb[0].mxu0 %v491
      %v689 = vpop.f32.mrb[0].mxu0
      %v690 = vadd.f32 0.0, %v689
      %v691 = vpop.f32.mrb[0].mxu0
      %v692 = vpop.f32.mrb[0].mxu0
      %v693 = vadd.f32 0.0, %v692
      %v694 = vpop.f32.mrb[0].mxu0
      %695 = vmatprep.mubr.bf16.mxu0 0
      %696 = vmatmul.mubr.bf16.gmra.mrb[0].mxu0 %v492
      %v697 = vpop.f32.mrb[0].mxu0
      %v698 = vadd.f32 0.0, %v697
      %v699 = vpop.f32.mrb[0].mxu0
      %v700 = vpop.f32.mrb[0].mxu0
      %v701 = vadd.f32 0.0, %v700
      %v702 = vpop.f32.mrb[0].mxu0
      %703 = vmatprep.mubr.bf16.mxu0 0
      %704 = vmatmul.mubr.bf16.gmra.mrb[0].mxu0 %v493
      %v705 = vpop.f32.mrb[0].mxu0
      %v706 = vadd.f32 0.0, %v705
      %v707 = vpop.f32.mrb[0].mxu0
      %v708 = vpop.f32.mrb[0].mxu0
      %v709 = vadd.f32 0.0, %v708
      %v710 = vpop.f32.mrb[0].mxu0
      %711 = vmatprep.mubr.bf16.mxu0 0
      %712 = vmatmul.mubr.bf16.gmra.mrb[0].mxu0 %v494
      %v713 = vpop.f32.mrb[0].mxu0
      %v714 = vadd.f32 0.0, %v713
      %v715 = vpop.f32.mrb[0].mxu0
      %v716 = vpop.f32.mrb[0].mxu0
      %v717 = vadd.f32 0.0, %v716
      %v718 = vpop.f32.mrb[0].mxu0
      %719 = vdwg.mxu0
      %v752 = vunpack.c.l.b16 %v319
      %v753 = vunpack.c.l.b16 %v320
      %v754 = vunpack.c.l.b16 %v321
      %v755 = vunpack.c.l.b16 %v322
      %v756 = vunpack.c.l.b16 %v323
      %v757 = vunpack.c.l.b16 %v324
      %v758 = vunpack.c.l.b16 %v325
      %v759 = vunpack.c.l.b16 %v326
      %v760 = vunpack.c.l.b16 %v327
      %v761 = vunpack.c.l.b16 %v328
      %v762 = vunpack.c.l.b16 %v329
      %v763 = vunpack.c.l.b16 %v330
      %v764 = vunpack.c.l.b16 %v331
      %v765 = vunpack.c.l.b16 %v332
      %v766 = vunpack.c.l.b16 %v333
      %v767 = vunpack.c.l.b16 %v334
      %v768 = vunpack.c.l.b16 %v335
      %v769 = vunpack.c.l.b16 %v336
      %v770 = vunpack.c.l.b16 %v337
      %v771 = vunpack.c.l.b16 %v338
      %v772 = vunpack.c.l.b16 %v339
      %v773 = vunpack.c.l.b16 %v340
      %v774 = vunpack.c.l.b16 %v341
      %v775 = vunpack.c.l.b16 %v342
      %v776 = vunpack.c.l.b16 %v343
      %v777 = vunpack.c.l.b16 %v344
      %v778 = vunpack.c.l.b16 %v345
      %v779 = vunpack.c.l.b16 %v346
      %v780 = vunpack.c.l.b16 %v347
      %v781 = vunpack.c.l.b16 %v348
      %v782 = vunpack.c.l.b16 %v349
      %v783 = vunpack.c.l.b16 %v350
      %v784 = vpack.c.b16 %v753, %v752
      %v785 = vpack.c.b16 %v755, %v754
      %v786 = vpack.c.b16 %v757, %v756
      %v787 = vpack.c.b16 %v759, %v758
      %v788 = vpack.c.b16 %v761, %v760
      %v789 = vpack.c.b16 %v763, %v762
      %v790 = vpack.c.b16 %v765, %v764
      %v791 = vpack.c.b16 %v767, %v766
      %v792 = vpack.c.b16 %v769, %v768
      %v793 = vpack.c.b16 %v771, %v770
      %v794 = vpack.c.b16 %v773, %v772
      %v795 = vpack.c.b16 %v775, %v774
      %v796 = vpack.c.b16 %v777, %v776
      %v797 = vpack.c.b16 %v779, %v778
      %v798 = vpack.c.b16 %v781, %v780
      %v799 = vpack.c.b16 %v783, %v782
      %v832 = vunpack.c.l.b16 %v351
      %v833 = vunpack.c.l.b16 %v352
      %v834 = vunpack.c.l.b16 %v353
      %v835 = vunpack.c.l.b16 %v354
      %v836 = vunpack.c.l.b16 %v355
      %v837 = vunpack.c.l.b16 %v356
      %v838 = vunpack.c.l.b16 %v357
      %v839 = vunpack.c.l.b16 %v358
      %v840 = vunpack.c.l.b16 %v359
      %v841 = vunpack.c.l.b16 %v360
      %v842 = vunpack.c.l.b16 %v361
      %v843 = vunpack.c.l.b16 %v362
      %v844 = vunpack.c.l.b16 %v363
      %v845 = vunpack.c.l.b16 %v364
      %v846 = vunpack.c.l.b16 %v365
      %v847 = vunpack.c.l.b16 %v366
      %v848 = vpack.c.b16 %v833, %v832
      %v849 = vpack.c.b16 %v835, %v834
      %v850 = vpack.c.b16 %v837, %v836
      %v851 = vpack.c.b16 %v839, %v838
      %v852 = vpack.c.b16 %v841, %v840
      %v853 = vpack.c.b16 %v843, %v842
      %v854 = vpack.c.b16 %v845, %v844
      %v855 = vpack.c.b16 %v847, %v846
      %864 = vmatprep.subr.bf16.mxu0 0
      %865 = vmatpush1.bf16.msra.mxu0 %v848
      %866 = vmatprep.subr.bf16.mxu0 0
      %867 = vmatpush1.bf16.msra.mxu0 %v849
      %868 = vmatprep.subr.bf16.mxu0 0
      %869 = vmatpush1.bf16.msra.mxu0 %v850
      %870 = vmatprep.subr.bf16.mxu0 0
      %871 = vmatpush1.bf16.msra.mxu0 %v851
      %872 = vmatprep.subr.bf16.mxu0 0
      %873 = vmatpush1.bf16.msra.mxu0 %v852
      %874 = vmatprep.subr.bf16.mxu0 0
      %875 = vmatpush1.bf16.msra.mxu0 %v853
      %876 = vmatprep.subr.bf16.mxu0 0
      %877 = vmatpush1.bf16.msra.mxu0 %v854
      %878 = vmatprep.subr.bf16.mxu0 0
      %879 = vmatpush1.bf16.msra.mxu0 %v855
      %880 = vmatprep.subr.bf16.mxu0 0
      %881 = vmatpush1.bf16.msra.mxu0 0
      %882 = vmatprep.subr.bf16.mxu0 0
      %883 = vmatpush1.bf16.msra.mxu0 0
      %884 = vmatprep.subr.bf16.mxu0 0
      %885 = vmatpush1.bf16.msra.mxu0 0
      %886 = vmatprep.subr.bf16.mxu0 0
      %887 = vmatpush1.bf16.msra.mxu0 0
      %888 = vmatprep.subr.bf16.mxu0 0
      %889 = vmatpush1.bf16.msra.mxu0 0
      %890 = vmatprep.subr.bf16.mxu0 0
      %891 = vmatpush1.bf16.msra.mxu0 0
      %892 = vmatprep.subr.bf16.mxu0 0
      %893 = vmatpush1.bf16.msra.mxu0 0
      %894 = vmatprep.subr.bf16.mxu0 0
      %895 = vmatpush1.bf16.msra.mxu0 0
      %896 = vmatprep.mubr.bf16.mxu0 0
      %897 = vmatmul.mubr.bf16.gmra.mrb[0].mxu0 %v784
      %v898 = vpop.f32.mrb[0].mxu0
      %v899 = vadd.f32 %v594, %v898
      %v900 = vpop.f32.mrb[0].mxu0
      %v901 = vpop.f32.mrb[0].mxu0
      %v902 = vadd.f32 %v597, %v901
      %v903 = vpop.f32.mrb[0].mxu0
      %904 = vmatprep.mubr.bf16.mxu0 0
      %905 = vmatmul.mubr.bf16.gmra.mrb[0].mxu0 %v785
      %v906 = vpop.f32.mrb[0].mxu0
      %v907 = vadd.f32 %v602, %v906
      %v908 = vpop.f32.mrb[0].mxu0
      %v909 = vpop.f32.mrb[0].mxu0
      %v910 = vadd.f32 %v605, %v909
      %v911 = vpop.f32.mrb[0].mxu0
      %912 = vmatprep.mubr.bf16.mxu0 0
      %913 = vmatmul.mubr.bf16.gmra.mrb[0].mxu0 %v786
      %v914 = vpop.f32.mrb[0].mxu0
      %v915 = vadd.f32 %v610, %v914
      %v916 = vpop.f32.mrb[0].mxu0
      %v917 = vpop.f32.mrb[0].mxu0
      %v918 = vadd.f32 %v613, %v917
      %v919 = vpop.f32.mrb[0].mxu0
      %920 = vmatprep.mubr.bf16.mxu0 0
      %921 = vmatmul.mubr.bf16.gmra.mrb[0].mxu0 %v787
      %v922 = vpop.f32.mrb[0].mxu0
      %v923 = vadd.f32 %v618, %v922
      %v924 = vpop.f32.mrb[0].mxu0
      %v925 = vpop.f32.mrb[0].mxu0
      %v926 = vadd.f32 %v621, %v925
      %v927 = vpop.f32.mrb[0].mxu0
      %928 = vmatprep.mubr.bf16.mxu0 0
      %929 = vmatmul.mubr.bf16.gmra.mrb[0].mxu0 %v788
      %v930 = vpop.f32.mrb[0].mxu0
      %v931 = vadd.f32 %v626, %v930
      %v932 = vpop.f32.mrb[0].mxu0
      %v933 = vpop.f32.mrb[0].mxu0
      %v934 = vadd.f32 %v629, %v933
      %v935 = vpop.f32.mrb[0].mxu0
      %936 = vmatprep.mubr.bf16.mxu0 0
      %937 = vmatmul.mubr.bf16.gmra.mrb[0].mxu0 %v789
      %v938 = vpop.f32.mrb[0].mxu0
      %v939 = vadd.f32 %v634, %v938
      %v940 = vpop.f32.mrb[0].mxu0
      %v941 = vpop.f32.mrb[0].mxu0
      %v942 = vadd.f32 %v637, %v941
      %v943 = vpop.f32.mrb[0].mxu0
      %944 = vmatprep.mubr.bf16.mxu0 0
      %945 = vmatmul.mubr.bf16.gmra.mrb[0].mxu0 %v790
      %v946 = vpop.f32.mrb[0].mxu0
      %v947 = vadd.f32 %v642, %v946
      %v948 = vpop.f32.mrb[0].mxu0
      %v949 = vpop.f32.mrb[0].mxu0
      %v950 = vadd.f32 %v645, %v949
      %v951 = vpop.f32.mrb[0].mxu0
      %952 = vmatprep.mubr.bf16.mxu0 0
      %953 = vmatmul.mubr.bf16.gmra.mrb[0].mxu0 %v791
      %v954 = vpop.f32.mrb[0].mxu0
      %v955 = vadd.f32 %v650, %v954
      %v956 = vpop.f32.mrb[0].mxu0
      %v957 = vpop.f32.mrb[0].mxu0
      %v958 = vadd.f32 %v653, %v957
      %v959 = vpop.f32.mrb[0].mxu0
      %960 = vmatprep.mubr.bf16.mxu0 0
      %961 = vmatmul.mubr.bf16.gmra.mrb[0].mxu0 %v792
      %v962 = vpop.f32.mrb[0].mxu0
      %v963 = vadd.f32 %v658, %v962
      %v964 = vpop.f32.mrb[0].mxu0
      %v965 = vpop.f32.mrb[0].mxu0
      %v966 = vadd.f32 %v661, %v965
      %v967 = vpop.f32.mrb[0].mxu0
      %968 = vmatprep.mubr.bf16.mxu0 0
      %969 = vmatmul.mubr.bf16.gmra.mrb[0].mxu0 %v793
      %v970 = vpop.f32.mrb[0].mxu0
      %v971 = vadd.f32 %v666, %v970
      %v972 = vpop.f32.mrb[0].mxu0
      %v973 = vpop.f32.mrb[0].mxu0
      %v974 = vadd.f32 %v669, %v973
      %v975 = vpop.f32.mrb[0].mxu0
      %976 = vmatprep.mubr.bf16.mxu0 0
      %977 = vmatmul.mubr.bf16.gmra.mrb[0].mxu0 %v794
      %v978 = vpop.f32.mrb[0].mxu0
      %v979 = vadd.f32 %v674, %v978
      %v980 = vpop.f32.mrb[0].mxu0
      %v981 = vpop.f32.mrb[0].mxu0
      %v982 = vadd.f32 %v677, %v981
      %v983 = vpop.f32.mrb[0].mxu0
      %984 = vmatprep.mubr.bf16.mxu0 0
      %985 = vmatmul.mubr.bf16.gmra.mrb[0].mxu0 %v795
      %v986 = vpop.f32.mrb[0].mxu0
      %v987 = vadd.f32 %v682, %v986
      %v988 = vpop.f32.mrb[0].mxu0
      %v989 = vpop.f32.mrb[0].mxu0
      %v990 = vadd.f32 %v685, %v989
      %v991 = vpop.f32.mrb[0].mxu0
      %992 = vmatprep.mubr.bf16.mxu0 0
      %993 = vmatmul.mubr.bf16.gmra.mrb[0].mxu0 %v796
      %v994 = vpop.f32.mrb[0].mxu0
      %v995 = vadd.f32 %v690, %v994
      %v996 = vpop.f32.mrb[0].mxu0
      %v997 = vpop.f32.mrb[0].mxu0
      %v998 = vadd.f32 %v693, %v997
      %v999 = vpop.f32.mrb[0].mxu0
      %1000 = vmatprep.mubr.bf16.mxu0 0
      %1001 = vmatmul.mubr.bf16.gmra.mrb[0].mxu0 %v797
      %v1002 = vpop.f32.mrb[0].mxu0
      %v1003 = vadd.f32 %v698, %v1002
      %v1004 = vpop.f32.mrb[0].mxu0
      %v1005 = vpop.f32.mrb[0].mxu0
      %v1006 = vadd.f32 %v701, %v1005
      %v1007 = vpop.f32.mrb[0].mxu0
      %1008 = vmatprep.mubr.bf16.mxu0 0
      %1009 = vmatmul.mubr.bf16.gmra.mrb[0].mxu0 %v798
      %v1010 = vpop.f32.mrb[0].mxu0
      %v1011 = vadd.f32 %v706, %v1010
      %v1012 = vpop.f32.mrb[0].mxu0
      %v1013 = vpop.f32.mrb[0].mxu0
      %v1014 = vadd.f32 %v709, %v1013
      %v1015 = vpop.f32.mrb[0].mxu0
      %1016 = vmatprep.mubr.bf16.mxu0 0
      %1017 = vmatmul.mubr.bf16.gmra.mrb[0].mxu0 %v799
      %v1018 = vpop.f32.mrb[0].mxu0
      %v1019 = vadd.f32 %v714, %v1018
      %v1020 = vpop.f32.mrb[0].mxu0
      %v1021 = vpop.f32.mrb[0].mxu0
      %v1022 = vadd.f32 %v717, %v1021
      %v1023 = vpop.f32.mrb[0].mxu0
      %1024 = vdwg.mxu0
      %v1025 = vld [vmem:[%s308] sm:$0x1]
      %v1027 = vlaneseq
      %v1028 = vshrl.u32 %v1027, 7
      %v1029 = vsub.s32 0, %v1028
      %v1030 = vrot.slane %v1025, %v1029
      %v1032 = vadd.f32 %v899, %v1030
      %v1033 = vadd.f32 %v902, %v1030
      %v1034 = vadd.f32 %v907, %v1030
      %v1035 = vadd.f32 %v910, %v1030
      %v1036 = vadd.f32 %v915, %v1030
      %v1037 = vadd.f32 %v918, %v1030
      %v1038 = vadd.f32 %v923, %v1030
      %v1039 = vadd.f32 %v926, %v1030
      %v1040 = vadd.f32 %v931, %v1030
      %v1041 = vadd.f32 %v934, %v1030
      %v1042 = vadd.f32 %v939, %v1030
      %v1043 = vadd.f32 %v942, %v1030
      %v1044 = vadd.f32 %v947, %v1030
      %v1045 = vadd.f32 %v950, %v1030
      %v1046 = vadd.f32 %v955, %v1030
      %v1047 = vadd.f32 %v958, %v1030
      %v1048 = vadd.f32 %v963, %v1030
      %v1049 = vadd.f32 %v966, %v1030
      %v1050 = vadd.f32 %v971, %v1030
      %v1051 = vadd.f32 %v974, %v1030
      %v1052 = vadd.f32 %v979, %v1030
      %v1053 = vadd.f32 %v982, %v1030
      %v1054 = vadd.f32 %v987, %v1030
      %v1055 = vadd.f32 %v990, %v1030
      %v1056 = vadd.f32 %v995, %v1030
      %v1057 = vadd.f32 %v998, %v1030
      %v1058 = vadd.f32 %v1003, %v1030
      %v1059 = vadd.f32 %v1006, %v1030
      %v1060 = vadd.f32 %v1011, %v1030
      %v1061 = vadd.f32 %v1014, %v1030
      %v1062 = vadd.f32 %v1019, %v1030
      %v1063 = vadd.f32 %v1022, %v1030
      %v1064 = vmax.f32 %v1032, 0.0
      %v1065 = vmax.f32 %v1033, 0.0
      %v1066 = vmax.f32 %v1034, 0.0
      %v1067 = vmax.f32 %v1035, 0.0
      %v1068 = vmax.f32 %v1036, 0.0
      %v1069 = vmax.f32 %v1037, 0.0
      %v1070 = vmax.f32 %v1038, 0.0
      %v1071 = vmax.f32 %v1039, 0.0
      %v1072 = vmax.f32 %v1040, 0.0
      %v1073 = vmax.f32 %v1041, 0.0
      %v1074 = vmax.f32 %v1042, 0.0
      %v1075 = vmax.f32 %v1043, 0.0
      %v1076 = vmax.f32 %v1044, 0.0
      %v1077 = vmax.f32 %v1045, 0.0
      %v1078 = vmax.f32 %v1046, 0.0
      %v1079 = vmax.f32 %v1047, 0.0
      %v1080 = vmax.f32 %v1048, 0.0
      %v1081 = vmax.f32 %v1049, 0.0
      %v1082 = vmax.f32 %v1050, 0.0
      %v1083 = vmax.f32 %v1051, 0.0
      %v1084 = vmax.f32 %v1052, 0.0
      %v1085 = vmax.f32 %v1053, 0.0
      %v1086 = vmax.f32 %v1054, 0.0
      %v1087 = vmax.f32 %v1055, 0.0
      %v1088 = vmax.f32 %v1056, 0.0
      %v1089 = vmax.f32 %v1057, 0.0
      %v1090 = vmax.f32 %v1058, 0.0
      %v1091 = vmax.f32 %v1059, 0.0
      %v1092 = vmax.f32 %v1060, 0.0
      %v1093 = vmax.f32 %v1061, 0.0
      %v1094 = vmax.f32 %v1062, 0.0
      %v1095 = vmax.f32 %v1063, 0.0
      %1096 = vst [vmem:[%s316] sm:$0xff] %v1064
      %1097 = vst [vmem:[%s316 + $0x8] sm:$0xff] %v1065
      %1098 = vst [vmem:[%s316 + $0x10] sm:$0xff] %v1066
      %1099 = vst [vmem:[%s316 + $0x18] sm:$0xff] %v1067
      %1100 = vst [vmem:[%s316 + $0x20] sm:$0xff] %v1068
      %1101 = vst [vmem:[%s316 + $0x28] sm:$0xff] %v1069
      %1102 = vst [vmem:[%s316 + $0x30] sm:$0xff] %v1070
      %1103 = vst [vmem:[%s316 + $0x38] sm:$0xff] %v1071
      %1104 = vst [vmem:[%s316 + $0x40] sm:$0xff] %v1072
      %1105 = vst [vmem:[%s316 + $0x48] sm:$0xff] %v1073
      %1106 = vst [vmem:[%s316 + $0x50] sm:$0xff] %v1074
      %1107 = vst [vmem:[%s316 + $0x58] sm:$0xff] %v1075
      %1108 = vst [vmem:[%s316 + $0x60] sm:$0xff] %v1076
      %1109 = vst [vmem:[%s316 + $0x68] sm:$0xff] %v1077
      %1110 = vst [vmem:[%s316 + $0x70] sm:$0xff] %v1078
      %1111 = vst [vmem:[%s316 + $0x78] sm:$0xff] %v1079
      %1112 = vst [vmem:[%s316 + $0x80] sm:$0xff] %v1080
      %1113 = vst [vmem:[%s316 + $0x88] sm:$0xff] %v1081
      %1114 = vst [vmem:[%s316 + $0x90] sm:$0xff] %v1082
      %1115 = vst [vmem:[%s316 + $0x98] sm:$0xff] %v1083
      %1116 = vst [vmem:[%s316 + $0xa0] sm:$0xff] %v1084
      %1117 = vst [vmem:[%s316 + $0xa8] sm:$0xff] %v1085
      %1118 = vst [vmem:[%s316 + $0xb0] sm:$0xff] %v1086
      %1119 = vst [vmem:[%s316 + $0xb8] sm:$0xff] %v1087
      %1120 = vst [vmem:[%s316 + $0xc0] sm:$0xff] %v1088
      %1121 = vst [vmem:[%s316 + $0xc8] sm:$0xff] %v1089
      %1122 = vst [vmem:[%s316 + $0xd0] sm:$0xff] %v1090
      %1123 = vst [vmem:[%s316 + $0xd8] sm:$0xff] %v1091
      %1124 = vst [vmem:[%s316 + $0xe0] sm:$0xff] %v1092
      %1125 = vst [vmem:[%s316 + $0xe8] sm:$0xff] %v1093
      %1126 = vst [vmem:[%s316 + $0xf0] sm:$0xff] %v1094
      %1127 = vst [vmem:[%s316 + $0xf8] sm:$0xff] %v1095
      %s1128 = smul.u32 32, %s20
      %p1129 = scmp.lt.s32.totalorder %s1128, 63
      %s1130 = scalar_select %p1129, %s1128, 63
      %p1131 = scmp.lt.s32.totalorder %s21, 0
      %s1132 = scalar_select %p1131, %s21, 0
      %s1133 = sadd.s32 %s1132, %s1130
      %s1134 = smul.addr %s1133, 8
      %s1135 = scalar_lea.vmem %s5, %s1134
      // Predicated region
      $region41: #{ocr_forward.21} parent=39 // pred_check
        %p1136 = pneg %p178
      $region42: #{ocr_forward.21} parent=39 // pred_check_branch
        %1138 = sbr.rel (%p1136) target = $region44
      $region43: #{ocr_forward.21} parent=39 // pred_region
        %s1139 = smul.u32 32, %s20
      $region44: #{ocr_forward.21} parent=39 // pred_fallthru
        _
    $region40: #{ocr_forward.21} parent=5 // pred_fallthru
      _
    %p1140 = scmp.le.s32.totalorder 2, %s11
    // Predicated region
    $region45: #{ocr_forward.21} parent=5 // pred_check
      %p1141 = pneg %p1140
    $region46: #{ocr_forward.21} parent=5 // pred_check_branch
      %1143 = sbr.rel (%p1141) target = $region48
    $region47: #{ocr_forward.21} parent=5 // pred_region
      %s1144 = ssub.s32 %s11, 2
      // Predicated region
      $region49: #{ocr_forward.21} parent=47 // pred_check
        %p1145 = pneg %p184
      $region50: #{ocr_forward.21} parent=47 // pred_check_branch
        %1147 = sbr.rel (%p1145) target = $region52
      $region51: #{ocr_forward.21} parent=47 // pred_region
        %s1148 = smul.u32 32, %s22
        %p1149 = scmp.lt.s32.totalorder %s1148, 63
        %s1150 = scalar_select %p1149, %s1148, 63
        %p1151 = scmp.lt.s32.totalorder %s23, 0
        %s1152 = scalar_select %p1151, %s23, 0
        %s1153 = sadd.s32 %s1152, %s1150
        %s1154 = smul.addr %s1153, 8
        %s1155 = scalar_lea.vmem %s5, %s1154
      $region52: #{ocr_forward.21} parent=47 // pred_fallthru
        _
    $region48: #{ocr_forward.21} parent=5 // pred_fallthru
      _
  $region6: #{ocr_forward.21} parent=0 // loop_footer
    %s15 = sadd.s32 1, %s11
  $region7: #{ocr_forward.21} parent=0 // loop_footer_branch
    %10 = sbr.rel target = $region3
  $region8: #{ocr_forward.21} parent=0 // loop_exit
    _

// kernel: ocr_forward.22
$region0: #{ocr_forward.22}
  #allocation0 [shape = 'u32[]', space=smem, size = 0x4, offset = 0x4, fixed_abs, tag = 'smem constant byte address 0x4 - core index']
  #allocation1 [shape = 'u32[144,128]{1,0:T(1,128)}', space=vmem, size = 0x12000, scoped, tag = 'internal scratch']
  #allocation2 [shape = 'f32[256,128]{1,0:T(8,128)}', space=vmem, size = 0x20000, scoped, tag = 'scratch operand']
  %s0 = inlined_call_operand.vmem [shape: bf16[512,128], index: 0, kind: input, shape index: {}]
  %s1 = inlined_call_operand.vmem [shape: bf16[128,128], index: 1, kind: input, shape index: {}]
  %s2 = inlined_call_operand.vmem [shape: f32[1,128], index: 2, kind: input, shape index: {}]
  %s3 = inlined_call_operand.vmem [shape: f32[512,128], index: 3, kind: output, shape index: {}]
  %s4 = sld [smem:[#allocation0]]
  $region45: #{ocr_forward.22} parent=0
    _
  %s6 = ssub.s32 1, %s4
  %s7 = scalar_select 0, %s6, %s4
  loop: start=0, step=1, limit=4
  $region2: #{ocr_forward.22} parent=0 // loop_pre_header
    _
  $region3: #{ocr_forward.22} parent=0 // loop_header
    %s9 = sphi 0, %s13
    %p10 = scmp.ge.s32.totalorder %s9, 4
    %s16 = sphi 0, %s35
    %s17 = sphi 0, %s31
    %s18 = sphi 0, %s27
    %s19 = sphi 0, %s16
    %s20 = sphi 0, %s17
    %s21 = sphi 0, %s18
    %s22 = sphi 0, %s19
    %s23 = sphi 0, %s20
    %s24 = sphi 0, %s21
    %s40 = sphi 0, %s42
    %s43 = sphi 0, %s40
    %s44 = sphi 0, %s43
    %s60 = sphi 0, %s44
    %s68 = sphi 0, %s70
    %s71 = sphi 0, %s68
    %s72 = sphi 0, %s71
    %s88 = sphi 0, %s72
    %s94 = sphi 0, %s96
    %s97 = sphi 0, %s94
    %s98 = sphi 0, %s97
    %s114 = sphi 0, %s98
    %s122 = sphi 0, %s124
    %s125 = sphi 0, %s122
    %s126 = sphi 0, %s125
    %s142 = sphi 0, %s126
  $region4: #{ocr_forward.22} parent=0 // loop_header_branch
    %12 = sbr.rel (%p10) target = $region8
  $region5: #{ocr_forward.22} parent=0 // loop_body
    %s14 = ssub.s32 %s9, 1
    %s15 = ssub.s32 %s9, 2
    %s25 = sadd.s32 1, %s18
    %p26 = scmp.ge.s32.totalorder %s25, 1
    %s27 = scalar_select %p26, 0, %s25
    %s28 = sadd.s32 1, %s17
    %s29 = scalar_select %p26, %s28, %s17
    %p30 = scmp.ge.s32.totalorder %s29, 1
    %s31 = scalar_select %p30, 0, %s29
    %s32 = sadd.s32 1, %s16
    %s33 = scalar_select %p30, %s32, %s16
    %p34 = scmp.ge.s32.totalorder %s33, 2
    %s35 = scalar_select %p34, 0, %s33
    %s36 = ssub.s32 %s16, %s35
    %s37 = ssub.s32 %s18, %s27
    %s38 = sor.u32 %s36, %s37
    %p39 = scmp.eq.s32.totalorder %s38, 0
    %s41 = sadd.s32 %s40, 1
    %s42 = scalar_select %p39, %s40, %s41
    %p45 = pneg %p39
    %p46 = scmp.eq.s32.totalorder %s9, 1
    %p47 = por %p45, %p46
    %p48 = scmp.ne.s32.totalorder %s40, %s43
    %p49 = scmp.eq.s32.totalorder %s9, 0
    %p50 = por %p48, %p49
    %p51 = scmp.ne.s32.totalorder %s40, %s43
    %p52 = scmp.eq.s32.totalorder %s14, 1
    %p53 = por %p51, %p52
    %p54 = scmp.ne.s32.totalorder %s43, %s44
    %p55 = scmp.eq.s32.totalorder %s14, 0
    %p56 = por %p54, %p55
    %p57 = scmp.ne.s32.totalorder %s43, %s44
    %p58 = scmp.eq.s32.totalorder %s15, 1
    %p59 = por %p57, %p58
    %p61 = scmp.ne.s32.totalorder %s44, %s60
    %p62 = scmp.eq.s32.totalorder %s15, 0
    %p63 = por %p61, %p62
    %s64 = ssub.s32 %s18, %s27
    %s65 = ssub.s32 %s17, %s31
    %s66 = sor.u32 %s64, %s65
    %p67 = scmp.eq.s32.totalorder %s66, 0
    %s69 = sadd.s32 %s68, 1
    %s70 = scalar_select %p67, %s68, %s69
    %p73 = pneg %p67
    %p74 = scmp.eq.s32.totalorder %s9, 1
    %p75 = por %p73, %p74
    %p76 = scmp.ne.s32.totalorder %s68, %s71
    %p77 = scmp.eq.s32.totalorder %s9, 0
    %p78 = por %p76, %p77
    %p79 = scmp.ne.s32.totalorder %s68, %s71
    %p80 = scmp.eq.s32.totalorder %s14, 1
    %p81 = por %p79, %p80
    %p82 = scmp.ne.s32.totalorder %s71, %s72
    %p83 = scmp.eq.s32.totalorder %s14, 0
    %p84 = por %p82, %p83
    %p85 = scmp.ne.s32.totalorder %s71, %s72
    %p86 = scmp.eq.s32.totalorder %s15, 1
    %p87 = por %p85, %p86
    %p89 = scmp.ne.s32.totalorder %s72, %s88
    %p90 = scmp.eq.s32.totalorder %s15, 0
    %p91 = por %p89, %p90
    %s92 = ssub.s32 %s17, %s31
    %p93 = scmp.eq.s32.totalorder %s92, 0
    %s95 = sadd.s32 %s94, 1
    %s96 = scalar_select %p93, %s94, %s95
    %p99 = pneg %p93
    %p100 = scmp.eq.s32.totalorder %s9, 1
    %p101 = por %p99, %p100
    %p102 = scmp.ne.s32.totalorder %s94, %s97
    %p103 = scmp.eq.s32.totalorder %s9, 0
    %p104 = por %p102, %p103
    %p105 = scmp.ne.s32.totalorder %s94, %s97
    %p106 = scmp.eq.s32.totalorder %s14, 1
    %p107 = por %p105, %p106
    %p108 = scmp.ne.s32.totalorder %s97, %s98
    %p109 = scmp.eq.s32.totalorder %s14, 0
    %p110 = por %p108, %p109
    %p111 = scmp.ne.s32.totalorder %s97, %s98
    %p112 = scmp.eq.s32.totalorder %s15, 1
    %p113 = por %p111, %p112
    %p115 = scmp.ne.s32.totalorder %s98, %s114
    %p116 = scmp.eq.s32.totalorder %s15, 0
    %p117 = por %p115, %p116
    %s118 = ssub.s32 %s16, %s35
    %s119 = ssub.s32 %s17, %s31
    %s120 = sor.u32 %s118, %s119
    %p121 = scmp.eq.s32.totalorder %s120, 0
    %s123 = sadd.s32 %s122, 1
    %s124 = scalar_select %p121, %s122, %s123
    %p127 = pneg %p121
    %p128 = scmp.eq.s32.totalorder %s9, 1
    %p129 = por %p127, %p128
    %p130 = scmp.ne.s32.totalorder %s122, %s125
    %p131 = scmp.eq.s32.totalorder %s9, 0
    %p132 = por %p130, %p131
    %p133 = scmp.ne.s32.totalorder %s122, %s125
    %p134 = scmp.eq.s32.totalorder %s14, 1
    %p135 = por %p133, %p134
    %p136 = scmp.ne.s32.totalorder %s125, %s126
    %p137 = scmp.eq.s32.totalorder %s14, 0
    %p138 = por %p136, %p137
    %p139 = scmp.ne.s32.totalorder %s125, %s126
    %p140 = scmp.eq.s32.totalorder %s15, 1
    %p141 = por %p139, %p140
    %p143 = scmp.ne.s32.totalorder %s126, %s142
    %p144 = scmp.eq.s32.totalorder %s15, 0
    %p145 = por %p143, %p144
    %p146 = scmp.le.s32.totalorder 1, %s9
    %p147 = scmp.lt.s32.totalorder %s9, 3
    %p148 = pnand %p146, %p147
    %p149 = pneg %p148
    // Predicated region
    $region9: #{ocr_forward.22} parent=5 // pred_check
      _
    $region10: #{ocr_forward.22} parent=5 // pred_check_branch
      %151 = sbr.rel (%p148) target = $region12
    $region11: #{ocr_forward.22} parent=5 // pred_region
      %s152 = ssub.s32 %s9, 1
      // Predicated region
      $region13: #{ocr_forward.22} parent=11 // pred_check
        %p153 = pneg %p84
      $region14: #{ocr_forward.22} parent=11 // pred_check_branch
        %155 = sbr.rel (%p153) target = $region16
      $region15: #{ocr_forward.22} parent=11 // pred_region
        %s156 = smul.u32 16, %s21
        %p157 = scmp.lt.s32.totalorder %s156, 15
        %s158 = scalar_select %p157, %s156, 15
        %p159 = scmp.lt.s32.totalorder %s20, 0
        %s160 = scalar_select %p159, %s20, 0
        %s161 = sadd.s32 %s160, %s158
        %s162 = smul.addr %s161, 4
        %s163 = scalar_lea.vmem %s1, %s162
        %s164 = smul.u32 16, %s21
      $region16: #{ocr_forward.22} parent=11 // pred_fallthru
        _
      // Predicated region
      $region17: #{ocr_forward.22} parent=11 // pred_check
        %p165 = pneg %p110
      $region18: #{ocr_forward.22} parent=11 // pred_check_branch
        %167 = sbr.rel (%p165) target = $region20
      $region19: #{ocr_forward.22} parent=11 // pred_region
        %p168 = scmp.lt.s32.totalorder %s20, 0
        %s169 = scalar_select %p168, %s20, 0
        %s170 = scalar_lea.vmem %s2, %s169
      $region20: #{ocr_forward.22} parent=11 // pred_fallthru
        _
    $region12: #{ocr_forward.22} parent=5 // pred_fallthru
      _
    %p171 = scmp.lt.s32.totalorder %s9, 2
    // Predicated region
    $region21: #{ocr_forward.22} parent=5 // pred_check
      %p172 = pneg %p171
    $region22: #{ocr_forward.22} parent=5 // pred_check_branch
      %174 = sbr.rel (%p172) target = $region24
    $region23: #{ocr_forward.22} parent=5 // pred_region
      // Predicated region
      $region25: #{ocr_forward.22} parent=23 // pred_check
        %p175 = pneg %p50
      $region26: #{ocr_forward.22} parent=23 // pred_check_branch
        %177 = sbr.rel (%p175) target = $region28
      $region27: #{ocr_forward.22} parent=23 // pred_region
        %s178 = smul.u32 32, %s16
        %p179 = scmp.lt.s32.totalorder %s178, 63
        %s180 = scalar_select %p179, %s178, 63
        %p181 = scmp.lt.s32.totalorder %s18, 0
        %s182 = scalar_select %p181, %s18, 0
        %s183 = sadd.s32 %s182, %s180
        %s184 = smul.addr %s183, 4
        %s185 = scalar_lea.vmem %s0, %s184
        %s186 = smul.u32 32, %s16
      $region28: #{ocr_forward.22} parent=23 // pred_fallthru
        _
    $region24: #{ocr_forward.22} parent=5 // pred_fallthru
      _
    %p187 = scmp.le.s32.totalorder 1, %s9
    %p188 = scmp.lt.s32.totalorder %s9, 3
    %p189 = pnand %p187, %p188
    %p190 = pneg %p189
    // Predicated region
    $region29: #{ocr_forward.22} parent=5 // pred_check
      _
    $region30: #{ocr_forward.22} parent=5 // pred_check_branch
      %192 = sbr.rel (%p189) target = $region32
    $region31: #{ocr_forward.22} parent=5 // pred_region
      %s193 = ssub.s32 %s9, 1
      %s194 = smul.u32 32, %s19
      %p195 = scmp.lt.s32.totalorder %s194, 63
      %s196 = scalar_select %p195, %s194, 63
      %p197 = scmp.lt.s32.totalorder %s21, 0
      %s198 = scalar_select %p197, %s21, 0
      %s199 = sadd.s32 %s198, %s196
      %s200 = smul.addr %s199, 4
      %s201 = scalar_lea.vmem %s0, %s200
      %p202 = pneg %p56
      %p203 = pneg %p53
      %s204 = smul.u32 16, %s21
      %p205 = scmp.lt.s32.totalorder %s204, 15
      %s206 = scalar_select %p205, %s204, 15
      %p207 = scmp.lt.s32.totalorder %s20, 0
      %s208 = scalar_select %p207, %s20, 0
      %s209 = sadd.s32 %s208, %s206
      %s210 = smul.addr %s209, 4
      %s211 = scalar_lea.vmem %s1, %s210
      %p212 = pneg %p84
      %p213 = pneg %p81
      %p214 = scmp.lt.s32.totalorder %s20, 0
      %s215 = scalar_select %p214, %s20, 0
      %s216 = scalar_lea.vmem %s2, %s215
      %p217 = pneg %p110
      %p218 = pneg %p107
      %p219 = pneg %p138
      %p220 = pneg %p135
      %s221 = smul.u32 32, %s19
      %p222 = scmp.lt.s32.totalorder %s221, 63
      %s223 = scalar_select %p222, %s221, 63
      %p224 = scmp.lt.s32.totalorder %s20, 0
      %s225 = scalar_select %p224, %s20, 0
      %s226 = sadd.s32 %s225, %s223
      %s227 = smul.addr %s226, 8
      %s228 = scalar_lea.vmem %s3, %s227
      %s229 = smul.u32 32, %s19
      %p230 = scmp.lt.s32.totalorder %s229, 63
      %s231 = scalar_select %p230, %s229, 63
      %p232 = scmp.lt.s32.totalorder %s21, 0
      %s233 = scalar_select %p232, %s21, 0
      %s234 = sadd.s32 %s233, %s231
      %s235 = smul.addr %s234, 4
      %s236 = scalar_lea.vmem %s0, %s235
      %s237 = smul.u32 32, %s19
      %s238 = smul.u32 16, %s21
      %p239 = scmp.lt.s32.totalorder %s238, 15
      %s240 = scalar_select %p239, %s238, 15
      %p241 = scmp.lt.s32.totalorder %s20, 0
      %s242 = scalar_select %p241, %s20, 0
      %s243 = sadd.s32 %s242, %s240
      %s244 = smul.addr %s243, 4
      %s245 = scalar_lea.vmem %s1, %s244
      %s246 = smul.u32 16, %s21
      %p247 = scmp.lt.s32.totalorder %s20, 0
      %s248 = scalar_select %p247, %s20, 0
      %s249 = scalar_lea.vmem %s2, %s248
      %s250 = smul.u32 32, %s19
      %p251 = scmp.lt.s32.totalorder %s250, 63
      %s252 = scalar_select %p251, %s250, 63
      %p253 = scmp.lt.s32.totalorder %s20, 0
      %s254 = scalar_select %p253, %s20, 0
      %s255 = sadd.s32 %s254, %s252
      %s256 = smul.addr %s255, 8
      %s257 = scalar_lea.vmem %s3, %s256
      %s258 = smul.u32 32, %s19
      %v260 = vld [vmem:[%s236] sm:$0xf]
      %v261 = vld [vmem:[%s236 + $0x4] sm:$0xf]
      %v262 = vld [vmem:[%s236 + $0x8] sm:$0xf]
      %v263 = vld [vmem:[%s236 + $0xc] sm:$0xf]
      %v264 = vld [vmem:[%s236 + $0x10] sm:$0xf]
      %v265 = vld [vmem:[%s236 + $0x14] sm:$0xf]
      %v266 = vld [vmem:[%s236 + $0x18] sm:$0xf]
      %v267 = vld [vmem:[%s236 + $0x1c] sm:$0xf]
      %v268 = vld [vmem:[%s236 + $0x20] sm:$0xf]
      %v269 = vld [vmem:[%s236 + $0x24] sm:$0xf]
      %v270 = vld [vmem:[%s236 + $0x28] sm:$0xf]
      %v271 = vld [vmem:[%s236 + $0x2c] sm:$0xf]
      %v272 = vld [vmem:[%s236 + $0x30] sm:$0xf]
      %v273 = vld [vmem:[%s236 + $0x34] sm:$0xf]
      %v274 = vld [vmem:[%s236 + $0x38] sm:$0xf]
      %v275 = vld [vmem:[%s236 + $0x3c] sm:$0xf]
      %v276 = vld [vmem:[%s236 + $0x40] sm:$0xf]
      %v277 = vld [vmem:[%s236 + $0x44] sm:$0xf]
      %v278 = vld [vmem:[%s236 + $0x48] sm:$0xf]
      %v279 = vld [vmem:[%s236 + $0x4c] sm:$0xf]
      %v280 = vld [vmem:[%s236 + $0x50] sm:$0xf]
      %v281 = vld [vmem:[%s236 + $0x54] sm:$0xf]
      %v282 = vld [vmem:[%s236 + $0x58] sm:$0xf]
      %v283 = vld [vmem:[%s236 + $0x5c] sm:$0xf]
      %v284 = vld [vmem:[%s236 + $0x60] sm:$0xf]
      %v285 = vld [vmem:[%s236 + $0x64] sm:$0xf]
      %v286 = vld [vmem:[%s236 + $0x68] sm:$0xf]
      %v287 = vld [vmem:[%s236 + $0x6c] sm:$0xf]
      %v288 = vld [vmem:[%s236 + $0x70] sm:$0xf]
      %v289 = vld [vmem:[%s236 + $0x74] sm:$0xf]
      %v290 = vld [vmem:[%s236 + $0x78] sm:$0xf]
      %v291 = vld [vmem:[%s236 + $0x7c] sm:$0xf]
      %v292 = vld [vmem:[%s245] sm:$0xf]
      %v293 = vld [vmem:[%s245 + $0x4] sm:$0xf]
      %v294 = vld [vmem:[%s245 + $0x8] sm:$0xf]
      %v295 = vld [vmem:[%s245 + $0xc] sm:$0xf]
      %v296 = vld [vmem:[%s245 + $0x10] sm:$0xf]
      %v297 = vld [vmem:[%s245 + $0x14] sm:$0xf]
      %v298 = vld [vmem:[%s245 + $0x18] sm:$0xf]
      %v299 = vld [vmem:[%s245 + $0x1c] sm:$0xf]
      %v300 = vld [vmem:[%s245 + $0x20] sm:$0xf]
      %v301 = vld [vmem:[%s245 + $0x24] sm:$0xf]
      %v302 = vld [vmem:[%s245 + $0x28] sm:$0xf]
      %v303 = vld [vmem:[%s245 + $0x2c] sm:$0xf]
      %v304 = vld [vmem:[%s245 + $0x30] sm:$0xf]
      %v305 = vld [vmem:[%s245 + $0x34] sm:$0xf]
      %v306 = vld [vmem:[%s245 + $0x38] sm:$0xf]
      %v307 = vld [vmem:[%s245 + $0x3c] sm:$0xf]
      %v308 = vld [vmem:[%s249] sm:$0x1]
      %v310 = vlaneseq
      %v311 = vshrl.u32 %v310, 7
      %v312 = vsub.s32 0, %v311
      %v313 = vrot.slane %v308, %v312
      %v347 = vunpack.c.l.b16 %v260
      %v348 = vunpack.c.l.b16 %v261
      %v349 = vunpack.c.l.b16 %v262
      %v350 = vunpack.c.l.b16 %v263
      %v351 = vunpack.c.l.b16 %v264
      %v352 = vunpack.c.l.b16 %v265
      %v353 = vunpack.c.l.b16 %v266
      %v354 = vunpack.c.l.b16 %v267
      %v355 = vunpack.c.l.b16 %v268
      %v356 = vunpack.c.l.b16 %v269
      %v357 = vunpack.c.l.b16 %v270
      %v358 = vunpack.c.l.b16 %v271
      %v359 = vunpack.c.l.b16 %v272
      %v360 = vunpack.c.l.b16 %v273
      %v361 = vunpack.c.l.b16 %v274
      %v362 = vunpack.c.l.b16 %v275
      %v363 = vunpack.c.l.b16 %v276
      %v364 = vunpack.c.l.b16 %v277
      %v365 = vunpack.c.l.b16 %v278
      %v366 = vunpack.c.l.b16 %v279
      %v367 = vunpack.c.l.b16 %v280
      %v368 = vunpack.c.l.b16 %v281
      %v369 = vunpack.c.l.b16 %v282
      %v370 = vunpack.c.l.b16 %v283
      %v371 = vunpack.c.l.b16 %v284
      %v372 = vunpack.c.l.b16 %v285
      %v373 = vunpack.c.l.b16 %v286
      %v374 = vunpack.c.l.b16 %v287
      %v375 = vunpack.c.l.b16 %v288
      %v376 = vunpack.c.l.b16 %v289
      %v377 = vunpack.c.l.b16 %v290
      %v378 = vunpack.c.l.b16 %v291
      %v379 = vpack.c.b16 %v348, %v347
      %v380 = vpack.c.b16 %v350, %v349
      %v381 = vpack.c.b16 %v352, %v351
      %v382 = vpack.c.b16 %v354, %v353
      %v383 = vpack.c.b16 %v356, %v355
      %v384 = vpack.c.b16 %v358, %v357
      %v385 = vpack.c.b16 %v360, %v359
      %v386 = vpack.c.b16 %v362, %v361
      %v387 = vpack.c.b16 %v364, %v363
      %v388 = vpack.c.b16 %v366, %v365
      %v389 = vpack.c.b16 %v368, %v367
      %v390 = vpack.c.b16 %v370, %v369
      %v391 = vpack.c.b16 %v372, %v371
      %v392 = vpack.c.b16 %v374, %v373
      %v393 = vpack.c.b16 %v376, %v375
      %v394 = vpack.c.b16 %v378, %v377
      %v427 = vunpack.c.l.b16 %v292
      %v428 = vunpack.c.l.b16 %v293
      %v429 = vunpack.c.l.b16 %v294
      %v430 = vunpack.c.l.b16 %v295
      %v431 = vunpack.c.l.b16 %v296
      %v432 = vunpack.c.l.b16 %v297
      %v433 = vunpack.c.l.b16 %v298
      %v434 = vunpack.c.l.b16 %v299
      %v435 = vunpack.c.l.b16 %v300
      %v436 = vunpack.c.l.b16 %v301
      %v437 = vunpack.c.l.b16 %v302
      %v438 = vunpack.c.l.b16 %v303
      %v439 = vunpack.c.l.b16 %v304
      %v440 = vunpack.c.l.b16 %v305
      %v441 = vunpack.c.l.b16 %v306
      %v442 = vunpack.c.l.b16 %v307
      %v443 = vpack.c.b16 %v428, %v427
      %v444 = vpack.c.b16 %v430, %v429
      %v445 = vpack.c.b16 %v432, %v431
      %v446 = vpack.c.b16 %v434, %v433
      %v447 = vpack.c.b16 %v436, %v435
      %v448 = vpack.c.b16 %v438, %v437
      %v449 = vpack.c.b16 %v440, %v439
      %v450 = vpack.c.b16 %v442, %v441
      %459 = vmatprep.subr.bf16.mxu0 0
      %460 = vmatpush1.bf16.msra.mxu0 %v443
      %461 = vmatprep.subr.bf16.mxu0 0
      %462 = vmatpush1.bf16.msra.mxu0 %v444
      %463 = vmatprep.subr.bf16.mxu0 0
      %464 = vmatpush1.bf16.msra.mxu0 %v445
      %465 = vmatprep.subr.bf16.mxu0 0
      %466 = vmatpush1.bf16.msra.mxu0 %v446
      %467 = vmatprep.subr.bf16.mxu0 0
      %468 = vmatpush1.bf16.msra.mxu0 %v447
      %469 = vmatprep.subr.bf16.mxu0 0
      %470 = vmatpush1.bf16.msra.mxu0 %v448
      %471 = vmatprep.subr.bf16.mxu0 0
      %472 = vmatpush1.bf16.msra.mxu0 %v449
      %473 = vmatprep.subr.bf16.mxu0 0
      %474 = vmatpush1.bf16.msra.mxu0 %v450
      %475 = vmatprep.subr.bf16.mxu0 0
      %476 = vmatpush1.bf16.msra.mxu0 0
      %477 = vmatprep.subr.bf16.mxu0 0
      %478 = vmatpush1.bf16.msra.mxu0 0
      %479 = vmatprep.subr.bf16.mxu0 0
      %480 = vmatpush1.bf16.msra.mxu0 0
      %481 = vmatprep.subr.bf16.mxu0 0
      %482 = vmatpush1.bf16.msra.mxu0 0
      %483 = vmatprep.subr.bf16.mxu0 0
      %484 = vmatpush1.bf16.msra.mxu0 0
      %485 = vmatprep.subr.bf16.mxu0 0
      %486 = vmatpush1.bf16.msra.mxu0 0
      %487 = vmatprep.subr.bf16.mxu0 0
      %488 = vmatpush1.bf16.msra.mxu0 0
      %489 = vmatprep.subr.bf16.mxu0 0
      %490 = vmatpush1.bf16.msra.mxu0 0
      %491 = vmatprep.mubr.bf16.mxu0 0
      %492 = vmatmul.mubr.bf16.gmra.mrb[0].mxu0 %v379
      %v493 = vpop.f32.mrb[0].mxu0
      %v494 = vadd.f32 %v313, %v493
      %v495 = vpop.f32.mrb[0].mxu0
      %v496 = vpop.f32.mrb[0].mxu0
      %v497 = vadd.f32 %v313, %v496
      %v498 = vpop.f32.mrb[0].mxu0
      %499 = vmatprep.mubr.bf16.mxu0 0
      %500 = vmatmul.mubr.bf16.gmra.mrb[0].mxu0 %v380
      %v501 = vpop.f32.mrb[0].mxu0
      %v502 = vadd.f32 %v313, %v501
      %v503 = vpop.f32.mrb[0].mxu0
      %v504 = vpop.f32.mrb[0].mxu0
      %v505 = vadd.f32 %v313, %v504
      %v506 = vpop.f32.mrb[0].mxu0
      %507 = vmatprep.mubr.bf16.mxu0 0
      %508 = vmatmul.mubr.bf16.gmra.mrb[0].mxu0 %v381
      %v509 = vpop.f32.mrb[0].mxu0
      %v510 = vadd.f32 %v313, %v509
      %v511 = vpop.f32.mrb[0].mxu0
      %v512 = vpop.f32.mrb[0].mxu0
      %v513 = vadd.f32 %v313, %v512
      %v514 = vpop.f32.mrb[0].mxu0
      %515 = vmatprep.mubr.bf16.mxu0 0
      %516 = vmatmul.mubr.bf16.gmra.mrb[0].mxu0 %v382
      %v517 = vpop.f32.mrb[0].mxu0
      %v518 = vadd.f32 %v313, %v517
      %v519 = vpop.f32.mrb[0].mxu0
      %v520 = vpop.f32.mrb[0].mxu0
      %v521 = vadd.f32 %v313, %v520
      %v522 = vpop.f32.mrb[0].mxu0
      %523 = vmatprep.mubr.bf16.mxu0 0
      %524 = vmatmul.mubr.bf16.gmra.mrb[0].mxu0 %v383
      %v525 = vpop.f32.mrb[0].mxu0
      %v526 = vadd.f32 %v313, %v525
      %v527 = vpop.f32.mrb[0].mxu0
      %v528 = vpop.f32.mrb[0].mxu0
      %v529 = vadd.f32 %v313, %v528
      %v530 = vpop.f32.mrb[0].mxu0
      %531 = vmatprep.mubr.bf16.mxu0 0
      %532 = vmatmul.mubr.bf16.gmra.mrb[0].mxu0 %v384
      %v533 = vpop.f32.mrb[0].mxu0
      %v534 = vadd.f32 %v313, %v533
      %v535 = vpop.f32.mrb[0].mxu0
      %v536 = vpop.f32.mrb[0].mxu0
      %v537 = vadd.f32 %v313, %v536
      %v538 = vpop.f32.mrb[0].mxu0
      %539 = vmatprep.mubr.bf16.mxu0 0
      %540 = vmatmul.mubr.bf16.gmra.mrb[0].mxu0 %v385
      %v541 = vpop.f32.mrb[0].mxu0
      %v542 = vadd.f32 %v313, %v541
      %v543 = vpop.f32.mrb[0].mxu0
      %v544 = vpop.f32.mrb[0].mxu0
      %v545 = vadd.f32 %v313, %v544
      %v546 = vpop.f32.mrb[0].mxu0
      %547 = vmatprep.mubr.bf16.mxu0 0
      %548 = vmatmul.mubr.bf16.gmra.mrb[0].mxu0 %v386
      %v549 = vpop.f32.mrb[0].mxu0
      %v550 = vadd.f32 %v313, %v549
      %v551 = vpop.f32.mrb[0].mxu0
      %v552 = vpop.f32.mrb[0].mxu0
      %v553 = vadd.f32 %v313, %v552
      %v554 = vpop.f32.mrb[0].mxu0
      %555 = vmatprep.mubr.bf16.mxu0 0
      %556 = vmatmul.mubr.bf16.gmra.mrb[0].mxu0 %v387
      %v557 = vpop.f32.mrb[0].mxu0
      %v558 = vadd.f32 %v313, %v557
      %v559 = vpop.f32.mrb[0].mxu0
      %v560 = vpop.f32.mrb[0].mxu0
      %v561 = vadd.f32 %v313, %v560
      %v562 = vpop.f32.mrb[0].mxu0
      %563 = vmatprep.mubr.bf16.mxu0 0
      %564 = vmatmul.mubr.bf16.gmra.mrb[0].mxu0 %v388
      %v565 = vpop.f32.mrb[0].mxu0
      %v566 = vadd.f32 %v313, %v565
      %v567 = vpop.f32.mrb[0].mxu0
      %v568 = vpop.f32.mrb[0].mxu0
      %v569 = vadd.f32 %v313, %v568
      %v570 = vpop.f32.mrb[0].mxu0
      %571 = vmatprep.mubr.bf16.mxu0 0
      %572 = vmatmul.mubr.bf16.gmra.mrb[0].mxu0 %v389
      %v573 = vpop.f32.mrb[0].mxu0
      %v574 = vadd.f32 %v313, %v573
      %v575 = vpop.f32.mrb[0].mxu0
      %v576 = vpop.f32.mrb[0].mxu0
      %v577 = vadd.f32 %v313, %v576
      %v578 = vpop.f32.mrb[0].mxu0
      %579 = vmatprep.mubr.bf16.mxu0 0
      %580 = vmatmul.mubr.bf16.gmra.mrb[0].mxu0 %v390
      %v581 = vpop.f32.mrb[0].mxu0
      %v582 = vadd.f32 %v313, %v581
      %v583 = vpop.f32.mrb[0].mxu0
      %v584 = vpop.f32.mrb[0].mxu0
      %v585 = vadd.f32 %v313, %v584
      %v586 = vpop.f32.mrb[0].mxu0
      %587 = vmatprep.mubr.bf16.mxu0 0
      %588 = vmatmul.mubr.bf16.gmra.mrb[0].mxu0 %v391
      %v589 = vpop.f32.mrb[0].mxu0
      %v590 = vadd.f32 %v313, %v589
      %v591 = vpop.f32.mrb[0].mxu0
      %v592 = vpop.f32.mrb[0].mxu0
      %v593 = vadd.f32 %v313, %v592
      %v594 = vpop.f32.mrb[0].mxu0
      %595 = vmatprep.mubr.bf16.mxu0 0
      %596 = vmatmul.mubr.bf16.gmra.mrb[0].mxu0 %v392
      %v597 = vpop.f32.mrb[0].mxu0
      %v598 = vadd.f32 %v313, %v597
      %v599 = vpop.f32.mrb[0].mxu0
      %v600 = vpop.f32.mrb[0].mxu0
      %v601 = vadd.f32 %v313, %v600
      %v602 = vpop.f32.mrb[0].mxu0
      %603 = vmatprep.mubr.bf16.mxu0 0
      %604 = vmatmul.mubr.bf16.gmra.mrb[0].mxu0 %v393
      %v605 = vpop.f32.mrb[0].mxu0
      %v606 = vadd.f32 %v313, %v605
      %v607 = vpop.f32.mrb[0].mxu0
      %v608 = vpop.f32.mrb[0].mxu0
      %v609 = vadd.f32 %v313, %v608
      %v610 = vpop.f32.mrb[0].mxu0
      %611 = vmatprep.mubr.bf16.mxu0 0
      %612 = vmatmul.mubr.bf16.gmra.mrb[0].mxu0 %v394
      %v613 = vpop.f32.mrb[0].mxu0
      %v614 = vadd.f32 %v313, %v613
      %v615 = vpop.f32.mrb[0].mxu0
      %v616 = vpop.f32.mrb[0].mxu0
      %v617 = vadd.f32 %v313, %v616
      %v618 = vpop.f32.mrb[0].mxu0
      %619 = vdwg.mxu0
      %620 = vst [vmem:[%s257] sm:$0xff] %v494
      %621 = vst [vmem:[%s257 + $0x8] sm:$0xff] %v497
      %622 = vst [vmem:[%s257 + $0x10] sm:$0xff] %v502
      %623 = vst [vmem:[%s257 + $0x18] sm:$0xff] %v505
      %624 = vst [vmem:[%s257 + $0x20] sm:$0xff] %v510
      %625 = vst [vmem:[%s257 + $0x28] sm:$0xff] %v513
      %626 = vst [vmem:[%s257 + $0x30] sm:$0xff] %v518
      %627 = vst [vmem:[%s257 + $0x38] sm:$0xff] %v521
      %628 = vst [vmem:[%s257 + $0x40] sm:$0xff] %v526
      %629 = vst [vmem:[%s257 + $0x48] sm:$0xff] %v529
      %630 = vst [vmem:[%s257 + $0x50] sm:$0xff] %v534
      %631 = vst [vmem:[%s257 + $0x58] sm:$0xff] %v537
      %632 = vst [vmem:[%s257 + $0x60] sm:$0xff] %v542
      %633 = vst [vmem:[%s257 + $0x68] sm:$0xff] %v545
      %634 = vst [vmem:[%s257 + $0x70] sm:$0xff] %v550
      %635 = vst [vmem:[%s257 + $0x78] sm:$0xff] %v553
      %636 = vst [vmem:[%s257 + $0x80] sm:$0xff] %v558
      %637 = vst [vmem:[%s257 + $0x88] sm:$0xff] %v561
      %638 = vst [vmem:[%s257 + $0x90] sm:$0xff] %v566
      %639 = vst [vmem:[%s257 + $0x98] sm:$0xff] %v569
      %640 = vst [vmem:[%s257 + $0xa0] sm:$0xff] %v574
      %641 = vst [vmem:[%s257 + $0xa8] sm:$0xff] %v577
      %642 = vst [vmem:[%s257 + $0xb0] sm:$0xff] %v582
      %643 = vst [vmem:[%s257 + $0xb8] sm:$0xff] %v585
      %644 = vst [vmem:[%s257 + $0xc0] sm:$0xff] %v590
      %645 = vst [vmem:[%s257 + $0xc8] sm:$0xff] %v593
      %646 = vst [vmem:[%s257 + $0xd0] sm:$0xff] %v598
      %647 = vst [vmem:[%s257 + $0xd8] sm:$0xff] %v601
      %648 = vst [vmem:[%s257 + $0xe0] sm:$0xff] %v606
      %649 = vst [vmem:[%s257 + $0xe8] sm:$0xff] %v609
      %650 = vst [vmem:[%s257 + $0xf0] sm:$0xff] %v614
      %651 = vst [vmem:[%s257 + $0xf8] sm:$0xff] %v617
      %s652 = smul.u32 32, %s19
      %p653 = scmp.lt.s32.totalorder %s652, 63
      %s654 = scalar_select %p653, %s652, 63
      %p655 = scmp.lt.s32.totalorder %s20, 0
      %s656 = scalar_select %p655, %s20, 0
      %s657 = sadd.s32 %s656, %s654
      %s658 = smul.addr %s657, 8
      %s659 = scalar_lea.vmem %s3, %s658
      // Predicated region
      $region33: #{ocr_forward.22} parent=31 // pred_check
        %p660 = pneg %p135
      $region34: #{ocr_forward.22} parent=31 // pred_check_branch
        %662 = sbr.rel (%p660) target = $region36
      $region35: #{ocr_forward.22} parent=31 // pred_region
        %s663 = smul.u32 32, %s19
      $region36: #{ocr_forward.22} parent=31 // pred_fallthru
        _
    $region32: #{ocr_forward.22} parent=5 // pred_fallthru
      _
    %p664 = scmp.le.s32.totalorder 2, %s9
    // Predicated region
    $region37: #{ocr_forward.22} parent=5 // pred_check
      %p665 = pneg %p664
    $region38: #{ocr_forward.22} parent=5 // pred_check_branch
      %667 = sbr.rel (%p665) target = $region40
    $region39: #{ocr_forward.22} parent=5 // pred_region
      %s668 = ssub.s32 %s9, 2
      // Predicated region
      $region41: #{ocr_forward.22} parent=39 // pred_check
        %p669 = pneg %p141
      $region42: #{ocr_forward.22} parent=39 // pred_check_branch
        %671 = sbr.rel (%p669) target = $region44
      $region43: #{ocr_forward.22} parent=39 // pred_region
        %s672 = smul.u32 32, %s22
        %p673 = scmp.lt.s32.totalorder %s672, 63
        %s674 = scalar_select %p673, %s672, 63
        %p675 = scmp.lt.s32.totalorder %s23, 0
        %s676 = scalar_select %p675, %s23, 0
        %s677 = sadd.s32 %s676, %s674
        %s678 = smul.addr %s677, 8
        %s679 = scalar_lea.vmem %s3, %s678
      $region44: #{ocr_forward.22} parent=39 // pred_fallthru
        _
    $region40: #{ocr_forward.22} parent=5 // pred_fallthru
      _
  $region6: #{ocr_forward.22} parent=0 // loop_footer
    %s13 = sadd.s32 1, %s9
  $region7: #{ocr_forward.22} parent=0 // loop_footer_branch
    %8 = sbr.rel target = $region3
  $region8: #{ocr_forward.22} parent=0 // loop_exit
    _

// kernel: ocr_forward.23
$region0: #{ocr_forward.23}
  #allocation0 [shape = 'u32[]', space=smem, size = 0x4, offset = 0x4, fixed_abs, tag = 'smem constant byte address 0x4 - core index']
  #allocation1 [shape = 'u32[144,128]{1,0:T(1,128)}', space=vmem, size = 0x12000, scoped, tag = 'internal scratch']
  %s0 = inlined_call_operand.vmem [shape: f32[2,19,16,16], index: 0, kind: input, shape index: {}]
  %s1 = inlined_call_operand.vmem [shape: f32[32,16], index: 1, kind: input, shape index: {}]
  %s2 = inlined_call_operand.vmem [shape: f32[16,32], index: 2, kind: input, shape index: {}]
  %s3 = inlined_call_operand.hbm [shape: f32[2,19,32,32], index: 3, kind: output, shape index: {}]
  %s4 = sld [smem:[#allocation0]]
  $region45: #{ocr_forward.23} parent=0
    _
  %s6 = ssub.s32 1, %s4
  %s7 = scalar_select 0, %s6, %s4
  $region1: #{ocr_forward.23} parent=0
    #allocation2 [shape = 'u8[32768]{0}', space=vmem, size = 0x8000, scoped, tag = 'output window, operand 0']
    #allocation3 [shape = 's32[2]{0}', space=sflag, size = 0x8, scoped, tag = 'scoped memory for ocr_forward.23']
    %8 = vsyncpa [#allocation3], 0
    %s9 = scalar_lea.sflag [#allocation3], 1
    %10 = vsyncpa %s9, 0
    loop: start=0, step=1, limit=40
    $region2: #{ocr_forward.23} parent=1 // loop_pre_header
      _
    $region3: #{ocr_forward.23} parent=1 // loop_header
      %s12 = sphi 0, %s16
      %p13 = scmp.ge.s32.totalorder %s12, 40
      %s19 = sphi 0, %s31
      %s20 = sphi 0, %s27
      %s21 = sphi 0, %s19
      %s22 = sphi 0, %s20
      %s23 = sphi 0, %s21
      %s24 = sphi 0, %s22
      %s36 = sphi 0, %s38
      %s39 = sphi 0, %s36
      %s40 = sphi 0, %s39
      %s56 = sphi 0, %s40
      %s60 = sphi 0, %s60
      %s62 = sphi 0, %s60
      %s63 = sphi 0, %s62
      %s77 = sphi 0, %s63
      %s81 = sphi 0, %s81
      %s83 = sphi 0, %s81
      %s84 = sphi 0, %s83
      %s98 = sphi 0, %s84
      %s106 = sphi 0, %s108
      %s109 = sphi 0, %s106
      %s110 = sphi 0, %s109
      %s126 = sphi 0, %s110
    $region4: #{ocr_forward.23} parent=1 // loop_header_branch
      %15 = sbr.rel (%p13) target = $region8
    $region5: #{ocr_forward.23} parent=1 // loop_body
      %s17 = ssub.s32 %s12, 1
      %s18 = ssub.s32 %s12, 2
      %s25 = sadd.s32 1, %s20
      %p26 = scmp.ge.s32.totalorder %s25, 19
      %s27 = scalar_select %p26, 0, %s25
      %s28 = sadd.s32 1, %s19
      %s29 = scalar_select %p26, %s28, %s19
      %p30 = scmp.ge.s32.totalorder %s29, 2
      %s31 = scalar_select %p30, 0, %s29
      %s32 = ssub.s32 %s19, %s31
      %s33 = ssub.s32 %s20, %s27
      %s34 = sor.u32 %s32, %s33
      %p35 = scmp.eq.s32.totalorder %s34, 0
      %s37 = sadd.s32 %s36, 1
      %s38 = scalar_select %p35, %s36, %s37
      %p41 = pneg %p35
      %p42 = scmp.eq.s32.totalorder %s12, 37
      %p43 = por %p41, %p42
      %p44 = scmp.ne.s32.totalorder %s36, %s39
      %p45 = scmp.eq.s32.totalorder %s12, 0
      %p46 = por %p44, %p45
      %p47 = scmp.ne.s32.totalorder %s36, %s39
      %p48 = scmp.eq.s32.totalorder %s17, 37
      %p49 = por %p47, %p48
      %p50 = scmp.ne.s32.totalorder %s39, %s40
      %p51 = scmp.eq.s32.totalorder %s17, 0
      %p52 = por %p50, %p51
      %p53 = scmp.ne.s32.totalorder %s39, %s40
      %p54 = scmp.eq.s32.totalorder %s18, 37
      %p55 = por %p53, %p54
      %p57 = scmp.ne.s32.totalorder %s40, %s56
      %p58 = scmp.eq.s32.totalorder %s18, 0
      %p59 = por %p57, %p58
      %s61 = sadd.s32 %s60, 1
      %p64 = scmp.eq.s32.totalorder %s12, 37
      %p65 = scmp.ne.s32.totalorder %s60, %s62
      %p66 = scmp.eq.s32.totalorder %s12, 0
      %p67 = por %p65, %p66
      %p68 = scmp.ne.s32.totalorder %s60, %s62
      %p69 = scmp.eq.s32.totalorder %s17, 37
      %p70 = por %p68, %p69
      %p71 = scmp.ne.s32.totalorder %s62, %s63
      %p72 = scmp.eq.s32.totalorder %s17, 0
      %p73 = por %p71, %p72
      %p74 = scmp.ne.s32.totalorder %s62, %s63
      %p75 = scmp.eq.s32.totalorder %s18, 37
      %p76 = por %p74, %p75
      %p78 = scmp.ne.s32.totalorder %s63, %s77
      %p79 = scmp.eq.s32.totalorder %s18, 0
      %p80 = por %p78, %p79
      %s82 = sadd.s32 %s81, 1
      %p85 = scmp.eq.s32.totalorder %s12, 37
      %p86 = scmp.ne.s32.totalorder %s81, %s83
      %p87 = scmp.eq.s32.totalorder %s12, 0
      %p88 = por %p86, %p87
      %p89 = scmp.ne.s32.totalorder %s81, %s83
      %p90 = scmp.eq.s32.totalorder %s17, 37
      %p91 = por %p89, %p90
      %p92 = scmp.ne.s32.totalorder %s83, %s84
      %p93 = scmp.eq.s32.totalorder %s17, 0
      %p94 = por %p92, %p93
      %p95 = scmp.ne.s32.totalorder %s83, %s84
      %p96 = scmp.eq.s32.totalorder %s18, 37
      %p97 = por %p95, %p96
      %p99 = scmp.ne.s32.totalorder %s84, %s98
      %p100 = scmp.eq.s32.totalorder %s18, 0
      %p101 = por %p99, %p100
      %s102 = ssub.s32 %s19, %s31
      %s103 = ssub.s32 %s20, %s27
      %s104 = sor.u32 %s102, %s103
      %p105 = scmp.eq.s32.totalorder %s104, 0
      %s107 = sadd.s32 %s106, 1
      %s108 = scalar_select %p105, %s106, %s107
      %p111 = pneg %p105
      %p112 = scmp.eq.s32.totalorder %s12, 37
      %p113 = por %p111, %p112
      %p114 = scmp.ne.s32.totalorder %s106, %s109
      %p115 = scmp.eq.s32.totalorder %s12, 0
      %p116 = por %p114, %p115
      %p117 = scmp.ne.s32.totalorder %s106, %s109
      %p118 = scmp.eq.s32.totalorder %s17, 37
      %p119 = por %p117, %p118
      %p120 = scmp.ne.s32.totalorder %s109, %s110
      %p121 = scmp.eq.s32.totalorder %s17, 0
      %p122 = por %p120, %p121
      %p123 = scmp.ne.s32.totalorder %s109, %s110
      %p124 = scmp.eq.s32.totalorder %s18, 37
      %p125 = por %p123, %p124
      %p127 = scmp.ne.s32.totalorder %s110, %s126
      %p128 = scmp.eq.s32.totalorder %s18, 0
      %p129 = por %p127, %p128
      %p130 = scmp.le.s32.totalorder 1, %s12
      %p131 = scmp.lt.s32.totalorder %s12, 39
      %p132 = pnand %p130, %p131
      %p133 = pneg %p132
      // Predicated region
      $region9: #{ocr_forward.23} parent=5 // pred_check
        _
      $region10: #{ocr_forward.23} parent=5 // pred_check_branch
        %135 = sbr.rel (%p132) target = $region12
      $region11: #{ocr_forward.23} parent=5 // pred_region
        %s136 = ssub.s32 %s12, 1
        // Predicated region
        $region13: #{ocr_forward.23} parent=11 // pred_check
          %p137 = pneg %p73
        $region14: #{ocr_forward.23} parent=11 // pred_check_branch
          %139 = sbr.rel (%p137) target = $region16
        $region15: #{ocr_forward.23} parent=11 // pred_region
          _
        $region16: #{ocr_forward.23} parent=11 // pred_fallthru
          _
        // Predicated region
        $region17: #{ocr_forward.23} parent=11 // pred_check
          %p140 = pneg %p94
        $region18: #{ocr_forward.23} parent=11 // pred_check_branch
          %142 = sbr.rel (%p140) target = $region20
        $region19: #{ocr_forward.23} parent=11 // pred_region
          _
        $region20: #{ocr_forward.23} parent=11 // pred_fallthru
          _
      $region12: #{ocr_forward.23} parent=5 // pred_fallthru
        _
      %p143 = scmp.lt.s32.totalorder %s12, 38
      // Predicated region
      $region21: #{ocr_forward.23} parent=5 // pred_check
        %p144 = pneg %p143
      $region22: #{ocr_forward.23} parent=5 // pred_check_branch
        %146 = sbr.rel (%p144) target = $region24
      $region23: #{ocr_forward.23} parent=5 // pred_region
        // Predicated region
        $region25: #{ocr_forward.23} parent=23 // pred_check
          %p147 = pneg %p46
        $region26: #{ocr_forward.23} parent=23 // pred_check_branch
          %149 = sbr.rel (%p147) target = $region28
        $region27: #{ocr_forward.23} parent=23 // pred_region
          %p150 = scmp.lt.s32.totalorder %s19, 1
          %s151 = scalar_select %p150, %s19, 1
          %p152 = scmp.lt.s32.totalorder %s20, 18
          %s153 = scalar_select %p152, %s20, 18
          %s154 = smul.addr %s153, 2
          %s155 = smul.addr %s151, 38
          %s156 = sadd.s32 %s154, %s155
          %s157 = smul.addr %s156, 8
          %s158 = scalar_lea.vmem %s0, %s157
        $region28: #{ocr_forward.23} parent=23 // pred_fallthru
          _
      $region24: #{ocr_forward.23} parent=5 // pred_fallthru
        _
      %p159 = scmp.le.s32.totalorder 1, %s12
      %p160 = scmp.lt.s32.totalorder %s12, 39
      %p161 = pnand %p159, %p160
      %p162 = pneg %p161
      // Predicated region
      $region29: #{ocr_forward.23} parent=5 // pred_check
        _
      $region30: #{ocr_forward.23} parent=5 // pred_check_branch
        %164 = sbr.rel (%p161) target = $region32
      $region31: #{ocr_forward.23} parent=5 // pred_region
        %s165 = ssub.s32 %s12, 1
        %p166 = scmp.lt.s32.totalorder %s21, 1
        %s167 = scalar_select %p166, %s21, 1
        %p168 = scmp.lt.s32.totalorder %s22, 18
        %s169 = scalar_select %p168, %s22, 18
        %s170 = smul.addr %s169, 2
        %s171 = smul.addr %s167, 38
        %s172 = sadd.s32 %s170, %s171
        %s173 = smul.addr %s172, 8
        %s174 = scalar_lea.vmem %s0, %s173
        %p175 = pneg %p52
        %p176 = pneg %p49
        %p177 = pneg %p73
        %p178 = pneg %p70
        %p179 = pneg %p94
        %p180 = pneg %p91
        %p181 = pneg %p122
        %p182 = pneg %p119
        %s183 = sand.u32 %s109, 1
        %s184 = scalar_lea.sflag [#allocation3], %s183
        %s185 = sand.u32 %s109, 1
        %s186 = smul.addr %s185, 32
        %s187 = scalar_lea.vmem [#allocation2], %s186
        %p188 = scmp.lt.s32.totalorder %s21, 1
        %s189 = scalar_select %p188, %s21, 1
        %p190 = scmp.lt.s32.totalorder %s22, 18
        %s191 = scalar_select %p190, %s22, 18
        %s192 = smul.addr %s191, 2
        %s193 = smul.addr %s189, 38
        %s194 = sadd.s32 %s192, %s193
        %s195 = smul.addr %s194, 8
        %s196 = scalar_lea.vmem %s0, %s195
        %v197 = vld [vmem:[%s1] sm:$0xff]
        %v198 = vld [vmem:[%s1 + $0x8] sm:$0xff]
        %v199 = vld [vmem:[%s1 + $0x10] sm:$0xff]
        %v200 = vld [vmem:[%s1 + $0x18] sm:$0xff]
        %v201 = vld [vmem:[%s196] sm:$0xff]
        %v202 = vld [vmem:[%s196 + $0x8] sm:$0xff]
        %vm203 = vcmask 130048
        %v205 = vsel %vm203, %v197, 0
        %v208 = vsel %vm203, %v198, 0
        %v211 = vsel %vm203, %v199, 0
        %v214 = vsel %vm203, %v200, 0
        %216 = vmatprep.subr.mxu0 0.0
        %217 = vmatpush1.msra.mxu0 %v201
        %218 = vmatprep.subr.mxu0 0.0
        %219 = vmatpush1.msra.mxu0 %v202
        %220 = vmatprep.subr.mxu0 0.0
        %221 = vmatpush1.msra.mxu0 0.0
        %222 = vmatprep.subr.mxu0 0.0
        %223 = vmatpush1.msra.mxu0 0.0
        %224 = vmatprep.subr.mxu0 0.0
        %225 = vmatpush1.msra.mxu0 0.0
        %226 = vmatprep.subr.mxu0 0.0
        %227 = vmatpush1.msra.mxu0 0.0
        %228 = vmatprep.subr.mxu0 0.0
        %229 = vmatpush1.msra.mxu0 0.0
        %230 = vmatprep.subr.mxu0 0.0
        %231 = vmatpush1.msra.mxu0 0.0
        %232 = vmatprep.subr.mxu0 0.0
        %233 = vmatpush1.msra.mxu0 0.0
        %234 = vmatprep.subr.mxu0 0.0
        %235 = vmatpush1.msra.mxu0 0.0
        %236 = vmatprep.subr.mxu0 0.0
        %237 = vmatpush1.msra.mxu0 0.0
        %238 = vmatprep.subr.mxu0 0.0
        %239 = vmatpush1.msra.mxu0 0.0
        %240 = vmatprep.subr.mxu0 0.0
        %241 = vmatpush1.msra.mxu0 0.0
        %242 = vmatprep.subr.mxu0 0.0
        %243 = vmatpush1.msra.mxu0 0.0
        %244 = vmatprep.subr.mxu0 0.0
        %245 = vmatpush1.msra.mxu0 0.0
        %246 = vmatprep.subr.mxu0 0.0
        %247 = vmatpush1.msra.mxu0 0.0
        %248 = vmatprep.subr.mxu0 0.0
        %249 = vmatpush1.msra.mxu0 0.0
        %250 = vmatprep.subr.mxu0 0.0
        %251 = vmatpush1.msra.mxu0 0.0
        %252 = vmatprep.subr.mxu0 0.0
        %253 = vmatpush1.msra.mxu0 0.0
        %254 = vmatprep.subr.mxu0 0.0
        %255 = vmatpush1.msra.mxu0 0.0
        %256 = vmatprep.subr.mxu0 0.0
        %257 = vmatpush1.msra.mxu0 0.0
        %258 = vmatprep.subr.mxu0 0.0
        %259 = vmatpush1.msra.mxu0 0.0
        %260 = vmatprep.subr.mxu0 0.0
        %261 = vmatpush1.msra.mxu0 0.0
        %262 = vmatprep.subr.mxu0 0.0
        %263 = vmatpush1.msra.mxu0 0.0
        %264 = vmatprep.subr.mxu0 0.0
        %265 = vmatpush1.msra.mxu0 0.0
        %266 = vmatprep.subr.mxu0 0.0
        %267 = vmatpush1.msra.mxu0 0.0
        %268 = vmatprep.subr.mxu0 0.0
        %269 = vmatpush1.msra.mxu0 0.0
        %270 = vmatprep.subr.mxu0 0.0
        %271 = vmatpush1.msra.mxu0 0.0
        %272 = vmatprep.subr.mxu0 0.0
        %273 = vmatpush1.msra.mxu0 0.0
        %274 = vmatprep.subr.mxu0 0.0
        %275 = vmatpush1.msra.mxu0 0.0
        %276 = vmatprep.subr.mxu0 0.0
        %277 = vmatpush1.msra.mxu0 0.0
        %278 = vmatprep.subr.mxu0 0.0
        %279 = vmatpush1.msra.mxu0 0.0
        %280 = vmatprep.mubr.f32.mxu0 0.0
        %281 = vmatmul.mubr.f32.gmra.mrb[0].mxu0 %v205
        %v282 = vpop.f32.mrb[0].mxu0
        %v283 = vadd.f32 0.0, %v282
        %v284 = vpop.f32.mrb[0].mxu0
        %285 = vmatprep.mubr.f32.mxu0 0.0
        %286 = vmatmul.mubr.f32.gmra.mrb[0].mxu0 %v208
        %v287 = vpop.f32.mrb[0].mxu0
        %v288 = vadd.f32 0.0, %v287
        %v289 = vpop.f32.mrb[0].mxu0
        %290 = vmatprep.mubr.f32.mxu0 0.0
        %291 = vmatmul.mubr.f32.gmra.mrb[0].mxu0 %v211
        %v292 = vpop.f32.mrb[0].mxu0
        %v293 = vadd.f32 0.0, %v292
        %v294 = vpop.f32.mrb[0].mxu0
        %295 = vmatprep.mubr.f32.mxu0 0.0
        %296 = vmatmul.mubr.f32.gmra.mrb[0].mxu0 %v214
        %v297 = vpop.f32.mrb[0].mxu0
        %v298 = vadd.f32 0.0, %v297
        %v299 = vpop.f32.mrb[0].mxu0
        %300 = vdwg.mxu0
        %v301 = vld [vmem:[%s2] sm:$0xff]
        %v302 = vld [vmem:[%s2 + $0x8] sm:$0xff]
        %v304 = vsel %vm203, %v283, 0
        %v307 = vsel %vm203, %v288, 0
        %v310 = vsel %vm203, %v293, 0
        %v313 = vsel %vm203, %v298, 0
        %315 = vmatprep.subr.mxu0 0.0
        %316 = vmatpush1.msra.mxu0 %v301
        %317 = vmatprep.subr.mxu0 0.0
        %318 = vmatpush1.msra.mxu0 %v302
        %319 = vmatprep.subr.mxu0 0.0
        %320 = vmatpush1.msra.mxu0 0.0
        %321 = vmatprep.subr.mxu0 0.0
        %322 = vmatpush1.msra.mxu0 0.0
        %323 = vmatprep.subr.mxu0 0.0
        %324 = vmatpush1.msra.mxu0 0.0
        %325 = vmatprep.subr.mxu0 0.0
        %326 = vmatpush1.msra.mxu0 0.0
        %327 = vmatprep.subr.mxu0 0.0
        %328 = vmatpush1.msra.mxu0 0.0
        %329 = vmatprep.subr.mxu0 0.0
        %330 = vmatpush1.msra.mxu0 0.0
        %331 = vmatprep.subr.mxu0 0.0
        %332 = vmatpush1.msra.mxu0 0.0
        %333 = vmatprep.subr.mxu0 0.0
        %334 = vmatpush1.msra.mxu0 0.0
        %335 = vmatprep.subr.mxu0 0.0
        %336 = vmatpush1.msra.mxu0 0.0
        %337 = vmatprep.subr.mxu0 0.0
        %338 = vmatpush1.msra.mxu0 0.0
        %339 = vmatprep.subr.mxu0 0.0
        %340 = vmatpush1.msra.mxu0 0.0
        %341 = vmatprep.subr.mxu0 0.0
        %342 = vmatpush1.msra.mxu0 0.0
        %343 = vmatprep.subr.mxu0 0.0
        %344 = vmatpush1.msra.mxu0 0.0
        %345 = vmatprep.subr.mxu0 0.0
        %346 = vmatpush1.msra.mxu0 0.0
        %347 = vmatprep.subr.mxu0 0.0
        %348 = vmatpush1.msra.mxu0 0.0
        %349 = vmatprep.subr.mxu0 0.0
        %350 = vmatpush1.msra.mxu0 0.0
        %351 = vmatprep.subr.mxu0 0.0
        %352 = vmatpush1.msra.mxu0 0.0
        %353 = vmatprep.subr.mxu0 0.0
        %354 = vmatpush1.msra.mxu0 0.0
        %355 = vmatprep.subr.mxu0 0.0
        %356 = vmatpush1.msra.mxu0 0.0
        %357 = vmatprep.subr.mxu0 0.0
        %358 = vmatpush1.msra.mxu0 0.0
        %359 = vmatprep.subr.mxu0 0.0
        %360 = vmatpush1.msra.mxu0 0.0
        %361 = vmatprep.subr.mxu0 0.0
        %362 = vmatpush1.msra.mxu0 0.0
        %363 = vmatprep.subr.mxu0 0.0
        %364 = vmatpush1.msra.mxu0 0.0
        %365 = vmatprep.subr.mxu0 0.0
        %366 = vmatpush1.msra.mxu0 0.0
        %367 = vmatprep.subr.mxu0 0.0
        %368 = vmatpush1.msra.mxu0 0.0
        %369 = vmatprep.subr.mxu0 0.0
        %370 = vmatpush1.msra.mxu0 0.0
        %371 = vmatprep.subr.mxu0 0.0
        %372 = vmatpush1.msra.mxu0 0.0
        %373 = vmatprep.subr.mxu0 0.0
        %374 = vmatpush1.msra.mxu0 0.0
        %375 = vmatprep.subr.mxu0 0.0
        %376 = vmatpush1.msra.mxu0 0.0
        %377 = vmatprep.subr.mxu0 0.0
        %378 = vmatpush1.msra.mxu0 0.0
        %379 = vmatprep.mubr.f32.mxu0 0.0
        %380 = vmatmul.mubr.f32.gmra.mrb[0].mxu0 %v304
        %v381 = vpop.f32.mrb[0].mxu0
        %v382 = vadd.f32 0.0, %v381
        %v383 = vpop.f32.mrb[0].mxu0
        %384 = vmatprep.mubr.f32.mxu0 0.0
        %385 = vmatmul.mubr.f32.gmra.mrb[0].mxu0 %v307
        %v386 = vpop.f32.mrb[0].mxu0
        %v387 = vadd.f32 0.0, %v386
        %v388 = vpop.f32.mrb[0].mxu0
        %389 = vmatprep.mubr.f32.mxu0 0.0
        %390 = vmatmul.mubr.f32.gmra.mrb[0].mxu0 %v310
        %v391 = vpop.f32.mrb[0].mxu0
        %v392 = vadd.f32 0.0, %v391
        %v393 = vpop.f32.mrb[0].mxu0
        %394 = vmatprep.mubr.f32.mxu0 0.0
        %395 = vmatmul.mubr.f32.gmra.mrb[0].mxu0 %v313
        %v396 = vpop.f32.mrb[0].mxu0
        %v397 = vadd.f32 0.0, %v396
        %v398 = vpop.f32.mrb[0].mxu0
        %399 = vdwg.mxu0
        %vm400 = vcmask 261120
        %401 = vst.msk [vmem:[%s187] sm:$0xff] %vm400, %v382
        %402 = vst.msk [vmem:[%s187 + $0x8] sm:$0xff] %vm400, %v387
        %403 = vst.msk [vmem:[%s187 + $0x10] sm:$0xff] %vm400, %v392
        %404 = vst.msk [vmem:[%s187 + $0x18] sm:$0xff] %vm400, %v397
        %s405 = sand.u32 %s109, 1
        %s406 = scalar_lea.sflag [#allocation3], %s405
        %s407 = sand.u32 %s109, 1
        %s408 = smul.addr %s407, 32
        %s409 = scalar_lea.vmem [#allocation2], %s408
        // Predicated region
        $region33: #{ocr_forward.23} parent=31 // pred_check
          %p410 = pneg %p119
        $region34: #{ocr_forward.23} parent=31 // pred_check_branch
          %412 = sbr.rel (%p410) target = $region36
        $region35: #{ocr_forward.23} parent=31 // pred_region
          %s414 = ssub.s32 512, 512
          %415 = vsyncadd %s406, %s414
          %s416 = smul.addr %s22, 4
          %s417 = smul.addr %s21, 76
          %s418 = sadd.s32 %s416, %s417
          %s419 = smul.addr %s418, 128
          %s420 = scalar_lea.hbm %s3, %s419
          %s421 = sshll.u32 %s409, 4
          %s422 = int_to_ptr.vmem [resolvable:$true] %s421
          %427 = dma.vmem_to_hbm [thread:$0]  %s422, 512, %s420, %s406, 128, 128, 8
        $region36: #{ocr_forward.23} parent=31 // pred_fallthru
          _
      $region32: #{ocr_forward.23} parent=5 // pred_fallthru
        _
      %p428 = scmp.le.s32.totalorder 2, %s12
      // Predicated region
      $region37: #{ocr_forward.23} parent=5 // pred_check
        %p429 = pneg %p428
      $region38: #{ocr_forward.23} parent=5 // pred_check_branch
        %431 = sbr.rel (%p429) target = $region40
      $region39: #{ocr_forward.23} parent=5 // pred_region
        %s432 = ssub.s32 %s12, 2
        // Predicated region
        $region41: #{ocr_forward.23} parent=39 // pred_check
          %p433 = pneg %p125
        $region42: #{ocr_forward.23} parent=39 // pred_check_branch
          %435 = sbr.rel (%p433) target = $region44
        $region43: #{ocr_forward.23} parent=39 // pred_region
          %s436 = sand.u32 %s110, 1
          %s437 = scalar_lea.sflag [#allocation3], %s436
          %s438 = sand.u32 %s110, 1
          %s439 = smul.addr %s438, 32
          %s440 = scalar_lea.vmem [#allocation2], %s439
          %441 = dma.done %s437, 512
        $region44: #{ocr_forward.23} parent=39 // pred_fallthru
          _
      $region40: #{ocr_forward.23} parent=5 // pred_fallthru
        _
    $region6: #{ocr_forward.23} parent=1 // loop_footer
      %s16 = sadd.s32 1, %s12
    $region7: #{ocr_forward.23} parent=1 // loop_footer_branch
      %11 = sbr.rel target = $region3
    $region8: #{ocr_forward.23} parent=1 // loop_exit
      _
    %442 = vsyncpa [#allocation3], 1
    %s443 = scalar_lea.sflag [#allocation3], 1
    %444 = vsyncpa %s443, 1

</llo_original>
